<compile_context>
chip_gen: v5e
topology: v5e:2x2
jax: 0.10.0
libtpu: 0.0.40
codegen_flags: <defaults>
</compile_context>

<pallas_src>
import functools

import jax
import jax.numpy as jnp
from jax import lax
from jax.experimental import pallas as pl
from jax.experimental.pallas import tpu as pltpu


def _round_up(x, m):
  return ((x + m - 1) // m) * m


def _decoder_block_kernel(
    ih1_ref,      # (TB, bn, 4H) f32   precomputed emb @ W_ih1[:, :E].T + b_ih1 + b_hh1
    key_ref,      # (bn, T, K)   compute dtype
    val_ref,      # (bn, T, V)   compute dtype
    eadd_ref,     # (bn, T)      f32   additive mask (-1e9 at pads) + key @ b_q (folded bias)
    wq_ref,       # (H, K)       compute dtype
    wih1v_ref,    # (V, 4H)      compute dtype (context half of lstm1 input weights)
    whh1_ref,     # (H, 4H)      compute dtype
    wih2_ref,     # (H, 4H)      compute dtype
    whh2_ref,     # (H, 4H)      compute dtype
    b2_ref,       # (1, 4H) f32  b_ih2 + b_hh2
    h2_out_ref,   # (TB, bn, H)  f32
    ctx_out_ref,  # (TB, bn, V)  f32
    state_ref,    # (bn, 4H) f32 scratch: [h1 | c1 | h2 | c2]; persists across time blocks
    *, hidden_dim, block_steps,
):
  H = hidden_dim

  # New batch tile -> reset recurrent state (PyTorch: hidden_states=[None,None], output=zeros).
  @pl.when(pl.program_id(1) == 0)
  def _():
    state_ref[...] = jnp.zeros_like(state_ref)

  # Grid-invariant operands, loaded once per time block.
  key = key_ref[...]
  val = val_ref[...]
  eadd = eadd_ref[...]
  wq = wq_ref[...]
  wih1v = wih1v_ref[...]
  whh1 = whh1_ref[...]
  wih2 = wih2_ref[...]
  whh2 = whh2_ref[...]
  b2 = b2_ref[...]

  def step(t, carry):
    h1, c1, h2, c2 = carry

    # query = linear_query(output); bq is folded into eadd.  Attention on the MXU.
    query = jnp.dot(h2.astype(wq.dtype), wq, preferred_element_type=jnp.float32)   # (bn, K)
    energy = jnp.einsum("nqk,ntk->nqt", query[:, None, :].astype(key.dtype), key,
                        preferred_element_type=jnp.float32)[:, 0, :] + eadd        # (bn, T)
    m = jnp.max(energy, axis=-1, keepdims=True)
    p = jnp.exp(energy - m)
    attn = p * pl.reciprocal(jnp.sum(p, axis=-1, keepdims=True), approx=True)
    ctx = jnp.einsum("nqt,ntv->nqv", attn[:, None, :].astype(val.dtype), val,
                     preferred_element_type=jnp.float32)[:, 0, :]                  # (bn, V)

    # LSTMCell 1 — gate order (i, f, g, o); embedding half + biases already in ih1_ref.
    gates1 = (ih1_ref[t]
              + jnp.dot(ctx.astype(wih1v.dtype), wih1v, preferred_element_type=jnp.float32)
              + jnp.dot(h1.astype(whh1.dtype), whh1, preferred_element_type=jnp.float32))
    i1 = jax.nn.sigmoid(gates1[:, 0 * H:1 * H])
    f1 = jax.nn.sigmoid(gates1[:, 1 * H:2 * H])
    g1 = jnp.tanh(gates1[:, 2 * H:3 * H])
    o1 = jax.nn.sigmoid(gates1[:, 3 * H:4 * H])
    c1n = f1 * c1 + i1 * g1
    h1n = o1 * jnp.tanh(c1n)

    # LSTMCell 2.
    gates2 = (jnp.dot(h1n.astype(wih2.dtype), wih2, preferred_element_type=jnp.float32)
              + jnp.dot(h2.astype(whh2.dtype), whh2, preferred_element_type=jnp.float32)
              + b2)
    i2 = jax.nn.sigmoid(gates2[:, 0 * H:1 * H])
    f2 = jax.nn.sigmoid(gates2[:, 1 * H:2 * H])
    g2 = jnp.tanh(gates2[:, 2 * H:3 * H])
    o2 = jax.nn.sigmoid(gates2[:, 3 * H:4 * H])
    c2n = f2 * c2 + i2 * g2
    h2n = o2 * jnp.tanh(c2n)

    # character_prob is deferred: emit (h2, context) for the batched vocab matmul outside.
    h2_out_ref[t] = h2n
    ctx_out_ref[t] = ctx
    return (h1n, c1n, h2n, c2n)

  carry0 = (state_ref[:, 0 * H:1 * H], state_ref[:, 1 * H:2 * H],
            state_ref[:, 2 * H:3 * H], state_ref[:, 3 * H:4 * H])
  h1, c1, h2, c2 = lax.fori_loop(0, block_steps, step, carry0, unroll=True)

  # Spill recurrent state once per time block (not per step).
  state_ref[:, 0 * H:1 * H] = h1
  state_ref[:, 1 * H:2 * H] = c1
  state_ref[:, 2 * H:3 * H] = h2
  state_ref[:, 3 * H:4 * H] = c2


def decoder_forward_pallas(params, key_tnk, values_tnv, speech_len, text,
                           *, compute_dtype=jnp.float32, block_steps=8, batch_tile=8):
  """Decoder.forward(key, values, speech_len, p=0, text, train=True) — teacher forcing."""
  T, N, K = key_tnk.shape
  V = values_tnv.shape[-1]
  H = params["w_hh1"].shape[1]
  E = params["emb"].shape[1]
  vocab = params["wc"].shape[0]
  L = text.shape[1]
  f32 = jnp.float32

  bn = min(batch_tile, _round_up(N, 8))      # batch tile (multiple of 8 sublanes)
  Np = _round_up(N, bn)
  TB = block_steps
  Lp = _round_up(max(L, 1), TB)

  # ---- glue: layout, padding, parameter re-packing, hoisted projections (plain XLA) ----
  key_nt = jnp.pad(jnp.transpose(key_tnk, (1, 0, 2)).astype(f32),
                   ((0, Np - N), (0, 0), (0, 0)))                       # (Np, T, K)
  val_nt = jnp.pad(jnp.transpose(values_tnv, (1, 0, 2)).astype(f32),
                   ((0, Np - N), (0, 0), (0, 0)))                       # (Np, T, V)
  sl = jnp.pad(speech_len, (0, Np - N), constant_values=T)
  amask = jnp.where(jnp.arange(T)[None, :] >= sl[:, None], f32(-1e9), f32(0.0))   # (Np, T)
  # Fold the linear_query bias into the additive energy term: key . b_q.
  eadd = amask + jnp.einsum("ntk,k->nt", key_nt, params["bq"].astype(f32))

  # Hoisted input projection for all L steps: emb @ W_ih1[:, :E].T + (b_ih1 + b_hh1).
  emb = jnp.transpose(params["emb"][text].astype(f32), (1, 0, 2))       # (L, N, E)
  emb = jnp.pad(emb, ((0, Lp - L), (0, Np - N), (0, 0)))
  wih1_t = params["w_ih1"].T.astype(f32)                                # (E+V, 4H)
  b1 = (params["b_ih1"] + params["b_hh1"]).astype(f32)[None, :]
  ih1 = (jnp.dot(emb.reshape(Lp * Np, E), wih1_t[:E], preferred_element_type=f32)
         + b1).reshape(Lp, Np, 4 * H)

  wq_t = params["wq"].T.astype(compute_dtype)                           # (H, K)
  wih1v = wih1_t[E:].astype(compute_dtype)                              # (V, 4H)
  whh1_t = params["w_hh1"].T.astype(compute_dtype)                      # (H, 4H)
  wih2_t = params["w_ih2"].T.astype(compute_dtype)                      # (H, 4H)
  whh2_t = params["w_hh2"].T.astype(compute_dtype)                      # (H, 4H)
  b2 = (params["b_ih2"] + params["b_hh2"]).astype(f32)[None, :]
  key_c = key_nt.astype(compute_dtype)
  val_c = val_nt.astype(compute_dtype)

  nb, nt = Np // bn, Lp // TB

  def const_spec(shape):
    zeros = (0,) * len(shape)
    return pl.BlockSpec(shape, lambda b, i: zeros)

  # Explicit VMEM budget: double-buffered blocks + scratch + headroom.
  def nbytes(shape, dtype):
    n = 1
    for d in shape:
      n *= d
    return n * jnp.dtype(dtype).itemsize

  blocks = [((TB, bn, 4 * H), f32), ((bn, T, K), compute_dtype), ((bn, T, V), compute_dtype),
            ((bn, T), f32), ((H, K), compute_dtype), ((V, 4 * H), compute_dtype),
            ((H, 4 * H), compute_dtype), ((H, 4 * H), compute_dtype),
            ((H, 4 * H), compute_dtype), ((1, 4 * H), f32),
            ((TB, bn, H), f32), ((TB, bn, V), f32)]
  vmem_limit = int(max(32 * 1024 * 1024,
                       min(100 * 1024 * 1024,
                           2 * sum(nbytes(s, d) for s, d in blocks) + (8 << 20))))

  h2_all, ctx_all = pl.pallas_call(
      functools.partial(_decoder_block_kernel, hidden_dim=H, block_steps=TB),
      out_shape=(jax.ShapeDtypeStruct((Lp, Np, H), f32),
                 jax.ShapeDtypeStruct((Lp, Np, V), f32)),
      grid=(nb, nt),
      in_specs=[
          pl.BlockSpec((TB, bn, 4 * H), lambda b, i: (i, b, 0)),   # streamed ih1 slab
          pl.BlockSpec((bn, T, K), lambda b, i: (b, 0, 0)),        # key (batch-tiled, const in time)
          pl.BlockSpec((bn, T, V), lambda b, i: (b, 0, 0)),        # value
          pl.BlockSpec((bn, T), lambda b, i: (b, 0)),              # additive mask + folded bq
          const_spec((H, K)),
          const_spec((V, 4 * H)), const_spec((H, 4 * H)),
          const_spec((H, 4 * H)), const_spec((H, 4 * H)), const_spec((1, 4 * H)),
      ],
      out_specs=(pl.BlockSpec((TB, bn, H), lambda b, i: (i, b, 0)),
                 pl.BlockSpec((TB, bn, V), lambda b, i: (i, b, 0))),
      scratch_shapes=[pltpu.VMEM((bn, 4 * H), f32)],
      compiler_params=pltpu.CompilerParams(
          dimension_semantics=("parallel", "arbitrary"),
          vmem_limit_bytes=vmem_limit),
      # TODO(synk): at large T*K/T*V consider pipeline_mode=pl.Buffered(1) on the
      #             grid-invariant inputs to drop their double-buffer copies.
  )(ih1, key_c, val_c, eadd, wq_t, wih1v, whh1_t, wih2_t, whh2_t, b2)

  # Deferred vocab projection: one big lane-dense matmul over all L*N steps (plain XLA).
  wc_t = params["wc"].T.astype(f32)                                     # (H+V, vocab)
  bc = params["bc"].astype(f32)[None, :]
  logits = (jnp.dot(h2_all.reshape(Lp * Np, H), wc_t[:H], preferred_element_type=f32)
            + jnp.dot(ctx_all.reshape(Lp * Np, V), wc_t[H:], preferred_element_type=f32)
            + bc)
  logits = logits.reshape(Lp, Np, vocab)[:L, :N]
  return jnp.transpose(logits, (1, 0, 2))                               # (N, L, vocab)


def decoder_forward_ref(params, key_tnk, values_tnv, speech_len, text):
  """Pure-JAX reference replicating the PyTorch loop (teacher forcing)."""
  T, N, _ = key_tnk.shape
  H = params["w_hh1"].shape[1]
  L = text.shape[1]

  key_nt = jnp.transpose(key_tnk, (1, 0, 2))
  val_nt = jnp.transpose(values_tnv, (1, 0, 2))
  emb = params["emb"][text]
  mask = jnp.arange(T)[None, :] >= speech_len[:, None]

  h1 = c1 = h2 = c2 = jnp.zeros((N, H), jnp.float32)
  output = jnp.zeros((N, H), jnp.float32)
  preds = []
  for i in range(L):
    query = output @ params["wq"].T + params["bq"]
    energy = jnp.einsum("ntk,nk->nt", key_nt, query)
    energy = jnp.where(mask, -1e9, energy)
    attn = jax.nn.softmax(energy, axis=1)
    context = jnp.einsum("nt,ntv->nv", attn, val_nt)

    inp = jnp.concatenate([emb[:, i, :], context], axis=1)
    g = inp @ params["w_ih1"].T + params["b_ih1"] + h1 @ params["w_hh1"].T + params["b_hh1"]
    i1, f1, gg1, o1 = jnp.split(g, 4, axis=1)
    c1 = jax.nn.sigmoid(f1) * c1 + jax.nn.sigmoid(i1) * jnp.tanh(gg1)
    h1 = jax.nn.sigmoid(o1) * jnp.tanh(c1)

    g = h1 @ params["w_ih2"].T + params["b_ih2"] + h2 @ params["w_hh2"].T + params["b_hh2"]
    i2, f2, gg2, o2 = jnp.split(g, 4, axis=1)
    c2 = jax.nn.sigmoid(f2) * c2 + jax.nn.sigmoid(i2) * jnp.tanh(gg2)
    h2 = jax.nn.sigmoid(o2) * jnp.tanh(c2)
    output = h2

    pred = jnp.concatenate([output, context], axis=1) @ params["wc"].T + params["bc"]
    preds.append(pred[:, None, :])
  return jnp.concatenate(preds, axis=1)


def make_params(key, vocab, E, H, K, V):
  ks = jax.random.split(key, 14)
  n = lambda k, s: (0.1 * jax.random.normal(k, s)).astype(jnp.float32)
  return {
      "emb":   n(ks[0], (vocab, E)),
      "wq":    n(ks[1], (K, H)),     "bq":    n(ks[2], (K,)),
      "w_ih1": n(ks[3], (4 * H, E + V)), "w_hh1": n(ks[4], (4 * H, H)),
      "b_ih1": n(ks[5], (4 * H,)),   "b_hh1": n(ks[6], (4 * H,)),
      "w_ih2": n(ks[7], (4 * H, H)), "w_hh2": n(ks[8], (4 * H, H)),
      "b_ih2": n(ks[9], (4 * H,)),   "b_hh2": n(ks[10], (4 * H,)),
      "wc":    n(ks[11], (vocab, H + V)), "bc": n(ks[12], (vocab,)),
  }


if __name__ == "__main__":
  N, T, L = 2, 8, 6           # batch, encoder length, decoder max_len (= text.shape[1])
  vocab, E, H, K, V = 32, 16, 32, 32, 16

  root = jax.random.PRNGKey(0)
  kp, kk, kv, kt = jax.random.split(root, 4)
  params = make_params(kp, vocab, E, H, K, V)

  key_tnk = jax.random.normal(kk, (T, N, K), jnp.float32)
  values_tnv = jax.random.normal(kv, (T, N, V), jnp.float32)
  speech_len = jnp.array([8, 5], dtype=jnp.int32)
  text = jax.random.randint(kt, (N, L), 0, vocab, dtype=jnp.int32)

  ref = decoder_forward_ref(params, key_tnk, values_tnv, speech_len, text)

  # f32 path (tolerance loosened vs. 1e-4 because the softmax uses the EUP approx reciprocal).
  out = decoder_forward_pallas(params, key_tnk, values_tnv, speech_len, text)
  out = jax.block_until_ready(out)
  assert out.shape == (N, L, vocab), out.shape
  assert jnp.allclose(out, ref, rtol=2e-2, atol=2e-2), float(jnp.max(jnp.abs(out - ref)))

  # bf16 weights / key / value path (v6e & v7x MXU + VMEM option); looser tolerance.
  out_bf16 = decoder_forward_pallas(params, key_tnk, values_tnv, speech_len, text,
                                    compute_dtype=jnp.bfloat16)
  out_bf16 = jax.block_until_ready(out_bf16)
  assert jnp.allclose(out_bf16, ref, rtol=6e-2, atol=6e-2), float(jnp.max(jnp.abs(out_bf16 - ref)))

  print("KERNEL_OK")
</pallas_src>

<mosaic_0001>
module attributes {stable_mosaic.version = 11 : i64} {
  func.func @_decoder_block_kernel(%arg0: i32, %arg1: i32, %arg2: memref<8x8x128xf32, #tpu.memory_space<vmem>>, %arg3: memref<8x8x32xf32, #tpu.memory_space<vmem>>, %arg4: memref<8x8x16xf32, #tpu.memory_space<vmem>>, %arg5: memref<8x8xf32, #tpu.memory_space<vmem>>, %arg6: memref<32x32xf32, #tpu.memory_space<vmem>>, %arg7: memref<16x128xf32, #tpu.memory_space<vmem>>, %arg8: memref<32x128xf32, #tpu.memory_space<vmem>>, %arg9: memref<32x128xf32, #tpu.memory_space<vmem>>, %arg10: memref<32x128xf32, #tpu.memory_space<vmem>>, %arg11: memref<1x128xf32, #tpu.memory_space<vmem>>, %arg12: memref<8x8x32xf32, #tpu.memory_space<vmem>>, %arg13: memref<8x8x16xf32, #tpu.memory_space<vmem>>, %arg14: memref<8x128xf32, #tpu.memory_space<vmem>>) attributes {dimension_semantics = [#tpu.dimension_semantics<parallel>, #tpu.dimension_semantics<arbitrary>], iteration_bounds = array<i64: 1, 1>, scalar_prefetch = 0 : i64, scratch_operands = 1 : i64, tpu.core_type = #tpu.core_type<tc>, window_params = [{transform_indices = @transform_0, window_bounds = array<i64: 8, 8, 128>}, {transform_indices = @transform_1, window_bounds = array<i64: 8, 8, 32>}, {transform_indices = @transform_2, window_bounds = array<i64: 8, 8, 16>}, {transform_indices = @transform_3, window_bounds = array<i64: 8, 8>}, {pipeline_mode = #tpu.pipeline_mode<synchronous>, transform_indices = @transform_4, window_bounds = array<i64: 32, 32>}, {pipeline_mode = #tpu.pipeline_mode<synchronous>, transform_indices = @transform_5, window_bounds = array<i64: 16, 128>}, {pipeline_mode = #tpu.pipeline_mode<synchronous>, transform_indices = @transform_6, window_bounds = array<i64: 32, 128>}, {pipeline_mode = #tpu.pipeline_mode<synchronous>, transform_indices = @transform_7, window_bounds = array<i64: 32, 128>}, {pipeline_mode = #tpu.pipeline_mode<synchronous>, transform_indices = @transform_8, window_bounds = array<i64: 32, 128>}, {pipeline_mode = #tpu.pipeline_mode<synchronous>, transform_indices = @transform_9, window_bounds = array<i64: 1, 128>}, {transform_indices = @transform_10, window_bounds = array<i64: 8, 8, 32>}, {transform_indices = @transform_11, window_bounds = array<i64: 8, 8, 16>}]} {
    %c0_i32 = arith.constant 0 : i32
    %0 = arith.cmpi eq, %arg1, %c0_i32 : i32
    %1 = arith.extui %0 : i1 to i32
    %c0_i32_0 = arith.constant 0 : i32
    %2 = arith.cmpi ne, %1, %c0_i32_0 : i32
    scf.if %2 {
      %cst_201 = arith.constant 0.000000e+00 : f32
      %724 = vector.broadcast %cst_201 : f32 to vector<8x128xf32>
      %c0_202 = arith.constant 0 : index
      %c0_203 = arith.constant 0 : index
      %725 = vector.load %arg14[%c0_202, %c0_203] : memref<8x128xf32, #tpu.memory_space<vmem>>, vector<8x128xf32>
      tpu.vector_store %arg14[%c0_202, %c0_203], %724 {strides = array<i32>} : memref<8x128xf32, #tpu.memory_space<vmem>>, vector<8x128xf32>,
    } else {
    }
    %c0 = arith.constant 0 : index
    %c0_1 = arith.constant 0 : index
    %c0_2 = arith.constant 0 : index
    %3 = vector.load %arg3[%c0, %c0_1, %c0_2] : memref<8x8x32xf32, #tpu.memory_space<vmem>>, vector<8x8x32xf32>
    %c0_3 = arith.constant 0 : index
    %c0_4 = arith.constant 0 : index
    %c0_5 = arith.constant 0 : index
    %4 = vector.load %arg4[%c0_3, %c0_4, %c0_5] : memref<8x8x16xf32, #tpu.memory_space<vmem>>, vector<8x8x16xf32>
    %c0_6 = arith.constant 0 : index
    %c0_7 = arith.constant 0 : index
    %5 = vector.load %arg5[%c0_6, %c0_7] : memref<8x8xf32, #tpu.memory_space<vmem>>, vector<8x8xf32>
    %c0_8 = arith.constant 0 : index
    %c0_9 = arith.constant 0 : index
    %6 = vector.load %arg6[%c0_8, %c0_9] : memref<32x32xf32, #tpu.memory_space<vmem>>, vector<32x32xf32>
    %c0_10 = arith.constant 0 : index
    %c0_11 = arith.constant 0 : index
    %7 = vector.load %arg7[%c0_10, %c0_11] : memref<16x128xf32, #tpu.memory_space<vmem>>, vector<16x128xf32>
    %c0_12 = arith.constant 0 : index
    %c0_13 = arith.constant 0 : index
    %8 = vector.load %arg8[%c0_12, %c0_13] : memref<32x128xf32, #tpu.memory_space<vmem>>, vector<32x128xf32>
    %c0_14 = arith.constant 0 : index
    %c0_15 = arith.constant 0 : index
    %9 = vector.load %arg9[%c0_14, %c0_15] : memref<32x128xf32, #tpu.memory_space<vmem>>, vector<32x128xf32>
    %c0_16 = arith.constant 0 : index
    %c0_17 = arith.constant 0 : index
    %10 = vector.load %arg10[%c0_16, %c0_17] : memref<32x128xf32, #tpu.memory_space<vmem>>, vector<32x128xf32>
    %c0_18 = arith.constant 0 : index
    %c0_19 = arith.constant 0 : index
    %11 = vector.load %arg11[%c0_18, %c0_19] : memref<1x128xf32, #tpu.memory_space<vmem>>, vector<1x128xf32>
    %c0_20 = arith.constant 0 : index
    %c0_21 = arith.constant 0 : index
    %12 = vector.load %arg14[%c0_20, %c0_21] : memref<8x128xf32, #tpu.memory_space<vmem>>, vector<8x32xf32>
    %c0_22 = arith.constant 0 : index
    %c32 = arith.constant 32 : index
    %13 = vector.load %arg14[%c0_22, %c32] : memref<8x128xf32, #tpu.memory_space<vmem>>, vector<8x32xf32>
    %c0_23 = arith.constant 0 : index
    %c64 = arith.constant 64 : index
    %14 = vector.load %arg14[%c0_23, %c64] : memref<8x128xf32, #tpu.memory_space<vmem>>, vector<8x32xf32>
    %c0_24 = arith.constant 0 : index
    %c96 = arith.constant 96 : index
    %15 = vector.load %arg14[%c0_24, %c96] : memref<8x128xf32, #tpu.memory_space<vmem>>, vector<8x32xf32>
    %c0_i32_25 = arith.constant 0 : i32
    %cst = arith.constant dense<0.000000e+00> : vector<8x32xf32>
    %16 = tpu.matmul %14, %6, %cst {dimension_numbers = #tpu.dot_dimension_numbers<[1], [0], [0], [1], [0, 0, 1, 1], [], []>} : vector<8x32xf32>, vector<32x32xf32>, vector<8x32xf32> -> vector<8x32xf32>
    %17 = vector.shape_cast %16 : vector<8x32xf32> to vector<8x1x32xf32>
    "tpu.trace_start"() <{level = 10 : i32, message = "nqk,ntk->nqt"}> : () -> ()
    %cst_26 = arith.constant dense<0.000000e+00> : vector<8x1x8xf32>
    %18 = tpu.matmul %17, %3, %cst_26 {dimension_numbers = #tpu.dot_dimension_numbers<[2], [2], [1], [1], [0, 0, 0, 1, 1, 1], [0], [0]>} : vector<8x1x32xf32>, vector<8x8x32xf32>, vector<8x1x8xf32> -> vector<8x1x8xf32>
    "tpu.trace_stop"() : () -> ()
    %19 = vector.shape_cast %18 : vector<8x1x8xf32> to vector<8x8xf32>
    %20 = arith.addf %19, %5 : vector<8x8xf32>
    %cst_27 = arith.constant dense<0xFF800000> : vector<8xf32>
    %21 = vector.multi_reduction <maximumf>, %20, %cst_27 [1] : vector<8x8xf32> to vector<8xf32>
    %22 = vector.shape_cast %21 : vector<8xf32> to vector<8x1xf32>
    %23 = vector.broadcast %22 : vector<8x1xf32> to vector<8x8xf32>
    %24 = arith.subf %20, %23 : vector<8x8xf32>
    %25 = math.exp %24 : vector<8x8xf32>
    %cst_28 = arith.constant dense<0.000000e+00> : vector<8xf32>
    %26 = vector.multi_reduction <add>, %25, %cst_28 [1] : vector<8x8xf32> to vector<8xf32>
    %27 = vector.shape_cast %26 : vector<8xf32> to vector<8x1xf32>
    %28 = tpu.reciprocal %27 {approx = true} : vector<8x1xf32> -> vector<8x1xf32>
    %29 = vector.broadcast %28 : vector<8x1xf32> to vector<8x8xf32>
    %30 = arith.mulf %25, %29 : vector<8x8xf32>
    %31 = vector.shape_cast %30 : vector<8x8xf32> to vector<8x1x8xf32>
    "tpu.trace_start"() <{level = 10 : i32, message = "nqt,ntv->nqv"}> : () -> ()
    %cst_29 = arith.constant dense<0.000000e+00> : vector<8x1x16xf32>
    %32 = tpu.matmul %31, %4, %cst_29 {dimension_numbers = #tpu.dot_dimension_numbers<[2], [1], [1], [2], [0, 0, 0, 1, 1, 2], [0], [0]>} : vector<8x1x8xf32>, vector<8x8x16xf32>, vector<8x1x16xf32> -> vector<8x1x16xf32>
    "tpu.trace_stop"() : () -> ()
    %33 = vector.shape_cast %32 : vector<8x1x16xf32> to vector<8x16xf32>
    %34 = arith.index_cast %c0_i32_25 : i32 to index
    %c0_30 = arith.constant 0 : index
    %c0_31 = arith.constant 0 : index
    %35 = vector.load %arg2[%34, %c0_30, %c0_31] : memref<8x8x128xf32, #tpu.memory_space<vmem>>, vector<1x8x128xf32>
    %36 = vector.shape_cast %35 : vector<1x8x128xf32> to vector<8x128xf32>
    %cst_32 = arith.constant dense<0.000000e+00> : vector<8x128xf32>
    %37 = tpu.matmul %33, %7, %cst_32 {dimension_numbers = #tpu.dot_dimension_numbers<[1], [0], [0], [1], [0, 0, 1, 1], [], []>} : vector<8x16xf32>, vector<16x128xf32>, vector<8x128xf32> -> vector<8x128xf32>
    %38 = arith.addf %36, %37 : vector<8x128xf32>
    %cst_33 = arith.constant dense<0.000000e+00> : vector<8x128xf32>
    %39 = tpu.matmul %12, %8, %cst_33 {dimension_numbers = #tpu.dot_dimension_numbers<[1], [0], [0], [1], [0, 0, 1, 1], [], []>} : vector<8x32xf32>, vector<32x128xf32>, vector<8x128xf32> -> vector<8x128xf32>
    %40 = arith.addf %38, %39 : vector<8x128xf32>
    %41 = vector.extract_strided_slice %40 {offsets = [0, 0], sizes = [8, 32], strides = [1, 1]} : vector<8x128xf32> to vector<8x32xf32>
    %42 = arith.negf %41 : vector<8x32xf32>
    %43 = math.exp %42 : vector<8x32xf32>
    %cst_34 = arith.constant 1.000000e+00 : f32
    %44 = vector.broadcast %cst_34 : f32 to vector<8x32xf32>
    %45 = arith.addf %44, %43 : vector<8x32xf32>
    %46 = arith.divf %44, %45 : vector<8x32xf32>
    %47 = vector.extract_strided_slice %40 {offsets = [0, 32], sizes = [8, 32], strides = [1, 1]} : vector<8x128xf32> to vector<8x32xf32>
    %48 = arith.negf %47 : vector<8x32xf32>
    %49 = math.exp %48 : vector<8x32xf32>
    %cst_35 = arith.constant 1.000000e+00 : f32
    %50 = vector.broadcast %cst_35 : f32 to vector<8x32xf32>
    %51 = arith.addf %50, %49 : vector<8x32xf32>
    %52 = arith.divf %50, %51 : vector<8x32xf32>
    %53 = vector.extract_strided_slice %40 {offsets = [0, 64], sizes = [8, 32], strides = [1, 1]} : vector<8x128xf32> to vector<8x32xf32>
    %54 = math.tanh %53 : vector<8x32xf32>
    %55 = vector.extract_strided_slice %40 {offsets = [0, 96], sizes = [8, 32], strides = [1, 1]} : vector<8x128xf32> to vector<8x32xf32>
    %56 = arith.negf %55 : vector<8x32xf32>
    %57 = math.exp %56 : vector<8x32xf32>
    %cst_36 = arith.constant 1.000000e+00 : f32
    %58 = vector.broadcast %cst_36 : f32 to vector<8x32xf32>
    %59 = arith.addf %58, %57 : vector<8x32xf32>
    %60 = arith.divf %58, %59 : vector<8x32xf32>
    %61 = arith.mulf %52, %13 : vector<8x32xf32>
    %62 = arith.mulf %46, %54 : vector<8x32xf32>
    %63 = arith.addf %61, %62 : vector<8x32xf32>
    %64 = math.tanh %63 : vector<8x32xf32>
    %65 = arith.mulf %60, %64 : vector<8x32xf32>
    %cst_37 = arith.constant dense<0.000000e+00> : vector<8x128xf32>
    %66 = tpu.matmul %65, %9, %cst_37 {dimension_numbers = #tpu.dot_dimension_numbers<[1], [0], [0], [1], [0, 0, 1, 1], [], []>} : vector<8x32xf32>, vector<32x128xf32>, vector<8x128xf32> -> vector<8x128xf32>
    %cst_38 = arith.constant dense<0.000000e+00> : vector<8x128xf32>
    %67 = tpu.matmul %14, %10, %cst_38 {dimension_numbers = #tpu.dot_dimension_numbers<[1], [0], [0], [1], [0, 0, 1, 1], [], []>} : vector<8x32xf32>, vector<32x128xf32>, vector<8x128xf32> -> vector<8x128xf32>
    %68 = arith.addf %66, %67 : vector<8x128xf32>
    %69 = vector.broadcast %11 : vector<1x128xf32> to vector<8x128xf32>
    %70 = arith.addf %68, %69 : vector<8x128xf32>
    %71 = vector.extract_strided_slice %70 {offsets = [0, 0], sizes = [8, 32], strides = [1, 1]} : vector<8x128xf32> to vector<8x32xf32>
    %72 = arith.negf %71 : vector<8x32xf32>
    %73 = math.exp %72 : vector<8x32xf32>
    %cst_39 = arith.constant 1.000000e+00 : f32
    %74 = vector.broadcast %cst_39 : f32 to vector<8x32xf32>
    %75 = arith.addf %74, %73 : vector<8x32xf32>
    %76 = arith.divf %74, %75 : vector<8x32xf32>
    %77 = vector.extract_strided_slice %70 {offsets = [0, 32], sizes = [8, 32], strides = [1, 1]} : vector<8x128xf32> to vector<8x32xf32>
    %78 = arith.negf %77 : vector<8x32xf32>
    %79 = math.exp %78 : vector<8x32xf32>
    %cst_40 = arith.constant 1.000000e+00 : f32
    %80 = vector.broadcast %cst_40 : f32 to vector<8x32xf32>
    %81 = arith.addf %80, %79 : vector<8x32xf32>
    %82 = arith.divf %80, %81 : vector<8x32xf32>
    %83 = vector.extract_strided_slice %70 {offsets = [0, 64], sizes = [8, 32], strides = [1, 1]} : vector<8x128xf32> to vector<8x32xf32>
    %84 = math.tanh %83 : vector<8x32xf32>
    %85 = vector.extract_strided_slice %70 {offsets = [0, 96], sizes = [8, 32], strides = [1, 1]} : vector<8x128xf32> to vector<8x32xf32>
    %86 = arith.negf %85 : vector<8x32xf32>
    %87 = math.exp %86 : vector<8x32xf32>
    %cst_41 = arith.constant 1.000000e+00 : f32
    %88 = vector.broadcast %cst_41 : f32 to vector<8x32xf32>
    %89 = arith.addf %88, %87 : vector<8x32xf32>
    %90 = arith.divf %88, %89 : vector<8x32xf32>
    %91 = arith.mulf %82, %15 : vector<8x32xf32>
    %92 = arith.mulf %76, %84 : vector<8x32xf32>
    %93 = arith.addf %91, %92 : vector<8x32xf32>
    %94 = math.tanh %93 : vector<8x32xf32>
    %95 = arith.mulf %90, %94 : vector<8x32xf32>
    %96 = arith.index_cast %c0_i32_25 : i32 to index
    %c0_42 = arith.constant 0 : index
    %c0_43 = arith.constant 0 : index
    %97 = vector.load %arg12[%96, %c0_42, %c0_43] : memref<8x8x32xf32, #tpu.memory_space<vmem>>, vector<1x8x32xf32>
    %98 = vector.shape_cast %97 : vector<1x8x32xf32> to vector<8x32xf32>
    %99 = vector.shape_cast %95 : vector<8x32xf32> to vector<1x8x32xf32>
    tpu.vector_store %arg12[%96, %c0_42, %c0_43], %99 {strides = array<i32>} : memref<8x8x32xf32, #tpu.memory_space<vmem>>, vector<1x8x32xf32>,
    %100 = arith.index_cast %c0_i32_25 : i32 to index
    %c0_44 = arith.constant 0 : index
    %c0_45 = arith.constant 0 : index
    %101 = vector.load %arg13[%100, %c0_44, %c0_45] : memref<8x8x16xf32, #tpu.memory_space<vmem>>, vector<1x8x16xf32>
    %102 = vector.shape_cast %101 : vector<1x8x16xf32> to vector<8x16xf32>
    %103 = vector.shape_cast %33 : vector<8x16xf32> to vector<1x8x16xf32>
    tpu.vector_store %arg13[%100, %c0_44, %c0_45], %103 {strides = array<i32>} : memref<8x8x16xf32, #tpu.memory_space<vmem>>, vector<1x8x16xf32>,
    %c1_i32 = arith.constant 1 : i32
    %cst_46 = arith.constant dense<0.000000e+00> : vector<8x32xf32>
    %104 = tpu.matmul %95, %6, %cst_46 {dimension_numbers = #tpu.dot_dimension_numbers<[1], [0], [0], [1], [0, 0, 1, 1], [], []>} : vector<8x32xf32>, vector<32x32xf32>, vector<8x32xf32> -> vector<8x32xf32>
    %105 = vector.shape_cast %104 : vector<8x32xf32> to vector<8x1x32xf32>
    "tpu.trace_start"() <{level = 10 : i32, message = "nqk,ntk->nqt"}> : () -> ()
    %cst_47 = arith.constant dense<0.000000e+00> : vector<8x1x8xf32>
    %106 = tpu.matmul %105, %3, %cst_47 {dimension_numbers = #tpu.dot_dimension_numbers<[2], [2], [1], [1], [0, 0, 0, 1, 1, 1], [0], [0]>} : vector<8x1x32xf32>, vector<8x8x32xf32>, vector<8x1x8xf32> -> vector<8x1x8xf32>
    "tpu.trace_stop"() : () -> ()
    %107 = vector.shape_cast %106 : vector<8x1x8xf32> to vector<8x8xf32>
    %108 = arith.addf %107, %5 : vector<8x8xf32>
    %cst_48 = arith.constant dense<0xFF800000> : vector<8xf32>
    %109 = vector.multi_reduction <maximumf>, %108, %cst_48 [1] : vector<8x8xf32> to vector<8xf32>
    %110 = vector.shape_cast %109 : vector<8xf32> to vector<8x1xf32>
    %111 = vector.broadcast %110 : vector<8x1xf32> to vector<8x8xf32>
    %112 = arith.subf %108, %111 : vector<8x8xf32>
    %113 = math.exp %112 : vector<8x8xf32>
    %cst_49 = arith.constant dense<0.000000e+00> : vector<8xf32>
    %114 = vector.multi_reduction <add>, %113, %cst_49 [1] : vector<8x8xf32> to vector<8xf32>
    %115 = vector.shape_cast %114 : vector<8xf32> to vector<8x1xf32>
    %116 = tpu.reciprocal %115 {approx = true} : vector<8x1xf32> -> vector<8x1xf32>
    %117 = vector.broadcast %116 : vector<8x1xf32> to vector<8x8xf32>
    %118 = arith.mulf %113, %117 : vector<8x8xf32>
    %119 = vector.shape_cast %118 : vector<8x8xf32> to vector<8x1x8xf32>
    "tpu.trace_start"() <{level = 10 : i32, message = "nqt,ntv->nqv"}> : () -> ()
    %cst_50 = arith.constant dense<0.000000e+00> : vector<8x1x16xf32>
    %120 = tpu.matmul %119, %4, %cst_50 {dimension_numbers = #tpu.dot_dimension_numbers<[2], [1], [1], [2], [0, 0, 0, 1, 1, 2], [0], [0]>} : vector<8x1x8xf32>, vector<8x8x16xf32>, vector<8x1x16xf32> -> vector<8x1x16xf32>
    "tpu.trace_stop"() : () -> ()
    %121 = vector.shape_cast %120 : vector<8x1x16xf32> to vector<8x16xf32>
    %122 = arith.index_cast %c1_i32 : i32 to index
    %c0_51 = arith.constant 0 : index
    %c0_52 = arith.constant 0 : index
    %123 = vector.load %arg2[%122, %c0_51, %c0_52] : memref<8x8x128xf32, #tpu.memory_space<vmem>>, vector<1x8x128xf32>
    %124 = vector.shape_cast %123 : vector<1x8x128xf32> to vector<8x128xf32>
    %cst_53 = arith.constant dense<0.000000e+00> : vector<8x128xf32>
    %125 = tpu.matmul %121, %7, %cst_53 {dimension_numbers = #tpu.dot_dimension_numbers<[1], [0], [0], [1], [0, 0, 1, 1], [], []>} : vector<8x16xf32>, vector<16x128xf32>, vector<8x128xf32> -> vector<8x128xf32>
    %126 = arith.addf %124, %125 : vector<8x128xf32>
    %cst_54 = arith.constant dense<0.000000e+00> : vector<8x128xf32>
    %127 = tpu.matmul %65, %8, %cst_54 {dimension_numbers = #tpu.dot_dimension_numbers<[1], [0], [0], [1], [0, 0, 1, 1], [], []>} : vector<8x32xf32>, vector<32x128xf32>, vector<8x128xf32> -> vector<8x128xf32>
    %128 = arith.addf %126, %127 : vector<8x128xf32>
    %129 = vector.extract_strided_slice %128 {offsets = [0, 0], sizes = [8, 32], strides = [1, 1]} : vector<8x128xf32> to vector<8x32xf32>
    %130 = arith.negf %129 : vector<8x32xf32>
    %131 = math.exp %130 : vector<8x32xf32>
    %cst_55 = arith.constant 1.000000e+00 : f32
    %132 = vector.broadcast %cst_55 : f32 to vector<8x32xf32>
    %133 = arith.addf %132, %131 : vector<8x32xf32>
    %134 = arith.divf %132, %133 : vector<8x32xf32>
    %135 = vector.extract_strided_slice %128 {offsets = [0, 32], sizes = [8, 32], strides = [1, 1]} : vector<8x128xf32> to vector<8x32xf32>
    %136 = arith.negf %135 : vector<8x32xf32>
    %137 = math.exp %136 : vector<8x32xf32>
    %cst_56 = arith.constant 1.000000e+00 : f32
    %138 = vector.broadcast %cst_56 : f32 to vector<8x32xf32>
    %139 = arith.addf %138, %137 : vector<8x32xf32>
    %140 = arith.divf %138, %139 : vector<8x32xf32>
    %141 = vector.extract_strided_slice %128 {offsets = [0, 64], sizes = [8, 32], strides = [1, 1]} : vector<8x128xf32> to vector<8x32xf32>
    %142 = math.tanh %141 : vector<8x32xf32>
    %143 = vector.extract_strided_slice %128 {offsets = [0, 96], sizes = [8, 32], strides = [1, 1]} : vector<8x128xf32> to vector<8x32xf32>
    %144 = arith.negf %143 : vector<8x32xf32>
    %145 = math.exp %144 : vector<8x32xf32>
    %cst_57 = arith.constant 1.000000e+00 : f32
    %146 = vector.broadcast %cst_57 : f32 to vector<8x32xf32>
    %147 = arith.addf %146, %145 : vector<8x32xf32>
    %148 = arith.divf %146, %147 : vector<8x32xf32>
    %149 = arith.mulf %140, %63 : vector<8x32xf32>
    %150 = arith.mulf %134, %142 : vector<8x32xf32>
    %151 = arith.addf %149, %150 : vector<8x32xf32>
    %152 = math.tanh %151 : vector<8x32xf32>
    %153 = arith.mulf %148, %152 : vector<8x32xf32>
    %cst_58 = arith.constant dense<0.000000e+00> : vector<8x128xf32>
    %154 = tpu.matmul %153, %9, %cst_58 {dimension_numbers = #tpu.dot_dimension_numbers<[1], [0], [0], [1], [0, 0, 1, 1], [], []>} : vector<8x32xf32>, vector<32x128xf32>, vector<8x128xf32> -> vector<8x128xf32>
    %cst_59 = arith.constant dense<0.000000e+00> : vector<8x128xf32>
    %155 = tpu.matmul %95, %10, %cst_59 {dimension_numbers = #tpu.dot_dimension_numbers<[1], [0], [0], [1], [0, 0, 1, 1], [], []>} : vector<8x32xf32>, vector<32x128xf32>, vector<8x128xf32> -> vector<8x128xf32>
    %156 = arith.addf %154, %155 : vector<8x128xf32>
    %157 = vector.broadcast %11 : vector<1x128xf32> to vector<8x128xf32>
    %158 = arith.addf %156, %157 : vector<8x128xf32>
    %159 = vector.extract_strided_slice %158 {offsets = [0, 0], sizes = [8, 32], strides = [1, 1]} : vector<8x128xf32> to vector<8x32xf32>
    %160 = arith.negf %159 : vector<8x32xf32>
    %161 = math.exp %160 : vector<8x32xf32>
    %cst_60 = arith.constant 1.000000e+00 : f32
    %162 = vector.broadcast %cst_60 : f32 to vector<8x32xf32>
    %163 = arith.addf %162, %161 : vector<8x32xf32>
    %164 = arith.divf %162, %163 : vector<8x32xf32>
    %165 = vector.extract_strided_slice %158 {offsets = [0, 32], sizes = [8, 32], strides = [1, 1]} : vector<8x128xf32> to vector<8x32xf32>
    %166 = arith.negf %165 : vector<8x32xf32>
    %167 = math.exp %166 : vector<8x32xf32>
    %cst_61 = arith.constant 1.000000e+00 : f32
    %168 = vector.broadcast %cst_61 : f32 to vector<8x32xf32>
    %169 = arith.addf %168, %167 : vector<8x32xf32>
    %170 = arith.divf %168, %169 : vector<8x32xf32>
    %171 = vector.extract_strided_slice %158 {offsets = [0, 64], sizes = [8, 32], strides = [1, 1]} : vector<8x128xf32> to vector<8x32xf32>
    %172 = math.tanh %171 : vector<8x32xf32>
    %173 = vector.extract_strided_slice %158 {offsets = [0, 96], sizes = [8, 32], strides = [1, 1]} : vector<8x128xf32> to vector<8x32xf32>
    %174 = arith.negf %173 : vector<8x32xf32>
    %175 = math.exp %174 : vector<8x32xf32>
    %cst_62 = arith.constant 1.000000e+00 : f32
    %176 = vector.broadcast %cst_62 : f32 to vector<8x32xf32>
    %177 = arith.addf %176, %175 : vector<8x32xf32>
    %178 = arith.divf %176, %177 : vector<8x32xf32>
    %179 = arith.mulf %170, %93 : vector<8x32xf32>
    %180 = arith.mulf %164, %172 : vector<8x32xf32>
    %181 = arith.addf %179, %180 : vector<8x32xf32>
    %182 = math.tanh %181 : vector<8x32xf32>
    %183 = arith.mulf %178, %182 : vector<8x32xf32>
    %184 = arith.index_cast %c1_i32 : i32 to index
    %c0_63 = arith.constant 0 : index
    %c0_64 = arith.constant 0 : index
    %185 = vector.load %arg12[%184, %c0_63, %c0_64] : memref<8x8x32xf32, #tpu.memory_space<vmem>>, vector<1x8x32xf32>
    %186 = vector.shape_cast %185 : vector<1x8x32xf32> to vector<8x32xf32>
    %187 = vector.shape_cast %183 : vector<8x32xf32> to vector<1x8x32xf32>
    tpu.vector_store %arg12[%184, %c0_63, %c0_64], %187 {strides = array<i32>} : memref<8x8x32xf32, #tpu.memory_space<vmem>>, vector<1x8x32xf32>,
    %188 = arith.index_cast %c1_i32 : i32 to index
    %c0_65 = arith.constant 0 : index
    %c0_66 = arith.constant 0 : index
    %189 = vector.load %arg13[%188, %c0_65, %c0_66] : memref<8x8x16xf32, #tpu.memory_space<vmem>>, vector<1x8x16xf32>
    %190 = vector.shape_cast %189 : vector<1x8x16xf32> to vector<8x16xf32>
    %191 = vector.shape_cast %121 : vector<8x16xf32> to vector<1x8x16xf32>
    tpu.vector_store %arg13[%188, %c0_65, %c0_66], %191 {strides = array<i32>} : memref<8x8x16xf32, #tpu.memory_space<vmem>>, vector<1x8x16xf32>,
    %c2_i32 = arith.constant 2 : i32
    %cst_67 = arith.constant dense<0.000000e+00> : vector<8x32xf32>
    %192 = tpu.matmul %183, %6, %cst_67 {dimension_numbers = #tpu.dot_dimension_numbers<[1], [0], [0], [1], [0, 0, 1, 1], [], []>} : vector<8x32xf32>, vector<32x32xf32>, vector<8x32xf32> -> vector<8x32xf32>
    %193 = vector.shape_cast %192 : vector<8x32xf32> to vector<8x1x32xf32>
    "tpu.trace_start"() <{level = 10 : i32, message = "nqk,ntk->nqt"}> : () -> ()
    %cst_68 = arith.constant dense<0.000000e+00> : vector<8x1x8xf32>
    %194 = tpu.matmul %193, %3, %cst_68 {dimension_numbers = #tpu.dot_dimension_numbers<[2], [2], [1], [1], [0, 0, 0, 1, 1, 1], [0], [0]>} : vector<8x1x32xf32>, vector<8x8x32xf32>, vector<8x1x8xf32> -> vector<8x1x8xf32>
    "tpu.trace_stop"() : () -> ()
    %195 = vector.shape_cast %194 : vector<8x1x8xf32> to vector<8x8xf32>
    %196 = arith.addf %195, %5 : vector<8x8xf32>
    %cst_69 = arith.constant dense<0xFF800000> : vector<8xf32>
    %197 = vector.multi_reduction <maximumf>, %196, %cst_69 [1] : vector<8x8xf32> to vector<8xf32>
    %198 = vector.shape_cast %197 : vector<8xf32> to vector<8x1xf32>
    %199 = vector.broadcast %198 : vector<8x1xf32> to vector<8x8xf32>
    %200 = arith.subf %196, %199 : vector<8x8xf32>
    %201 = math.exp %200 : vector<8x8xf32>
    %cst_70 = arith.constant dense<0.000000e+00> : vector<8xf32>
    %202 = vector.multi_reduction <add>, %201, %cst_70 [1] : vector<8x8xf32> to vector<8xf32>
    %203 = vector.shape_cast %202 : vector<8xf32> to vector<8x1xf32>
    %204 = tpu.reciprocal %203 {approx = true} : vector<8x1xf32> -> vector<8x1xf32>
    %205 = vector.broadcast %204 : vector<8x1xf32> to vector<8x8xf32>
    %206 = arith.mulf %201, %205 : vector<8x8xf32>
    %207 = vector.shape_cast %206 : vector<8x8xf32> to vector<8x1x8xf32>
    "tpu.trace_start"() <{level = 10 : i32, message = "nqt,ntv->nqv"}> : () -> ()
    %cst_71 = arith.constant dense<0.000000e+00> : vector<8x1x16xf32>
    %208 = tpu.matmul %207, %4, %cst_71 {dimension_numbers = #tpu.dot_dimension_numbers<[2], [1], [1], [2], [0, 0, 0, 1, 1, 2], [0], [0]>} : vector<8x1x8xf32>, vector<8x8x16xf32>, vector<8x1x16xf32> -> vector<8x1x16xf32>
    "tpu.trace_stop"() : () -> ()
    %209 = vector.shape_cast %208 : vector<8x1x16xf32> to vector<8x16xf32>
    %210 = arith.index_cast %c2_i32 : i32 to index
    %c0_72 = arith.constant 0 : index
    %c0_73 = arith.constant 0 : index
    %211 = vector.load %arg2[%210, %c0_72, %c0_73] : memref<8x8x128xf32, #tpu.memory_space<vmem>>, vector<1x8x128xf32>
    %212 = vector.shape_cast %211 : vector<1x8x128xf32> to vector<8x128xf32>
    %cst_74 = arith.constant dense<0.000000e+00> : vector<8x128xf32>
    %213 = tpu.matmul %209, %7, %cst_74 {dimension_numbers = #tpu.dot_dimension_numbers<[1], [0], [0], [1], [0, 0, 1, 1], [], []>} : vector<8x16xf32>, vector<16x128xf32>, vector<8x128xf32> -> vector<8x128xf32>
    %214 = arith.addf %212, %213 : vector<8x128xf32>
    %cst_75 = arith.constant dense<0.000000e+00> : vector<8x128xf32>
    %215 = tpu.matmul %153, %8, %cst_75 {dimension_numbers = #tpu.dot_dimension_numbers<[1], [0], [0], [1], [0, 0, 1, 1], [], []>} : vector<8x32xf32>, vector<32x128xf32>, vector<8x128xf32> -> vector<8x128xf32>
    %216 = arith.addf %214, %215 : vector<8x128xf32>
    %217 = vector.extract_strided_slice %216 {offsets = [0, 0], sizes = [8, 32], strides = [1, 1]} : vector<8x128xf32> to vector<8x32xf32>
    %218 = arith.negf %217 : vector<8x32xf32>
    %219 = math.exp %218 : vector<8x32xf32>
    %cst_76 = arith.constant 1.000000e+00 : f32
    %220 = vector.broadcast %cst_76 : f32 to vector<8x32xf32>
    %221 = arith.addf %220, %219 : vector<8x32xf32>
    %222 = arith.divf %220, %221 : vector<8x32xf32>
    %223 = vector.extract_strided_slice %216 {offsets = [0, 32], sizes = [8, 32], strides = [1, 1]} : vector<8x128xf32> to vector<8x32xf32>
    %224 = arith.negf %223 : vector<8x32xf32>
    %225 = math.exp %224 : vector<8x32xf32>
    %cst_77 = arith.constant 1.000000e+00 : f32
    %226 = vector.broadcast %cst_77 : f32 to vector<8x32xf32>
    %227 = arith.addf %226, %225 : vector<8x32xf32>
    %228 = arith.divf %226, %227 : vector<8x32xf32>
    %229 = vector.extract_strided_slice %216 {offsets = [0, 64], sizes = [8, 32], strides = [1, 1]} : vector<8x128xf32> to vector<8x32xf32>
    %230 = math.tanh %229 : vector<8x32xf32>
    %231 = vector.extract_strided_slice %216 {offsets = [0, 96], sizes = [8, 32], strides = [1, 1]} : vector<8x128xf32> to vector<8x32xf32>
    %232 = arith.negf %231 : vector<8x32xf32>
    %233 = math.exp %232 : vector<8x32xf32>
    %cst_78 = arith.constant 1.000000e+00 : f32
    %234 = vector.broadcast %cst_78 : f32 to vector<8x32xf32>
    %235 = arith.addf %234, %233 : vector<8x32xf32>
    %236 = arith.divf %234, %235 : vector<8x32xf32>
    %237 = arith.mulf %228, %151 : vector<8x32xf32>
    %238 = arith.mulf %222, %230 : vector<8x32xf32>
    %239 = arith.addf %237, %238 : vector<8x32xf32>
    %240 = math.tanh %239 : vector<8x32xf32>
    %241 = arith.mulf %236, %240 : vector<8x32xf32>
    %cst_79 = arith.constant dense<0.000000e+00> : vector<8x128xf32>
    %242 = tpu.matmul %241, %9, %cst_79 {dimension_numbers = #tpu.dot_dimension_numbers<[1], [0], [0], [1], [0, 0, 1, 1], [], []>} : vector<8x32xf32>, vector<32x128xf32>, vector<8x128xf32> -> vector<8x128xf32>
    %cst_80 = arith.constant dense<0.000000e+00> : vector<8x128xf32>
    %243 = tpu.matmul %183, %10, %cst_80 {dimension_numbers = #tpu.dot_dimension_numbers<[1], [0], [0], [1], [0, 0, 1, 1], [], []>} : vector<8x32xf32>, vector<32x128xf32>, vector<8x128xf32> -> vector<8x128xf32>
    %244 = arith.addf %242, %243 : vector<8x128xf32>
    %245 = vector.broadcast %11 : vector<1x128xf32> to vector<8x128xf32>
    %246 = arith.addf %244, %245 : vector<8x128xf32>
    %247 = vector.extract_strided_slice %246 {offsets = [0, 0], sizes = [8, 32], strides = [1, 1]} : vector<8x128xf32> to vector<8x32xf32>
    %248 = arith.negf %247 : vector<8x32xf32>
    %249 = math.exp %248 : vector<8x32xf32>
    %cst_81 = arith.constant 1.000000e+00 : f32
    %250 = vector.broadcast %cst_81 : f32 to vector<8x32xf32>
    %251 = arith.addf %250, %249 : vector<8x32xf32>
    %252 = arith.divf %250, %251 : vector<8x32xf32>
    %253 = vector.extract_strided_slice %246 {offsets = [0, 32], sizes = [8, 32], strides = [1, 1]} : vector<8x128xf32> to vector<8x32xf32>
    %254 = arith.negf %253 : vector<8x32xf32>
    %255 = math.exp %254 : vector<8x32xf32>
    %cst_82 = arith.constant 1.000000e+00 : f32
    %256 = vector.broadcast %cst_82 : f32 to vector<8x32xf32>
    %257 = arith.addf %256, %255 : vector<8x32xf32>
    %258 = arith.divf %256, %257 : vector<8x32xf32>
    %259 = vector.extract_strided_slice %246 {offsets = [0, 64], sizes = [8, 32], strides = [1, 1]} : vector<8x128xf32> to vector<8x32xf32>
    %260 = math.tanh %259 : vector<8x32xf32>
    %261 = vector.extract_strided_slice %246 {offsets = [0, 96], sizes = [8, 32], strides = [1, 1]} : vector<8x128xf32> to vector<8x32xf32>
    %262 = arith.negf %261 : vector<8x32xf32>
    %263 = math.exp %262 : vector<8x32xf32>
    %cst_83 = arith.constant 1.000000e+00 : f32
    %264 = vector.broadcast %cst_83 : f32 to vector<8x32xf32>
    %265 = arith.addf %264, %263 : vector<8x32xf32>
    %266 = arith.divf %264, %265 : vector<8x32xf32>
    %267 = arith.mulf %258, %181 : vector<8x32xf32>
    %268 = arith.mulf %252, %260 : vector<8x32xf32>
    %269 = arith.addf %267, %268 : vector<8x32xf32>
    %270 = math.tanh %269 : vector<8x32xf32>
    %271 = arith.mulf %266, %270 : vector<8x32xf32>
    %272 = arith.index_cast %c2_i32 : i32 to index
    %c0_84 = arith.constant 0 : index
    %c0_85 = arith.constant 0 : index
    %273 = vector.load %arg12[%272, %c0_84, %c0_85] : memref<8x8x32xf32, #tpu.memory_space<vmem>>, vector<1x8x32xf32>
    %274 = vector.shape_cast %273 : vector<1x8x32xf32> to vector<8x32xf32>
    %275 = vector.shape_cast %271 : vector<8x32xf32> to vector<1x8x32xf32>
    tpu.vector_store %arg12[%272, %c0_84, %c0_85], %275 {strides = array<i32>} : memref<8x8x32xf32, #tpu.memory_space<vmem>>, vector<1x8x32xf32>,
    %276 = arith.index_cast %c2_i32 : i32 to index
    %c0_86 = arith.constant 0 : index
    %c0_87 = arith.constant 0 : index
    %277 = vector.load %arg13[%276, %c0_86, %c0_87] : memref<8x8x16xf32, #tpu.memory_space<vmem>>, vector<1x8x16xf32>
    %278 = vector.shape_cast %277 : vector<1x8x16xf32> to vector<8x16xf32>
    %279 = vector.shape_cast %209 : vector<8x16xf32> to vector<1x8x16xf32>
    tpu.vector_store %arg13[%276, %c0_86, %c0_87], %279 {strides = array<i32>} : memref<8x8x16xf32, #tpu.memory_space<vmem>>, vector<1x8x16xf32>,
    %c3_i32 = arith.constant 3 : i32
    %cst_88 = arith.constant dense<0.000000e+00> : vector<8x32xf32>
    %280 = tpu.matmul %271, %6, %cst_88 {dimension_numbers = #tpu.dot_dimension_numbers<[1], [0], [0], [1], [0, 0, 1, 1], [], []>} : vector<8x32xf32>, vector<32x32xf32>, vector<8x32xf32> -> vector<8x32xf32>
    %281 = vector.shape_cast %280 : vector<8x32xf32> to vector<8x1x32xf32>
    "tpu.trace_start"() <{level = 10 : i32, message = "nqk,ntk->nqt"}> : () -> ()
    %cst_89 = arith.constant dense<0.000000e+00> : vector<8x1x8xf32>
    %282 = tpu.matmul %281, %3, %cst_89 {dimension_numbers = #tpu.dot_dimension_numbers<[2], [2], [1], [1], [0, 0, 0, 1, 1, 1], [0], [0]>} : vector<8x1x32xf32>, vector<8x8x32xf32>, vector<8x1x8xf32> -> vector<8x1x8xf32>
    "tpu.trace_stop"() : () -> ()
    %283 = vector.shape_cast %282 : vector<8x1x8xf32> to vector<8x8xf32>
    %284 = arith.addf %283, %5 : vector<8x8xf32>
    %cst_90 = arith.constant dense<0xFF800000> : vector<8xf32>
    %285 = vector.multi_reduction <maximumf>, %284, %cst_90 [1] : vector<8x8xf32> to vector<8xf32>
    %286 = vector.shape_cast %285 : vector<8xf32> to vector<8x1xf32>
    %287 = vector.broadcast %286 : vector<8x1xf32> to vector<8x8xf32>
    %288 = arith.subf %284, %287 : vector<8x8xf32>
    %289 = math.exp %288 : vector<8x8xf32>
    %cst_91 = arith.constant dense<0.000000e+00> : vector<8xf32>
    %290 = vector.multi_reduction <add>, %289, %cst_91 [1] : vector<8x8xf32> to vector<8xf32>
    %291 = vector.shape_cast %290 : vector<8xf32> to vector<8x1xf32>
    %292 = tpu.reciprocal %291 {approx = true} : vector<8x1xf32> -> vector<8x1xf32>
    %293 = vector.broadcast %292 : vector<8x1xf32> to vector<8x8xf32>
    %294 = arith.mulf %289, %293 : vector<8x8xf32>
    %295 = vector.shape_cast %294 : vector<8x8xf32> to vector<8x1x8xf32>
    "tpu.trace_start"() <{level = 10 : i32, message = "nqt,ntv->nqv"}> : () -> ()
    %cst_92 = arith.constant dense<0.000000e+00> : vector<8x1x16xf32>
    %296 = tpu.matmul %295, %4, %cst_92 {dimension_numbers = #tpu.dot_dimension_numbers<[2], [1], [1], [2], [0, 0, 0, 1, 1, 2], [0], [0]>} : vector<8x1x8xf32>, vector<8x8x16xf32>, vector<8x1x16xf32> -> vector<8x1x16xf32>
    "tpu.trace_stop"() : () -> ()
    %297 = vector.shape_cast %296 : vector<8x1x16xf32> to vector<8x16xf32>
    %298 = arith.index_cast %c3_i32 : i32 to index
    %c0_93 = arith.constant 0 : index
    %c0_94 = arith.constant 0 : index
    %299 = vector.load %arg2[%298, %c0_93, %c0_94] : memref<8x8x128xf32, #tpu.memory_space<vmem>>, vector<1x8x128xf32>
    %300 = vector.shape_cast %299 : vector<1x8x128xf32> to vector<8x128xf32>
    %cst_95 = arith.constant dense<0.000000e+00> : vector<8x128xf32>
    %301 = tpu.matmul %297, %7, %cst_95 {dimension_numbers = #tpu.dot_dimension_numbers<[1], [0], [0], [1], [0, 0, 1, 1], [], []>} : vector<8x16xf32>, vector<16x128xf32>, vector<8x128xf32> -> vector<8x128xf32>
    %302 = arith.addf %300, %301 : vector<8x128xf32>
    %cst_96 = arith.constant dense<0.000000e+00> : vector<8x128xf32>
    %303 = tpu.matmul %241, %8, %cst_96 {dimension_numbers = #tpu.dot_dimension_numbers<[1], [0], [0], [1], [0, 0, 1, 1], [], []>} : vector<8x32xf32>, vector<32x128xf32>, vector<8x128xf32> -> vector<8x128xf32>
    %304 = arith.addf %302, %303 : vector<8x128xf32>
    %305 = vector.extract_strided_slice %304 {offsets = [0, 0], sizes = [8, 32], strides = [1, 1]} : vector<8x128xf32> to vector<8x32xf32>
    %306 = arith.negf %305 : vector<8x32xf32>
    %307 = math.exp %306 : vector<8x32xf32>
    %cst_97 = arith.constant 1.000000e+00 : f32
    %308 = vector.broadcast %cst_97 : f32 to vector<8x32xf32>
    %309 = arith.addf %308, %307 : vector<8x32xf32>
    %310 = arith.divf %308, %309 : vector<8x32xf32>
    %311 = vector.extract_strided_slice %304 {offsets = [0, 32], sizes = [8, 32], strides = [1, 1]} : vector<8x128xf32> to vector<8x32xf32>
    %312 = arith.negf %311 : vector<8x32xf32>
    %313 = math.exp %312 : vector<8x32xf32>
    %cst_98 = arith.constant 1.000000e+00 : f32
    %314 = vector.broadcast %cst_98 : f32 to vector<8x32xf32>
    %315 = arith.addf %314, %313 : vector<8x32xf32>
    %316 = arith.divf %314, %315 : vector<8x32xf32>
    %317 = vector.extract_strided_slice %304 {offsets = [0, 64], sizes = [8, 32], strides = [1, 1]} : vector<8x128xf32> to vector<8x32xf32>
    %318 = math.tanh %317 : vector<8x32xf32>
    %319 = vector.extract_strided_slice %304 {offsets = [0, 96], sizes = [8, 32], strides = [1, 1]} : vector<8x128xf32> to vector<8x32xf32>
    %320 = arith.negf %319 : vector<8x32xf32>
    %321 = math.exp %320 : vector<8x32xf32>
    %cst_99 = arith.constant 1.000000e+00 : f32
    %322 = vector.broadcast %cst_99 : f32 to vector<8x32xf32>
    %323 = arith.addf %322, %321 : vector<8x32xf32>
    %324 = arith.divf %322, %323 : vector<8x32xf32>
    %325 = arith.mulf %316, %239 : vector<8x32xf32>
    %326 = arith.mulf %310, %318 : vector<8x32xf32>
    %327 = arith.addf %325, %326 : vector<8x32xf32>
    %328 = math.tanh %327 : vector<8x32xf32>
    %329 = arith.mulf %324, %328 : vector<8x32xf32>
    %cst_100 = arith.constant dense<0.000000e+00> : vector<8x128xf32>
    %330 = tpu.matmul %329, %9, %cst_100 {dimension_numbers = #tpu.dot_dimension_numbers<[1], [0], [0], [1], [0, 0, 1, 1], [], []>} : vector<8x32xf32>, vector<32x128xf32>, vector<8x128xf32> -> vector<8x128xf32>
    %cst_101 = arith.constant dense<0.000000e+00> : vector<8x128xf32>
    %331 = tpu.matmul %271, %10, %cst_101 {dimension_numbers = #tpu.dot_dimension_numbers<[1], [0], [0], [1], [0, 0, 1, 1], [], []>} : vector<8x32xf32>, vector<32x128xf32>, vector<8x128xf32> -> vector<8x128xf32>
    %332 = arith.addf %330, %331 : vector<8x128xf32>
    %333 = vector.broadcast %11 : vector<1x128xf32> to vector<8x128xf32>
    %334 = arith.addf %332, %333 : vector<8x128xf32>
    %335 = vector.extract_strided_slice %334 {offsets = [0, 0], sizes = [8, 32], strides = [1, 1]} : vector<8x128xf32> to vector<8x32xf32>
    %336 = arith.negf %335 : vector<8x32xf32>
    %337 = math.exp %336 : vector<8x32xf32>
    %cst_102 = arith.constant 1.000000e+00 : f32
    %338 = vector.broadcast %cst_102 : f32 to vector<8x32xf32>
    %339 = arith.addf %338, %337 : vector<8x32xf32>
    %340 = arith.divf %338, %339 : vector<8x32xf32>
    %341 = vector.extract_strided_slice %334 {offsets = [0, 32], sizes = [8, 32], strides = [1, 1]} : vector<8x128xf32> to vector<8x32xf32>
    %342 = arith.negf %341 : vector<8x32xf32>
    %343 = math.exp %342 : vector<8x32xf32>
    %cst_103 = arith.constant 1.000000e+00 : f32
    %344 = vector.broadcast %cst_103 : f32 to vector<8x32xf32>
    %345 = arith.addf %344, %343 : vector<8x32xf32>
    %346 = arith.divf %344, %345 : vector<8x32xf32>
    %347 = vector.extract_strided_slice %334 {offsets = [0, 64], sizes = [8, 32], strides = [1, 1]} : vector<8x128xf32> to vector<8x32xf32>
    %348 = math.tanh %347 : vector<8x32xf32>
    %349 = vector.extract_strided_slice %334 {offsets = [0, 96], sizes = [8, 32], strides = [1, 1]} : vector<8x128xf32> to vector<8x32xf32>
    %350 = arith.negf %349 : vector<8x32xf32>
    %351 = math.exp %350 : vector<8x32xf32>
    %cst_104 = arith.constant 1.000000e+00 : f32
    %352 = vector.broadcast %cst_104 : f32 to vector<8x32xf32>
    %353 = arith.addf %352, %351 : vector<8x32xf32>
    %354 = arith.divf %352, %353 : vector<8x32xf32>
    %355 = arith.mulf %346, %269 : vector<8x32xf32>
    %356 = arith.mulf %340, %348 : vector<8x32xf32>
    %357 = arith.addf %355, %356 : vector<8x32xf32>
    %358 = math.tanh %357 : vector<8x32xf32>
    %359 = arith.mulf %354, %358 : vector<8x32xf32>
    %360 = arith.index_cast %c3_i32 : i32 to index
    %c0_105 = arith.constant 0 : index
    %c0_106 = arith.constant 0 : index
    %361 = vector.load %arg12[%360, %c0_105, %c0_106] : memref<8x8x32xf32, #tpu.memory_space<vmem>>, vector<1x8x32xf32>
    %362 = vector.shape_cast %361 : vector<1x8x32xf32> to vector<8x32xf32>
    %363 = vector.shape_cast %359 : vector<8x32xf32> to vector<1x8x32xf32>
    tpu.vector_store %arg12[%360, %c0_105, %c0_106], %363 {strides = array<i32>} : memref<8x8x32xf32, #tpu.memory_space<vmem>>, vector<1x8x32xf32>,
    %364 = arith.index_cast %c3_i32 : i32 to index
    %c0_107 = arith.constant 0 : index
    %c0_108 = arith.constant 0 : index
    %365 = vector.load %arg13[%364, %c0_107, %c0_108] : memref<8x8x16xf32, #tpu.memory_space<vmem>>, vector<1x8x16xf32>
    %366 = vector.shape_cast %365 : vector<1x8x16xf32> to vector<8x16xf32>
    %367 = vector.shape_cast %297 : vector<8x16xf32> to vector<1x8x16xf32>
    tpu.vector_store %arg13[%364, %c0_107, %c0_108], %367 {strides = array<i32>} : memref<8x8x16xf32, #tpu.memory_space<vmem>>, vector<1x8x16xf32>,
    %c4_i32 = arith.constant 4 : i32
    %cst_109 = arith.constant dense<0.000000e+00> : vector<8x32xf32>
    %368 = tpu.matmul %359, %6, %cst_109 {dimension_numbers = #tpu.dot_dimension_numbers<[1], [0], [0], [1], [0, 0, 1, 1], [], []>} : vector<8x32xf32>, vector<32x32xf32>, vector<8x32xf32> -> vector<8x32xf32>
    %369 = vector.shape_cast %368 : vector<8x32xf32> to vector<8x1x32xf32>
    "tpu.trace_start"() <{level = 10 : i32, message = "nqk,ntk->nqt"}> : () -> ()
    %cst_110 = arith.constant dense<0.000000e+00> : vector<8x1x8xf32>
    %370 = tpu.matmul %369, %3, %cst_110 {dimension_numbers = #tpu.dot_dimension_numbers<[2], [2], [1], [1], [0, 0, 0, 1, 1, 1], [0], [0]>} : vector<8x1x32xf32>, vector<8x8x32xf32>, vector<8x1x8xf32> -> vector<8x1x8xf32>
    "tpu.trace_stop"() : () -> ()
    %371 = vector.shape_cast %370 : vector<8x1x8xf32> to vector<8x8xf32>
    %372 = arith.addf %371, %5 : vector<8x8xf32>
    %cst_111 = arith.constant dense<0xFF800000> : vector<8xf32>
    %373 = vector.multi_reduction <maximumf>, %372, %cst_111 [1] : vector<8x8xf32> to vector<8xf32>
    %374 = vector.shape_cast %373 : vector<8xf32> to vector<8x1xf32>
    %375 = vector.broadcast %374 : vector<8x1xf32> to vector<8x8xf32>
    %376 = arith.subf %372, %375 : vector<8x8xf32>
    %377 = math.exp %376 : vector<8x8xf32>
    %cst_112 = arith.constant dense<0.000000e+00> : vector<8xf32>
    %378 = vector.multi_reduction <add>, %377, %cst_112 [1] : vector<8x8xf32> to vector<8xf32>
    %379 = vector.shape_cast %378 : vector<8xf32> to vector<8x1xf32>
    %380 = tpu.reciprocal %379 {approx = true} : vector<8x1xf32> -> vector<8x1xf32>
    %381 = vector.broadcast %380 : vector<8x1xf32> to vector<8x8xf32>
    %382 = arith.mulf %377, %381 : vector<8x8xf32>
    %383 = vector.shape_cast %382 : vector<8x8xf32> to vector<8x1x8xf32>
    "tpu.trace_start"() <{level = 10 : i32, message = "nqt,ntv->nqv"}> : () -> ()
    %cst_113 = arith.constant dense<0.000000e+00> : vector<8x1x16xf32>
    %384 = tpu.matmul %383, %4, %cst_113 {dimension_numbers = #tpu.dot_dimension_numbers<[2], [1], [1], [2], [0, 0, 0, 1, 1, 2], [0], [0]>} : vector<8x1x8xf32>, vector<8x8x16xf32>, vector<8x1x16xf32> -> vector<8x1x16xf32>
    "tpu.trace_stop"() : () -> ()
    %385 = vector.shape_cast %384 : vector<8x1x16xf32> to vector<8x16xf32>
    %386 = arith.index_cast %c4_i32 : i32 to index
    %c0_114 = arith.constant 0 : index
    %c0_115 = arith.constant 0 : index
    %387 = vector.load %arg2[%386, %c0_114, %c0_115] : memref<8x8x128xf32, #tpu.memory_space<vmem>>, vector<1x8x128xf32>
    %388 = vector.shape_cast %387 : vector<1x8x128xf32> to vector<8x128xf32>
    %cst_116 = arith.constant dense<0.000000e+00> : vector<8x128xf32>
    %389 = tpu.matmul %385, %7, %cst_116 {dimension_numbers = #tpu.dot_dimension_numbers<[1], [0], [0], [1], [0, 0, 1, 1], [], []>} : vector<8x16xf32>, vector<16x128xf32>, vector<8x128xf32> -> vector<8x128xf32>
    %390 = arith.addf %388, %389 : vector<8x128xf32>
    %cst_117 = arith.constant dense<0.000000e+00> : vector<8x128xf32>
    %391 = tpu.matmul %329, %8, %cst_117 {dimension_numbers = #tpu.dot_dimension_numbers<[1], [0], [0], [1], [0, 0, 1, 1], [], []>} : vector<8x32xf32>, vector<32x128xf32>, vector<8x128xf32> -> vector<8x128xf32>
    %392 = arith.addf %390, %391 : vector<8x128xf32>
    %393 = vector.extract_strided_slice %392 {offsets = [0, 0], sizes = [8, 32], strides = [1, 1]} : vector<8x128xf32> to vector<8x32xf32>
    %394 = arith.negf %393 : vector<8x32xf32>
    %395 = math.exp %394 : vector<8x32xf32>
    %cst_118 = arith.constant 1.000000e+00 : f32
    %396 = vector.broadcast %cst_118 : f32 to vector<8x32xf32>
    %397 = arith.addf %396, %395 : vector<8x32xf32>
    %398 = arith.divf %396, %397 : vector<8x32xf32>
    %399 = vector.extract_strided_slice %392 {offsets = [0, 32], sizes = [8, 32], strides = [1, 1]} : vector<8x128xf32> to vector<8x32xf32>
    %400 = arith.negf %399 : vector<8x32xf32>
    %401 = math.exp %400 : vector<8x32xf32>
    %cst_119 = arith.constant 1.000000e+00 : f32
    %402 = vector.broadcast %cst_119 : f32 to vector<8x32xf32>
    %403 = arith.addf %402, %401 : vector<8x32xf32>
    %404 = arith.divf %402, %403 : vector<8x32xf32>
    %405 = vector.extract_strided_slice %392 {offsets = [0, 64], sizes = [8, 32], strides = [1, 1]} : vector<8x128xf32> to vector<8x32xf32>
    %406 = math.tanh %405 : vector<8x32xf32>
    %407 = vector.extract_strided_slice %392 {offsets = [0, 96], sizes = [8, 32], strides = [1, 1]} : vector<8x128xf32> to vector<8x32xf32>
    %408 = arith.negf %407 : vector<8x32xf32>
    %409 = math.exp %408 : vector<8x32xf32>
    %cst_120 = arith.constant 1.000000e+00 : f32
    %410 = vector.broadcast %cst_120 : f32 to vector<8x32xf32>
    %411 = arith.addf %410, %409 : vector<8x32xf32>
    %412 = arith.divf %410, %411 : vector<8x32xf32>
    %413 = arith.mulf %404, %327 : vector<8x32xf32>
    %414 = arith.mulf %398, %406 : vector<8x32xf32>
    %415 = arith.addf %413, %414 : vector<8x32xf32>
    %416 = math.tanh %415 : vector<8x32xf32>
    %417 = arith.mulf %412, %416 : vector<8x32xf32>
    %cst_121 = arith.constant dense<0.000000e+00> : vector<8x128xf32>
    %418 = tpu.matmul %417, %9, %cst_121 {dimension_numbers = #tpu.dot_dimension_numbers<[1], [0], [0], [1], [0, 0, 1, 1], [], []>} : vector<8x32xf32>, vector<32x128xf32>, vector<8x128xf32> -> vector<8x128xf32>
    %cst_122 = arith.constant dense<0.000000e+00> : vector<8x128xf32>
    %419 = tpu.matmul %359, %10, %cst_122 {dimension_numbers = #tpu.dot_dimension_numbers<[1], [0], [0], [1], [0, 0, 1, 1], [], []>} : vector<8x32xf32>, vector<32x128xf32>, vector<8x128xf32> -> vector<8x128xf32>
    %420 = arith.addf %418, %419 : vector<8x128xf32>
    %421 = vector.broadcast %11 : vector<1x128xf32> to vector<8x128xf32>
    %422 = arith.addf %420, %421 : vector<8x128xf32>
    %423 = vector.extract_strided_slice %422 {offsets = [0, 0], sizes = [8, 32], strides = [1, 1]} : vector<8x128xf32> to vector<8x32xf32>
    %424 = arith.negf %423 : vector<8x32xf32>
    %425 = math.exp %424 : vector<8x32xf32>
    %cst_123 = arith.constant 1.000000e+00 : f32
    %426 = vector.broadcast %cst_123 : f32 to vector<8x32xf32>
    %427 = arith.addf %426, %425 : vector<8x32xf32>
    %428 = arith.divf %426, %427 : vector<8x32xf32>
    %429 = vector.extract_strided_slice %422 {offsets = [0, 32], sizes = [8, 32], strides = [1, 1]} : vector<8x128xf32> to vector<8x32xf32>
    %430 = arith.negf %429 : vector<8x32xf32>
    %431 = math.exp %430 : vector<8x32xf32>
    %cst_124 = arith.constant 1.000000e+00 : f32
    %432 = vector.broadcast %cst_124 : f32 to vector<8x32xf32>
    %433 = arith.addf %432, %431 : vector<8x32xf32>
    %434 = arith.divf %432, %433 : vector<8x32xf32>
    %435 = vector.extract_strided_slice %422 {offsets = [0, 64], sizes = [8, 32], strides = [1, 1]} : vector<8x128xf32> to vector<8x32xf32>
    %436 = math.tanh %435 : vector<8x32xf32>
    %437 = vector.extract_strided_slice %422 {offsets = [0, 96], sizes = [8, 32], strides = [1, 1]} : vector<8x128xf32> to vector<8x32xf32>
    %438 = arith.negf %437 : vector<8x32xf32>
    %439 = math.exp %438 : vector<8x32xf32>
    %cst_125 = arith.constant 1.000000e+00 : f32
    %440 = vector.broadcast %cst_125 : f32 to vector<8x32xf32>
    %441 = arith.addf %440, %439 : vector<8x32xf32>
    %442 = arith.divf %440, %441 : vector<8x32xf32>
    %443 = arith.mulf %434, %357 : vector<8x32xf32>
    %444 = arith.mulf %428, %436 : vector<8x32xf32>
    %445 = arith.addf %443, %444 : vector<8x32xf32>
    %446 = math.tanh %445 : vector<8x32xf32>
    %447 = arith.mulf %442, %446 : vector<8x32xf32>
    %448 = arith.index_cast %c4_i32 : i32 to index
    %c0_126 = arith.constant 0 : index
    %c0_127 = arith.constant 0 : index
    %449 = vector.load %arg12[%448, %c0_126, %c0_127] : memref<8x8x32xf32, #tpu.memory_space<vmem>>, vector<1x8x32xf32>
    %450 = vector.shape_cast %449 : vector<1x8x32xf32> to vector<8x32xf32>
    %451 = vector.shape_cast %447 : vector<8x32xf32> to vector<1x8x32xf32>
    tpu.vector_store %arg12[%448, %c0_126, %c0_127], %451 {strides = array<i32>} : memref<8x8x32xf32, #tpu.memory_space<vmem>>, vector<1x8x32xf32>,
    %452 = arith.index_cast %c4_i32 : i32 to index
    %c0_128 = arith.constant 0 : index
    %c0_129 = arith.constant 0 : index
    %453 = vector.load %arg13[%452, %c0_128, %c0_129] : memref<8x8x16xf32, #tpu.memory_space<vmem>>, vector<1x8x16xf32>
    %454 = vector.shape_cast %453 : vector<1x8x16xf32> to vector<8x16xf32>
    %455 = vector.shape_cast %385 : vector<8x16xf32> to vector<1x8x16xf32>
    tpu.vector_store %arg13[%452, %c0_128, %c0_129], %455 {strides = array<i32>} : memref<8x8x16xf32, #tpu.memory_space<vmem>>, vector<1x8x16xf32>,
    %c5_i32 = arith.constant 5 : i32
    %cst_130 = arith.constant dense<0.000000e+00> : vector<8x32xf32>
    %456 = tpu.matmul %447, %6, %cst_130 {dimension_numbers = #tpu.dot_dimension_numbers<[1], [0], [0], [1], [0, 0, 1, 1], [], []>} : vector<8x32xf32>, vector<32x32xf32>, vector<8x32xf32> -> vector<8x32xf32>
    %457 = vector.shape_cast %456 : vector<8x32xf32> to vector<8x1x32xf32>
    "tpu.trace_start"() <{level = 10 : i32, message = "nqk,ntk->nqt"}> : () -> ()
    %cst_131 = arith.constant dense<0.000000e+00> : vector<8x1x8xf32>
    %458 = tpu.matmul %457, %3, %cst_131 {dimension_numbers = #tpu.dot_dimension_numbers<[2], [2], [1], [1], [0, 0, 0, 1, 1, 1], [0], [0]>} : vector<8x1x32xf32>, vector<8x8x32xf32>, vector<8x1x8xf32> -> vector<8x1x8xf32>
    "tpu.trace_stop"() : () -> ()
    %459 = vector.shape_cast %458 : vector<8x1x8xf32> to vector<8x8xf32>
    %460 = arith.addf %459, %5 : vector<8x8xf32>
    %cst_132 = arith.constant dense<0xFF800000> : vector<8xf32>
    %461 = vector.multi_reduction <maximumf>, %460, %cst_132 [1] : vector<8x8xf32> to vector<8xf32>
    %462 = vector.shape_cast %461 : vector<8xf32> to vector<8x1xf32>
    %463 = vector.broadcast %462 : vector<8x1xf32> to vector<8x8xf32>
    %464 = arith.subf %460, %463 : vector<8x8xf32>
    %465 = math.exp %464 : vector<8x8xf32>
    %cst_133 = arith.constant dense<0.000000e+00> : vector<8xf32>
    %466 = vector.multi_reduction <add>, %465, %cst_133 [1] : vector<8x8xf32> to vector<8xf32>
    %467 = vector.shape_cast %466 : vector<8xf32> to vector<8x1xf32>
    %468 = tpu.reciprocal %467 {approx = true} : vector<8x1xf32> -> vector<8x1xf32>
    %469 = vector.broadcast %468 : vector<8x1xf32> to vector<8x8xf32>
    %470 = arith.mulf %465, %469 : vector<8x8xf32>
    %471 = vector.shape_cast %470 : vector<8x8xf32> to vector<8x1x8xf32>
    "tpu.trace_start"() <{level = 10 : i32, message = "nqt,ntv->nqv"}> : () -> ()
    %cst_134 = arith.constant dense<0.000000e+00> : vector<8x1x16xf32>
    %472 = tpu.matmul %471, %4, %cst_134 {dimension_numbers = #tpu.dot_dimension_numbers<[2], [1], [1], [2], [0, 0, 0, 1, 1, 2], [0], [0]>} : vector<8x1x8xf32>, vector<8x8x16xf32>, vector<8x1x16xf32> -> vector<8x1x16xf32>
    "tpu.trace_stop"() : () -> ()
    %473 = vector.shape_cast %472 : vector<8x1x16xf32> to vector<8x16xf32>
    %474 = arith.index_cast %c5_i32 : i32 to index
    %c0_135 = arith.constant 0 : index
    %c0_136 = arith.constant 0 : index
    %475 = vector.load %arg2[%474, %c0_135, %c0_136] : memref<8x8x128xf32, #tpu.memory_space<vmem>>, vector<1x8x128xf32>
    %476 = vector.shape_cast %475 : vector<1x8x128xf32> to vector<8x128xf32>
    %cst_137 = arith.constant dense<0.000000e+00> : vector<8x128xf32>
    %477 = tpu.matmul %473, %7, %cst_137 {dimension_numbers = #tpu.dot_dimension_numbers<[1], [0], [0], [1], [0, 0, 1, 1], [], []>} : vector<8x16xf32>, vector<16x128xf32>, vector<8x128xf32> -> vector<8x128xf32>
    %478 = arith.addf %476, %477 : vector<8x128xf32>
    %cst_138 = arith.constant dense<0.000000e+00> : vector<8x128xf32>
    %479 = tpu.matmul %417, %8, %cst_138 {dimension_numbers = #tpu.dot_dimension_numbers<[1], [0], [0], [1], [0, 0, 1, 1], [], []>} : vector<8x32xf32>, vector<32x128xf32>, vector<8x128xf32> -> vector<8x128xf32>
    %480 = arith.addf %478, %479 : vector<8x128xf32>
    %481 = vector.extract_strided_slice %480 {offsets = [0, 0], sizes = [8, 32], strides = [1, 1]} : vector<8x128xf32> to vector<8x32xf32>
    %482 = arith.negf %481 : vector<8x32xf32>
    %483 = math.exp %482 : vector<8x32xf32>
    %cst_139 = arith.constant 1.000000e+00 : f32
    %484 = vector.broadcast %cst_139 : f32 to vector<8x32xf32>
    %485 = arith.addf %484, %483 : vector<8x32xf32>
    %486 = arith.divf %484, %485 : vector<8x32xf32>
    %487 = vector.extract_strided_slice %480 {offsets = [0, 32], sizes = [8, 32], strides = [1, 1]} : vector<8x128xf32> to vector<8x32xf32>
    %488 = arith.negf %487 : vector<8x32xf32>
    %489 = math.exp %488 : vector<8x32xf32>
    %cst_140 = arith.constant 1.000000e+00 : f32
    %490 = vector.broadcast %cst_140 : f32 to vector<8x32xf32>
    %491 = arith.addf %490, %489 : vector<8x32xf32>
    %492 = arith.divf %490, %491 : vector<8x32xf32>
    %493 = vector.extract_strided_slice %480 {offsets = [0, 64], sizes = [8, 32], strides = [1, 1]} : vector<8x128xf32> to vector<8x32xf32>
    %494 = math.tanh %493 : vector<8x32xf32>
    %495 = vector.extract_strided_slice %480 {offsets = [0, 96], sizes = [8, 32], strides = [1, 1]} : vector<8x128xf32> to vector<8x32xf32>
    %496 = arith.negf %495 : vector<8x32xf32>
    %497 = math.exp %496 : vector<8x32xf32>
    %cst_141 = arith.constant 1.000000e+00 : f32
    %498 = vector.broadcast %cst_141 : f32 to vector<8x32xf32>
    %499 = arith.addf %498, %497 : vector<8x32xf32>
    %500 = arith.divf %498, %499 : vector<8x32xf32>
    %501 = arith.mulf %492, %415 : vector<8x32xf32>
    %502 = arith.mulf %486, %494 : vector<8x32xf32>
    %503 = arith.addf %501, %502 : vector<8x32xf32>
    %504 = math.tanh %503 : vector<8x32xf32>
    %505 = arith.mulf %500, %504 : vector<8x32xf32>
    %cst_142 = arith.constant dense<0.000000e+00> : vector<8x128xf32>
    %506 = tpu.matmul %505, %9, %cst_142 {dimension_numbers = #tpu.dot_dimension_numbers<[1], [0], [0], [1], [0, 0, 1, 1], [], []>} : vector<8x32xf32>, vector<32x128xf32>, vector<8x128xf32> -> vector<8x128xf32>
    %cst_143 = arith.constant dense<0.000000e+00> : vector<8x128xf32>
    %507 = tpu.matmul %447, %10, %cst_143 {dimension_numbers = #tpu.dot_dimension_numbers<[1], [0], [0], [1], [0, 0, 1, 1], [], []>} : vector<8x32xf32>, vector<32x128xf32>, vector<8x128xf32> -> vector<8x128xf32>
    %508 = arith.addf %506, %507 : vector<8x128xf32>
    %509 = vector.broadcast %11 : vector<1x128xf32> to vector<8x128xf32>
    %510 = arith.addf %508, %509 : vector<8x128xf32>
    %511 = vector.extract_strided_slice %510 {offsets = [0, 0], sizes = [8, 32], strides = [1, 1]} : vector<8x128xf32> to vector<8x32xf32>
    %512 = arith.negf %511 : vector<8x32xf32>
    %513 = math.exp %512 : vector<8x32xf32>
    %cst_144 = arith.constant 1.000000e+00 : f32
    %514 = vector.broadcast %cst_144 : f32 to vector<8x32xf32>
    %515 = arith.addf %514, %513 : vector<8x32xf32>
    %516 = arith.divf %514, %515 : vector<8x32xf32>
    %517 = vector.extract_strided_slice %510 {offsets = [0, 32], sizes = [8, 32], strides = [1, 1]} : vector<8x128xf32> to vector<8x32xf32>
    %518 = arith.negf %517 : vector<8x32xf32>
    %519 = math.exp %518 : vector<8x32xf32>
    %cst_145 = arith.constant 1.000000e+00 : f32
    %520 = vector.broadcast %cst_145 : f32 to vector<8x32xf32>
    %521 = arith.addf %520, %519 : vector<8x32xf32>
    %522 = arith.divf %520, %521 : vector<8x32xf32>
    %523 = vector.extract_strided_slice %510 {offsets = [0, 64], sizes = [8, 32], strides = [1, 1]} : vector<8x128xf32> to vector<8x32xf32>
    %524 = math.tanh %523 : vector<8x32xf32>
    %525 = vector.extract_strided_slice %510 {offsets = [0, 96], sizes = [8, 32], strides = [1, 1]} : vector<8x128xf32> to vector<8x32xf32>
    %526 = arith.negf %525 : vector<8x32xf32>
    %527 = math.exp %526 : vector<8x32xf32>
    %cst_146 = arith.constant 1.000000e+00 : f32
    %528 = vector.broadcast %cst_146 : f32 to vector<8x32xf32>
    %529 = arith.addf %528, %527 : vector<8x32xf32>
    %530 = arith.divf %528, %529 : vector<8x32xf32>
    %531 = arith.mulf %522, %445 : vector<8x32xf32>
    %532 = arith.mulf %516, %524 : vector<8x32xf32>
    %533 = arith.addf %531, %532 : vector<8x32xf32>
    %534 = math.tanh %533 : vector<8x32xf32>
    %535 = arith.mulf %530, %534 : vector<8x32xf32>
    %536 = arith.index_cast %c5_i32 : i32 to index
    %c0_147 = arith.constant 0 : index
    %c0_148 = arith.constant 0 : index
    %537 = vector.load %arg12[%536, %c0_147, %c0_148] : memref<8x8x32xf32, #tpu.memory_space<vmem>>, vector<1x8x32xf32>
    %538 = vector.shape_cast %537 : vector<1x8x32xf32> to vector<8x32xf32>
    %539 = vector.shape_cast %535 : vector<8x32xf32> to vector<1x8x32xf32>
    tpu.vector_store %arg12[%536, %c0_147, %c0_148], %539 {strides = array<i32>} : memref<8x8x32xf32, #tpu.memory_space<vmem>>, vector<1x8x32xf32>,
    %540 = arith.index_cast %c5_i32 : i32 to index
    %c0_149 = arith.constant 0 : index
    %c0_150 = arith.constant 0 : index
    %541 = vector.load %arg13[%540, %c0_149, %c0_150] : memref<8x8x16xf32, #tpu.memory_space<vmem>>, vector<1x8x16xf32>
    %542 = vector.shape_cast %541 : vector<1x8x16xf32> to vector<8x16xf32>
    %543 = vector.shape_cast %473 : vector<8x16xf32> to vector<1x8x16xf32>
    tpu.vector_store %arg13[%540, %c0_149, %c0_150], %543 {strides = array<i32>} : memref<8x8x16xf32, #tpu.memory_space<vmem>>, vector<1x8x16xf32>,
    %c6_i32 = arith.constant 6 : i32
    %cst_151 = arith.constant dense<0.000000e+00> : vector<8x32xf32>
    %544 = tpu.matmul %535, %6, %cst_151 {dimension_numbers = #tpu.dot_dimension_numbers<[1], [0], [0], [1], [0, 0, 1, 1], [], []>} : vector<8x32xf32>, vector<32x32xf32>, vector<8x32xf32> -> vector<8x32xf32>
    %545 = vector.shape_cast %544 : vector<8x32xf32> to vector<8x1x32xf32>
    "tpu.trace_start"() <{level = 10 : i32, message = "nqk,ntk->nqt"}> : () -> ()
    %cst_152 = arith.constant dense<0.000000e+00> : vector<8x1x8xf32>
    %546 = tpu.matmul %545, %3, %cst_152 {dimension_numbers = #tpu.dot_dimension_numbers<[2], [2], [1], [1], [0, 0, 0, 1, 1, 1], [0], [0]>} : vector<8x1x32xf32>, vector<8x8x32xf32>, vector<8x1x8xf32> -> vector<8x1x8xf32>
    "tpu.trace_stop"() : () -> ()
    %547 = vector.shape_cast %546 : vector<8x1x8xf32> to vector<8x8xf32>
    %548 = arith.addf %547, %5 : vector<8x8xf32>
    %cst_153 = arith.constant dense<0xFF800000> : vector<8xf32>
    %549 = vector.multi_reduction <maximumf>, %548, %cst_153 [1] : vector<8x8xf32> to vector<8xf32>
    %550 = vector.shape_cast %549 : vector<8xf32> to vector<8x1xf32>
    %551 = vector.broadcast %550 : vector<8x1xf32> to vector<8x8xf32>
    %552 = arith.subf %548, %551 : vector<8x8xf32>
    %553 = math.exp %552 : vector<8x8xf32>
    %cst_154 = arith.constant dense<0.000000e+00> : vector<8xf32>
    %554 = vector.multi_reduction <add>, %553, %cst_154 [1] : vector<8x8xf32> to vector<8xf32>
    %555 = vector.shape_cast %554 : vector<8xf32> to vector<8x1xf32>
    %556 = tpu.reciprocal %555 {approx = true} : vector<8x1xf32> -> vector<8x1xf32>
    %557 = vector.broadcast %556 : vector<8x1xf32> to vector<8x8xf32>
    %558 = arith.mulf %553, %557 : vector<8x8xf32>
    %559 = vector.shape_cast %558 : vector<8x8xf32> to vector<8x1x8xf32>
    "tpu.trace_start"() <{level = 10 : i32, message = "nqt,ntv->nqv"}> : () -> ()
    %cst_155 = arith.constant dense<0.000000e+00> : vector<8x1x16xf32>
    %560 = tpu.matmul %559, %4, %cst_155 {dimension_numbers = #tpu.dot_dimension_numbers<[2], [1], [1], [2], [0, 0, 0, 1, 1, 2], [0], [0]>} : vector<8x1x8xf32>, vector<8x8x16xf32>, vector<8x1x16xf32> -> vector<8x1x16xf32>
    "tpu.trace_stop"() : () -> ()
    %561 = vector.shape_cast %560 : vector<8x1x16xf32> to vector<8x16xf32>
    %562 = arith.index_cast %c6_i32 : i32 to index
    %c0_156 = arith.constant 0 : index
    %c0_157 = arith.constant 0 : index
    %563 = vector.load %arg2[%562, %c0_156, %c0_157] : memref<8x8x128xf32, #tpu.memory_space<vmem>>, vector<1x8x128xf32>
    %564 = vector.shape_cast %563 : vector<1x8x128xf32> to vector<8x128xf32>
    %cst_158 = arith.constant dense<0.000000e+00> : vector<8x128xf32>
    %565 = tpu.matmul %561, %7, %cst_158 {dimension_numbers = #tpu.dot_dimension_numbers<[1], [0], [0], [1], [0, 0, 1, 1], [], []>} : vector<8x16xf32>, vector<16x128xf32>, vector<8x128xf32> -> vector<8x128xf32>
    %566 = arith.addf %564, %565 : vector<8x128xf32>
    %cst_159 = arith.constant dense<0.000000e+00> : vector<8x128xf32>
    %567 = tpu.matmul %505, %8, %cst_159 {dimension_numbers = #tpu.dot_dimension_numbers<[1], [0], [0], [1], [0, 0, 1, 1], [], []>} : vector<8x32xf32>, vector<32x128xf32>, vector<8x128xf32> -> vector<8x128xf32>
    %568 = arith.addf %566, %567 : vector<8x128xf32>
    %569 = vector.extract_strided_slice %568 {offsets = [0, 0], sizes = [8, 32], strides = [1, 1]} : vector<8x128xf32> to vector<8x32xf32>
    %570 = arith.negf %569 : vector<8x32xf32>
    %571 = math.exp %570 : vector<8x32xf32>
    %cst_160 = arith.constant 1.000000e+00 : f32
    %572 = vector.broadcast %cst_160 : f32 to vector<8x32xf32>
    %573 = arith.addf %572, %571 : vector<8x32xf32>
    %574 = arith.divf %572, %573 : vector<8x32xf32>
    %575 = vector.extract_strided_slice %568 {offsets = [0, 32], sizes = [8, 32], strides = [1, 1]} : vector<8x128xf32> to vector<8x32xf32>
    %576 = arith.negf %575 : vector<8x32xf32>
    %577 = math.exp %576 : vector<8x32xf32>
    %cst_161 = arith.constant 1.000000e+00 : f32
    %578 = vector.broadcast %cst_161 : f32 to vector<8x32xf32>
    %579 = arith.addf %578, %577 : vector<8x32xf32>
    %580 = arith.divf %578, %579 : vector<8x32xf32>
    %581 = vector.extract_strided_slice %568 {offsets = [0, 64], sizes = [8, 32], strides = [1, 1]} : vector<8x128xf32> to vector<8x32xf32>
    %582 = math.tanh %581 : vector<8x32xf32>
    %583 = vector.extract_strided_slice %568 {offsets = [0, 96], sizes = [8, 32], strides = [1, 1]} : vector<8x128xf32> to vector<8x32xf32>
    %584 = arith.negf %583 : vector<8x32xf32>
    %585 = math.exp %584 : vector<8x32xf32>
    %cst_162 = arith.constant 1.000000e+00 : f32
    %586 = vector.broadcast %cst_162 : f32 to vector<8x32xf32>
    %587 = arith.addf %586, %585 : vector<8x32xf32>
    %588 = arith.divf %586, %587 : vector<8x32xf32>
    %589 = arith.mulf %580, %503 : vector<8x32xf32>
    %590 = arith.mulf %574, %582 : vector<8x32xf32>
    %591 = arith.addf %589, %590 : vector<8x32xf32>
    %592 = math.tanh %591 : vector<8x32xf32>
    %593 = arith.mulf %588, %592 : vector<8x32xf32>
    %cst_163 = arith.constant dense<0.000000e+00> : vector<8x128xf32>
    %594 = tpu.matmul %593, %9, %cst_163 {dimension_numbers = #tpu.dot_dimension_numbers<[1], [0], [0], [1], [0, 0, 1, 1], [], []>} : vector<8x32xf32>, vector<32x128xf32>, vector<8x128xf32> -> vector<8x128xf32>
    %cst_164 = arith.constant dense<0.000000e+00> : vector<8x128xf32>
    %595 = tpu.matmul %535, %10, %cst_164 {dimension_numbers = #tpu.dot_dimension_numbers<[1], [0], [0], [1], [0, 0, 1, 1], [], []>} : vector<8x32xf32>, vector<32x128xf32>, vector<8x128xf32> -> vector<8x128xf32>
    %596 = arith.addf %594, %595 : vector<8x128xf32>
    %597 = vector.broadcast %11 : vector<1x128xf32> to vector<8x128xf32>
    %598 = arith.addf %596, %597 : vector<8x128xf32>
    %599 = vector.extract_strided_slice %598 {offsets = [0, 0], sizes = [8, 32], strides = [1, 1]} : vector<8x128xf32> to vector<8x32xf32>
    %600 = arith.negf %599 : vector<8x32xf32>
    %601 = math.exp %600 : vector<8x32xf32>
    %cst_165 = arith.constant 1.000000e+00 : f32
    %602 = vector.broadcast %cst_165 : f32 to vector<8x32xf32>
    %603 = arith.addf %602, %601 : vector<8x32xf32>
    %604 = arith.divf %602, %603 : vector<8x32xf32>
    %605 = vector.extract_strided_slice %598 {offsets = [0, 32], sizes = [8, 32], strides = [1, 1]} : vector<8x128xf32> to vector<8x32xf32>
    %606 = arith.negf %605 : vector<8x32xf32>
    %607 = math.exp %606 : vector<8x32xf32>
    %cst_166 = arith.constant 1.000000e+00 : f32
    %608 = vector.broadcast %cst_166 : f32 to vector<8x32xf32>
    %609 = arith.addf %608, %607 : vector<8x32xf32>
    %610 = arith.divf %608, %609 : vector<8x32xf32>
    %611 = vector.extract_strided_slice %598 {offsets = [0, 64], sizes = [8, 32], strides = [1, 1]} : vector<8x128xf32> to vector<8x32xf32>
    %612 = math.tanh %611 : vector<8x32xf32>
    %613 = vector.extract_strided_slice %598 {offsets = [0, 96], sizes = [8, 32], strides = [1, 1]} : vector<8x128xf32> to vector<8x32xf32>
    %614 = arith.negf %613 : vector<8x32xf32>
    %615 = math.exp %614 : vector<8x32xf32>
    %cst_167 = arith.constant 1.000000e+00 : f32
    %616 = vector.broadcast %cst_167 : f32 to vector<8x32xf32>
    %617 = arith.addf %616, %615 : vector<8x32xf32>
    %618 = arith.divf %616, %617 : vector<8x32xf32>
    %619 = arith.mulf %610, %533 : vector<8x32xf32>
    %620 = arith.mulf %604, %612 : vector<8x32xf32>
    %621 = arith.addf %619, %620 : vector<8x32xf32>
    %622 = math.tanh %621 : vector<8x32xf32>
    %623 = arith.mulf %618, %622 : vector<8x32xf32>
    %624 = arith.index_cast %c6_i32 : i32 to index
    %c0_168 = arith.constant 0 : index
    %c0_169 = arith.constant 0 : index
    %625 = vector.load %arg12[%624, %c0_168, %c0_169] : memref<8x8x32xf32, #tpu.memory_space<vmem>>, vector<1x8x32xf32>
    %626 = vector.shape_cast %625 : vector<1x8x32xf32> to vector<8x32xf32>
    %627 = vector.shape_cast %623 : vector<8x32xf32> to vector<1x8x32xf32>
    tpu.vector_store %arg12[%624, %c0_168, %c0_169], %627 {strides = array<i32>} : memref<8x8x32xf32, #tpu.memory_space<vmem>>, vector<1x8x32xf32>,
    %628 = arith.index_cast %c6_i32 : i32 to index
    %c0_170 = arith.constant 0 : index
    %c0_171 = arith.constant 0 : index
    %629 = vector.load %arg13[%628, %c0_170, %c0_171] : memref<8x8x16xf32, #tpu.memory_space<vmem>>, vector<1x8x16xf32>
    %630 = vector.shape_cast %629 : vector<1x8x16xf32> to vector<8x16xf32>
    %631 = vector.shape_cast %561 : vector<8x16xf32> to vector<1x8x16xf32>
    tpu.vector_store %arg13[%628, %c0_170, %c0_171], %631 {strides = array<i32>} : memref<8x8x16xf32, #tpu.memory_space<vmem>>, vector<1x8x16xf32>,
    %c7_i32 = arith.constant 7 : i32
    %cst_172 = arith.constant dense<0.000000e+00> : vector<8x32xf32>
    %632 = tpu.matmul %623, %6, %cst_172 {dimension_numbers = #tpu.dot_dimension_numbers<[1], [0], [0], [1], [0, 0, 1, 1], [], []>} : vector<8x32xf32>, vector<32x32xf32>, vector<8x32xf32> -> vector<8x32xf32>
    %633 = vector.shape_cast %632 : vector<8x32xf32> to vector<8x1x32xf32>
    "tpu.trace_start"() <{level = 10 : i32, message = "nqk,ntk->nqt"}> : () -> ()
    %cst_173 = arith.constant dense<0.000000e+00> : vector<8x1x8xf32>
    %634 = tpu.matmul %633, %3, %cst_173 {dimension_numbers = #tpu.dot_dimension_numbers<[2], [2], [1], [1], [0, 0, 0, 1, 1, 1], [0], [0]>} : vector<8x1x32xf32>, vector<8x8x32xf32>, vector<8x1x8xf32> -> vector<8x1x8xf32>
    "tpu.trace_stop"() : () -> ()
    %635 = vector.shape_cast %634 : vector<8x1x8xf32> to vector<8x8xf32>
    %636 = arith.addf %635, %5 : vector<8x8xf32>
    %cst_174 = arith.constant dense<0xFF800000> : vector<8xf32>
    %637 = vector.multi_reduction <maximumf>, %636, %cst_174 [1] : vector<8x8xf32> to vector<8xf32>
    %638 = vector.shape_cast %637 : vector<8xf32> to vector<8x1xf32>
    %639 = vector.broadcast %638 : vector<8x1xf32> to vector<8x8xf32>
    %640 = arith.subf %636, %639 : vector<8x8xf32>
    %641 = math.exp %640 : vector<8x8xf32>
    %cst_175 = arith.constant dense<0.000000e+00> : vector<8xf32>
    %642 = vector.multi_reduction <add>, %641, %cst_175 [1] : vector<8x8xf32> to vector<8xf32>
    %643 = vector.shape_cast %642 : vector<8xf32> to vector<8x1xf32>
    %644 = tpu.reciprocal %643 {approx = true} : vector<8x1xf32> -> vector<8x1xf32>
    %645 = vector.broadcast %644 : vector<8x1xf32> to vector<8x8xf32>
    %646 = arith.mulf %641, %645 : vector<8x8xf32>
    %647 = vector.shape_cast %646 : vector<8x8xf32> to vector<8x1x8xf32>
    "tpu.trace_start"() <{level = 10 : i32, message = "nqt,ntv->nqv"}> : () -> ()
    %cst_176 = arith.constant dense<0.000000e+00> : vector<8x1x16xf32>
    %648 = tpu.matmul %647, %4, %cst_176 {dimension_numbers = #tpu.dot_dimension_numbers<[2], [1], [1], [2], [0, 0, 0, 1, 1, 2], [0], [0]>} : vector<8x1x8xf32>, vector<8x8x16xf32>, vector<8x1x16xf32> -> vector<8x1x16xf32>
    "tpu.trace_stop"() : () -> ()
    %649 = vector.shape_cast %648 : vector<8x1x16xf32> to vector<8x16xf32>
    %650 = arith.index_cast %c7_i32 : i32 to index
    %c0_177 = arith.constant 0 : index
    %c0_178 = arith.constant 0 : index
    %651 = vector.load %arg2[%650, %c0_177, %c0_178] : memref<8x8x128xf32, #tpu.memory_space<vmem>>, vector<1x8x128xf32>
    %652 = vector.shape_cast %651 : vector<1x8x128xf32> to vector<8x128xf32>
    %cst_179 = arith.constant dense<0.000000e+00> : vector<8x128xf32>
    %653 = tpu.matmul %649, %7, %cst_179 {dimension_numbers = #tpu.dot_dimension_numbers<[1], [0], [0], [1], [0, 0, 1, 1], [], []>} : vector<8x16xf32>, vector<16x128xf32>, vector<8x128xf32> -> vector<8x128xf32>
    %654 = arith.addf %652, %653 : vector<8x128xf32>
    %cst_180 = arith.constant dense<0.000000e+00> : vector<8x128xf32>
    %655 = tpu.matmul %593, %8, %cst_180 {dimension_numbers = #tpu.dot_dimension_numbers<[1], [0], [0], [1], [0, 0, 1, 1], [], []>} : vector<8x32xf32>, vector<32x128xf32>, vector<8x128xf32> -> vector<8x128xf32>
    %656 = arith.addf %654, %655 : vector<8x128xf32>
    %657 = vector.extract_strided_slice %656 {offsets = [0, 0], sizes = [8, 32], strides = [1, 1]} : vector<8x128xf32> to vector<8x32xf32>
    %658 = arith.negf %657 : vector<8x32xf32>
    %659 = math.exp %658 : vector<8x32xf32>
    %cst_181 = arith.constant 1.000000e+00 : f32
    %660 = vector.broadcast %cst_181 : f32 to vector<8x32xf32>
    %661 = arith.addf %660, %659 : vector<8x32xf32>
    %662 = arith.divf %660, %661 : vector<8x32xf32>
    %663 = vector.extract_strided_slice %656 {offsets = [0, 32], sizes = [8, 32], strides = [1, 1]} : vector<8x128xf32> to vector<8x32xf32>
    %664 = arith.negf %663 : vector<8x32xf32>
    %665 = math.exp %664 : vector<8x32xf32>
    %cst_182 = arith.constant 1.000000e+00 : f32
    %666 = vector.broadcast %cst_182 : f32 to vector<8x32xf32>
    %667 = arith.addf %666, %665 : vector<8x32xf32>
    %668 = arith.divf %666, %667 : vector<8x32xf32>
    %669 = vector.extract_strided_slice %656 {offsets = [0, 64], sizes = [8, 32], strides = [1, 1]} : vector<8x128xf32> to vector<8x32xf32>
    %670 = math.tanh %669 : vector<8x32xf32>
    %671 = vector.extract_strided_slice %656 {offsets = [0, 96], sizes = [8, 32], strides = [1, 1]} : vector<8x128xf32> to vector<8x32xf32>
    %672 = arith.negf %671 : vector<8x32xf32>
    %673 = math.exp %672 : vector<8x32xf32>
    %cst_183 = arith.constant 1.000000e+00 : f32
    %674 = vector.broadcast %cst_183 : f32 to vector<8x32xf32>
    %675 = arith.addf %674, %673 : vector<8x32xf32>
    %676 = arith.divf %674, %675 : vector<8x32xf32>
    %677 = arith.mulf %668, %591 : vector<8x32xf32>
    %678 = arith.mulf %662, %670 : vector<8x32xf32>
    %679 = arith.addf %677, %678 : vector<8x32xf32>
    %680 = math.tanh %679 : vector<8x32xf32>
    %681 = arith.mulf %676, %680 : vector<8x32xf32>
    %cst_184 = arith.constant dense<0.000000e+00> : vector<8x128xf32>
    %682 = tpu.matmul %681, %9, %cst_184 {dimension_numbers = #tpu.dot_dimension_numbers<[1], [0], [0], [1], [0, 0, 1, 1], [], []>} : vector<8x32xf32>, vector<32x128xf32>, vector<8x128xf32> -> vector<8x128xf32>
    %cst_185 = arith.constant dense<0.000000e+00> : vector<8x128xf32>
    %683 = tpu.matmul %623, %10, %cst_185 {dimension_numbers = #tpu.dot_dimension_numbers<[1], [0], [0], [1], [0, 0, 1, 1], [], []>} : vector<8x32xf32>, vector<32x128xf32>, vector<8x128xf32> -> vector<8x128xf32>
    %684 = arith.addf %682, %683 : vector<8x128xf32>
    %685 = vector.broadcast %11 : vector<1x128xf32> to vector<8x128xf32>
    %686 = arith.addf %684, %685 : vector<8x128xf32>
    %687 = vector.extract_strided_slice %686 {offsets = [0, 0], sizes = [8, 32], strides = [1, 1]} : vector<8x128xf32> to vector<8x32xf32>
    %688 = arith.negf %687 : vector<8x32xf32>
    %689 = math.exp %688 : vector<8x32xf32>
    %cst_186 = arith.constant 1.000000e+00 : f32
    %690 = vector.broadcast %cst_186 : f32 to vector<8x32xf32>
    %691 = arith.addf %690, %689 : vector<8x32xf32>
    %692 = arith.divf %690, %691 : vector<8x32xf32>
    %693 = vector.extract_strided_slice %686 {offsets = [0, 32], sizes = [8, 32], strides = [1, 1]} : vector<8x128xf32> to vector<8x32xf32>
    %694 = arith.negf %693 : vector<8x32xf32>
    %695 = math.exp %694 : vector<8x32xf32>
    %cst_187 = arith.constant 1.000000e+00 : f32
    %696 = vector.broadcast %cst_187 : f32 to vector<8x32xf32>
    %697 = arith.addf %696, %695 : vector<8x32xf32>
    %698 = arith.divf %696, %697 : vector<8x32xf32>
    %699 = vector.extract_strided_slice %686 {offsets = [0, 64], sizes = [8, 32], strides = [1, 1]} : vector<8x128xf32> to vector<8x32xf32>
    %700 = math.tanh %699 : vector<8x32xf32>
    %701 = vector.extract_strided_slice %686 {offsets = [0, 96], sizes = [8, 32], strides = [1, 1]} : vector<8x128xf32> to vector<8x32xf32>
    %702 = arith.negf %701 : vector<8x32xf32>
    %703 = math.exp %702 : vector<8x32xf32>
    %cst_188 = arith.constant 1.000000e+00 : f32
    %704 = vector.broadcast %cst_188 : f32 to vector<8x32xf32>
    %705 = arith.addf %704, %703 : vector<8x32xf32>
    %706 = arith.divf %704, %705 : vector<8x32xf32>
    %707 = arith.mulf %698, %621 : vector<8x32xf32>
    %708 = arith.mulf %692, %700 : vector<8x32xf32>
    %709 = arith.addf %707, %708 : vector<8x32xf32>
    %710 = math.tanh %709 : vector<8x32xf32>
    %711 = arith.mulf %706, %710 : vector<8x32xf32>
    %712 = arith.index_cast %c7_i32 : i32 to index
    %c0_189 = arith.constant 0 : index
    %c0_190 = arith.constant 0 : index
    %713 = vector.load %arg12[%712, %c0_189, %c0_190] : memref<8x8x32xf32, #tpu.memory_space<vmem>>, vector<1x8x32xf32>
    %714 = vector.shape_cast %713 : vector<1x8x32xf32> to vector<8x32xf32>
    %715 = vector.shape_cast %711 : vector<8x32xf32> to vector<1x8x32xf32>
    tpu.vector_store %arg12[%712, %c0_189, %c0_190], %715 {strides = array<i32>} : memref<8x8x32xf32, #tpu.memory_space<vmem>>, vector<1x8x32xf32>,
    %716 = arith.index_cast %c7_i32 : i32 to index
    %c0_191 = arith.constant 0 : index
    %c0_192 = arith.constant 0 : index
    %717 = vector.load %arg13[%716, %c0_191, %c0_192] : memref<8x8x16xf32, #tpu.memory_space<vmem>>, vector<1x8x16xf32>
    %718 = vector.shape_cast %717 : vector<1x8x16xf32> to vector<8x16xf32>
    %719 = vector.shape_cast %649 : vector<8x16xf32> to vector<1x8x16xf32>
    tpu.vector_store %arg13[%716, %c0_191, %c0_192], %719 {strides = array<i32>} : memref<8x8x16xf32, #tpu.memory_space<vmem>>, vector<1x8x16xf32>,
    %c8_i32 = arith.constant 8 : i32
    %c0_193 = arith.constant 0 : index
    %c0_194 = arith.constant 0 : index
    %720 = vector.load %arg14[%c0_193, %c0_194] : memref<8x128xf32, #tpu.memory_space<vmem>>, vector<8x32xf32>
    tpu.vector_store %arg14[%c0_193, %c0_194], %681 {strides = array<i32>} : memref<8x128xf32, #tpu.memory_space<vmem>>, vector<8x32xf32>,
    %c0_195 = arith.constant 0 : index
    %c32_196 = arith.constant 32 : index
    %721 = vector.load %arg14[%c0_195, %c32_196] : memref<8x128xf32, #tpu.memory_space<vmem>>, vector<8x32xf32>
    tpu.vector_store %arg14[%c0_195, %c32_196], %679 {strides = array<i32>} : memref<8x128xf32, #tpu.memory_space<vmem>>, vector<8x32xf32>,
    %c0_197 = arith.constant 0 : index
    %c64_198 = arith.constant 64 : index
    %722 = vector.load %arg14[%c0_197, %c64_198] : memref<8x128xf32, #tpu.memory_space<vmem>>, vector<8x32xf32>
    tpu.vector_store %arg14[%c0_197, %c64_198], %711 {strides = array<i32>} : memref<8x128xf32, #tpu.memory_space<vmem>>, vector<8x32xf32>,
    %c0_199 = arith.constant 0 : index
    %c96_200 = arith.constant 96 : index
    %723 = vector.load %arg14[%c0_199, %c96_200] : memref<8x128xf32, #tpu.memory_space<vmem>>, vector<8x32xf32>
    tpu.vector_store %arg14[%c0_199, %c96_200], %709 {strides = array<i32>} : memref<8x128xf32, #tpu.memory_space<vmem>>, vector<8x32xf32>,
    return
  }
  func.func @transform_0(%arg0: i32, %arg1: i32) -> (i32, i32, i32) {
    %c0_i32 = arith.constant 0 : i32
    %c0_i32_0 = arith.constant 0 : i32
    return %arg1, %arg0, %c0_i32 : i32, i32, i32
  }
  func.func @transform_1(%arg0: i32, %arg1: i32) -> (i32, i32, i32) {
    %c0_i32 = arith.constant 0 : i32
    %c0_i32_0 = arith.constant 0 : i32
    %c0_i32_1 = arith.constant 0 : i32
    return %arg0, %c0_i32, %c0_i32_0 : i32, i32, i32
  }
  func.func @transform_2(%arg0: i32, %arg1: i32) -> (i32, i32, i32) {
    %c0_i32 = arith.constant 0 : i32
    %c0_i32_0 = arith.constant 0 : i32
    %c0_i32_1 = arith.constant 0 : i32
    return %arg0, %c0_i32, %c0_i32_0 : i32, i32, i32
  }
  func.func @transform_3(%arg0: i32, %arg1: i32) -> (i32, i32) {
    %c0_i32 = arith.constant 0 : i32
    %c0_i32_0 = arith.constant 0 : i32
    return %arg0, %c0_i32 : i32, i32
  }
  func.func @transform_4(%arg0: i32, %arg1: i32) -> (i32, i32) {
    %c0_i32 = arith.constant 0 : i32
    %c0_i32_0 = arith.constant 0 : i32
    %c0_i32_1 = arith.constant 0 : i32
    return %c0_i32, %c0_i32_0 : i32, i32
  }
  func.func @transform_5(%arg0: i32, %arg1: i32) -> (i32, i32) {
    %c0_i32 = arith.constant 0 : i32
    %c0_i32_0 = arith.constant 0 : i32
    %c0_i32_1 = arith.constant 0 : i32
    return %c0_i32, %c0_i32_0 : i32, i32
  }
  func.func @transform_6(%arg0: i32, %arg1: i32) -> (i32, i32) {
    %c0_i32 = arith.constant 0 : i32
    %c0_i32_0 = arith.constant 0 : i32
    %c0_i32_1 = arith.constant 0 : i32
    return %c0_i32, %c0_i32_0 : i32, i32
  }
  func.func @transform_7(%arg0: i32, %arg1: i32) -> (i32, i32) {
    %c0_i32 = arith.constant 0 : i32
    %c0_i32_0 = arith.constant 0 : i32
    %c0_i32_1 = arith.constant 0 : i32
    return %c0_i32, %c0_i32_0 : i32, i32
  }
  func.func @transform_8(%arg0: i32, %arg1: i32) -> (i32, i32) {
    %c0_i32 = arith.constant 0 : i32
    %c0_i32_0 = arith.constant 0 : i32
    %c0_i32_1 = arith.constant 0 : i32
    return %c0_i32, %c0_i32_0 : i32, i32
  }
  func.func @transform_9(%arg0: i32, %arg1: i32) -> (i32, i32) {
    %c0_i32 = arith.constant 0 : i32
    %c0_i32_0 = arith.constant 0 : i32
    %c0_i32_1 = arith.constant 0 : i32
    return %c0_i32, %c0_i32_0 : i32, i32
  }
  func.func @transform_10(%arg0: i32, %arg1: i32) -> (i32, i32, i32) {
    %c0_i32 = arith.constant 0 : i32
    %c0_i32_0 = arith.constant 0 : i32
    return %arg1, %arg0, %c0_i32 : i32, i32, i32
  }
  func.func @transform_11(%arg0: i32, %arg1: i32) -> (i32, i32, i32) {
    %c0_i32 = arith.constant 0 : i32
    %c0_i32_0 = arith.constant 0 : i32
    return %arg1, %arg0, %c0_i32 : i32, i32, i32
  }
}

</mosaic_0001>

<llo_original>
// kernel: tpu_custom_call.1
$region0: #{tpu_custom_call.1}
  #allocation0 [shape = 'u32[]', space=smem, size = 0x4, offset = 0x4, fixed_abs, tag = 'smem constant byte address 0x4 - core index']
  #allocation1 [shape = 'u32[72,128]{1,0:T(1,128)}', space=vmem, size = 0x9000, scoped, tag = 'internal scratch']
  #allocation2 [shape = 'f32[8,128]{1,0:T(8,128)}', space=vmem, size = 0x1000, scoped, tag = 'scratch operand']
  %s0 = inlined_call_operand.hbm [shape: f32[8,8,128], index: 0, kind: input, shape index: {}]
  %s1 = inlined_call_operand.hbm [shape: f32[8,8,32], index: 1, kind: input, shape index: {}]
  %s2 = inlined_call_operand.hbm [shape: f32[8,8,16], index: 2, kind: input, shape index: {}]
  %s3 = inlined_call_operand.hbm [shape: f32[8,8], index: 3, kind: input, shape index: {}]
  %s4 = inlined_call_operand.hbm [shape: f32[32,32], index: 4, kind: input, shape index: {}]
  %s5 = inlined_call_operand.hbm [shape: f32[16,128], index: 5, kind: input, shape index: {}]
  %s6 = inlined_call_operand.hbm [shape: f32[32,128], index: 6, kind: input, shape index: {}]
  %s7 = inlined_call_operand.hbm [shape: f32[32,128], index: 7, kind: input, shape index: {}]
  %s8 = inlined_call_operand.hbm [shape: f32[32,128], index: 8, kind: input, shape index: {}]
  %s9 = inlined_call_operand.vmem [shape: f32[1,128], index: 9, kind: input, shape index: {}]
  %s10 = inlined_call_operand.hbm [shape: f32[8,8,32], index: 10, kind: output, shape index: {0}]
  %s11 = inlined_call_operand.hbm [shape: f32[8,8,16], index: 11, kind: output, shape index: {1}]
  %12 = xla_tuple %s10, %s11
  %s13 = sld [smem:[#allocation0]]
  $region98: #{tpu_custom_call.1} parent=0
    _
  %s15 = ssub.s32 1, %s13
  %s16 = scalar_select 0, %s15, %s13
  $region1: #{tpu_custom_call.1} parent=0
    #allocation3 [shape = 'u8[32768]{0}', space=vmem, size = 0x8000, scoped, tag = 'input window, operand 0, single buffered']
    #allocation4 [shape = 's32[1]{0}', space=sflag, size = 0x4, scoped, tag = 'scoped memory for tpu_custom_call.1']
    #allocation5 [shape = 's32[1]{0}', space=sflag, size = 0x4, scoped, tag = 'scoped memory for tpu_custom_call.1']
    #allocation6 [shape = 'u8[32768]{0}', space=vmem, size = 0x8000, scoped, tag = 'input window, operand 1, single buffered']
    #allocation7 [shape = 's32[1]{0}', space=sflag, size = 0x4, scoped, tag = 'scoped memory for tpu_custom_call.1']
    #allocation8 [shape = 'u8[32768]{0}', space=vmem, size = 0x8000, scoped, tag = 'input window, operand 2, single buffered']
    #allocation9 [shape = 'u8[4096]{0}', space=vmem, size = 0x1000, scoped, tag = 'input window, operand 3, single buffered']
    #allocation10 [shape = 's32[1]{0}', space=sflag, size = 0x4, scoped, tag = 'scoped memory for tpu_custom_call.1']
    #allocation11 [shape = 'u8[16384]{0}', space=vmem, size = 0x4000, scoped, tag = 'input window, operand 4, single buffered']
    #allocation12 [shape = 'u8[8192]{0}', space=vmem, size = 0x2000, scoped, tag = 'input window, operand 5, single buffered']
    #allocation13 [shape = 's32[1]{0}', space=sflag, size = 0x4, scoped, tag = 'scoped memory for tpu_custom_call.1']
    #allocation14 [shape = 'u8[16384]{0}', space=vmem, size = 0x4000, scoped, tag = 'input window, operand 6, single buffered']
    #allocation15 [shape = 'u8[16384]{0}', space=vmem, size = 0x4000, scoped, tag = 'input window, operand 7, single buffered']
    #allocation16 [shape = 's32[1]{0}', space=sflag, size = 0x4, scoped, tag = 'scoped memory for tpu_custom_call.1']
    #allocation17 [shape = 'u8[16384]{0}', space=vmem, size = 0x4000, scoped, tag = 'input window, operand 8, single buffered']
    #allocation18 [shape = 'u8[32768]{0}', space=vmem, size = 0x8000, scoped, tag = 'output window, operand 0, single buffered']
    #allocation19 [shape = 'u8[32768]{0}', space=vmem, size = 0x8000, scoped, tag = 'output window, operand 1, single buffered']
    #allocation20 [shape = 's32[1]{0}', space=sflag, size = 0x4, scoped, tag = 'scoped memory for tpu_custom_call.1']
    %17 = vsyncpa [#allocation4], 0
    %18 = vsyncpa [#allocation7], 0
    %19 = vsyncpa [#allocation10], 0
    %20 = vsyncpa [#allocation13], 0
    %21 = vsyncpa [#allocation16], 0
    %22 = vsyncpa [#allocation5], 0
    %23 = vsyncpa [#allocation20], 0
    // Predicated region
    $region2: #{tpu_custom_call.1} parent=1 // pred_check
      _
    $region3: #{tpu_custom_call.1} parent=1 // pred_check_branch
      %25 = sbr.rel (0) target = $region5
    $region4: #{tpu_custom_call.1} parent=1 // pred_region
      %27 = vsyncadd [#allocation4], 0
      %s28 = sshll.u32 %s0, 4
      %s29 = int_to_ptr.hbm [resolvable:$true] %s28
      %s30 = sshll.u32 [#allocation3], 4
      %s31 = int_to_ptr.vmem [resolvable:$true] %s30
      %36 = dma.hbm_to_vmem [thread:$0]  %s29, 1024, %s31, [#allocation4], 128, 128, 8
    $region5: #{tpu_custom_call.1} parent=1 // pred_fallthru
      _
    // Predicated region
    $region6: #{tpu_custom_call.1} parent=1 // pred_check
      _
    $region7: #{tpu_custom_call.1} parent=1 // pred_check_branch
      %38 = sbr.rel (0) target = $region9
    $region8: #{tpu_custom_call.1} parent=1 // pred_region
      %40 = vsyncadd [#allocation7], 0
      %s41 = sshll.u32 %s1, 4
      %s42 = int_to_ptr.hbm [resolvable:$true] %s41
      %s43 = sshll.u32 [#allocation6], 4
      %s44 = int_to_ptr.vmem [resolvable:$true] %s43
      %49 = dma.hbm_to_vmem [thread:$0]  %s42, 1024, %s44, [#allocation7], 128, 128, 8
    $region9: #{tpu_custom_call.1} parent=1 // pred_fallthru
      _
    // Predicated region
    $region10: #{tpu_custom_call.1} parent=1 // pred_check
      _
    $region11: #{tpu_custom_call.1} parent=1 // pred_check_branch
      %51 = sbr.rel (0) target = $region13
    $region12: #{tpu_custom_call.1} parent=1 // pred_region
      %53 = vsyncadd [#allocation7], 0
      %s54 = sshll.u32 %s2, 4
      %s55 = int_to_ptr.hbm [resolvable:$true] %s54
      %s56 = sshll.u32 [#allocation8], 4
      %s57 = int_to_ptr.vmem [resolvable:$true] %s56
      %62 = dma.hbm_to_vmem [thread:$0]  %s55, 1024, %s57, [#allocation7], 128, 128, 8
    $region13: #{tpu_custom_call.1} parent=1 // pred_fallthru
      _
    // Predicated region
    $region14: #{tpu_custom_call.1} parent=1 // pred_check
      _
    $region15: #{tpu_custom_call.1} parent=1 // pred_check_branch
      %64 = sbr.rel (0) target = $region17
    $region16: #{tpu_custom_call.1} parent=1 // pred_region
      %66 = vsyncadd [#allocation10], 0
      %s68 = sshll.u32 %s3, 4
      %s69 = int_to_ptr.hbm [resolvable:$true] %s68
      %s70 = sshll.u32 [#allocation9], 4
      %s71 = int_to_ptr.vmem [resolvable:$true] %s70
      %73 = dma.hbm_to_vmem [thread:$0]  %s69, 128, %s71, [#allocation10]
    $region17: #{tpu_custom_call.1} parent=1 // pred_fallthru
      _
    // Predicated region
    $region18: #{tpu_custom_call.1} parent=1 // pred_check
      _
    $region19: #{tpu_custom_call.1} parent=1 // pred_check_branch
      %75 = sbr.rel (0) target = $region21
    $region20: #{tpu_custom_call.1} parent=1 // pred_region
      %77 = vsyncadd [#allocation10], 0
      %s78 = sshll.u32 %s4, 4
      %s79 = int_to_ptr.hbm [resolvable:$true] %s78
      %s80 = sshll.u32 [#allocation11], 4
      %s81 = int_to_ptr.vmem [resolvable:$true] %s80
      %86 = dma.hbm_to_vmem [thread:$0]  %s79, 512, %s81, [#allocation10], 128, 128, 8
    $region21: #{tpu_custom_call.1} parent=1 // pred_fallthru
      _
    // Predicated region
    $region22: #{tpu_custom_call.1} parent=1 // pred_check
      _
    $region23: #{tpu_custom_call.1} parent=1 // pred_check_branch
      %88 = sbr.rel (0) target = $region25
    $region24: #{tpu_custom_call.1} parent=1 // pred_region
      %90 = vsyncadd [#allocation13], 0
      %s91 = sshll.u32 %s5, 4
      %s92 = int_to_ptr.hbm [resolvable:$true] %s91
      %s93 = sshll.u32 [#allocation12], 4
      %s94 = int_to_ptr.vmem [resolvable:$true] %s93
      %99 = dma.hbm_to_vmem [thread:$0]  %s92, 256, %s94, [#allocation13], 128, 128, 8
    $region25: #{tpu_custom_call.1} parent=1 // pred_fallthru
      _
    // Predicated region
    $region26: #{tpu_custom_call.1} parent=1 // pred_check
      _
    $region27: #{tpu_custom_call.1} parent=1 // pred_check_branch
      %101 = sbr.rel (0) target = $region29
    $region28: #{tpu_custom_call.1} parent=1 // pred_region
      %103 = vsyncadd [#allocation13], 0
      %s104 = sshll.u32 %s6, 4
      %s105 = int_to_ptr.hbm [resolvable:$true] %s104
      %s106 = sshll.u32 [#allocation14], 4
      %s107 = int_to_ptr.vmem [resolvable:$true] %s106
      %112 = dma.hbm_to_vmem [thread:$0]  %s105, 512, %s107, [#allocation13], 128, 128, 8
    $region29: #{tpu_custom_call.1} parent=1 // pred_fallthru
      _
    // Predicated region
    $region30: #{tpu_custom_call.1} parent=1 // pred_check
      _
    $region31: #{tpu_custom_call.1} parent=1 // pred_check_branch
      %114 = sbr.rel (0) target = $region33
    $region32: #{tpu_custom_call.1} parent=1 // pred_region
      %116 = vsyncadd [#allocation16], 0
      %s117 = sshll.u32 %s7, 4
      %s118 = int_to_ptr.hbm [resolvable:$true] %s117
      %s119 = sshll.u32 [#allocation15], 4
      %s120 = int_to_ptr.vmem [resolvable:$true] %s119
      %125 = dma.hbm_to_vmem [thread:$0]  %s118, 512, %s120, [#allocation16], 128, 128, 8
    $region33: #{tpu_custom_call.1} parent=1 // pred_fallthru
      _
    // Predicated region
    $region34: #{tpu_custom_call.1} parent=1 // pred_check
      _
    $region35: #{tpu_custom_call.1} parent=1 // pred_check_branch
      %127 = sbr.rel (0) target = $region37
    $region36: #{tpu_custom_call.1} parent=1 // pred_region
      %129 = vsyncadd [#allocation16], 0
      %s130 = sshll.u32 %s8, 4
      %s131 = int_to_ptr.hbm [resolvable:$true] %s130
      %s132 = sshll.u32 [#allocation17], 4
      %s133 = int_to_ptr.vmem [resolvable:$true] %s132
      %138 = dma.hbm_to_vmem [thread:$0]  %s131, 512, %s133, [#allocation16], 128, 128, 8
    $region37: #{tpu_custom_call.1} parent=1 // pred_fallthru
      _
    // Predicated region
    $region38: #{tpu_custom_call.1} parent=1 // pred_check
      _
    $region39: #{tpu_custom_call.1} parent=1 // pred_check_branch
      %140 = sbr.rel (0) target = $region41
    $region40: #{tpu_custom_call.1} parent=1 // pred_region
      _
    $region41: #{tpu_custom_call.1} parent=1 // pred_fallthru
      _
    // Predicated region
    $region42: #{tpu_custom_call.1} parent=1 // pred_check
      _
    $region43: #{tpu_custom_call.1} parent=1 // pred_check_branch
      %142 = sbr.rel (0) target = $region45
    $region44: #{tpu_custom_call.1} parent=1 // pred_region
      %144 = dma.done [#allocation4], 1024
    $region45: #{tpu_custom_call.1} parent=1 // pred_fallthru
      _
    // Predicated region
    $region46: #{tpu_custom_call.1} parent=1 // pred_check
      _
    $region47: #{tpu_custom_call.1} parent=1 // pred_check_branch
      %146 = sbr.rel (0) target = $region49
    $region48: #{tpu_custom_call.1} parent=1 // pred_region
      %148 = dma.done [#allocation7], 1024
    $region49: #{tpu_custom_call.1} parent=1 // pred_fallthru
      _
    // Predicated region
    $region50: #{tpu_custom_call.1} parent=1 // pred_check
      _
    $region51: #{tpu_custom_call.1} parent=1 // pred_check_branch
      %150 = sbr.rel (0) target = $region53
    $region52: #{tpu_custom_call.1} parent=1 // pred_region
      %152 = dma.done [#allocation7], 1024
    $region53: #{tpu_custom_call.1} parent=1 // pred_fallthru
      _
    // Predicated region
    $region54: #{tpu_custom_call.1} parent=1 // pred_check
      _
    $region55: #{tpu_custom_call.1} parent=1 // pred_check_branch
      %154 = sbr.rel (0) target = $region57
    $region56: #{tpu_custom_call.1} parent=1 // pred_region
      %156 = dma.done [#allocation10], 128
    $region57: #{tpu_custom_call.1} parent=1 // pred_fallthru
      _
    // Predicated region
    $region58: #{tpu_custom_call.1} parent=1 // pred_check
      _
    $region59: #{tpu_custom_call.1} parent=1 // pred_check_branch
      %158 = sbr.rel (0) target = $region61
    $region60: #{tpu_custom_call.1} parent=1 // pred_region
      %160 = dma.done [#allocation10], 512
    $region61: #{tpu_custom_call.1} parent=1 // pred_fallthru
      _
    // Predicated region
    $region62: #{tpu_custom_call.1} parent=1 // pred_check
      _
    $region63: #{tpu_custom_call.1} parent=1 // pred_check_branch
      %162 = sbr.rel (0) target = $region65
    $region64: #{tpu_custom_call.1} parent=1 // pred_region
      %164 = dma.done [#allocation13], 256
    $region65: #{tpu_custom_call.1} parent=1 // pred_fallthru
      _
    // Predicated region
    $region66: #{tpu_custom_call.1} parent=1 // pred_check
      _
    $region67: #{tpu_custom_call.1} parent=1 // pred_check_branch
      %166 = sbr.rel (0) target = $region69
    $region68: #{tpu_custom_call.1} parent=1 // pred_region
      %168 = dma.done [#allocation13], 512
    $region69: #{tpu_custom_call.1} parent=1 // pred_fallthru
      _
    // Predicated region
    $region70: #{tpu_custom_call.1} parent=1 // pred_check
      _
    $region71: #{tpu_custom_call.1} parent=1 // pred_check_branch
      %170 = sbr.rel (0) target = $region73
    $region72: #{tpu_custom_call.1} parent=1 // pred_region
      %172 = dma.done [#allocation16], 512
    $region73: #{tpu_custom_call.1} parent=1 // pred_fallthru
      _
    // Predicated region
    $region74: #{tpu_custom_call.1} parent=1 // pred_check
      _
    $region75: #{tpu_custom_call.1} parent=1 // pred_check_branch
      %174 = sbr.rel (0) target = $region77
    $region76: #{tpu_custom_call.1} parent=1 // pred_region
      %176 = dma.done [#allocation16], 512
    $region77: #{tpu_custom_call.1} parent=1 // pred_fallthru
      _
    %p177 = scmp.eq.s32.totalorder 0, 0
    // Predicated region
    $region78: #{tpu_custom_call.1} parent=1 // pred_check
      %p178 = pneg %p177
    $region79: #{tpu_custom_call.1} parent=1 // pred_check_branch
      %180 = sbr.rel (%p178) target = $region81
    $region80: #{tpu_custom_call.1} parent=1 // pred_region
      %181 = vst [vmem:[#allocation2] sm:$0xff] 0.0
    $region81: #{tpu_custom_call.1} parent=1 // pred_fallthru
      _
    %v182 = vld [vmem:[#allocation6] sm:$0xff]
    %v183 = vld [vmem:[#allocation6 + $0x8] sm:$0xff]
    %v184 = vld [vmem:[#allocation6 + $0x10] sm:$0xff]
    %v185 = vld [vmem:[#allocation6 + $0x18] sm:$0xff]
    %v186 = vld [vmem:[#allocation6 + $0x20] sm:$0xff]
    %v187 = vld [vmem:[#allocation6 + $0x28] sm:$0xff]
    %v188 = vld [vmem:[#allocation6 + $0x30] sm:$0xff]
    %v189 = vld [vmem:[#allocation6 + $0x38] sm:$0xff]
    %v190 = vld [vmem:[#allocation8] sm:$0xff]
    %v191 = vld [vmem:[#allocation8 + $0x8] sm:$0xff]
    %v192 = vld [vmem:[#allocation8 + $0x10] sm:$0xff]
    %v193 = vld [vmem:[#allocation8 + $0x18] sm:$0xff]
    %v194 = vld [vmem:[#allocation8 + $0x20] sm:$0xff]
    %v195 = vld [vmem:[#allocation8 + $0x28] sm:$0xff]
    %v196 = vld [vmem:[#allocation8 + $0x30] sm:$0xff]
    %v197 = vld [vmem:[#allocation8 + $0x38] sm:$0xff]
    %v198 = vld [vmem:[#allocation9] sm:$0xff]
    %v199 = vld [vmem:[#allocation11] sm:$0xff]
    %v200 = vld [vmem:[#allocation11 + $0x8] sm:$0xff]
    %v201 = vld [vmem:[#allocation11 + $0x10] sm:$0xff]
    %v202 = vld [vmem:[#allocation11 + $0x18] sm:$0xff]
    %v203 = vld [vmem:[#allocation12] sm:$0xff]
    %v204 = vld [vmem:[#allocation12 + $0x8] sm:$0xff]
    %v205 = vld [vmem:[#allocation14] sm:$0xff]
    %v206 = vld [vmem:[#allocation14 + $0x8] sm:$0xff]
    %v207 = vld [vmem:[#allocation14 + $0x10] sm:$0xff]
    %v208 = vld [vmem:[#allocation14 + $0x18] sm:$0xff]
    %v209 = vld [vmem:[#allocation15] sm:$0xff]
    %v210 = vld [vmem:[#allocation15 + $0x8] sm:$0xff]
    %v211 = vld [vmem:[#allocation15 + $0x10] sm:$0xff]
    %v212 = vld [vmem:[#allocation15 + $0x18] sm:$0xff]
    %v213 = vld [vmem:[#allocation17] sm:$0xff]
    %v214 = vld [vmem:[#allocation17 + $0x8] sm:$0xff]
    %v215 = vld [vmem:[#allocation17 + $0x10] sm:$0xff]
    %v216 = vld [vmem:[#allocation17 + $0x18] sm:$0xff]
    %v217 = vld [vmem:[%s9] sm:$0x1]
    %v218 = vld [vmem:[#allocation2] sm:$0xff]
    %220 = vrot.lane.b32.xlu0 %v218, 64
    %v221 = vpop.permute.xlu0 %220
    %vm222 = vcmask 261120
    %v223 = vsel %vm222, %v221, 0
    %225 = vmatpush.msra.mxu0 0.0
    %226 = vmatpush.msra.mxu0 0.0
    %227 = vmatpush.msra.mxu0 0.0
    %228 = vmatpush.msra.mxu0 0.0
    %229 = vmatpush.msra.mxu0 0.0
    %230 = vmatpush.msra.mxu0 0.0
    %231 = vmatpush.msra.mxu0 0.0
    %232 = vmatpush.msra.mxu0 0.0
    %233 = vmatpush.msra.mxu0 0.0
    %234 = vmatpush.msra.mxu0 0.0
    %235 = vmatpush.msra.mxu0 0.0
    %236 = vmatpush.msra.mxu0 0.0
    %237 = vmatpush.msra.mxu0 %v202
    %238 = vmatpush.msra.mxu0 %v201
    %239 = vmatpush.msra.mxu0 %v200
    %240 = vmatpush.msra.mxu0 %v199
    %241 = vmatmul.f32.gmra.mxu0 %v223
    %v242 = vpop.f32.mrf.mxu0
    %v243 = vadd.f32 0.0, %v242
    %244 = vdwg.mxu0
    %v246 = vrot.slane %v243, 1
    %v247 = vrot.slane %v243, 2
    %v248 = vrot.slane %v243, 3
    %v249 = vrot.slane %v243, 4
    %v250 = vrot.slane %v243, 5
    %v251 = vrot.slane %v243, 6
    %v252 = vrot.slane %v243, 7
    %v253 = vsel %vm222, %v243, 0
    %v256 = vsel %vm222, %v182, 0
    %258 = vmatpush.xpose.msra.mxu0 0.0
    %259 = vmatpush.xpose.msra.mxu0 0.0
    %260 = vmatpush.xpose.msra.mxu0 0.0
    %261 = vmatpush.xpose.msra.mxu0 0.0
    %262 = vmatpush.xpose.msra.mxu0 0.0
    %263 = vmatpush.xpose.msra.mxu0 0.0
    %264 = vmatpush.xpose.msra.mxu0 0.0
    %265 = vmatpush.xpose.msra.mxu0 0.0
    %266 = vmatpush.xpose.msra.mxu0 0.0
    %267 = vmatpush.xpose.msra.mxu0 0.0
    %268 = vmatpush.xpose.msra.mxu0 0.0
    %269 = vmatpush.xpose.msra.mxu0 0.0
    %270 = vmatpush.xpose.msra.mxu0 0.0
    %271 = vmatpush.xpose.msra.mxu0 0.0
    %272 = vmatpush.xpose.msra.mxu0 0.0
    %273 = vmatpush.xpose.msra.mxu0 %v256
    %274 = vmatmul.f32.gmra.mxu0 %v253
    %v275 = vpop.f32.mrf.mxu0
    %v276 = vadd.f32 0.0, %v275
    %277 = vdwg.mxu0
    %v278 = vsel %vm222, %v246, 0
    %v281 = vsel %vm222, %v183, 0
    %283 = vmatpush.xpose.msra.mxu0 0.0
    %284 = vmatpush.xpose.msra.mxu0 0.0
    %285 = vmatpush.xpose.msra.mxu0 0.0
    %286 = vmatpush.xpose.msra.mxu0 0.0
    %287 = vmatpush.xpose.msra.mxu0 0.0
    %288 = vmatpush.xpose.msra.mxu0 0.0
    %289 = vmatpush.xpose.msra.mxu0 0.0
    %290 = vmatpush.xpose.msra.mxu0 0.0
    %291 = vmatpush.xpose.msra.mxu0 0.0
    %292 = vmatpush.xpose.msra.mxu0 0.0
    %293 = vmatpush.xpose.msra.mxu0 0.0
    %294 = vmatpush.xpose.msra.mxu0 0.0
    %295 = vmatpush.xpose.msra.mxu0 0.0
    %296 = vmatpush.xpose.msra.mxu0 0.0
    %297 = vmatpush.xpose.msra.mxu0 0.0
    %298 = vmatpush.xpose.msra.mxu0 %v281
    %299 = vmatmul.f32.gmra.mxu0 %v278
    %v300 = vpop.f32.mrf.mxu0
    %v301 = vadd.f32 0.0, %v300
    %302 = vdwg.mxu0
    %v303 = vsel %vm222, %v247, 0
    %v306 = vsel %vm222, %v184, 0
    %308 = vmatpush.xpose.msra.mxu0 0.0
    %309 = vmatpush.xpose.msra.mxu0 0.0
    %310 = vmatpush.xpose.msra.mxu0 0.0
    %311 = vmatpush.xpose.msra.mxu0 0.0
    %312 = vmatpush.xpose.msra.mxu0 0.0
    %313 = vmatpush.xpose.msra.mxu0 0.0
    %314 = vmatpush.xpose.msra.mxu0 0.0
    %315 = vmatpush.xpose.msra.mxu0 0.0
    %316 = vmatpush.xpose.msra.mxu0 0.0
    %317 = vmatpush.xpose.msra.mxu0 0.0
    %318 = vmatpush.xpose.msra.mxu0 0.0
    %319 = vmatpush.xpose.msra.mxu0 0.0
    %320 = vmatpush.xpose.msra.mxu0 0.0
    %321 = vmatpush.xpose.msra.mxu0 0.0
    %322 = vmatpush.xpose.msra.mxu0 0.0
    %323 = vmatpush.xpose.msra.mxu0 %v306
    %324 = vmatmul.f32.gmra.mxu0 %v303
    %v325 = vpop.f32.mrf.mxu0
    %v326 = vadd.f32 0.0, %v325
    %327 = vdwg.mxu0
    %v328 = vsel %vm222, %v248, 0
    %v331 = vsel %vm222, %v185, 0
    %333 = vmatpush.xpose.msra.mxu0 0.0
    %334 = vmatpush.xpose.msra.mxu0 0.0
    %335 = vmatpush.xpose.msra.mxu0 0.0
    %336 = vmatpush.xpose.msra.mxu0 0.0
    %337 = vmatpush.xpose.msra.mxu0 0.0
    %338 = vmatpush.xpose.msra.mxu0 0.0
    %339 = vmatpush.xpose.msra.mxu0 0.0
    %340 = vmatpush.xpose.msra.mxu0 0.0
    %341 = vmatpush.xpose.msra.mxu0 0.0
    %342 = vmatpush.xpose.msra.mxu0 0.0
    %343 = vmatpush.xpose.msra.mxu0 0.0
    %344 = vmatpush.xpose.msra.mxu0 0.0
    %345 = vmatpush.xpose.msra.mxu0 0.0
    %346 = vmatpush.xpose.msra.mxu0 0.0
    %347 = vmatpush.xpose.msra.mxu0 0.0
    %348 = vmatpush.xpose.msra.mxu0 %v331
    %349 = vmatmul.f32.gmra.mxu0 %v328
    %v350 = vpop.f32.mrf.mxu0
    %v351 = vadd.f32 0.0, %v350
    %352 = vdwg.mxu0
    %v353 = vsel %vm222, %v249, 0
    %v356 = vsel %vm222, %v186, 0
    %358 = vmatpush.xpose.msra.mxu0 0.0
    %359 = vmatpush.xpose.msra.mxu0 0.0
    %360 = vmatpush.xpose.msra.mxu0 0.0
    %361 = vmatpush.xpose.msra.mxu0 0.0
    %362 = vmatpush.xpose.msra.mxu0 0.0
    %363 = vmatpush.xpose.msra.mxu0 0.0
    %364 = vmatpush.xpose.msra.mxu0 0.0
    %365 = vmatpush.xpose.msra.mxu0 0.0
    %366 = vmatpush.xpose.msra.mxu0 0.0
    %367 = vmatpush.xpose.msra.mxu0 0.0
    %368 = vmatpush.xpose.msra.mxu0 0.0
    %369 = vmatpush.xpose.msra.mxu0 0.0
    %370 = vmatpush.xpose.msra.mxu0 0.0
    %371 = vmatpush.xpose.msra.mxu0 0.0
    %372 = vmatpush.xpose.msra.mxu0 0.0
    %373 = vmatpush.xpose.msra.mxu0 %v356
    %374 = vmatmul.f32.gmra.mxu0 %v353
    %v375 = vpop.f32.mrf.mxu0
    %v376 = vadd.f32 0.0, %v375
    %377 = vdwg.mxu0
    %v378 = vsel %vm222, %v250, 0
    %v381 = vsel %vm222, %v187, 0
    %383 = vmatpush.xpose.msra.mxu0 0.0
    %384 = vmatpush.xpose.msra.mxu0 0.0
    %385 = vmatpush.xpose.msra.mxu0 0.0
    %386 = vmatpush.xpose.msra.mxu0 0.0
    %387 = vmatpush.xpose.msra.mxu0 0.0
    %388 = vmatpush.xpose.msra.mxu0 0.0
    %389 = vmatpush.xpose.msra.mxu0 0.0
    %390 = vmatpush.xpose.msra.mxu0 0.0
    %391 = vmatpush.xpose.msra.mxu0 0.0
    %392 = vmatpush.xpose.msra.mxu0 0.0
    %393 = vmatpush.xpose.msra.mxu0 0.0
    %394 = vmatpush.xpose.msra.mxu0 0.0
    %395 = vmatpush.xpose.msra.mxu0 0.0
    %396 = vmatpush.xpose.msra.mxu0 0.0
    %397 = vmatpush.xpose.msra.mxu0 0.0
    %398 = vmatpush.xpose.msra.mxu0 %v381
    %399 = vmatmul.f32.gmra.mxu0 %v378
    %v400 = vpop.f32.mrf.mxu0
    %v401 = vadd.f32 0.0, %v400
    %402 = vdwg.mxu0
    %v403 = vsel %vm222, %v251, 0
    %v406 = vsel %vm222, %v188, 0
    %408 = vmatpush.xpose.msra.mxu0 0.0
    %409 = vmatpush.xpose.msra.mxu0 0.0
    %410 = vmatpush.xpose.msra.mxu0 0.0
    %411 = vmatpush.xpose.msra.mxu0 0.0
    %412 = vmatpush.xpose.msra.mxu0 0.0
    %413 = vmatpush.xpose.msra.mxu0 0.0
    %414 = vmatpush.xpose.msra.mxu0 0.0
    %415 = vmatpush.xpose.msra.mxu0 0.0
    %416 = vmatpush.xpose.msra.mxu0 0.0
    %417 = vmatpush.xpose.msra.mxu0 0.0
    %418 = vmatpush.xpose.msra.mxu0 0.0
    %419 = vmatpush.xpose.msra.mxu0 0.0
    %420 = vmatpush.xpose.msra.mxu0 0.0
    %421 = vmatpush.xpose.msra.mxu0 0.0
    %422 = vmatpush.xpose.msra.mxu0 0.0
    %423 = vmatpush.xpose.msra.mxu0 %v406
    %424 = vmatmul.f32.gmra.mxu0 %v403
    %v425 = vpop.f32.mrf.mxu0
    %v426 = vadd.f32 0.0, %v425
    %427 = vdwg.mxu0
    %v428 = vsel %vm222, %v252, 0
    %v431 = vsel %vm222, %v189, 0
    %433 = vmatpush.xpose.msra.mxu0 0.0
    %434 = vmatpush.xpose.msra.mxu0 0.0
    %435 = vmatpush.xpose.msra.mxu0 0.0
    %436 = vmatpush.xpose.msra.mxu0 0.0
    %437 = vmatpush.xpose.msra.mxu0 0.0
    %438 = vmatpush.xpose.msra.mxu0 0.0
    %439 = vmatpush.xpose.msra.mxu0 0.0
    %440 = vmatpush.xpose.msra.mxu0 0.0
    %441 = vmatpush.xpose.msra.mxu0 0.0
    %442 = vmatpush.xpose.msra.mxu0 0.0
    %443 = vmatpush.xpose.msra.mxu0 0.0
    %444 = vmatpush.xpose.msra.mxu0 0.0
    %445 = vmatpush.xpose.msra.mxu0 0.0
    %446 = vmatpush.xpose.msra.mxu0 0.0
    %447 = vmatpush.xpose.msra.mxu0 0.0
    %448 = vmatpush.xpose.msra.mxu0 %v431
    %449 = vmatmul.f32.gmra.mxu0 %v428
    %v450 = vpop.f32.mrf.mxu0
    %v451 = vadd.f32 0.0, %v450
    %452 = vdwg.mxu0
    %v454 = vrot.slane %v198, 1
    %v455 = vrot.slane %v198, 2
    %v456 = vrot.slane %v198, 3
    %v457 = vrot.slane %v198, 4
    %v458 = vrot.slane %v198, 5
    %v459 = vrot.slane %v198, 6
    %v460 = vrot.slane %v198, 7
    %v469 = vadd.f32 %v276, %v198
    %v470 = vadd.f32 %v301, %v454
    %v471 = vadd.f32 %v326, %v455
    %v472 = vadd.f32 %v351, %v456
    %v473 = vadd.f32 %v376, %v457
    %v474 = vadd.f32 %v401, %v458
    %v475 = vadd.f32 %v426, %v459
    %v476 = vadd.f32 %v451, %v460
    %v485 = vrot.slane %v470, 7
    %vm486 = vcmask 1041409
    %v487 = vsel %vm486, %v485, %v469
    %v488 = vrot.slane %v471, 6
    %vm489 = vcmask 1042434
    %v490 = vsel %vm489, %v488, %v487
    %v491 = vrot.slane %v472, 5
    %vm492 = vcmask 1043459
    %v493 = vsel %vm492, %v491, %v490
    %v494 = vrot.slane %v473, 4
    %vm495 = vcmask 1044484
    %v496 = vsel %vm495, %v494, %v493
    %v497 = vrot.slane %v474, 3
    %vm498 = vcmask 1045509
    %v499 = vsel %vm498, %v497, %v496
    %v500 = vrot.slane %v475, 2
    %vm501 = vcmask 1046534
    %v502 = vsel %vm501, %v500, %v499
    %v503 = vrot.slane %v476, 1
    %vm504 = vcmask 1047559
    %v505 = vsel %vm504, %v503, %v502
    %vm507 = vcmask 64512
    %v508 = vsel %vm507, %v505, -inf
    %509 = vmax.xlane.f32.xlu0 %v508
    %v510 = vpop.xlane.xlu0 %509
    %v512 = vrot.slane %v510, 1
    %v513 = vrot.slane %v510, 2
    %v514 = vrot.slane %v510, 3
    %v515 = vrot.slane %v510, 4
    %v516 = vrot.slane %v510, 5
    %v517 = vrot.slane %v510, 6
    %v518 = vrot.slane %v510, 7
    %v527 = vsub.f32 %v469, %v510
    %v528 = vsub.f32 %v470, %v512
    %v529 = vsub.f32 %v471, %v513
    %v530 = vsub.f32 %v472, %v514
    %v531 = vsub.f32 %v473, %v515
    %v532 = vsub.f32 %v474, %v516
    %v533 = vsub.f32 %v475, %v517
    %v534 = vsub.f32 %v476, %v518
    %v535 = vmul.f32 %v527, 1.442695
    %v536 = vpow.pop %v535
    %v537 = vmul.f32 %v528, 1.442695
    %v538 = vpow.pop %v537
    %v539 = vmul.f32 %v529, 1.442695
    %v540 = vpow.pop %v539
    %v541 = vmul.f32 %v530, 1.442695
    %v542 = vpow.pop %v541
    %v543 = vmul.f32 %v531, 1.442695
    %v544 = vpow.pop %v543
    %v545 = vmul.f32 %v532, 1.442695
    %v546 = vpow.pop %v545
    %v547 = vmul.f32 %v533, 1.442695
    %v548 = vpow.pop %v547
    %v549 = vmul.f32 %v534, 1.442695
    %v550 = vpow.pop %v549
    %v559 = vrot.slane %v538, 7
    %v560 = vsel %vm486, %v559, %v536
    %v561 = vrot.slane %v540, 6
    %v562 = vsel %vm489, %v561, %v560
    %v563 = vrot.slane %v542, 5
    %v564 = vsel %vm492, %v563, %v562
    %v565 = vrot.slane %v544, 4
    %v566 = vsel %vm495, %v565, %v564
    %v567 = vrot.slane %v546, 3
    %v568 = vsel %vm498, %v567, %v566
    %v569 = vrot.slane %v548, 2
    %v570 = vsel %vm501, %v569, %v568
    %v571 = vrot.slane %v550, 1
    %v572 = vsel %vm504, %v571, %v570
    %v574 = vsel %vm507, %v572, 0.0
    %575 = vadd.xlane.f32.xlu0 %v574
    %v576 = vpop.xlane.xlu0 %575
    %v577 = vrcp.pop %v576
    %v579 = vrot.slane %v577, 1
    %v580 = vrot.slane %v577, 2
    %v581 = vrot.slane %v577, 3
    %v582 = vrot.slane %v577, 4
    %v583 = vrot.slane %v577, 5
    %v584 = vrot.slane %v577, 6
    %v585 = vrot.slane %v577, 7
    %v594 = vmul.f32 %v536, %v577
    %v595 = vmul.f32 %v538, %v579
    %v596 = vmul.f32 %v540, %v580
    %v597 = vmul.f32 %v542, %v581
    %v598 = vmul.f32 %v544, %v582
    %v599 = vmul.f32 %v546, %v583
    %v600 = vmul.f32 %v548, %v584
    %v601 = vmul.f32 %v550, %v585
    %v603 = vsel %vm507, %v594, 0
    %605 = vmatpush.msra.mxu0 0.0
    %606 = vmatpush.msra.mxu0 0.0
    %607 = vmatpush.msra.mxu0 0.0
    %608 = vmatpush.msra.mxu0 0.0
    %609 = vmatpush.msra.mxu0 0.0
    %610 = vmatpush.msra.mxu0 0.0
    %611 = vmatpush.msra.mxu0 0.0
    %612 = vmatpush.msra.mxu0 0.0
    %613 = vmatpush.msra.mxu0 0.0
    %614 = vmatpush.msra.mxu0 0.0
    %615 = vmatpush.msra.mxu0 0.0
    %616 = vmatpush.msra.mxu0 0.0
    %617 = vmatpush.msra.mxu0 0.0
    %618 = vmatpush.msra.mxu0 0.0
    %619 = vmatpush.msra.mxu0 0.0
    %620 = vmatpush.msra.mxu0 %v190
    %621 = vmatmul.f32.gmra.mxu0 %v603
    %v622 = vpop.f32.mrf.mxu0
    %v623 = vadd.f32 0.0, %v622
    %624 = vdwg.mxu0
    %v626 = vsel %vm507, %v595, 0
    %628 = vmatpush.msra.mxu0 0.0
    %629 = vmatpush.msra.mxu0 0.0
    %630 = vmatpush.msra.mxu0 0.0
    %631 = vmatpush.msra.mxu0 0.0
    %632 = vmatpush.msra.mxu0 0.0
    %633 = vmatpush.msra.mxu0 0.0
    %634 = vmatpush.msra.mxu0 0.0
    %635 = vmatpush.msra.mxu0 0.0
    %636 = vmatpush.msra.mxu0 0.0
    %637 = vmatpush.msra.mxu0 0.0
    %638 = vmatpush.msra.mxu0 0.0
    %639 = vmatpush.msra.mxu0 0.0
    %640 = vmatpush.msra.mxu0 0.0
    %641 = vmatpush.msra.mxu0 0.0
    %642 = vmatpush.msra.mxu0 0.0
    %643 = vmatpush.msra.mxu0 %v191
    %644 = vmatmul.f32.gmra.mxu0 %v626
    %v645 = vpop.f32.mrf.mxu0
    %v646 = vadd.f32 0.0, %v645
    %647 = vdwg.mxu0
    %v649 = vsel %vm507, %v596, 0
    %651 = vmatpush.msra.mxu0 0.0
    %652 = vmatpush.msra.mxu0 0.0
    %653 = vmatpush.msra.mxu0 0.0
    %654 = vmatpush.msra.mxu0 0.0
    %655 = vmatpush.msra.mxu0 0.0
    %656 = vmatpush.msra.mxu0 0.0
    %657 = vmatpush.msra.mxu0 0.0
    %658 = vmatpush.msra.mxu0 0.0
    %659 = vmatpush.msra.mxu0 0.0
    %660 = vmatpush.msra.mxu0 0.0
    %661 = vmatpush.msra.mxu0 0.0
    %662 = vmatpush.msra.mxu0 0.0
    %663 = vmatpush.msra.mxu0 0.0
    %664 = vmatpush.msra.mxu0 0.0
    %665 = vmatpush.msra.mxu0 0.0
    %666 = vmatpush.msra.mxu0 %v192
    %667 = vmatmul.f32.gmra.mxu0 %v649
    %v668 = vpop.f32.mrf.mxu0
    %v669 = vadd.f32 0.0, %v668
    %670 = vdwg.mxu0
    %v672 = vsel %vm507, %v597, 0
    %674 = vmatpush.msra.mxu0 0.0
    %675 = vmatpush.msra.mxu0 0.0
    %676 = vmatpush.msra.mxu0 0.0
    %677 = vmatpush.msra.mxu0 0.0
    %678 = vmatpush.msra.mxu0 0.0
    %679 = vmatpush.msra.mxu0 0.0
    %680 = vmatpush.msra.mxu0 0.0
    %681 = vmatpush.msra.mxu0 0.0
    %682 = vmatpush.msra.mxu0 0.0
    %683 = vmatpush.msra.mxu0 0.0
    %684 = vmatpush.msra.mxu0 0.0
    %685 = vmatpush.msra.mxu0 0.0
    %686 = vmatpush.msra.mxu0 0.0
    %687 = vmatpush.msra.mxu0 0.0
    %688 = vmatpush.msra.mxu0 0.0
    %689 = vmatpush.msra.mxu0 %v193
    %690 = vmatmul.f32.gmra.mxu0 %v672
    %v691 = vpop.f32.mrf.mxu0
    %v692 = vadd.f32 0.0, %v691
    %693 = vdwg.mxu0
    %v695 = vsel %vm507, %v598, 0
    %697 = vmatpush.msra.mxu0 0.0
    %698 = vmatpush.msra.mxu0 0.0
    %699 = vmatpush.msra.mxu0 0.0
    %700 = vmatpush.msra.mxu0 0.0
    %701 = vmatpush.msra.mxu0 0.0
    %702 = vmatpush.msra.mxu0 0.0
    %703 = vmatpush.msra.mxu0 0.0
    %704 = vmatpush.msra.mxu0 0.0
    %705 = vmatpush.msra.mxu0 0.0
    %706 = vmatpush.msra.mxu0 0.0
    %707 = vmatpush.msra.mxu0 0.0
    %708 = vmatpush.msra.mxu0 0.0
    %709 = vmatpush.msra.mxu0 0.0
    %710 = vmatpush.msra.mxu0 0.0
    %711 = vmatpush.msra.mxu0 0.0
    %712 = vmatpush.msra.mxu0 %v194
    %713 = vmatmul.f32.gmra.mxu0 %v695
    %v714 = vpop.f32.mrf.mxu0
    %v715 = vadd.f32 0.0, %v714
    %716 = vdwg.mxu0
    %v718 = vsel %vm507, %v599, 0
    %720 = vmatpush.msra.mxu0 0.0
    %721 = vmatpush.msra.mxu0 0.0
    %722 = vmatpush.msra.mxu0 0.0
    %723 = vmatpush.msra.mxu0 0.0
    %724 = vmatpush.msra.mxu0 0.0
    %725 = vmatpush.msra.mxu0 0.0
    %726 = vmatpush.msra.mxu0 0.0
    %727 = vmatpush.msra.mxu0 0.0
    %728 = vmatpush.msra.mxu0 0.0
    %729 = vmatpush.msra.mxu0 0.0
    %730 = vmatpush.msra.mxu0 0.0
    %731 = vmatpush.msra.mxu0 0.0
    %732 = vmatpush.msra.mxu0 0.0
    %733 = vmatpush.msra.mxu0 0.0
    %734 = vmatpush.msra.mxu0 0.0
    %735 = vmatpush.msra.mxu0 %v195
    %736 = vmatmul.f32.gmra.mxu0 %v718
    %v737 = vpop.f32.mrf.mxu0
    %v738 = vadd.f32 0.0, %v737
    %739 = vdwg.mxu0
    %v741 = vsel %vm507, %v600, 0
    %743 = vmatpush.msra.mxu0 0.0
    %744 = vmatpush.msra.mxu0 0.0
    %745 = vmatpush.msra.mxu0 0.0
    %746 = vmatpush.msra.mxu0 0.0
    %747 = vmatpush.msra.mxu0 0.0
    %748 = vmatpush.msra.mxu0 0.0
    %749 = vmatpush.msra.mxu0 0.0
    %750 = vmatpush.msra.mxu0 0.0
    %751 = vmatpush.msra.mxu0 0.0
    %752 = vmatpush.msra.mxu0 0.0
    %753 = vmatpush.msra.mxu0 0.0
    %754 = vmatpush.msra.mxu0 0.0
    %755 = vmatpush.msra.mxu0 0.0
    %756 = vmatpush.msra.mxu0 0.0
    %757 = vmatpush.msra.mxu0 0.0
    %758 = vmatpush.msra.mxu0 %v196
    %759 = vmatmul.f32.gmra.mxu0 %v741
    %v760 = vpop.f32.mrf.mxu0
    %v761 = vadd.f32 0.0, %v760
    %762 = vdwg.mxu0
    %v764 = vsel %vm507, %v601, 0
    %766 = vmatpush.msra.mxu0 0.0
    %767 = vmatpush.msra.mxu0 0.0
    %768 = vmatpush.msra.mxu0 0.0
    %769 = vmatpush.msra.mxu0 0.0
    %770 = vmatpush.msra.mxu0 0.0
    %771 = vmatpush.msra.mxu0 0.0
    %772 = vmatpush.msra.mxu0 0.0
    %773 = vmatpush.msra.mxu0 0.0
    %774 = vmatpush.msra.mxu0 0.0
    %775 = vmatpush.msra.mxu0 0.0
    %776 = vmatpush.msra.mxu0 0.0
    %777 = vmatpush.msra.mxu0 0.0
    %778 = vmatpush.msra.mxu0 0.0
    %779 = vmatpush.msra.mxu0 0.0
    %780 = vmatpush.msra.mxu0 0.0
    %781 = vmatpush.msra.mxu0 %v197
    %782 = vmatmul.f32.gmra.mxu0 %v764
    %v783 = vpop.f32.mrf.mxu0
    %v784 = vadd.f32 0.0, %v783
    %785 = vdwg.mxu0
    %v786 = vld [vmem:[#allocation3] sm:$0xff]
    %v795 = vrot.slane %v646, 7
    %v796 = vsel %vm486, %v795, %v623
    %v797 = vrot.slane %v669, 6
    %v798 = vsel %vm489, %v797, %v796
    %v799 = vrot.slane %v692, 5
    %v800 = vsel %vm492, %v799, %v798
    %v801 = vrot.slane %v715, 4
    %v802 = vsel %vm495, %v801, %v800
    %v803 = vrot.slane %v738, 3
    %v804 = vsel %vm498, %v803, %v802
    %v805 = vrot.slane %v761, 2
    %v806 = vsel %vm501, %v805, %v804
    %v807 = vrot.slane %v784, 1
    %v808 = vsel %vm504, %v807, %v806
    %vm809 = vcmask 130048
    %v810 = vsel %vm809, %v808, 0
    %812 = vmatpush.msra.mxu0 0.0
    %813 = vmatpush.msra.mxu0 0.0
    %814 = vmatpush.msra.mxu0 0.0
    %815 = vmatpush.msra.mxu0 0.0
    %816 = vmatpush.msra.mxu0 0.0
    %817 = vmatpush.msra.mxu0 0.0
    %818 = vmatpush.msra.mxu0 0.0
    %819 = vmatpush.msra.mxu0 0.0
    %820 = vmatpush.msra.mxu0 0.0
    %821 = vmatpush.msra.mxu0 0.0
    %822 = vmatpush.msra.mxu0 0.0
    %823 = vmatpush.msra.mxu0 0.0
    %824 = vmatpush.msra.mxu0 0.0
    %825 = vmatpush.msra.mxu0 0.0
    %826 = vmatpush.msra.mxu0 %v204
    %827 = vmatpush.msra.mxu0 %v203
    %828 = vmatmul.f32.gmra.mxu0 %v810
    %v829 = vpop.f32.mrf.mxu0
    %v830 = vadd.f32 0.0, %v829
    %831 = vdwg.mxu0
    %v832 = vadd.f32 %v786, %v830
    %v833 = vsel %vm222, %v218, 0
    %835 = vmatpush.msra.mxu0 0.0
    %836 = vmatpush.msra.mxu0 0.0
    %837 = vmatpush.msra.mxu0 0.0
    %838 = vmatpush.msra.mxu0 0.0
    %839 = vmatpush.msra.mxu0 0.0
    %840 = vmatpush.msra.mxu0 0.0
    %841 = vmatpush.msra.mxu0 0.0
    %842 = vmatpush.msra.mxu0 0.0
    %843 = vmatpush.msra.mxu0 0.0
    %844 = vmatpush.msra.mxu0 0.0
    %845 = vmatpush.msra.mxu0 0.0
    %846 = vmatpush.msra.mxu0 0.0
    %847 = vmatpush.msra.mxu0 %v208
    %848 = vmatpush.msra.mxu0 %v207
    %849 = vmatpush.msra.mxu0 %v206
    %850 = vmatpush.msra.mxu0 %v205
    %851 = vmatmul.f32.gmra.mxu0 %v833
    %v852 = vpop.f32.mrf.mxu0
    %v853 = vadd.f32 0.0, %v852
    %854 = vdwg.mxu0
    %v855 = vadd.f32 %v832, %v853
    %v856 = vxor.u32 %v855, 2147483648
    %v857 = vmul.f32 %v856, 1.442695
    %v858 = vpow.pop %v857
    %v859 = vadd.f32 %v858, 1.0
    %v860 = vrcp.pop %v859
    %v861 = vmul.f32 %v859, %v860
    %v862 = vsub.f32 1.0, %v861
    %v863 = vmul.f32 %v860, %v862
    %v864 = vadd.f32 %v860, %v863
    %vm865 = vweird.f32 %v859
    %vm866 = vweird.f32 %v860
    %vm867 = vmor %vm865, %vm866
    %v868 = vsel %vm867, %v860, %v864
    %v869 = vand.u32 2147483647, %v859
    %vm870 = vcmp.eq.f32.partialorder %v869, 8.507059e+37
    %v871 = vand.u32 %v859, 2147483648
    %v872 = vor.u32 1.1754944e-38, %v871
    %v873 = vsel %vm870, %v872, %v868
    %v874 = vmul.f32 1.0, %v873
    %v875 = vtanh.pop %v855
    %v876 = vmul.f32 %v874, %v218
    %878 = vrot.lane.b32.xlu0 %v875, 64
    %v879 = vpop.permute.xlu0 %878
    %v881 = vmul.f32 %v874, %v879
    %883 = vrot.lane.b32.xlu0 %v881, 32
    %v884 = vpop.permute.xlu0 %883
    %v886 = vadd.f32 %v876, %v884
    %v887 = vtanh.pop %v886
    %889 = vrot.lane.b32.xlu0 %v887, 64
    %v890 = vpop.permute.xlu0 %889
    %v892 = vmul.f32 %v874, %v890
    %893 = vmatpush.msra.mxu0 0.0
    %894 = vmatpush.msra.mxu0 0.0
    %895 = vmatpush.msra.mxu0 0.0
    %896 = vmatpush.msra.mxu0 0.0
    %897 = vmatpush.msra.mxu0 0.0
    %898 = vmatpush.msra.mxu0 0.0
    %899 = vmatpush.msra.mxu0 0.0
    %900 = vmatpush.msra.mxu0 0.0
    %901 = vmatpush.msra.mxu0 0.0
    %902 = vmatpush.msra.mxu0 0.0
    %903 = vmatpush.msra.mxu0 0.0
    %904 = vmatpush.msra.mxu0 0.0
    %905 = vmatpush.msra.mxu0 %v216
    %906 = vmatpush.msra.mxu0 %v215
    %907 = vmatpush.msra.mxu0 %v214
    %908 = vmatpush.msra.mxu0 %v213
    %909 = vmatmul.f32.gmra.mxu0 %v223
    %v910 = vpop.f32.mrf.mxu0
    %v911 = vadd.f32 0.0, %v910
    %912 = vdwg.mxu0
    %914 = vrot.lane.b32.xlu0 %v892, 32
    %v915 = vpop.permute.xlu0 %914
    %v916 = vsel %vm222, %v915, 0
    %918 = vmatpush.msra.mxu0 0.0
    %919 = vmatpush.msra.mxu0 0.0
    %920 = vmatpush.msra.mxu0 0.0
    %921 = vmatpush.msra.mxu0 0.0
    %922 = vmatpush.msra.mxu0 0.0
    %923 = vmatpush.msra.mxu0 0.0
    %924 = vmatpush.msra.mxu0 0.0
    %925 = vmatpush.msra.mxu0 0.0
    %926 = vmatpush.msra.mxu0 0.0
    %927 = vmatpush.msra.mxu0 0.0
    %928 = vmatpush.msra.mxu0 0.0
    %929 = vmatpush.msra.mxu0 0.0
    %930 = vmatpush.msra.mxu0 %v212
    %931 = vmatpush.msra.mxu0 %v211
    %932 = vmatpush.msra.mxu0 %v210
    %933 = vmatpush.msra.mxu0 %v209
    %934 = vmatmul.f32.gmra.mxu0 %v916
    %v935 = vpop.f32.mrf.mxu0
    %v936 = vadd.f32 %v911, %v935
    %937 = vdwg.mxu0
    %v939 = vperm.slane %v217, 0
    %v941 = vadd.f32 %v936, %v939
    %v942 = vxor.u32 %v941, 2147483648
    %v943 = vmul.f32 %v942, 1.442695
    %v944 = vpow.pop %v943
    %v945 = vadd.f32 %v944, 1.0
    %v946 = vrcp.pop %v945
    %v947 = vmul.f32 %v945, %v946
    %v948 = vsub.f32 1.0, %v947
    %v949 = vmul.f32 %v946, %v948
    %v950 = vadd.f32 %v946, %v949
    %vm951 = vweird.f32 %v945
    %vm952 = vweird.f32 %v946
    %vm953 = vmor %vm951, %vm952
    %v954 = vsel %vm953, %v946, %v950
    %v955 = vand.u32 2147483647, %v945
    %vm956 = vcmp.eq.f32.partialorder %v955, 8.507059e+37
    %v957 = vand.u32 %v945, 2147483648
    %v958 = vor.u32 1.1754944e-38, %v957
    %v959 = vsel %vm956, %v958, %v954
    %v960 = vmul.f32 1.0, %v959
    %v961 = vtanh.pop %v941
    %v963 = vmul.f32 %v960, %v221
    %965 = vrot.lane.b32.xlu0 %v961, 64
    %v966 = vpop.permute.xlu0 %965
    %v968 = vmul.f32 %v960, %v966
    %970 = vrot.lane.b32.xlu0 %v968, 32
    %v971 = vpop.permute.xlu0 %970
    %v973 = vadd.f32 %v963, %v971
    %v974 = vtanh.pop %v973
    %976 = vrot.lane.b32.xlu0 %v974, 64
    %v977 = vpop.permute.xlu0 %976
    %v979 = vmul.f32 %v960, %v977
    %981 = vrot.lane.b32.xlu0 %v979, 32
    %v982 = vpop.permute.xlu0 %981
    %984 = vst.msk [vmem:[#allocation18] sm:$0xff] %vm222, %v982
    %986 = vst.msk [vmem:[#allocation19] sm:$0xff] %vm809, %v808
    %v987 = vsel %vm222, %v982, 0
    %989 = vmatpush.msra.mxu0 0.0
    %990 = vmatpush.msra.mxu0 0.0
    %991 = vmatpush.msra.mxu0 0.0
    %992 = vmatpush.msra.mxu0 0.0
    %993 = vmatpush.msra.mxu0 0.0
    %994 = vmatpush.msra.mxu0 0.0
    %995 = vmatpush.msra.mxu0 0.0
    %996 = vmatpush.msra.mxu0 0.0
    %997 = vmatpush.msra.mxu0 0.0
    %998 = vmatpush.msra.mxu0 0.0
    %999 = vmatpush.msra.mxu0 0.0
    %1000 = vmatpush.msra.mxu0 0.0
    %1001 = vmatpush.msra.mxu0 %v202
    %1002 = vmatpush.msra.mxu0 %v201
    %1003 = vmatpush.msra.mxu0 %v200
    %1004 = vmatpush.msra.mxu0 %v199
    %1005 = vmatmul.f32.gmra.mxu0 %v987
    %v1006 = vpop.f32.mrf.mxu0
    %v1007 = vadd.f32 0.0, %v1006
    %1008 = vdwg.mxu0
    %v1010 = vrot.slane %v1007, 1
    %v1011 = vrot.slane %v1007, 2
    %v1012 = vrot.slane %v1007, 3
    %v1013 = vrot.slane %v1007, 4
    %v1014 = vrot.slane %v1007, 5
    %v1015 = vrot.slane %v1007, 6
    %v1016 = vrot.slane %v1007, 7
    %v1017 = vsel %vm222, %v1007, 0
    %1019 = vmatpush.xpose.msra.mxu0 0.0
    %1020 = vmatpush.xpose.msra.mxu0 0.0
    %1021 = vmatpush.xpose.msra.mxu0 0.0
    %1022 = vmatpush.xpose.msra.mxu0 0.0
    %1023 = vmatpush.xpose.msra.mxu0 0.0
    %1024 = vmatpush.xpose.msra.mxu0 0.0
    %1025 = vmatpush.xpose.msra.mxu0 0.0
    %1026 = vmatpush.xpose.msra.mxu0 0.0
    %1027 = vmatpush.xpose.msra.mxu0 0.0
    %1028 = vmatpush.xpose.msra.mxu0 0.0
    %1029 = vmatpush.xpose.msra.mxu0 0.0
    %1030 = vmatpush.xpose.msra.mxu0 0.0
    %1031 = vmatpush.xpose.msra.mxu0 0.0
    %1032 = vmatpush.xpose.msra.mxu0 0.0
    %1033 = vmatpush.xpose.msra.mxu0 0.0
    %1034 = vmatpush.xpose.msra.mxu0 %v256
    %1035 = vmatmul.f32.gmra.mxu0 %v1017
    %v1036 = vpop.f32.mrf.mxu0
    %v1037 = vadd.f32 0.0, %v1036
    %1038 = vdwg.mxu0
    %v1039 = vsel %vm222, %v1010, 0
    %1041 = vmatpush.xpose.msra.mxu0 0.0
    %1042 = vmatpush.xpose.msra.mxu0 0.0
    %1043 = vmatpush.xpose.msra.mxu0 0.0
    %1044 = vmatpush.xpose.msra.mxu0 0.0
    %1045 = vmatpush.xpose.msra.mxu0 0.0
    %1046 = vmatpush.xpose.msra.mxu0 0.0
    %1047 = vmatpush.xpose.msra.mxu0 0.0
    %1048 = vmatpush.xpose.msra.mxu0 0.0
    %1049 = vmatpush.xpose.msra.mxu0 0.0
    %1050 = vmatpush.xpose.msra.mxu0 0.0
    %1051 = vmatpush.xpose.msra.mxu0 0.0
    %1052 = vmatpush.xpose.msra.mxu0 0.0
    %1053 = vmatpush.xpose.msra.mxu0 0.0
    %1054 = vmatpush.xpose.msra.mxu0 0.0
    %1055 = vmatpush.xpose.msra.mxu0 0.0
    %1056 = vmatpush.xpose.msra.mxu0 %v281
    %1057 = vmatmul.f32.gmra.mxu0 %v1039
    %v1058 = vpop.f32.mrf.mxu0
    %v1059 = vadd.f32 0.0, %v1058
    %1060 = vdwg.mxu0
    %v1061 = vsel %vm222, %v1011, 0
    %1063 = vmatpush.xpose.msra.mxu0 0.0
    %1064 = vmatpush.xpose.msra.mxu0 0.0
    %1065 = vmatpush.xpose.msra.mxu0 0.0
    %1066 = vmatpush.xpose.msra.mxu0 0.0
    %1067 = vmatpush.xpose.msra.mxu0 0.0
    %1068 = vmatpush.xpose.msra.mxu0 0.0
    %1069 = vmatpush.xpose.msra.mxu0 0.0
    %1070 = vmatpush.xpose.msra.mxu0 0.0
    %1071 = vmatpush.xpose.msra.mxu0 0.0
    %1072 = vmatpush.xpose.msra.mxu0 0.0
    %1073 = vmatpush.xpose.msra.mxu0 0.0
    %1074 = vmatpush.xpose.msra.mxu0 0.0
    %1075 = vmatpush.xpose.msra.mxu0 0.0
    %1076 = vmatpush.xpose.msra.mxu0 0.0
    %1077 = vmatpush.xpose.msra.mxu0 0.0
    %1078 = vmatpush.xpose.msra.mxu0 %v306
    %1079 = vmatmul.f32.gmra.mxu0 %v1061
    %v1080 = vpop.f32.mrf.mxu0
    %v1081 = vadd.f32 0.0, %v1080
    %1082 = vdwg.mxu0
    %v1083 = vsel %vm222, %v1012, 0
    %1085 = vmatpush.xpose.msra.mxu0 0.0
    %1086 = vmatpush.xpose.msra.mxu0 0.0
    %1087 = vmatpush.xpose.msra.mxu0 0.0
    %1088 = vmatpush.xpose.msra.mxu0 0.0
    %1089 = vmatpush.xpose.msra.mxu0 0.0
    %1090 = vmatpush.xpose.msra.mxu0 0.0
    %1091 = vmatpush.xpose.msra.mxu0 0.0
    %1092 = vmatpush.xpose.msra.mxu0 0.0
    %1093 = vmatpush.xpose.msra.mxu0 0.0
    %1094 = vmatpush.xpose.msra.mxu0 0.0
    %1095 = vmatpush.xpose.msra.mxu0 0.0
    %1096 = vmatpush.xpose.msra.mxu0 0.0
    %1097 = vmatpush.xpose.msra.mxu0 0.0
    %1098 = vmatpush.xpose.msra.mxu0 0.0
    %1099 = vmatpush.xpose.msra.mxu0 0.0
    %1100 = vmatpush.xpose.msra.mxu0 %v331
    %1101 = vmatmul.f32.gmra.mxu0 %v1083
    %v1102 = vpop.f32.mrf.mxu0
    %v1103 = vadd.f32 0.0, %v1102
    %1104 = vdwg.mxu0
    %v1105 = vsel %vm222, %v1013, 0
    %1107 = vmatpush.xpose.msra.mxu0 0.0
    %1108 = vmatpush.xpose.msra.mxu0 0.0
    %1109 = vmatpush.xpose.msra.mxu0 0.0
    %1110 = vmatpush.xpose.msra.mxu0 0.0
    %1111 = vmatpush.xpose.msra.mxu0 0.0
    %1112 = vmatpush.xpose.msra.mxu0 0.0
    %1113 = vmatpush.xpose.msra.mxu0 0.0
    %1114 = vmatpush.xpose.msra.mxu0 0.0
    %1115 = vmatpush.xpose.msra.mxu0 0.0
    %1116 = vmatpush.xpose.msra.mxu0 0.0
    %1117 = vmatpush.xpose.msra.mxu0 0.0
    %1118 = vmatpush.xpose.msra.mxu0 0.0
    %1119 = vmatpush.xpose.msra.mxu0 0.0
    %1120 = vmatpush.xpose.msra.mxu0 0.0
    %1121 = vmatpush.xpose.msra.mxu0 0.0
    %1122 = vmatpush.xpose.msra.mxu0 %v356
    %1123 = vmatmul.f32.gmra.mxu0 %v1105
    %v1124 = vpop.f32.mrf.mxu0
    %v1125 = vadd.f32 0.0, %v1124
    %1126 = vdwg.mxu0
    %v1127 = vsel %vm222, %v1014, 0
    %1129 = vmatpush.xpose.msra.mxu0 0.0
    %1130 = vmatpush.xpose.msra.mxu0 0.0
    %1131 = vmatpush.xpose.msra.mxu0 0.0
    %1132 = vmatpush.xpose.msra.mxu0 0.0
    %1133 = vmatpush.xpose.msra.mxu0 0.0
    %1134 = vmatpush.xpose.msra.mxu0 0.0
    %1135 = vmatpush.xpose.msra.mxu0 0.0
    %1136 = vmatpush.xpose.msra.mxu0 0.0
    %1137 = vmatpush.xpose.msra.mxu0 0.0
    %1138 = vmatpush.xpose.msra.mxu0 0.0
    %1139 = vmatpush.xpose.msra.mxu0 0.0
    %1140 = vmatpush.xpose.msra.mxu0 0.0
    %1141 = vmatpush.xpose.msra.mxu0 0.0
    %1142 = vmatpush.xpose.msra.mxu0 0.0
    %1143 = vmatpush.xpose.msra.mxu0 0.0
    %1144 = vmatpush.xpose.msra.mxu0 %v381
    %1145 = vmatmul.f32.gmra.mxu0 %v1127
    %v1146 = vpop.f32.mrf.mxu0
    %v1147 = vadd.f32 0.0, %v1146
    %1148 = vdwg.mxu0
    %v1149 = vsel %vm222, %v1015, 0
    %1151 = vmatpush.xpose.msra.mxu0 0.0
    %1152 = vmatpush.xpose.msra.mxu0 0.0
    %1153 = vmatpush.xpose.msra.mxu0 0.0
    %1154 = vmatpush.xpose.msra.mxu0 0.0
    %1155 = vmatpush.xpose.msra.mxu0 0.0
    %1156 = vmatpush.xpose.msra.mxu0 0.0
    %1157 = vmatpush.xpose.msra.mxu0 0.0
    %1158 = vmatpush.xpose.msra.mxu0 0.0
    %1159 = vmatpush.xpose.msra.mxu0 0.0
    %1160 = vmatpush.xpose.msra.mxu0 0.0
    %1161 = vmatpush.xpose.msra.mxu0 0.0
    %1162 = vmatpush.xpose.msra.mxu0 0.0
    %1163 = vmatpush.xpose.msra.mxu0 0.0
    %1164 = vmatpush.xpose.msra.mxu0 0.0
    %1165 = vmatpush.xpose.msra.mxu0 0.0
    %1166 = vmatpush.xpose.msra.mxu0 %v406
    %1167 = vmatmul.f32.gmra.mxu0 %v1149
    %v1168 = vpop.f32.mrf.mxu0
    %v1169 = vadd.f32 0.0, %v1168
    %1170 = vdwg.mxu0
    %v1171 = vsel %vm222, %v1016, 0
    %1173 = vmatpush.xpose.msra.mxu0 0.0
    %1174 = vmatpush.xpose.msra.mxu0 0.0
    %1175 = vmatpush.xpose.msra.mxu0 0.0
    %1176 = vmatpush.xpose.msra.mxu0 0.0
    %1177 = vmatpush.xpose.msra.mxu0 0.0
    %1178 = vmatpush.xpose.msra.mxu0 0.0
    %1179 = vmatpush.xpose.msra.mxu0 0.0
    %1180 = vmatpush.xpose.msra.mxu0 0.0
    %1181 = vmatpush.xpose.msra.mxu0 0.0
    %1182 = vmatpush.xpose.msra.mxu0 0.0
    %1183 = vmatpush.xpose.msra.mxu0 0.0
    %1184 = vmatpush.xpose.msra.mxu0 0.0
    %1185 = vmatpush.xpose.msra.mxu0 0.0
    %1186 = vmatpush.xpose.msra.mxu0 0.0
    %1187 = vmatpush.xpose.msra.mxu0 0.0
    %1188 = vmatpush.xpose.msra.mxu0 %v431
    %1189 = vmatmul.f32.gmra.mxu0 %v1171
    %v1190 = vpop.f32.mrf.mxu0
    %v1191 = vadd.f32 0.0, %v1190
    %1192 = vdwg.mxu0
    %v1193 = vadd.f32 %v1037, %v198
    %v1194 = vadd.f32 %v1059, %v454
    %v1195 = vadd.f32 %v1081, %v455
    %v1196 = vadd.f32 %v1103, %v456
    %v1197 = vadd.f32 %v1125, %v457
    %v1198 = vadd.f32 %v1147, %v458
    %v1199 = vadd.f32 %v1169, %v459
    %v1200 = vadd.f32 %v1191, %v460
    %v1209 = vrot.slane %v1194, 7
    %v1210 = vsel %vm486, %v1209, %v1193
    %v1211 = vrot.slane %v1195, 6
    %v1212 = vsel %vm489, %v1211, %v1210
    %v1213 = vrot.slane %v1196, 5
    %v1214 = vsel %vm492, %v1213, %v1212
    %v1215 = vrot.slane %v1197, 4
    %v1216 = vsel %vm495, %v1215, %v1214
    %v1217 = vrot.slane %v1198, 3
    %v1218 = vsel %vm498, %v1217, %v1216
    %v1219 = vrot.slane %v1199, 2
    %v1220 = vsel %vm501, %v1219, %v1218
    %v1221 = vrot.slane %v1200, 1
    %v1222 = vsel %vm504, %v1221, %v1220
    %v1224 = vsel %vm507, %v1222, -inf
    %1225 = vmax.xlane.f32.xlu0 %v1224
    %v1226 = vpop.xlane.xlu0 %1225
    %v1228 = vrot.slane %v1226, 1
    %v1229 = vrot.slane %v1226, 2
    %v1230 = vrot.slane %v1226, 3
    %v1231 = vrot.slane %v1226, 4
    %v1232 = vrot.slane %v1226, 5
    %v1233 = vrot.slane %v1226, 6
    %v1234 = vrot.slane %v1226, 7
    %v1243 = vsub.f32 %v1193, %v1226
    %v1244 = vsub.f32 %v1194, %v1228
    %v1245 = vsub.f32 %v1195, %v1229
    %v1246 = vsub.f32 %v1196, %v1230
    %v1247 = vsub.f32 %v1197, %v1231
    %v1248 = vsub.f32 %v1198, %v1232
    %v1249 = vsub.f32 %v1199, %v1233
    %v1250 = vsub.f32 %v1200, %v1234
    %v1251 = vmul.f32 %v1243, 1.442695
    %v1252 = vpow.pop %v1251
    %v1253 = vmul.f32 %v1244, 1.442695
    %v1254 = vpow.pop %v1253
    %v1255 = vmul.f32 %v1245, 1.442695
    %v1256 = vpow.pop %v1255
    %v1257 = vmul.f32 %v1246, 1.442695
    %v1258 = vpow.pop %v1257
    %v1259 = vmul.f32 %v1247, 1.442695
    %v1260 = vpow.pop %v1259
    %v1261 = vmul.f32 %v1248, 1.442695
    %v1262 = vpow.pop %v1261
    %v1263 = vmul.f32 %v1249, 1.442695
    %v1264 = vpow.pop %v1263
    %v1265 = vmul.f32 %v1250, 1.442695
    %v1266 = vpow.pop %v1265
    %v1275 = vrot.slane %v1254, 7
    %v1276 = vsel %vm486, %v1275, %v1252
    %v1277 = vrot.slane %v1256, 6
    %v1278 = vsel %vm489, %v1277, %v1276
    %v1279 = vrot.slane %v1258, 5
    %v1280 = vsel %vm492, %v1279, %v1278
    %v1281 = vrot.slane %v1260, 4
    %v1282 = vsel %vm495, %v1281, %v1280
    %v1283 = vrot.slane %v1262, 3
    %v1284 = vsel %vm498, %v1283, %v1282
    %v1285 = vrot.slane %v1264, 2
    %v1286 = vsel %vm501, %v1285, %v1284
    %v1287 = vrot.slane %v1266, 1
    %v1288 = vsel %vm504, %v1287, %v1286
    %v1290 = vsel %vm507, %v1288, 0.0
    %1291 = vadd.xlane.f32.xlu0 %v1290
    %v1292 = vpop.xlane.xlu0 %1291
    %v1293 = vrcp.pop %v1292
    %v1295 = vrot.slane %v1293, 1
    %v1296 = vrot.slane %v1293, 2
    %v1297 = vrot.slane %v1293, 3
    %v1298 = vrot.slane %v1293, 4
    %v1299 = vrot.slane %v1293, 5
    %v1300 = vrot.slane %v1293, 6
    %v1301 = vrot.slane %v1293, 7
    %v1310 = vmul.f32 %v1252, %v1293
    %v1311 = vmul.f32 %v1254, %v1295
    %v1312 = vmul.f32 %v1256, %v1296
    %v1313 = vmul.f32 %v1258, %v1297
    %v1314 = vmul.f32 %v1260, %v1298
    %v1315 = vmul.f32 %v1262, %v1299
    %v1316 = vmul.f32 %v1264, %v1300
    %v1317 = vmul.f32 %v1266, %v1301
    %v1319 = vsel %vm507, %v1310, 0
    %1321 = vmatpush.msra.mxu0 0.0
    %1322 = vmatpush.msra.mxu0 0.0
    %1323 = vmatpush.msra.mxu0 0.0
    %1324 = vmatpush.msra.mxu0 0.0
    %1325 = vmatpush.msra.mxu0 0.0
    %1326 = vmatpush.msra.mxu0 0.0
    %1327 = vmatpush.msra.mxu0 0.0
    %1328 = vmatpush.msra.mxu0 0.0
    %1329 = vmatpush.msra.mxu0 0.0
    %1330 = vmatpush.msra.mxu0 0.0
    %1331 = vmatpush.msra.mxu0 0.0
    %1332 = vmatpush.msra.mxu0 0.0
    %1333 = vmatpush.msra.mxu0 0.0
    %1334 = vmatpush.msra.mxu0 0.0
    %1335 = vmatpush.msra.mxu0 0.0
    %1336 = vmatpush.msra.mxu0 %v190
    %1337 = vmatmul.f32.gmra.mxu0 %v1319
    %v1338 = vpop.f32.mrf.mxu0
    %v1339 = vadd.f32 0.0, %v1338
    %1340 = vdwg.mxu0
    %v1342 = vsel %vm507, %v1311, 0
    %1344 = vmatpush.msra.mxu0 0.0
    %1345 = vmatpush.msra.mxu0 0.0
    %1346 = vmatpush.msra.mxu0 0.0
    %1347 = vmatpush.msra.mxu0 0.0
    %1348 = vmatpush.msra.mxu0 0.0
    %1349 = vmatpush.msra.mxu0 0.0
    %1350 = vmatpush.msra.mxu0 0.0
    %1351 = vmatpush.msra.mxu0 0.0
    %1352 = vmatpush.msra.mxu0 0.0
    %1353 = vmatpush.msra.mxu0 0.0
    %1354 = vmatpush.msra.mxu0 0.0
    %1355 = vmatpush.msra.mxu0 0.0
    %1356 = vmatpush.msra.mxu0 0.0
    %1357 = vmatpush.msra.mxu0 0.0
    %1358 = vmatpush.msra.mxu0 0.0
    %1359 = vmatpush.msra.mxu0 %v191
    %1360 = vmatmul.f32.gmra.mxu0 %v1342
    %v1361 = vpop.f32.mrf.mxu0
    %v1362 = vadd.f32 0.0, %v1361
    %1363 = vdwg.mxu0
    %v1365 = vsel %vm507, %v1312, 0
    %1367 = vmatpush.msra.mxu0 0.0
    %1368 = vmatpush.msra.mxu0 0.0
    %1369 = vmatpush.msra.mxu0 0.0
    %1370 = vmatpush.msra.mxu0 0.0
    %1371 = vmatpush.msra.mxu0 0.0
    %1372 = vmatpush.msra.mxu0 0.0
    %1373 = vmatpush.msra.mxu0 0.0
    %1374 = vmatpush.msra.mxu0 0.0
    %1375 = vmatpush.msra.mxu0 0.0
    %1376 = vmatpush.msra.mxu0 0.0
    %1377 = vmatpush.msra.mxu0 0.0
    %1378 = vmatpush.msra.mxu0 0.0
    %1379 = vmatpush.msra.mxu0 0.0
    %1380 = vmatpush.msra.mxu0 0.0
    %1381 = vmatpush.msra.mxu0 0.0
    %1382 = vmatpush.msra.mxu0 %v192
    %1383 = vmatmul.f32.gmra.mxu0 %v1365
    %v1384 = vpop.f32.mrf.mxu0
    %v1385 = vadd.f32 0.0, %v1384
    %1386 = vdwg.mxu0
    %v1388 = vsel %vm507, %v1313, 0
    %1390 = vmatpush.msra.mxu0 0.0
    %1391 = vmatpush.msra.mxu0 0.0
    %1392 = vmatpush.msra.mxu0 0.0
    %1393 = vmatpush.msra.mxu0 0.0
    %1394 = vmatpush.msra.mxu0 0.0
    %1395 = vmatpush.msra.mxu0 0.0
    %1396 = vmatpush.msra.mxu0 0.0
    %1397 = vmatpush.msra.mxu0 0.0
    %1398 = vmatpush.msra.mxu0 0.0
    %1399 = vmatpush.msra.mxu0 0.0
    %1400 = vmatpush.msra.mxu0 0.0
    %1401 = vmatpush.msra.mxu0 0.0
    %1402 = vmatpush.msra.mxu0 0.0
    %1403 = vmatpush.msra.mxu0 0.0
    %1404 = vmatpush.msra.mxu0 0.0
    %1405 = vmatpush.msra.mxu0 %v193
    %1406 = vmatmul.f32.gmra.mxu0 %v1388
    %v1407 = vpop.f32.mrf.mxu0
    %v1408 = vadd.f32 0.0, %v1407
    %1409 = vdwg.mxu0
    %v1411 = vsel %vm507, %v1314, 0
    %1413 = vmatpush.msra.mxu0 0.0
    %1414 = vmatpush.msra.mxu0 0.0
    %1415 = vmatpush.msra.mxu0 0.0
    %1416 = vmatpush.msra.mxu0 0.0
    %1417 = vmatpush.msra.mxu0 0.0
    %1418 = vmatpush.msra.mxu0 0.0
    %1419 = vmatpush.msra.mxu0 0.0
    %1420 = vmatpush.msra.mxu0 0.0
    %1421 = vmatpush.msra.mxu0 0.0
    %1422 = vmatpush.msra.mxu0 0.0
    %1423 = vmatpush.msra.mxu0 0.0
    %1424 = vmatpush.msra.mxu0 0.0
    %1425 = vmatpush.msra.mxu0 0.0
    %1426 = vmatpush.msra.mxu0 0.0
    %1427 = vmatpush.msra.mxu0 0.0
    %1428 = vmatpush.msra.mxu0 %v194
    %1429 = vmatmul.f32.gmra.mxu0 %v1411
    %v1430 = vpop.f32.mrf.mxu0
    %v1431 = vadd.f32 0.0, %v1430
    %1432 = vdwg.mxu0
    %v1434 = vsel %vm507, %v1315, 0
    %1436 = vmatpush.msra.mxu0 0.0
    %1437 = vmatpush.msra.mxu0 0.0
    %1438 = vmatpush.msra.mxu0 0.0
    %1439 = vmatpush.msra.mxu0 0.0
    %1440 = vmatpush.msra.mxu0 0.0
    %1441 = vmatpush.msra.mxu0 0.0
    %1442 = vmatpush.msra.mxu0 0.0
    %1443 = vmatpush.msra.mxu0 0.0
    %1444 = vmatpush.msra.mxu0 0.0
    %1445 = vmatpush.msra.mxu0 0.0
    %1446 = vmatpush.msra.mxu0 0.0
    %1447 = vmatpush.msra.mxu0 0.0
    %1448 = vmatpush.msra.mxu0 0.0
    %1449 = vmatpush.msra.mxu0 0.0
    %1450 = vmatpush.msra.mxu0 0.0
    %1451 = vmatpush.msra.mxu0 %v195
    %1452 = vmatmul.f32.gmra.mxu0 %v1434
    %v1453 = vpop.f32.mrf.mxu0
    %v1454 = vadd.f32 0.0, %v1453
    %1455 = vdwg.mxu0
    %v1457 = vsel %vm507, %v1316, 0
    %1459 = vmatpush.msra.mxu0 0.0
    %1460 = vmatpush.msra.mxu0 0.0
    %1461 = vmatpush.msra.mxu0 0.0
    %1462 = vmatpush.msra.mxu0 0.0
    %1463 = vmatpush.msra.mxu0 0.0
    %1464 = vmatpush.msra.mxu0 0.0
    %1465 = vmatpush.msra.mxu0 0.0
    %1466 = vmatpush.msra.mxu0 0.0
    %1467 = vmatpush.msra.mxu0 0.0
    %1468 = vmatpush.msra.mxu0 0.0
    %1469 = vmatpush.msra.mxu0 0.0
    %1470 = vmatpush.msra.mxu0 0.0
    %1471 = vmatpush.msra.mxu0 0.0
    %1472 = vmatpush.msra.mxu0 0.0
    %1473 = vmatpush.msra.mxu0 0.0
    %1474 = vmatpush.msra.mxu0 %v196
    %1475 = vmatmul.f32.gmra.mxu0 %v1457
    %v1476 = vpop.f32.mrf.mxu0
    %v1477 = vadd.f32 0.0, %v1476
    %1478 = vdwg.mxu0
    %v1480 = vsel %vm507, %v1317, 0
    %1482 = vmatpush.msra.mxu0 0.0
    %1483 = vmatpush.msra.mxu0 0.0
    %1484 = vmatpush.msra.mxu0 0.0
    %1485 = vmatpush.msra.mxu0 0.0
    %1486 = vmatpush.msra.mxu0 0.0
    %1487 = vmatpush.msra.mxu0 0.0
    %1488 = vmatpush.msra.mxu0 0.0
    %1489 = vmatpush.msra.mxu0 0.0
    %1490 = vmatpush.msra.mxu0 0.0
    %1491 = vmatpush.msra.mxu0 0.0
    %1492 = vmatpush.msra.mxu0 0.0
    %1493 = vmatpush.msra.mxu0 0.0
    %1494 = vmatpush.msra.mxu0 0.0
    %1495 = vmatpush.msra.mxu0 0.0
    %1496 = vmatpush.msra.mxu0 0.0
    %1497 = vmatpush.msra.mxu0 %v197
    %1498 = vmatmul.f32.gmra.mxu0 %v1480
    %v1499 = vpop.f32.mrf.mxu0
    %v1500 = vadd.f32 0.0, %v1499
    %1501 = vdwg.mxu0
    %s1502 = scalar_lea.vmem [#allocation3], 8
    %v1503 = vld [vmem:[%s1502] sm:$0xff]
    %v1512 = vrot.slane %v1362, 7
    %v1513 = vsel %vm486, %v1512, %v1339
    %v1514 = vrot.slane %v1385, 6
    %v1515 = vsel %vm489, %v1514, %v1513
    %v1516 = vrot.slane %v1408, 5
    %v1517 = vsel %vm492, %v1516, %v1515
    %v1518 = vrot.slane %v1431, 4
    %v1519 = vsel %vm495, %v1518, %v1517
    %v1520 = vrot.slane %v1454, 3
    %v1521 = vsel %vm498, %v1520, %v1519
    %v1522 = vrot.slane %v1477, 2
    %v1523 = vsel %vm501, %v1522, %v1521
    %v1524 = vrot.slane %v1500, 1
    %v1525 = vsel %vm504, %v1524, %v1523
    %v1526 = vsel %vm809, %v1525, 0
    %1528 = vmatpush.msra.mxu0 0.0
    %1529 = vmatpush.msra.mxu0 0.0
    %1530 = vmatpush.msra.mxu0 0.0
    %1531 = vmatpush.msra.mxu0 0.0
    %1532 = vmatpush.msra.mxu0 0.0
    %1533 = vmatpush.msra.mxu0 0.0
    %1534 = vmatpush.msra.mxu0 0.0
    %1535 = vmatpush.msra.mxu0 0.0
    %1536 = vmatpush.msra.mxu0 0.0
    %1537 = vmatpush.msra.mxu0 0.0
    %1538 = vmatpush.msra.mxu0 0.0
    %1539 = vmatpush.msra.mxu0 0.0
    %1540 = vmatpush.msra.mxu0 0.0
    %1541 = vmatpush.msra.mxu0 0.0
    %1542 = vmatpush.msra.mxu0 %v204
    %1543 = vmatpush.msra.mxu0 %v203
    %1544 = vmatmul.f32.gmra.mxu0 %v1526
    %v1545 = vpop.f32.mrf.mxu0
    %v1546 = vadd.f32 0.0, %v1545
    %1547 = vdwg.mxu0
    %v1548 = vadd.f32 %v1503, %v1546
    %1549 = vmatpush.msra.mxu0 0.0
    %1550 = vmatpush.msra.mxu0 0.0
    %1551 = vmatpush.msra.mxu0 0.0
    %1552 = vmatpush.msra.mxu0 0.0
    %1553 = vmatpush.msra.mxu0 0.0
    %1554 = vmatpush.msra.mxu0 0.0
    %1555 = vmatpush.msra.mxu0 0.0
    %1556 = vmatpush.msra.mxu0 0.0
    %1557 = vmatpush.msra.mxu0 0.0
    %1558 = vmatpush.msra.mxu0 0.0
    %1559 = vmatpush.msra.mxu0 0.0
    %1560 = vmatpush.msra.mxu0 0.0
    %1561 = vmatpush.msra.mxu0 %v208
    %1562 = vmatpush.msra.mxu0 %v207
    %1563 = vmatpush.msra.mxu0 %v206
    %1564 = vmatpush.msra.mxu0 %v205
    %1565 = vmatmul.f32.gmra.mxu0 %v916
    %v1566 = vpop.f32.mrf.mxu0
    %v1567 = vadd.f32 0.0, %v1566
    %1568 = vdwg.mxu0
    %v1569 = vadd.f32 %v1548, %v1567
    %v1570 = vxor.u32 %v1569, 2147483648
    %v1571 = vmul.f32 %v1570, 1.442695
    %v1572 = vpow.pop %v1571
    %v1573 = vadd.f32 %v1572, 1.0
    %v1574 = vrcp.pop %v1573
    %v1575 = vmul.f32 %v1573, %v1574
    %v1576 = vsub.f32 1.0, %v1575
    %v1577 = vmul.f32 %v1574, %v1576
    %v1578 = vadd.f32 %v1574, %v1577
    %vm1579 = vweird.f32 %v1573
    %vm1580 = vweird.f32 %v1574
    %vm1581 = vmor %vm1579, %vm1580
    %v1582 = vsel %vm1581, %v1574, %v1578
    %v1583 = vand.u32 2147483647, %v1573
    %vm1584 = vcmp.eq.f32.partialorder %v1583, 8.507059e+37
    %v1585 = vand.u32 %v1573, 2147483648
    %v1586 = vor.u32 1.1754944e-38, %v1585
    %v1587 = vsel %vm1584, %v1586, %v1582
    %v1588 = vmul.f32 1.0, %v1587
    %v1589 = vtanh.pop %v1569
    %v1590 = vmul.f32 %v1588, %v886
    %1592 = vrot.lane.b32.xlu0 %v1589, 64
    %v1593 = vpop.permute.xlu0 %1592
    %v1595 = vmul.f32 %v1588, %v1593
    %1597 = vrot.lane.b32.xlu0 %v1595, 32
    %v1598 = vpop.permute.xlu0 %1597
    %v1600 = vadd.f32 %v1590, %v1598
    %v1601 = vtanh.pop %v1600
    %1603 = vrot.lane.b32.xlu0 %v1601, 64
    %v1604 = vpop.permute.xlu0 %1603
    %v1606 = vmul.f32 %v1588, %v1604
    %1607 = vmatpush.msra.mxu0 0.0
    %1608 = vmatpush.msra.mxu0 0.0
    %1609 = vmatpush.msra.mxu0 0.0
    %1610 = vmatpush.msra.mxu0 0.0
    %1611 = vmatpush.msra.mxu0 0.0
    %1612 = vmatpush.msra.mxu0 0.0
    %1613 = vmatpush.msra.mxu0 0.0
    %1614 = vmatpush.msra.mxu0 0.0
    %1615 = vmatpush.msra.mxu0 0.0
    %1616 = vmatpush.msra.mxu0 0.0
    %1617 = vmatpush.msra.mxu0 0.0
    %1618 = vmatpush.msra.mxu0 0.0
    %1619 = vmatpush.msra.mxu0 %v216
    %1620 = vmatpush.msra.mxu0 %v215
    %1621 = vmatpush.msra.mxu0 %v214
    %1622 = vmatpush.msra.mxu0 %v213
    %1623 = vmatmul.f32.gmra.mxu0 %v987
    %v1624 = vpop.f32.mrf.mxu0
    %v1625 = vadd.f32 0.0, %v1624
    %1626 = vdwg.mxu0
    %1628 = vrot.lane.b32.xlu0 %v1606, 32
    %v1629 = vpop.permute.xlu0 %1628
    %v1630 = vsel %vm222, %v1629, 0
    %1632 = vmatpush.msra.mxu0 0.0
    %1633 = vmatpush.msra.mxu0 0.0
    %1634 = vmatpush.msra.mxu0 0.0
    %1635 = vmatpush.msra.mxu0 0.0
    %1636 = vmatpush.msra.mxu0 0.0
    %1637 = vmatpush.msra.mxu0 0.0
    %1638 = vmatpush.msra.mxu0 0.0
    %1639 = vmatpush.msra.mxu0 0.0
    %1640 = vmatpush.msra.mxu0 0.0
    %1641 = vmatpush.msra.mxu0 0.0
    %1642 = vmatpush.msra.mxu0 0.0
    %1643 = vmatpush.msra.mxu0 0.0
    %1644 = vmatpush.msra.mxu0 %v212
    %1645 = vmatpush.msra.mxu0 %v211
    %1646 = vmatpush.msra.mxu0 %v210
    %1647 = vmatpush.msra.mxu0 %v209
    %1648 = vmatmul.f32.gmra.mxu0 %v1630
    %v1649 = vpop.f32.mrf.mxu0
    %v1650 = vadd.f32 %v1625, %v1649
    %1651 = vdwg.mxu0
    %v1652 = vadd.f32 %v1650, %v939
    %v1653 = vxor.u32 %v1652, 2147483648
    %v1654 = vmul.f32 %v1653, 1.442695
    %v1655 = vpow.pop %v1654
    %v1656 = vadd.f32 %v1655, 1.0
    %v1657 = vrcp.pop %v1656
    %v1658 = vmul.f32 %v1656, %v1657
    %v1659 = vsub.f32 1.0, %v1658
    %v1660 = vmul.f32 %v1657, %v1659
    %v1661 = vadd.f32 %v1657, %v1660
    %vm1662 = vweird.f32 %v1656
    %vm1663 = vweird.f32 %v1657
    %vm1664 = vmor %vm1662, %vm1663
    %v1665 = vsel %vm1664, %v1657, %v1661
    %v1666 = vand.u32 2147483647, %v1656
    %vm1667 = vcmp.eq.f32.partialorder %v1666, 8.507059e+37
    %v1668 = vand.u32 %v1656, 2147483648
    %v1669 = vor.u32 1.1754944e-38, %v1668
    %v1670 = vsel %vm1667, %v1669, %v1665
    %v1671 = vmul.f32 1.0, %v1670
    %v1672 = vtanh.pop %v1652
    %v1673 = vmul.f32 %v1671, %v973
    %1675 = vrot.lane.b32.xlu0 %v1672, 64
    %v1676 = vpop.permute.xlu0 %1675
    %v1678 = vmul.f32 %v1671, %v1676
    %1680 = vrot.lane.b32.xlu0 %v1678, 32
    %v1681 = vpop.permute.xlu0 %1680
    %v1683 = vadd.f32 %v1673, %v1681
    %v1684 = vtanh.pop %v1683
    %1686 = vrot.lane.b32.xlu0 %v1684, 64
    %v1687 = vpop.permute.xlu0 %1686
    %v1689 = vmul.f32 %v1671, %v1687
    %1691 = vrot.lane.b32.xlu0 %v1689, 32
    %v1692 = vpop.permute.xlu0 %1691
    %s1694 = scalar_lea.vmem [#allocation18], 8
    %1695 = vst.msk [vmem:[%s1694] sm:$0xff] %vm222, %v1692
    %s1697 = scalar_lea.vmem [#allocation19], 8
    %1698 = vst.msk [vmem:[%s1697] sm:$0xff] %vm809, %v1525
    %v1699 = vsel %vm222, %v1692, 0
    %1701 = vmatpush.msra.mxu0 0.0
    %1702 = vmatpush.msra.mxu0 0.0
    %1703 = vmatpush.msra.mxu0 0.0
    %1704 = vmatpush.msra.mxu0 0.0
    %1705 = vmatpush.msra.mxu0 0.0
    %1706 = vmatpush.msra.mxu0 0.0
    %1707 = vmatpush.msra.mxu0 0.0
    %1708 = vmatpush.msra.mxu0 0.0
    %1709 = vmatpush.msra.mxu0 0.0
    %1710 = vmatpush.msra.mxu0 0.0
    %1711 = vmatpush.msra.mxu0 0.0
    %1712 = vmatpush.msra.mxu0 0.0
    %1713 = vmatpush.msra.mxu0 %v202
    %1714 = vmatpush.msra.mxu0 %v201
    %1715 = vmatpush.msra.mxu0 %v200
    %1716 = vmatpush.msra.mxu0 %v199
    %1717 = vmatmul.f32.gmra.mxu0 %v1699
    %v1718 = vpop.f32.mrf.mxu0
    %v1719 = vadd.f32 0.0, %v1718
    %1720 = vdwg.mxu0
    %v1722 = vrot.slane %v1719, 1
    %v1723 = vrot.slane %v1719, 2
    %v1724 = vrot.slane %v1719, 3
    %v1725 = vrot.slane %v1719, 4
    %v1726 = vrot.slane %v1719, 5
    %v1727 = vrot.slane %v1719, 6
    %v1728 = vrot.slane %v1719, 7
    %v1729 = vsel %vm222, %v1719, 0
    %1731 = vmatpush.xpose.msra.mxu0 0.0
    %1732 = vmatpush.xpose.msra.mxu0 0.0
    %1733 = vmatpush.xpose.msra.mxu0 0.0
    %1734 = vmatpush.xpose.msra.mxu0 0.0
    %1735 = vmatpush.xpose.msra.mxu0 0.0
    %1736 = vmatpush.xpose.msra.mxu0 0.0
    %1737 = vmatpush.xpose.msra.mxu0 0.0
    %1738 = vmatpush.xpose.msra.mxu0 0.0
    %1739 = vmatpush.xpose.msra.mxu0 0.0
    %1740 = vmatpush.xpose.msra.mxu0 0.0
    %1741 = vmatpush.xpose.msra.mxu0 0.0
    %1742 = vmatpush.xpose.msra.mxu0 0.0
    %1743 = vmatpush.xpose.msra.mxu0 0.0
    %1744 = vmatpush.xpose.msra.mxu0 0.0
    %1745 = vmatpush.xpose.msra.mxu0 0.0
    %1746 = vmatpush.xpose.msra.mxu0 %v256
    %1747 = vmatmul.f32.gmra.mxu0 %v1729
    %v1748 = vpop.f32.mrf.mxu0
    %v1749 = vadd.f32 0.0, %v1748
    %1750 = vdwg.mxu0
    %v1751 = vsel %vm222, %v1722, 0
    %1753 = vmatpush.xpose.msra.mxu0 0.0
    %1754 = vmatpush.xpose.msra.mxu0 0.0
    %1755 = vmatpush.xpose.msra.mxu0 0.0
    %1756 = vmatpush.xpose.msra.mxu0 0.0
    %1757 = vmatpush.xpose.msra.mxu0 0.0
    %1758 = vmatpush.xpose.msra.mxu0 0.0
    %1759 = vmatpush.xpose.msra.mxu0 0.0
    %1760 = vmatpush.xpose.msra.mxu0 0.0
    %1761 = vmatpush.xpose.msra.mxu0 0.0
    %1762 = vmatpush.xpose.msra.mxu0 0.0
    %1763 = vmatpush.xpose.msra.mxu0 0.0
    %1764 = vmatpush.xpose.msra.mxu0 0.0
    %1765 = vmatpush.xpose.msra.mxu0 0.0
    %1766 = vmatpush.xpose.msra.mxu0 0.0
    %1767 = vmatpush.xpose.msra.mxu0 0.0
    %1768 = vmatpush.xpose.msra.mxu0 %v281
    %1769 = vmatmul.f32.gmra.mxu0 %v1751
    %v1770 = vpop.f32.mrf.mxu0
    %v1771 = vadd.f32 0.0, %v1770
    %1772 = vdwg.mxu0
    %v1773 = vsel %vm222, %v1723, 0
    %1775 = vmatpush.xpose.msra.mxu0 0.0
    %1776 = vmatpush.xpose.msra.mxu0 0.0
    %1777 = vmatpush.xpose.msra.mxu0 0.0
    %1778 = vmatpush.xpose.msra.mxu0 0.0
    %1779 = vmatpush.xpose.msra.mxu0 0.0
    %1780 = vmatpush.xpose.msra.mxu0 0.0
    %1781 = vmatpush.xpose.msra.mxu0 0.0
    %1782 = vmatpush.xpose.msra.mxu0 0.0
    %1783 = vmatpush.xpose.msra.mxu0 0.0
    %1784 = vmatpush.xpose.msra.mxu0 0.0
    %1785 = vmatpush.xpose.msra.mxu0 0.0
    %1786 = vmatpush.xpose.msra.mxu0 0.0
    %1787 = vmatpush.xpose.msra.mxu0 0.0
    %1788 = vmatpush.xpose.msra.mxu0 0.0
    %1789 = vmatpush.xpose.msra.mxu0 0.0
    %1790 = vmatpush.xpose.msra.mxu0 %v306
    %1791 = vmatmul.f32.gmra.mxu0 %v1773
    %v1792 = vpop.f32.mrf.mxu0
    %v1793 = vadd.f32 0.0, %v1792
    %1794 = vdwg.mxu0
    %v1795 = vsel %vm222, %v1724, 0
    %1797 = vmatpush.xpose.msra.mxu0 0.0
    %1798 = vmatpush.xpose.msra.mxu0 0.0
    %1799 = vmatpush.xpose.msra.mxu0 0.0
    %1800 = vmatpush.xpose.msra.mxu0 0.0
    %1801 = vmatpush.xpose.msra.mxu0 0.0
    %1802 = vmatpush.xpose.msra.mxu0 0.0
    %1803 = vmatpush.xpose.msra.mxu0 0.0
    %1804 = vmatpush.xpose.msra.mxu0 0.0
    %1805 = vmatpush.xpose.msra.mxu0 0.0
    %1806 = vmatpush.xpose.msra.mxu0 0.0
    %1807 = vmatpush.xpose.msra.mxu0 0.0
    %1808 = vmatpush.xpose.msra.mxu0 0.0
    %1809 = vmatpush.xpose.msra.mxu0 0.0
    %1810 = vmatpush.xpose.msra.mxu0 0.0
    %1811 = vmatpush.xpose.msra.mxu0 0.0
    %1812 = vmatpush.xpose.msra.mxu0 %v331
    %1813 = vmatmul.f32.gmra.mxu0 %v1795
    %v1814 = vpop.f32.mrf.mxu0
    %v1815 = vadd.f32 0.0, %v1814
    %1816 = vdwg.mxu0
    %v1817 = vsel %vm222, %v1725, 0
    %1819 = vmatpush.xpose.msra.mxu0 0.0
    %1820 = vmatpush.xpose.msra.mxu0 0.0
    %1821 = vmatpush.xpose.msra.mxu0 0.0
    %1822 = vmatpush.xpose.msra.mxu0 0.0
    %1823 = vmatpush.xpose.msra.mxu0 0.0
    %1824 = vmatpush.xpose.msra.mxu0 0.0
    %1825 = vmatpush.xpose.msra.mxu0 0.0
    %1826 = vmatpush.xpose.msra.mxu0 0.0
    %1827 = vmatpush.xpose.msra.mxu0 0.0
    %1828 = vmatpush.xpose.msra.mxu0 0.0
    %1829 = vmatpush.xpose.msra.mxu0 0.0
    %1830 = vmatpush.xpose.msra.mxu0 0.0
    %1831 = vmatpush.xpose.msra.mxu0 0.0
    %1832 = vmatpush.xpose.msra.mxu0 0.0
    %1833 = vmatpush.xpose.msra.mxu0 0.0
    %1834 = vmatpush.xpose.msra.mxu0 %v356
    %1835 = vmatmul.f32.gmra.mxu0 %v1817
    %v1836 = vpop.f32.mrf.mxu0
    %v1837 = vadd.f32 0.0, %v1836
    %1838 = vdwg.mxu0
    %v1839 = vsel %vm222, %v1726, 0
    %1841 = vmatpush.xpose.msra.mxu0 0.0
    %1842 = vmatpush.xpose.msra.mxu0 0.0
    %1843 = vmatpush.xpose.msra.mxu0 0.0
    %1844 = vmatpush.xpose.msra.mxu0 0.0
    %1845 = vmatpush.xpose.msra.mxu0 0.0
    %1846 = vmatpush.xpose.msra.mxu0 0.0
    %1847 = vmatpush.xpose.msra.mxu0 0.0
    %1848 = vmatpush.xpose.msra.mxu0 0.0
    %1849 = vmatpush.xpose.msra.mxu0 0.0
    %1850 = vmatpush.xpose.msra.mxu0 0.0
    %1851 = vmatpush.xpose.msra.mxu0 0.0
    %1852 = vmatpush.xpose.msra.mxu0 0.0
    %1853 = vmatpush.xpose.msra.mxu0 0.0
    %1854 = vmatpush.xpose.msra.mxu0 0.0
    %1855 = vmatpush.xpose.msra.mxu0 0.0
    %1856 = vmatpush.xpose.msra.mxu0 %v381
    %1857 = vmatmul.f32.gmra.mxu0 %v1839
    %v1858 = vpop.f32.mrf.mxu0
    %v1859 = vadd.f32 0.0, %v1858
    %1860 = vdwg.mxu0
    %v1861 = vsel %vm222, %v1727, 0
    %1863 = vmatpush.xpose.msra.mxu0 0.0
    %1864 = vmatpush.xpose.msra.mxu0 0.0
    %1865 = vmatpush.xpose.msra.mxu0 0.0
    %1866 = vmatpush.xpose.msra.mxu0 0.0
    %1867 = vmatpush.xpose.msra.mxu0 0.0
    %1868 = vmatpush.xpose.msra.mxu0 0.0
    %1869 = vmatpush.xpose.msra.mxu0 0.0
    %1870 = vmatpush.xpose.msra.mxu0 0.0
    %1871 = vmatpush.xpose.msra.mxu0 0.0
    %1872 = vmatpush.xpose.msra.mxu0 0.0
    %1873 = vmatpush.xpose.msra.mxu0 0.0
    %1874 = vmatpush.xpose.msra.mxu0 0.0
    %1875 = vmatpush.xpose.msra.mxu0 0.0
    %1876 = vmatpush.xpose.msra.mxu0 0.0
    %1877 = vmatpush.xpose.msra.mxu0 0.0
    %1878 = vmatpush.xpose.msra.mxu0 %v406
    %1879 = vmatmul.f32.gmra.mxu0 %v1861
    %v1880 = vpop.f32.mrf.mxu0
    %v1881 = vadd.f32 0.0, %v1880
    %1882 = vdwg.mxu0
    %v1883 = vsel %vm222, %v1728, 0
    %1885 = vmatpush.xpose.msra.mxu0 0.0
    %1886 = vmatpush.xpose.msra.mxu0 0.0
    %1887 = vmatpush.xpose.msra.mxu0 0.0
    %1888 = vmatpush.xpose.msra.mxu0 0.0
    %1889 = vmatpush.xpose.msra.mxu0 0.0
    %1890 = vmatpush.xpose.msra.mxu0 0.0
    %1891 = vmatpush.xpose.msra.mxu0 0.0
    %1892 = vmatpush.xpose.msra.mxu0 0.0
    %1893 = vmatpush.xpose.msra.mxu0 0.0
    %1894 = vmatpush.xpose.msra.mxu0 0.0
    %1895 = vmatpush.xpose.msra.mxu0 0.0
    %1896 = vmatpush.xpose.msra.mxu0 0.0
    %1897 = vmatpush.xpose.msra.mxu0 0.0
    %1898 = vmatpush.xpose.msra.mxu0 0.0
    %1899 = vmatpush.xpose.msra.mxu0 0.0
    %1900 = vmatpush.xpose.msra.mxu0 %v431
    %1901 = vmatmul.f32.gmra.mxu0 %v1883
    %v1902 = vpop.f32.mrf.mxu0
    %v1903 = vadd.f32 0.0, %v1902
    %1904 = vdwg.mxu0
    %v1905 = vadd.f32 %v1749, %v198
    %v1906 = vadd.f32 %v1771, %v454
    %v1907 = vadd.f32 %v1793, %v455
    %v1908 = vadd.f32 %v1815, %v456
    %v1909 = vadd.f32 %v1837, %v457
    %v1910 = vadd.f32 %v1859, %v458
    %v1911 = vadd.f32 %v1881, %v459
    %v1912 = vadd.f32 %v1903, %v460
    %v1921 = vrot.slane %v1906, 7
    %v1922 = vsel %vm486, %v1921, %v1905
    %v1923 = vrot.slane %v1907, 6
    %v1924 = vsel %vm489, %v1923, %v1922
    %v1925 = vrot.slane %v1908, 5
    %v1926 = vsel %vm492, %v1925, %v1924
    %v1927 = vrot.slane %v1909, 4
    %v1928 = vsel %vm495, %v1927, %v1926
    %v1929 = vrot.slane %v1910, 3
    %v1930 = vsel %vm498, %v1929, %v1928
    %v1931 = vrot.slane %v1911, 2
    %v1932 = vsel %vm501, %v1931, %v1930
    %v1933 = vrot.slane %v1912, 1
    %v1934 = vsel %vm504, %v1933, %v1932
    %v1936 = vsel %vm507, %v1934, -inf
    %1937 = vmax.xlane.f32.xlu0 %v1936
    %v1938 = vpop.xlane.xlu0 %1937
    %v1940 = vrot.slane %v1938, 1
    %v1941 = vrot.slane %v1938, 2
    %v1942 = vrot.slane %v1938, 3
    %v1943 = vrot.slane %v1938, 4
    %v1944 = vrot.slane %v1938, 5
    %v1945 = vrot.slane %v1938, 6
    %v1946 = vrot.slane %v1938, 7
    %v1955 = vsub.f32 %v1905, %v1938
    %v1956 = vsub.f32 %v1906, %v1940
    %v1957 = vsub.f32 %v1907, %v1941
    %v1958 = vsub.f32 %v1908, %v1942
    %v1959 = vsub.f32 %v1909, %v1943
    %v1960 = vsub.f32 %v1910, %v1944
    %v1961 = vsub.f32 %v1911, %v1945
    %v1962 = vsub.f32 %v1912, %v1946
    %v1963 = vmul.f32 %v1955, 1.442695
    %v1964 = vpow.pop %v1963
    %v1965 = vmul.f32 %v1956, 1.442695
    %v1966 = vpow.pop %v1965
    %v1967 = vmul.f32 %v1957, 1.442695
    %v1968 = vpow.pop %v1967
    %v1969 = vmul.f32 %v1958, 1.442695
    %v1970 = vpow.pop %v1969
    %v1971 = vmul.f32 %v1959, 1.442695
    %v1972 = vpow.pop %v1971
    %v1973 = vmul.f32 %v1960, 1.442695
    %v1974 = vpow.pop %v1973
    %v1975 = vmul.f32 %v1961, 1.442695
    %v1976 = vpow.pop %v1975
    %v1977 = vmul.f32 %v1962, 1.442695
    %v1978 = vpow.pop %v1977
    %v1987 = vrot.slane %v1966, 7
    %v1988 = vsel %vm486, %v1987, %v1964
    %v1989 = vrot.slane %v1968, 6
    %v1990 = vsel %vm489, %v1989, %v1988
    %v1991 = vrot.slane %v1970, 5
    %v1992 = vsel %vm492, %v1991, %v1990
    %v1993 = vrot.slane %v1972, 4
    %v1994 = vsel %vm495, %v1993, %v1992
    %v1995 = vrot.slane %v1974, 3
    %v1996 = vsel %vm498, %v1995, %v1994
    %v1997 = vrot.slane %v1976, 2
    %v1998 = vsel %vm501, %v1997, %v1996
    %v1999 = vrot.slane %v1978, 1
    %v2000 = vsel %vm504, %v1999, %v1998
    %v2002 = vsel %vm507, %v2000, 0.0
    %2003 = vadd.xlane.f32.xlu0 %v2002
    %v2004 = vpop.xlane.xlu0 %2003
    %v2005 = vrcp.pop %v2004
    %v2007 = vrot.slane %v2005, 1
    %v2008 = vrot.slane %v2005, 2
    %v2009 = vrot.slane %v2005, 3
    %v2010 = vrot.slane %v2005, 4
    %v2011 = vrot.slane %v2005, 5
    %v2012 = vrot.slane %v2005, 6
    %v2013 = vrot.slane %v2005, 7
    %v2022 = vmul.f32 %v1964, %v2005
    %v2023 = vmul.f32 %v1966, %v2007
    %v2024 = vmul.f32 %v1968, %v2008
    %v2025 = vmul.f32 %v1970, %v2009
    %v2026 = vmul.f32 %v1972, %v2010
    %v2027 = vmul.f32 %v1974, %v2011
    %v2028 = vmul.f32 %v1976, %v2012
    %v2029 = vmul.f32 %v1978, %v2013
    %v2031 = vsel %vm507, %v2022, 0
    %2033 = vmatpush.msra.mxu0 0.0
    %2034 = vmatpush.msra.mxu0 0.0
    %2035 = vmatpush.msra.mxu0 0.0
    %2036 = vmatpush.msra.mxu0 0.0
    %2037 = vmatpush.msra.mxu0 0.0
    %2038 = vmatpush.msra.mxu0 0.0
    %2039 = vmatpush.msra.mxu0 0.0
    %2040 = vmatpush.msra.mxu0 0.0
    %2041 = vmatpush.msra.mxu0 0.0
    %2042 = vmatpush.msra.mxu0 0.0
    %2043 = vmatpush.msra.mxu0 0.0
    %2044 = vmatpush.msra.mxu0 0.0
    %2045 = vmatpush.msra.mxu0 0.0
    %2046 = vmatpush.msra.mxu0 0.0
    %2047 = vmatpush.msra.mxu0 0.0
    %2048 = vmatpush.msra.mxu0 %v190
    %2049 = vmatmul.f32.gmra.mxu0 %v2031
    %v2050 = vpop.f32.mrf.mxu0
    %v2051 = vadd.f32 0.0, %v2050
    %2052 = vdwg.mxu0
    %v2054 = vsel %vm507, %v2023, 0
    %2056 = vmatpush.msra.mxu0 0.0
    %2057 = vmatpush.msra.mxu0 0.0
    %2058 = vmatpush.msra.mxu0 0.0
    %2059 = vmatpush.msra.mxu0 0.0
    %2060 = vmatpush.msra.mxu0 0.0
    %2061 = vmatpush.msra.mxu0 0.0
    %2062 = vmatpush.msra.mxu0 0.0
    %2063 = vmatpush.msra.mxu0 0.0
    %2064 = vmatpush.msra.mxu0 0.0
    %2065 = vmatpush.msra.mxu0 0.0
    %2066 = vmatpush.msra.mxu0 0.0
    %2067 = vmatpush.msra.mxu0 0.0
    %2068 = vmatpush.msra.mxu0 0.0
    %2069 = vmatpush.msra.mxu0 0.0
    %2070 = vmatpush.msra.mxu0 0.0
    %2071 = vmatpush.msra.mxu0 %v191
    %2072 = vmatmul.f32.gmra.mxu0 %v2054
    %v2073 = vpop.f32.mrf.mxu0
    %v2074 = vadd.f32 0.0, %v2073
    %2075 = vdwg.mxu0
    %v2077 = vsel %vm507, %v2024, 0
    %2079 = vmatpush.msra.mxu0 0.0
    %2080 = vmatpush.msra.mxu0 0.0
    %2081 = vmatpush.msra.mxu0 0.0
    %2082 = vmatpush.msra.mxu0 0.0
    %2083 = vmatpush.msra.mxu0 0.0
    %2084 = vmatpush.msra.mxu0 0.0
    %2085 = vmatpush.msra.mxu0 0.0
    %2086 = vmatpush.msra.mxu0 0.0
    %2087 = vmatpush.msra.mxu0 0.0
    %2088 = vmatpush.msra.mxu0 0.0
    %2089 = vmatpush.msra.mxu0 0.0
    %2090 = vmatpush.msra.mxu0 0.0
    %2091 = vmatpush.msra.mxu0 0.0
    %2092 = vmatpush.msra.mxu0 0.0
    %2093 = vmatpush.msra.mxu0 0.0
    %2094 = vmatpush.msra.mxu0 %v192
    %2095 = vmatmul.f32.gmra.mxu0 %v2077
    %v2096 = vpop.f32.mrf.mxu0
    %v2097 = vadd.f32 0.0, %v2096
    %2098 = vdwg.mxu0
    %v2100 = vsel %vm507, %v2025, 0
    %2102 = vmatpush.msra.mxu0 0.0
    %2103 = vmatpush.msra.mxu0 0.0
    %2104 = vmatpush.msra.mxu0 0.0
    %2105 = vmatpush.msra.mxu0 0.0
    %2106 = vmatpush.msra.mxu0 0.0
    %2107 = vmatpush.msra.mxu0 0.0
    %2108 = vmatpush.msra.mxu0 0.0
    %2109 = vmatpush.msra.mxu0 0.0
    %2110 = vmatpush.msra.mxu0 0.0
    %2111 = vmatpush.msra.mxu0 0.0
    %2112 = vmatpush.msra.mxu0 0.0
    %2113 = vmatpush.msra.mxu0 0.0
    %2114 = vmatpush.msra.mxu0 0.0
    %2115 = vmatpush.msra.mxu0 0.0
    %2116 = vmatpush.msra.mxu0 0.0
    %2117 = vmatpush.msra.mxu0 %v193
    %2118 = vmatmul.f32.gmra.mxu0 %v2100
    %v2119 = vpop.f32.mrf.mxu0
    %v2120 = vadd.f32 0.0, %v2119
    %2121 = vdwg.mxu0
    %v2123 = vsel %vm507, %v2026, 0
    %2125 = vmatpush.msra.mxu0 0.0
    %2126 = vmatpush.msra.mxu0 0.0
    %2127 = vmatpush.msra.mxu0 0.0
    %2128 = vmatpush.msra.mxu0 0.0
    %2129 = vmatpush.msra.mxu0 0.0
    %2130 = vmatpush.msra.mxu0 0.0
    %2131 = vmatpush.msra.mxu0 0.0
    %2132 = vmatpush.msra.mxu0 0.0
    %2133 = vmatpush.msra.mxu0 0.0
    %2134 = vmatpush.msra.mxu0 0.0
    %2135 = vmatpush.msra.mxu0 0.0
    %2136 = vmatpush.msra.mxu0 0.0
    %2137 = vmatpush.msra.mxu0 0.0
    %2138 = vmatpush.msra.mxu0 0.0
    %2139 = vmatpush.msra.mxu0 0.0
    %2140 = vmatpush.msra.mxu0 %v194
    %2141 = vmatmul.f32.gmra.mxu0 %v2123
    %v2142 = vpop.f32.mrf.mxu0
    %v2143 = vadd.f32 0.0, %v2142
    %2144 = vdwg.mxu0
    %v2146 = vsel %vm507, %v2027, 0
    %2148 = vmatpush.msra.mxu0 0.0
    %2149 = vmatpush.msra.mxu0 0.0
    %2150 = vmatpush.msra.mxu0 0.0
    %2151 = vmatpush.msra.mxu0 0.0
    %2152 = vmatpush.msra.mxu0 0.0
    %2153 = vmatpush.msra.mxu0 0.0
    %2154 = vmatpush.msra.mxu0 0.0
    %2155 = vmatpush.msra.mxu0 0.0
    %2156 = vmatpush.msra.mxu0 0.0
    %2157 = vmatpush.msra.mxu0 0.0
    %2158 = vmatpush.msra.mxu0 0.0
    %2159 = vmatpush.msra.mxu0 0.0
    %2160 = vmatpush.msra.mxu0 0.0
    %2161 = vmatpush.msra.mxu0 0.0
    %2162 = vmatpush.msra.mxu0 0.0
    %2163 = vmatpush.msra.mxu0 %v195
    %2164 = vmatmul.f32.gmra.mxu0 %v2146
    %v2165 = vpop.f32.mrf.mxu0
    %v2166 = vadd.f32 0.0, %v2165
    %2167 = vdwg.mxu0
    %v2169 = vsel %vm507, %v2028, 0
    %2171 = vmatpush.msra.mxu0 0.0
    %2172 = vmatpush.msra.mxu0 0.0
    %2173 = vmatpush.msra.mxu0 0.0
    %2174 = vmatpush.msra.mxu0 0.0
    %2175 = vmatpush.msra.mxu0 0.0
    %2176 = vmatpush.msra.mxu0 0.0
    %2177 = vmatpush.msra.mxu0 0.0
    %2178 = vmatpush.msra.mxu0 0.0
    %2179 = vmatpush.msra.mxu0 0.0
    %2180 = vmatpush.msra.mxu0 0.0
    %2181 = vmatpush.msra.mxu0 0.0
    %2182 = vmatpush.msra.mxu0 0.0
    %2183 = vmatpush.msra.mxu0 0.0
    %2184 = vmatpush.msra.mxu0 0.0
    %2185 = vmatpush.msra.mxu0 0.0
    %2186 = vmatpush.msra.mxu0 %v196
    %2187 = vmatmul.f32.gmra.mxu0 %v2169
    %v2188 = vpop.f32.mrf.mxu0
    %v2189 = vadd.f32 0.0, %v2188
    %2190 = vdwg.mxu0
    %v2192 = vsel %vm507, %v2029, 0
    %2194 = vmatpush.msra.mxu0 0.0
    %2195 = vmatpush.msra.mxu0 0.0
    %2196 = vmatpush.msra.mxu0 0.0
    %2197 = vmatpush.msra.mxu0 0.0
    %2198 = vmatpush.msra.mxu0 0.0
    %2199 = vmatpush.msra.mxu0 0.0
    %2200 = vmatpush.msra.mxu0 0.0
    %2201 = vmatpush.msra.mxu0 0.0
    %2202 = vmatpush.msra.mxu0 0.0
    %2203 = vmatpush.msra.mxu0 0.0
    %2204 = vmatpush.msra.mxu0 0.0
    %2205 = vmatpush.msra.mxu0 0.0
    %2206 = vmatpush.msra.mxu0 0.0
    %2207 = vmatpush.msra.mxu0 0.0
    %2208 = vmatpush.msra.mxu0 0.0
    %2209 = vmatpush.msra.mxu0 %v197
    %2210 = vmatmul.f32.gmra.mxu0 %v2192
    %v2211 = vpop.f32.mrf.mxu0
    %v2212 = vadd.f32 0.0, %v2211
    %2213 = vdwg.mxu0
    %s2214 = scalar_lea.vmem [#allocation3], 16
    %v2215 = vld [vmem:[%s2214] sm:$0xff]
    %v2224 = vrot.slane %v2074, 7
    %v2225 = vsel %vm486, %v2224, %v2051
    %v2226 = vrot.slane %v2097, 6
    %v2227 = vsel %vm489, %v2226, %v2225
    %v2228 = vrot.slane %v2120, 5
    %v2229 = vsel %vm492, %v2228, %v2227
    %v2230 = vrot.slane %v2143, 4
    %v2231 = vsel %vm495, %v2230, %v2229
    %v2232 = vrot.slane %v2166, 3
    %v2233 = vsel %vm498, %v2232, %v2231
    %v2234 = vrot.slane %v2189, 2
    %v2235 = vsel %vm501, %v2234, %v2233
    %v2236 = vrot.slane %v2212, 1
    %v2237 = vsel %vm504, %v2236, %v2235
    %v2238 = vsel %vm809, %v2237, 0
    %2240 = vmatpush.msra.mxu0 0.0
    %2241 = vmatpush.msra.mxu0 0.0
    %2242 = vmatpush.msra.mxu0 0.0
    %2243 = vmatpush.msra.mxu0 0.0
    %2244 = vmatpush.msra.mxu0 0.0
    %2245 = vmatpush.msra.mxu0 0.0
    %2246 = vmatpush.msra.mxu0 0.0
    %2247 = vmatpush.msra.mxu0 0.0
    %2248 = vmatpush.msra.mxu0 0.0
    %2249 = vmatpush.msra.mxu0 0.0
    %2250 = vmatpush.msra.mxu0 0.0
    %2251 = vmatpush.msra.mxu0 0.0
    %2252 = vmatpush.msra.mxu0 0.0
    %2253 = vmatpush.msra.mxu0 0.0
    %2254 = vmatpush.msra.mxu0 %v204
    %2255 = vmatpush.msra.mxu0 %v203
    %2256 = vmatmul.f32.gmra.mxu0 %v2238
    %v2257 = vpop.f32.mrf.mxu0
    %v2258 = vadd.f32 0.0, %v2257
    %2259 = vdwg.mxu0
    %v2260 = vadd.f32 %v2215, %v2258
    %2261 = vmatpush.msra.mxu0 0.0
    %2262 = vmatpush.msra.mxu0 0.0
    %2263 = vmatpush.msra.mxu0 0.0
    %2264 = vmatpush.msra.mxu0 0.0
    %2265 = vmatpush.msra.mxu0 0.0
    %2266 = vmatpush.msra.mxu0 0.0
    %2267 = vmatpush.msra.mxu0 0.0
    %2268 = vmatpush.msra.mxu0 0.0
    %2269 = vmatpush.msra.mxu0 0.0
    %2270 = vmatpush.msra.mxu0 0.0
    %2271 = vmatpush.msra.mxu0 0.0
    %2272 = vmatpush.msra.mxu0 0.0
    %2273 = vmatpush.msra.mxu0 %v208
    %2274 = vmatpush.msra.mxu0 %v207
    %2275 = vmatpush.msra.mxu0 %v206
    %2276 = vmatpush.msra.mxu0 %v205
    %2277 = vmatmul.f32.gmra.mxu0 %v1630
    %v2278 = vpop.f32.mrf.mxu0
    %v2279 = vadd.f32 0.0, %v2278
    %2280 = vdwg.mxu0
    %v2281 = vadd.f32 %v2260, %v2279
    %v2282 = vxor.u32 %v2281, 2147483648
    %v2283 = vmul.f32 %v2282, 1.442695
    %v2284 = vpow.pop %v2283
    %v2285 = vadd.f32 %v2284, 1.0
    %v2286 = vrcp.pop %v2285
    %v2287 = vmul.f32 %v2285, %v2286
    %v2288 = vsub.f32 1.0, %v2287
    %v2289 = vmul.f32 %v2286, %v2288
    %v2290 = vadd.f32 %v2286, %v2289
    %vm2291 = vweird.f32 %v2285
    %vm2292 = vweird.f32 %v2286
    %vm2293 = vmor %vm2291, %vm2292
    %v2294 = vsel %vm2293, %v2286, %v2290
    %v2295 = vand.u32 2147483647, %v2285
    %vm2296 = vcmp.eq.f32.partialorder %v2295, 8.507059e+37
    %v2297 = vand.u32 %v2285, 2147483648
    %v2298 = vor.u32 1.1754944e-38, %v2297
    %v2299 = vsel %vm2296, %v2298, %v2294
    %v2300 = vmul.f32 1.0, %v2299
    %v2301 = vtanh.pop %v2281
    %v2302 = vmul.f32 %v2300, %v1600
    %2304 = vrot.lane.b32.xlu0 %v2301, 64
    %v2305 = vpop.permute.xlu0 %2304
    %v2307 = vmul.f32 %v2300, %v2305
    %2309 = vrot.lane.b32.xlu0 %v2307, 32
    %v2310 = vpop.permute.xlu0 %2309
    %v2312 = vadd.f32 %v2302, %v2310
    %v2313 = vtanh.pop %v2312
    %2315 = vrot.lane.b32.xlu0 %v2313, 64
    %v2316 = vpop.permute.xlu0 %2315
    %v2318 = vmul.f32 %v2300, %v2316
    %2319 = vmatpush.msra.mxu0 0.0
    %2320 = vmatpush.msra.mxu0 0.0
    %2321 = vmatpush.msra.mxu0 0.0
    %2322 = vmatpush.msra.mxu0 0.0
    %2323 = vmatpush.msra.mxu0 0.0
    %2324 = vmatpush.msra.mxu0 0.0
    %2325 = vmatpush.msra.mxu0 0.0
    %2326 = vmatpush.msra.mxu0 0.0
    %2327 = vmatpush.msra.mxu0 0.0
    %2328 = vmatpush.msra.mxu0 0.0
    %2329 = vmatpush.msra.mxu0 0.0
    %2330 = vmatpush.msra.mxu0 0.0
    %2331 = vmatpush.msra.mxu0 %v216
    %2332 = vmatpush.msra.mxu0 %v215
    %2333 = vmatpush.msra.mxu0 %v214
    %2334 = vmatpush.msra.mxu0 %v213
    %2335 = vmatmul.f32.gmra.mxu0 %v1699
    %v2336 = vpop.f32.mrf.mxu0
    %v2337 = vadd.f32 0.0, %v2336
    %2338 = vdwg.mxu0
    %2340 = vrot.lane.b32.xlu0 %v2318, 32
    %v2341 = vpop.permute.xlu0 %2340
    %v2342 = vsel %vm222, %v2341, 0
    %2344 = vmatpush.msra.mxu0 0.0
    %2345 = vmatpush.msra.mxu0 0.0
    %2346 = vmatpush.msra.mxu0 0.0
    %2347 = vmatpush.msra.mxu0 0.0
    %2348 = vmatpush.msra.mxu0 0.0
    %2349 = vmatpush.msra.mxu0 0.0
    %2350 = vmatpush.msra.mxu0 0.0
    %2351 = vmatpush.msra.mxu0 0.0
    %2352 = vmatpush.msra.mxu0 0.0
    %2353 = vmatpush.msra.mxu0 0.0
    %2354 = vmatpush.msra.mxu0 0.0
    %2355 = vmatpush.msra.mxu0 0.0
    %2356 = vmatpush.msra.mxu0 %v212
    %2357 = vmatpush.msra.mxu0 %v211
    %2358 = vmatpush.msra.mxu0 %v210
    %2359 = vmatpush.msra.mxu0 %v209
    %2360 = vmatmul.f32.gmra.mxu0 %v2342
    %v2361 = vpop.f32.mrf.mxu0
    %v2362 = vadd.f32 %v2337, %v2361
    %2363 = vdwg.mxu0
    %v2364 = vadd.f32 %v2362, %v939
    %v2365 = vxor.u32 %v2364, 2147483648
    %v2366 = vmul.f32 %v2365, 1.442695
    %v2367 = vpow.pop %v2366
    %v2368 = vadd.f32 %v2367, 1.0
    %v2369 = vrcp.pop %v2368
    %v2370 = vmul.f32 %v2368, %v2369
    %v2371 = vsub.f32 1.0, %v2370
    %v2372 = vmul.f32 %v2369, %v2371
    %v2373 = vadd.f32 %v2369, %v2372
    %vm2374 = vweird.f32 %v2368
    %vm2375 = vweird.f32 %v2369
    %vm2376 = vmor %vm2374, %vm2375
    %v2377 = vsel %vm2376, %v2369, %v2373
    %v2378 = vand.u32 2147483647, %v2368
    %vm2379 = vcmp.eq.f32.partialorder %v2378, 8.507059e+37
    %v2380 = vand.u32 %v2368, 2147483648
    %v2381 = vor.u32 1.1754944e-38, %v2380
    %v2382 = vsel %vm2379, %v2381, %v2377
    %v2383 = vmul.f32 1.0, %v2382
    %v2384 = vtanh.pop %v2364
    %v2385 = vmul.f32 %v2383, %v1683
    %2387 = vrot.lane.b32.xlu0 %v2384, 64
    %v2388 = vpop.permute.xlu0 %2387
    %v2390 = vmul.f32 %v2383, %v2388
    %2392 = vrot.lane.b32.xlu0 %v2390, 32
    %v2393 = vpop.permute.xlu0 %2392
    %v2395 = vadd.f32 %v2385, %v2393
    %v2396 = vtanh.pop %v2395
    %2398 = vrot.lane.b32.xlu0 %v2396, 64
    %v2399 = vpop.permute.xlu0 %2398
    %v2401 = vmul.f32 %v2383, %v2399
    %2403 = vrot.lane.b32.xlu0 %v2401, 32
    %v2404 = vpop.permute.xlu0 %2403
    %s2406 = scalar_lea.vmem [#allocation18], 16
    %2407 = vst.msk [vmem:[%s2406] sm:$0xff] %vm222, %v2404
    %s2409 = scalar_lea.vmem [#allocation19], 16
    %2410 = vst.msk [vmem:[%s2409] sm:$0xff] %vm809, %v2237
    %v2411 = vsel %vm222, %v2404, 0
    %2413 = vmatpush.msra.mxu0 0.0
    %2414 = vmatpush.msra.mxu0 0.0
    %2415 = vmatpush.msra.mxu0 0.0
    %2416 = vmatpush.msra.mxu0 0.0
    %2417 = vmatpush.msra.mxu0 0.0
    %2418 = vmatpush.msra.mxu0 0.0
    %2419 = vmatpush.msra.mxu0 0.0
    %2420 = vmatpush.msra.mxu0 0.0
    %2421 = vmatpush.msra.mxu0 0.0
    %2422 = vmatpush.msra.mxu0 0.0
    %2423 = vmatpush.msra.mxu0 0.0
    %2424 = vmatpush.msra.mxu0 0.0
    %2425 = vmatpush.msra.mxu0 %v202
    %2426 = vmatpush.msra.mxu0 %v201
    %2427 = vmatpush.msra.mxu0 %v200
    %2428 = vmatpush.msra.mxu0 %v199
    %2429 = vmatmul.f32.gmra.mxu0 %v2411
    %v2430 = vpop.f32.mrf.mxu0
    %v2431 = vadd.f32 0.0, %v2430
    %2432 = vdwg.mxu0
    %v2434 = vrot.slane %v2431, 1
    %v2435 = vrot.slane %v2431, 2
    %v2436 = vrot.slane %v2431, 3
    %v2437 = vrot.slane %v2431, 4
    %v2438 = vrot.slane %v2431, 5
    %v2439 = vrot.slane %v2431, 6
    %v2440 = vrot.slane %v2431, 7
    %v2441 = vsel %vm222, %v2431, 0
    %2443 = vmatpush.xpose.msra.mxu0 0.0
    %2444 = vmatpush.xpose.msra.mxu0 0.0
    %2445 = vmatpush.xpose.msra.mxu0 0.0
    %2446 = vmatpush.xpose.msra.mxu0 0.0
    %2447 = vmatpush.xpose.msra.mxu0 0.0
    %2448 = vmatpush.xpose.msra.mxu0 0.0
    %2449 = vmatpush.xpose.msra.mxu0 0.0
    %2450 = vmatpush.xpose.msra.mxu0 0.0
    %2451 = vmatpush.xpose.msra.mxu0 0.0
    %2452 = vmatpush.xpose.msra.mxu0 0.0
    %2453 = vmatpush.xpose.msra.mxu0 0.0
    %2454 = vmatpush.xpose.msra.mxu0 0.0
    %2455 = vmatpush.xpose.msra.mxu0 0.0
    %2456 = vmatpush.xpose.msra.mxu0 0.0
    %2457 = vmatpush.xpose.msra.mxu0 0.0
    %2458 = vmatpush.xpose.msra.mxu0 %v256
    %2459 = vmatmul.f32.gmra.mxu0 %v2441
    %v2460 = vpop.f32.mrf.mxu0
    %v2461 = vadd.f32 0.0, %v2460
    %2462 = vdwg.mxu0
    %v2463 = vsel %vm222, %v2434, 0
    %2465 = vmatpush.xpose.msra.mxu0 0.0
    %2466 = vmatpush.xpose.msra.mxu0 0.0
    %2467 = vmatpush.xpose.msra.mxu0 0.0
    %2468 = vmatpush.xpose.msra.mxu0 0.0
    %2469 = vmatpush.xpose.msra.mxu0 0.0
    %2470 = vmatpush.xpose.msra.mxu0 0.0
    %2471 = vmatpush.xpose.msra.mxu0 0.0
    %2472 = vmatpush.xpose.msra.mxu0 0.0
    %2473 = vmatpush.xpose.msra.mxu0 0.0
    %2474 = vmatpush.xpose.msra.mxu0 0.0
    %2475 = vmatpush.xpose.msra.mxu0 0.0
    %2476 = vmatpush.xpose.msra.mxu0 0.0
    %2477 = vmatpush.xpose.msra.mxu0 0.0
    %2478 = vmatpush.xpose.msra.mxu0 0.0
    %2479 = vmatpush.xpose.msra.mxu0 0.0
    %2480 = vmatpush.xpose.msra.mxu0 %v281
    %2481 = vmatmul.f32.gmra.mxu0 %v2463
    %v2482 = vpop.f32.mrf.mxu0
    %v2483 = vadd.f32 0.0, %v2482
    %2484 = vdwg.mxu0
    %v2485 = vsel %vm222, %v2435, 0
    %2487 = vmatpush.xpose.msra.mxu0 0.0
    %2488 = vmatpush.xpose.msra.mxu0 0.0
    %2489 = vmatpush.xpose.msra.mxu0 0.0
    %2490 = vmatpush.xpose.msra.mxu0 0.0
    %2491 = vmatpush.xpose.msra.mxu0 0.0
    %2492 = vmatpush.xpose.msra.mxu0 0.0
    %2493 = vmatpush.xpose.msra.mxu0 0.0
    %2494 = vmatpush.xpose.msra.mxu0 0.0
    %2495 = vmatpush.xpose.msra.mxu0 0.0
    %2496 = vmatpush.xpose.msra.mxu0 0.0
    %2497 = vmatpush.xpose.msra.mxu0 0.0
    %2498 = vmatpush.xpose.msra.mxu0 0.0
    %2499 = vmatpush.xpose.msra.mxu0 0.0
    %2500 = vmatpush.xpose.msra.mxu0 0.0
    %2501 = vmatpush.xpose.msra.mxu0 0.0
    %2502 = vmatpush.xpose.msra.mxu0 %v306
    %2503 = vmatmul.f32.gmra.mxu0 %v2485
    %v2504 = vpop.f32.mrf.mxu0
    %v2505 = vadd.f32 0.0, %v2504
    %2506 = vdwg.mxu0
    %v2507 = vsel %vm222, %v2436, 0
    %2509 = vmatpush.xpose.msra.mxu0 0.0
    %2510 = vmatpush.xpose.msra.mxu0 0.0
    %2511 = vmatpush.xpose.msra.mxu0 0.0
    %2512 = vmatpush.xpose.msra.mxu0 0.0
    %2513 = vmatpush.xpose.msra.mxu0 0.0
    %2514 = vmatpush.xpose.msra.mxu0 0.0
    %2515 = vmatpush.xpose.msra.mxu0 0.0
    %2516 = vmatpush.xpose.msra.mxu0 0.0
    %2517 = vmatpush.xpose.msra.mxu0 0.0
    %2518 = vmatpush.xpose.msra.mxu0 0.0
    %2519 = vmatpush.xpose.msra.mxu0 0.0
    %2520 = vmatpush.xpose.msra.mxu0 0.0
    %2521 = vmatpush.xpose.msra.mxu0 0.0
    %2522 = vmatpush.xpose.msra.mxu0 0.0
    %2523 = vmatpush.xpose.msra.mxu0 0.0
    %2524 = vmatpush.xpose.msra.mxu0 %v331
    %2525 = vmatmul.f32.gmra.mxu0 %v2507
    %v2526 = vpop.f32.mrf.mxu0
    %v2527 = vadd.f32 0.0, %v2526
    %2528 = vdwg.mxu0
    %v2529 = vsel %vm222, %v2437, 0
    %2531 = vmatpush.xpose.msra.mxu0 0.0
    %2532 = vmatpush.xpose.msra.mxu0 0.0
    %2533 = vmatpush.xpose.msra.mxu0 0.0
    %2534 = vmatpush.xpose.msra.mxu0 0.0
    %2535 = vmatpush.xpose.msra.mxu0 0.0
    %2536 = vmatpush.xpose.msra.mxu0 0.0
    %2537 = vmatpush.xpose.msra.mxu0 0.0
    %2538 = vmatpush.xpose.msra.mxu0 0.0
    %2539 = vmatpush.xpose.msra.mxu0 0.0
    %2540 = vmatpush.xpose.msra.mxu0 0.0
    %2541 = vmatpush.xpose.msra.mxu0 0.0
    %2542 = vmatpush.xpose.msra.mxu0 0.0
    %2543 = vmatpush.xpose.msra.mxu0 0.0
    %2544 = vmatpush.xpose.msra.mxu0 0.0
    %2545 = vmatpush.xpose.msra.mxu0 0.0
    %2546 = vmatpush.xpose.msra.mxu0 %v356
    %2547 = vmatmul.f32.gmra.mxu0 %v2529
    %v2548 = vpop.f32.mrf.mxu0
    %v2549 = vadd.f32 0.0, %v2548
    %2550 = vdwg.mxu0
    %v2551 = vsel %vm222, %v2438, 0
    %2553 = vmatpush.xpose.msra.mxu0 0.0
    %2554 = vmatpush.xpose.msra.mxu0 0.0
    %2555 = vmatpush.xpose.msra.mxu0 0.0
    %2556 = vmatpush.xpose.msra.mxu0 0.0
    %2557 = vmatpush.xpose.msra.mxu0 0.0
    %2558 = vmatpush.xpose.msra.mxu0 0.0
    %2559 = vmatpush.xpose.msra.mxu0 0.0
    %2560 = vmatpush.xpose.msra.mxu0 0.0
    %2561 = vmatpush.xpose.msra.mxu0 0.0
    %2562 = vmatpush.xpose.msra.mxu0 0.0
    %2563 = vmatpush.xpose.msra.mxu0 0.0
    %2564 = vmatpush.xpose.msra.mxu0 0.0
    %2565 = vmatpush.xpose.msra.mxu0 0.0
    %2566 = vmatpush.xpose.msra.mxu0 0.0
    %2567 = vmatpush.xpose.msra.mxu0 0.0
    %2568 = vmatpush.xpose.msra.mxu0 %v381
    %2569 = vmatmul.f32.gmra.mxu0 %v2551
    %v2570 = vpop.f32.mrf.mxu0
    %v2571 = vadd.f32 0.0, %v2570
    %2572 = vdwg.mxu0
    %v2573 = vsel %vm222, %v2439, 0
    %2575 = vmatpush.xpose.msra.mxu0 0.0
    %2576 = vmatpush.xpose.msra.mxu0 0.0
    %2577 = vmatpush.xpose.msra.mxu0 0.0
    %2578 = vmatpush.xpose.msra.mxu0 0.0
    %2579 = vmatpush.xpose.msra.mxu0 0.0
    %2580 = vmatpush.xpose.msra.mxu0 0.0
    %2581 = vmatpush.xpose.msra.mxu0 0.0
    %2582 = vmatpush.xpose.msra.mxu0 0.0
    %2583 = vmatpush.xpose.msra.mxu0 0.0
    %2584 = vmatpush.xpose.msra.mxu0 0.0
    %2585 = vmatpush.xpose.msra.mxu0 0.0
    %2586 = vmatpush.xpose.msra.mxu0 0.0
    %2587 = vmatpush.xpose.msra.mxu0 0.0
    %2588 = vmatpush.xpose.msra.mxu0 0.0
    %2589 = vmatpush.xpose.msra.mxu0 0.0
    %2590 = vmatpush.xpose.msra.mxu0 %v406
    %2591 = vmatmul.f32.gmra.mxu0 %v2573
    %v2592 = vpop.f32.mrf.mxu0
    %v2593 = vadd.f32 0.0, %v2592
    %2594 = vdwg.mxu0
    %v2595 = vsel %vm222, %v2440, 0
    %2597 = vmatpush.xpose.msra.mxu0 0.0
    %2598 = vmatpush.xpose.msra.mxu0 0.0
    %2599 = vmatpush.xpose.msra.mxu0 0.0
    %2600 = vmatpush.xpose.msra.mxu0 0.0
    %2601 = vmatpush.xpose.msra.mxu0 0.0
    %2602 = vmatpush.xpose.msra.mxu0 0.0
    %2603 = vmatpush.xpose.msra.mxu0 0.0
    %2604 = vmatpush.xpose.msra.mxu0 0.0
    %2605 = vmatpush.xpose.msra.mxu0 0.0
    %2606 = vmatpush.xpose.msra.mxu0 0.0
    %2607 = vmatpush.xpose.msra.mxu0 0.0
    %2608 = vmatpush.xpose.msra.mxu0 0.0
    %2609 = vmatpush.xpose.msra.mxu0 0.0
    %2610 = vmatpush.xpose.msra.mxu0 0.0
    %2611 = vmatpush.xpose.msra.mxu0 0.0
    %2612 = vmatpush.xpose.msra.mxu0 %v431
    %2613 = vmatmul.f32.gmra.mxu0 %v2595
    %v2614 = vpop.f32.mrf.mxu0
    %v2615 = vadd.f32 0.0, %v2614
    %2616 = vdwg.mxu0
    %v2617 = vadd.f32 %v2461, %v198
    %v2618 = vadd.f32 %v2483, %v454
    %v2619 = vadd.f32 %v2505, %v455
    %v2620 = vadd.f32 %v2527, %v456
    %v2621 = vadd.f32 %v2549, %v457
    %v2622 = vadd.f32 %v2571, %v458
    %v2623 = vadd.f32 %v2593, %v459
    %v2624 = vadd.f32 %v2615, %v460
    %v2633 = vrot.slane %v2618, 7
    %v2634 = vsel %vm486, %v2633, %v2617
    %v2635 = vrot.slane %v2619, 6
    %v2636 = vsel %vm489, %v2635, %v2634
    %v2637 = vrot.slane %v2620, 5
    %v2638 = vsel %vm492, %v2637, %v2636
    %v2639 = vrot.slane %v2621, 4
    %v2640 = vsel %vm495, %v2639, %v2638
    %v2641 = vrot.slane %v2622, 3
    %v2642 = vsel %vm498, %v2641, %v2640
    %v2643 = vrot.slane %v2623, 2
    %v2644 = vsel %vm501, %v2643, %v2642
    %v2645 = vrot.slane %v2624, 1
    %v2646 = vsel %vm504, %v2645, %v2644
    %v2648 = vsel %vm507, %v2646, -inf
    %2649 = vmax.xlane.f32.xlu0 %v2648
    %v2650 = vpop.xlane.xlu0 %2649
    %v2652 = vrot.slane %v2650, 1
    %v2653 = vrot.slane %v2650, 2
    %v2654 = vrot.slane %v2650, 3
    %v2655 = vrot.slane %v2650, 4
    %v2656 = vrot.slane %v2650, 5
    %v2657 = vrot.slane %v2650, 6
    %v2658 = vrot.slane %v2650, 7
    %v2667 = vsub.f32 %v2617, %v2650
    %v2668 = vsub.f32 %v2618, %v2652
    %v2669 = vsub.f32 %v2619, %v2653
    %v2670 = vsub.f32 %v2620, %v2654
    %v2671 = vsub.f32 %v2621, %v2655
    %v2672 = vsub.f32 %v2622, %v2656
    %v2673 = vsub.f32 %v2623, %v2657
    %v2674 = vsub.f32 %v2624, %v2658
    %v2675 = vmul.f32 %v2667, 1.442695
    %v2676 = vpow.pop %v2675
    %v2677 = vmul.f32 %v2668, 1.442695
    %v2678 = vpow.pop %v2677
    %v2679 = vmul.f32 %v2669, 1.442695
    %v2680 = vpow.pop %v2679
    %v2681 = vmul.f32 %v2670, 1.442695
    %v2682 = vpow.pop %v2681
    %v2683 = vmul.f32 %v2671, 1.442695
    %v2684 = vpow.pop %v2683
    %v2685 = vmul.f32 %v2672, 1.442695
    %v2686 = vpow.pop %v2685
    %v2687 = vmul.f32 %v2673, 1.442695
    %v2688 = vpow.pop %v2687
    %v2689 = vmul.f32 %v2674, 1.442695
    %v2690 = vpow.pop %v2689
    %v2699 = vrot.slane %v2678, 7
    %v2700 = vsel %vm486, %v2699, %v2676
    %v2701 = vrot.slane %v2680, 6
    %v2702 = vsel %vm489, %v2701, %v2700
    %v2703 = vrot.slane %v2682, 5
    %v2704 = vsel %vm492, %v2703, %v2702
    %v2705 = vrot.slane %v2684, 4
    %v2706 = vsel %vm495, %v2705, %v2704
    %v2707 = vrot.slane %v2686, 3
    %v2708 = vsel %vm498, %v2707, %v2706
    %v2709 = vrot.slane %v2688, 2
    %v2710 = vsel %vm501, %v2709, %v2708
    %v2711 = vrot.slane %v2690, 1
    %v2712 = vsel %vm504, %v2711, %v2710
    %v2714 = vsel %vm507, %v2712, 0.0
    %2715 = vadd.xlane.f32.xlu0 %v2714
    %v2716 = vpop.xlane.xlu0 %2715
    %v2717 = vrcp.pop %v2716
    %v2719 = vrot.slane %v2717, 1
    %v2720 = vrot.slane %v2717, 2
    %v2721 = vrot.slane %v2717, 3
    %v2722 = vrot.slane %v2717, 4
    %v2723 = vrot.slane %v2717, 5
    %v2724 = vrot.slane %v2717, 6
    %v2725 = vrot.slane %v2717, 7
    %v2734 = vmul.f32 %v2676, %v2717
    %v2735 = vmul.f32 %v2678, %v2719
    %v2736 = vmul.f32 %v2680, %v2720
    %v2737 = vmul.f32 %v2682, %v2721
    %v2738 = vmul.f32 %v2684, %v2722
    %v2739 = vmul.f32 %v2686, %v2723
    %v2740 = vmul.f32 %v2688, %v2724
    %v2741 = vmul.f32 %v2690, %v2725
    %v2743 = vsel %vm507, %v2734, 0
    %2745 = vmatpush.msra.mxu0 0.0
    %2746 = vmatpush.msra.mxu0 0.0
    %2747 = vmatpush.msra.mxu0 0.0
    %2748 = vmatpush.msra.mxu0 0.0
    %2749 = vmatpush.msra.mxu0 0.0
    %2750 = vmatpush.msra.mxu0 0.0
    %2751 = vmatpush.msra.mxu0 0.0
    %2752 = vmatpush.msra.mxu0 0.0
    %2753 = vmatpush.msra.mxu0 0.0
    %2754 = vmatpush.msra.mxu0 0.0
    %2755 = vmatpush.msra.mxu0 0.0
    %2756 = vmatpush.msra.mxu0 0.0
    %2757 = vmatpush.msra.mxu0 0.0
    %2758 = vmatpush.msra.mxu0 0.0
    %2759 = vmatpush.msra.mxu0 0.0
    %2760 = vmatpush.msra.mxu0 %v190
    %2761 = vmatmul.f32.gmra.mxu0 %v2743
    %v2762 = vpop.f32.mrf.mxu0
    %v2763 = vadd.f32 0.0, %v2762
    %2764 = vdwg.mxu0
    %v2766 = vsel %vm507, %v2735, 0
    %2768 = vmatpush.msra.mxu0 0.0
    %2769 = vmatpush.msra.mxu0 0.0
    %2770 = vmatpush.msra.mxu0 0.0
    %2771 = vmatpush.msra.mxu0 0.0
    %2772 = vmatpush.msra.mxu0 0.0
    %2773 = vmatpush.msra.mxu0 0.0
    %2774 = vmatpush.msra.mxu0 0.0
    %2775 = vmatpush.msra.mxu0 0.0
    %2776 = vmatpush.msra.mxu0 0.0
    %2777 = vmatpush.msra.mxu0 0.0
    %2778 = vmatpush.msra.mxu0 0.0
    %2779 = vmatpush.msra.mxu0 0.0
    %2780 = vmatpush.msra.mxu0 0.0
    %2781 = vmatpush.msra.mxu0 0.0
    %2782 = vmatpush.msra.mxu0 0.0
    %2783 = vmatpush.msra.mxu0 %v191
    %2784 = vmatmul.f32.gmra.mxu0 %v2766
    %v2785 = vpop.f32.mrf.mxu0
    %v2786 = vadd.f32 0.0, %v2785
    %2787 = vdwg.mxu0
    %v2789 = vsel %vm507, %v2736, 0
    %2791 = vmatpush.msra.mxu0 0.0
    %2792 = vmatpush.msra.mxu0 0.0
    %2793 = vmatpush.msra.mxu0 0.0
    %2794 = vmatpush.msra.mxu0 0.0
    %2795 = vmatpush.msra.mxu0 0.0
    %2796 = vmatpush.msra.mxu0 0.0
    %2797 = vmatpush.msra.mxu0 0.0
    %2798 = vmatpush.msra.mxu0 0.0
    %2799 = vmatpush.msra.mxu0 0.0
    %2800 = vmatpush.msra.mxu0 0.0
    %2801 = vmatpush.msra.mxu0 0.0
    %2802 = vmatpush.msra.mxu0 0.0
    %2803 = vmatpush.msra.mxu0 0.0
    %2804 = vmatpush.msra.mxu0 0.0
    %2805 = vmatpush.msra.mxu0 0.0
    %2806 = vmatpush.msra.mxu0 %v192
    %2807 = vmatmul.f32.gmra.mxu0 %v2789
    %v2808 = vpop.f32.mrf.mxu0
    %v2809 = vadd.f32 0.0, %v2808
    %2810 = vdwg.mxu0
    %v2812 = vsel %vm507, %v2737, 0
    %2814 = vmatpush.msra.mxu0 0.0
    %2815 = vmatpush.msra.mxu0 0.0
    %2816 = vmatpush.msra.mxu0 0.0
    %2817 = vmatpush.msra.mxu0 0.0
    %2818 = vmatpush.msra.mxu0 0.0
    %2819 = vmatpush.msra.mxu0 0.0
    %2820 = vmatpush.msra.mxu0 0.0
    %2821 = vmatpush.msra.mxu0 0.0
    %2822 = vmatpush.msra.mxu0 0.0
    %2823 = vmatpush.msra.mxu0 0.0
    %2824 = vmatpush.msra.mxu0 0.0
    %2825 = vmatpush.msra.mxu0 0.0
    %2826 = vmatpush.msra.mxu0 0.0
    %2827 = vmatpush.msra.mxu0 0.0
    %2828 = vmatpush.msra.mxu0 0.0
    %2829 = vmatpush.msra.mxu0 %v193
    %2830 = vmatmul.f32.gmra.mxu0 %v2812
    %v2831 = vpop.f32.mrf.mxu0
    %v2832 = vadd.f32 0.0, %v2831
    %2833 = vdwg.mxu0
    %v2835 = vsel %vm507, %v2738, 0
    %2837 = vmatpush.msra.mxu0 0.0
    %2838 = vmatpush.msra.mxu0 0.0
    %2839 = vmatpush.msra.mxu0 0.0
    %2840 = vmatpush.msra.mxu0 0.0
    %2841 = vmatpush.msra.mxu0 0.0
    %2842 = vmatpush.msra.mxu0 0.0
    %2843 = vmatpush.msra.mxu0 0.0
    %2844 = vmatpush.msra.mxu0 0.0
    %2845 = vmatpush.msra.mxu0 0.0
    %2846 = vmatpush.msra.mxu0 0.0
    %2847 = vmatpush.msra.mxu0 0.0
    %2848 = vmatpush.msra.mxu0 0.0
    %2849 = vmatpush.msra.mxu0 0.0
    %2850 = vmatpush.msra.mxu0 0.0
    %2851 = vmatpush.msra.mxu0 0.0
    %2852 = vmatpush.msra.mxu0 %v194
    %2853 = vmatmul.f32.gmra.mxu0 %v2835
    %v2854 = vpop.f32.mrf.mxu0
    %v2855 = vadd.f32 0.0, %v2854
    %2856 = vdwg.mxu0
    %v2858 = vsel %vm507, %v2739, 0
    %2860 = vmatpush.msra.mxu0 0.0
    %2861 = vmatpush.msra.mxu0 0.0
    %2862 = vmatpush.msra.mxu0 0.0
    %2863 = vmatpush.msra.mxu0 0.0
    %2864 = vmatpush.msra.mxu0 0.0
    %2865 = vmatpush.msra.mxu0 0.0
    %2866 = vmatpush.msra.mxu0 0.0
    %2867 = vmatpush.msra.mxu0 0.0
    %2868 = vmatpush.msra.mxu0 0.0
    %2869 = vmatpush.msra.mxu0 0.0
    %2870 = vmatpush.msra.mxu0 0.0
    %2871 = vmatpush.msra.mxu0 0.0
    %2872 = vmatpush.msra.mxu0 0.0
    %2873 = vmatpush.msra.mxu0 0.0
    %2874 = vmatpush.msra.mxu0 0.0
    %2875 = vmatpush.msra.mxu0 %v195
    %2876 = vmatmul.f32.gmra.mxu0 %v2858
    %v2877 = vpop.f32.mrf.mxu0
    %v2878 = vadd.f32 0.0, %v2877
    %2879 = vdwg.mxu0
    %v2881 = vsel %vm507, %v2740, 0
    %2883 = vmatpush.msra.mxu0 0.0
    %2884 = vmatpush.msra.mxu0 0.0
    %2885 = vmatpush.msra.mxu0 0.0
    %2886 = vmatpush.msra.mxu0 0.0
    %2887 = vmatpush.msra.mxu0 0.0
    %2888 = vmatpush.msra.mxu0 0.0
    %2889 = vmatpush.msra.mxu0 0.0
    %2890 = vmatpush.msra.mxu0 0.0
    %2891 = vmatpush.msra.mxu0 0.0
    %2892 = vmatpush.msra.mxu0 0.0
    %2893 = vmatpush.msra.mxu0 0.0
    %2894 = vmatpush.msra.mxu0 0.0
    %2895 = vmatpush.msra.mxu0 0.0
    %2896 = vmatpush.msra.mxu0 0.0
    %2897 = vmatpush.msra.mxu0 0.0
    %2898 = vmatpush.msra.mxu0 %v196
    %2899 = vmatmul.f32.gmra.mxu0 %v2881
    %v2900 = vpop.f32.mrf.mxu0
    %v2901 = vadd.f32 0.0, %v2900
    %2902 = vdwg.mxu0
    %v2904 = vsel %vm507, %v2741, 0
    %2906 = vmatpush.msra.mxu0 0.0
    %2907 = vmatpush.msra.mxu0 0.0
    %2908 = vmatpush.msra.mxu0 0.0
    %2909 = vmatpush.msra.mxu0 0.0
    %2910 = vmatpush.msra.mxu0 0.0
    %2911 = vmatpush.msra.mxu0 0.0
    %2912 = vmatpush.msra.mxu0 0.0
    %2913 = vmatpush.msra.mxu0 0.0
    %2914 = vmatpush.msra.mxu0 0.0
    %2915 = vmatpush.msra.mxu0 0.0
    %2916 = vmatpush.msra.mxu0 0.0
    %2917 = vmatpush.msra.mxu0 0.0
    %2918 = vmatpush.msra.mxu0 0.0
    %2919 = vmatpush.msra.mxu0 0.0
    %2920 = vmatpush.msra.mxu0 0.0
    %2921 = vmatpush.msra.mxu0 %v197
    %2922 = vmatmul.f32.gmra.mxu0 %v2904
    %v2923 = vpop.f32.mrf.mxu0
    %v2924 = vadd.f32 0.0, %v2923
    %2925 = vdwg.mxu0
    %s2926 = scalar_lea.vmem [#allocation3], 24
    %v2927 = vld [vmem:[%s2926] sm:$0xff]
    %v2936 = vrot.slane %v2786, 7
    %v2937 = vsel %vm486, %v2936, %v2763
    %v2938 = vrot.slane %v2809, 6
    %v2939 = vsel %vm489, %v2938, %v2937
    %v2940 = vrot.slane %v2832, 5
    %v2941 = vsel %vm492, %v2940, %v2939
    %v2942 = vrot.slane %v2855, 4
    %v2943 = vsel %vm495, %v2942, %v2941
    %v2944 = vrot.slane %v2878, 3
    %v2945 = vsel %vm498, %v2944, %v2943
    %v2946 = vrot.slane %v2901, 2
    %v2947 = vsel %vm501, %v2946, %v2945
    %v2948 = vrot.slane %v2924, 1
    %v2949 = vsel %vm504, %v2948, %v2947
    %v2950 = vsel %vm809, %v2949, 0
    %2952 = vmatpush.msra.mxu0 0.0
    %2953 = vmatpush.msra.mxu0 0.0
    %2954 = vmatpush.msra.mxu0 0.0
    %2955 = vmatpush.msra.mxu0 0.0
    %2956 = vmatpush.msra.mxu0 0.0
    %2957 = vmatpush.msra.mxu0 0.0
    %2958 = vmatpush.msra.mxu0 0.0
    %2959 = vmatpush.msra.mxu0 0.0
    %2960 = vmatpush.msra.mxu0 0.0
    %2961 = vmatpush.msra.mxu0 0.0
    %2962 = vmatpush.msra.mxu0 0.0
    %2963 = vmatpush.msra.mxu0 0.0
    %2964 = vmatpush.msra.mxu0 0.0
    %2965 = vmatpush.msra.mxu0 0.0
    %2966 = vmatpush.msra.mxu0 %v204
    %2967 = vmatpush.msra.mxu0 %v203
    %2968 = vmatmul.f32.gmra.mxu0 %v2950
    %v2969 = vpop.f32.mrf.mxu0
    %v2970 = vadd.f32 0.0, %v2969
    %2971 = vdwg.mxu0
    %v2972 = vadd.f32 %v2927, %v2970
    %2973 = vmatpush.msra.mxu0 0.0
    %2974 = vmatpush.msra.mxu0 0.0
    %2975 = vmatpush.msra.mxu0 0.0
    %2976 = vmatpush.msra.mxu0 0.0
    %2977 = vmatpush.msra.mxu0 0.0
    %2978 = vmatpush.msra.mxu0 0.0
    %2979 = vmatpush.msra.mxu0 0.0
    %2980 = vmatpush.msra.mxu0 0.0
    %2981 = vmatpush.msra.mxu0 0.0
    %2982 = vmatpush.msra.mxu0 0.0
    %2983 = vmatpush.msra.mxu0 0.0
    %2984 = vmatpush.msra.mxu0 0.0
    %2985 = vmatpush.msra.mxu0 %v208
    %2986 = vmatpush.msra.mxu0 %v207
    %2987 = vmatpush.msra.mxu0 %v206
    %2988 = vmatpush.msra.mxu0 %v205
    %2989 = vmatmul.f32.gmra.mxu0 %v2342
    %v2990 = vpop.f32.mrf.mxu0
    %v2991 = vadd.f32 0.0, %v2990
    %2992 = vdwg.mxu0
    %v2993 = vadd.f32 %v2972, %v2991
    %v2994 = vxor.u32 %v2993, 2147483648
    %v2995 = vmul.f32 %v2994, 1.442695
    %v2996 = vpow.pop %v2995
    %v2997 = vadd.f32 %v2996, 1.0
    %v2998 = vrcp.pop %v2997
    %v2999 = vmul.f32 %v2997, %v2998
    %v3000 = vsub.f32 1.0, %v2999
    %v3001 = vmul.f32 %v2998, %v3000
    %v3002 = vadd.f32 %v2998, %v3001
    %vm3003 = vweird.f32 %v2997
    %vm3004 = vweird.f32 %v2998
    %vm3005 = vmor %vm3003, %vm3004
    %v3006 = vsel %vm3005, %v2998, %v3002
    %v3007 = vand.u32 2147483647, %v2997
    %vm3008 = vcmp.eq.f32.partialorder %v3007, 8.507059e+37
    %v3009 = vand.u32 %v2997, 2147483648
    %v3010 = vor.u32 1.1754944e-38, %v3009
    %v3011 = vsel %vm3008, %v3010, %v3006
    %v3012 = vmul.f32 1.0, %v3011
    %v3013 = vtanh.pop %v2993
    %v3014 = vmul.f32 %v3012, %v2312
    %3016 = vrot.lane.b32.xlu0 %v3013, 64
    %v3017 = vpop.permute.xlu0 %3016
    %v3019 = vmul.f32 %v3012, %v3017
    %3021 = vrot.lane.b32.xlu0 %v3019, 32
    %v3022 = vpop.permute.xlu0 %3021
    %v3024 = vadd.f32 %v3014, %v3022
    %v3025 = vtanh.pop %v3024
    %3027 = vrot.lane.b32.xlu0 %v3025, 64
    %v3028 = vpop.permute.xlu0 %3027
    %v3030 = vmul.f32 %v3012, %v3028
    %3031 = vmatpush.msra.mxu0 0.0
    %3032 = vmatpush.msra.mxu0 0.0
    %3033 = vmatpush.msra.mxu0 0.0
    %3034 = vmatpush.msra.mxu0 0.0
    %3035 = vmatpush.msra.mxu0 0.0
    %3036 = vmatpush.msra.mxu0 0.0
    %3037 = vmatpush.msra.mxu0 0.0
    %3038 = vmatpush.msra.mxu0 0.0
    %3039 = vmatpush.msra.mxu0 0.0
    %3040 = vmatpush.msra.mxu0 0.0
    %3041 = vmatpush.msra.mxu0 0.0
    %3042 = vmatpush.msra.mxu0 0.0
    %3043 = vmatpush.msra.mxu0 %v216
    %3044 = vmatpush.msra.mxu0 %v215
    %3045 = vmatpush.msra.mxu0 %v214
    %3046 = vmatpush.msra.mxu0 %v213
    %3047 = vmatmul.f32.gmra.mxu0 %v2411
    %v3048 = vpop.f32.mrf.mxu0
    %v3049 = vadd.f32 0.0, %v3048
    %3050 = vdwg.mxu0
    %3052 = vrot.lane.b32.xlu0 %v3030, 32
    %v3053 = vpop.permute.xlu0 %3052
    %v3054 = vsel %vm222, %v3053, 0
    %3056 = vmatpush.msra.mxu0 0.0
    %3057 = vmatpush.msra.mxu0 0.0
    %3058 = vmatpush.msra.mxu0 0.0
    %3059 = vmatpush.msra.mxu0 0.0
    %3060 = vmatpush.msra.mxu0 0.0
    %3061 = vmatpush.msra.mxu0 0.0
    %3062 = vmatpush.msra.mxu0 0.0
    %3063 = vmatpush.msra.mxu0 0.0
    %3064 = vmatpush.msra.mxu0 0.0
    %3065 = vmatpush.msra.mxu0 0.0
    %3066 = vmatpush.msra.mxu0 0.0
    %3067 = vmatpush.msra.mxu0 0.0
    %3068 = vmatpush.msra.mxu0 %v212
    %3069 = vmatpush.msra.mxu0 %v211
    %3070 = vmatpush.msra.mxu0 %v210
    %3071 = vmatpush.msra.mxu0 %v209
    %3072 = vmatmul.f32.gmra.mxu0 %v3054
    %v3073 = vpop.f32.mrf.mxu0
    %v3074 = vadd.f32 %v3049, %v3073
    %3075 = vdwg.mxu0
    %v3076 = vadd.f32 %v3074, %v939
    %v3077 = vxor.u32 %v3076, 2147483648
    %v3078 = vmul.f32 %v3077, 1.442695
    %v3079 = vpow.pop %v3078
    %v3080 = vadd.f32 %v3079, 1.0
    %v3081 = vrcp.pop %v3080
    %v3082 = vmul.f32 %v3080, %v3081
    %v3083 = vsub.f32 1.0, %v3082
    %v3084 = vmul.f32 %v3081, %v3083
    %v3085 = vadd.f32 %v3081, %v3084
    %vm3086 = vweird.f32 %v3080
    %vm3087 = vweird.f32 %v3081
    %vm3088 = vmor %vm3086, %vm3087
    %v3089 = vsel %vm3088, %v3081, %v3085
    %v3090 = vand.u32 2147483647, %v3080
    %vm3091 = vcmp.eq.f32.partialorder %v3090, 8.507059e+37
    %v3092 = vand.u32 %v3080, 2147483648
    %v3093 = vor.u32 1.1754944e-38, %v3092
    %v3094 = vsel %vm3091, %v3093, %v3089
    %v3095 = vmul.f32 1.0, %v3094
    %v3096 = vtanh.pop %v3076
    %v3097 = vmul.f32 %v3095, %v2395
    %3099 = vrot.lane.b32.xlu0 %v3096, 64
    %v3100 = vpop.permute.xlu0 %3099
    %v3102 = vmul.f32 %v3095, %v3100
    %3104 = vrot.lane.b32.xlu0 %v3102, 32
    %v3105 = vpop.permute.xlu0 %3104
    %v3107 = vadd.f32 %v3097, %v3105
    %v3108 = vtanh.pop %v3107
    %3110 = vrot.lane.b32.xlu0 %v3108, 64
    %v3111 = vpop.permute.xlu0 %3110
    %v3113 = vmul.f32 %v3095, %v3111
    %3115 = vrot.lane.b32.xlu0 %v3113, 32
    %v3116 = vpop.permute.xlu0 %3115
    %s3118 = scalar_lea.vmem [#allocation18], 24
    %3119 = vst.msk [vmem:[%s3118] sm:$0xff] %vm222, %v3116
    %s3121 = scalar_lea.vmem [#allocation19], 24
    %3122 = vst.msk [vmem:[%s3121] sm:$0xff] %vm809, %v2949
    %v3123 = vsel %vm222, %v3116, 0
    %3125 = vmatpush.msra.mxu0 0.0
    %3126 = vmatpush.msra.mxu0 0.0
    %3127 = vmatpush.msra.mxu0 0.0
    %3128 = vmatpush.msra.mxu0 0.0
    %3129 = vmatpush.msra.mxu0 0.0
    %3130 = vmatpush.msra.mxu0 0.0
    %3131 = vmatpush.msra.mxu0 0.0
    %3132 = vmatpush.msra.mxu0 0.0
    %3133 = vmatpush.msra.mxu0 0.0
    %3134 = vmatpush.msra.mxu0 0.0
    %3135 = vmatpush.msra.mxu0 0.0
    %3136 = vmatpush.msra.mxu0 0.0
    %3137 = vmatpush.msra.mxu0 %v202
    %3138 = vmatpush.msra.mxu0 %v201
    %3139 = vmatpush.msra.mxu0 %v200
    %3140 = vmatpush.msra.mxu0 %v199
    %3141 = vmatmul.f32.gmra.mxu0 %v3123
    %v3142 = vpop.f32.mrf.mxu0
    %v3143 = vadd.f32 0.0, %v3142
    %3144 = vdwg.mxu0
    %v3146 = vrot.slane %v3143, 1
    %v3147 = vrot.slane %v3143, 2
    %v3148 = vrot.slane %v3143, 3
    %v3149 = vrot.slane %v3143, 4
    %v3150 = vrot.slane %v3143, 5
    %v3151 = vrot.slane %v3143, 6
    %v3152 = vrot.slane %v3143, 7
    %v3153 = vsel %vm222, %v3143, 0
    %3155 = vmatpush.xpose.msra.mxu0 0.0
    %3156 = vmatpush.xpose.msra.mxu0 0.0
    %3157 = vmatpush.xpose.msra.mxu0 0.0
    %3158 = vmatpush.xpose.msra.mxu0 0.0
    %3159 = vmatpush.xpose.msra.mxu0 0.0
    %3160 = vmatpush.xpose.msra.mxu0 0.0
    %3161 = vmatpush.xpose.msra.mxu0 0.0
    %3162 = vmatpush.xpose.msra.mxu0 0.0
    %3163 = vmatpush.xpose.msra.mxu0 0.0
    %3164 = vmatpush.xpose.msra.mxu0 0.0
    %3165 = vmatpush.xpose.msra.mxu0 0.0
    %3166 = vmatpush.xpose.msra.mxu0 0.0
    %3167 = vmatpush.xpose.msra.mxu0 0.0
    %3168 = vmatpush.xpose.msra.mxu0 0.0
    %3169 = vmatpush.xpose.msra.mxu0 0.0
    %3170 = vmatpush.xpose.msra.mxu0 %v256
    %3171 = vmatmul.f32.gmra.mxu0 %v3153
    %v3172 = vpop.f32.mrf.mxu0
    %v3173 = vadd.f32 0.0, %v3172
    %3174 = vdwg.mxu0
    %v3175 = vsel %vm222, %v3146, 0
    %3177 = vmatpush.xpose.msra.mxu0 0.0
    %3178 = vmatpush.xpose.msra.mxu0 0.0
    %3179 = vmatpush.xpose.msra.mxu0 0.0
    %3180 = vmatpush.xpose.msra.mxu0 0.0
    %3181 = vmatpush.xpose.msra.mxu0 0.0
    %3182 = vmatpush.xpose.msra.mxu0 0.0
    %3183 = vmatpush.xpose.msra.mxu0 0.0
    %3184 = vmatpush.xpose.msra.mxu0 0.0
    %3185 = vmatpush.xpose.msra.mxu0 0.0
    %3186 = vmatpush.xpose.msra.mxu0 0.0
    %3187 = vmatpush.xpose.msra.mxu0 0.0
    %3188 = vmatpush.xpose.msra.mxu0 0.0
    %3189 = vmatpush.xpose.msra.mxu0 0.0
    %3190 = vmatpush.xpose.msra.mxu0 0.0
    %3191 = vmatpush.xpose.msra.mxu0 0.0
    %3192 = vmatpush.xpose.msra.mxu0 %v281
    %3193 = vmatmul.f32.gmra.mxu0 %v3175
    %v3194 = vpop.f32.mrf.mxu0
    %v3195 = vadd.f32 0.0, %v3194
    %3196 = vdwg.mxu0
    %v3197 = vsel %vm222, %v3147, 0
    %3199 = vmatpush.xpose.msra.mxu0 0.0
    %3200 = vmatpush.xpose.msra.mxu0 0.0
    %3201 = vmatpush.xpose.msra.mxu0 0.0
    %3202 = vmatpush.xpose.msra.mxu0 0.0
    %3203 = vmatpush.xpose.msra.mxu0 0.0
    %3204 = vmatpush.xpose.msra.mxu0 0.0
    %3205 = vmatpush.xpose.msra.mxu0 0.0
    %3206 = vmatpush.xpose.msra.mxu0 0.0
    %3207 = vmatpush.xpose.msra.mxu0 0.0
    %3208 = vmatpush.xpose.msra.mxu0 0.0
    %3209 = vmatpush.xpose.msra.mxu0 0.0
    %3210 = vmatpush.xpose.msra.mxu0 0.0
    %3211 = vmatpush.xpose.msra.mxu0 0.0
    %3212 = vmatpush.xpose.msra.mxu0 0.0
    %3213 = vmatpush.xpose.msra.mxu0 0.0
    %3214 = vmatpush.xpose.msra.mxu0 %v306
    %3215 = vmatmul.f32.gmra.mxu0 %v3197
    %v3216 = vpop.f32.mrf.mxu0
    %v3217 = vadd.f32 0.0, %v3216
    %3218 = vdwg.mxu0
    %v3219 = vsel %vm222, %v3148, 0
    %3221 = vmatpush.xpose.msra.mxu0 0.0
    %3222 = vmatpush.xpose.msra.mxu0 0.0
    %3223 = vmatpush.xpose.msra.mxu0 0.0
    %3224 = vmatpush.xpose.msra.mxu0 0.0
    %3225 = vmatpush.xpose.msra.mxu0 0.0
    %3226 = vmatpush.xpose.msra.mxu0 0.0
    %3227 = vmatpush.xpose.msra.mxu0 0.0
    %3228 = vmatpush.xpose.msra.mxu0 0.0
    %3229 = vmatpush.xpose.msra.mxu0 0.0
    %3230 = vmatpush.xpose.msra.mxu0 0.0
    %3231 = vmatpush.xpose.msra.mxu0 0.0
    %3232 = vmatpush.xpose.msra.mxu0 0.0
    %3233 = vmatpush.xpose.msra.mxu0 0.0
    %3234 = vmatpush.xpose.msra.mxu0 0.0
    %3235 = vmatpush.xpose.msra.mxu0 0.0
    %3236 = vmatpush.xpose.msra.mxu0 %v331
    %3237 = vmatmul.f32.gmra.mxu0 %v3219
    %v3238 = vpop.f32.mrf.mxu0
    %v3239 = vadd.f32 0.0, %v3238
    %3240 = vdwg.mxu0
    %v3241 = vsel %vm222, %v3149, 0
    %3243 = vmatpush.xpose.msra.mxu0 0.0
    %3244 = vmatpush.xpose.msra.mxu0 0.0
    %3245 = vmatpush.xpose.msra.mxu0 0.0
    %3246 = vmatpush.xpose.msra.mxu0 0.0
    %3247 = vmatpush.xpose.msra.mxu0 0.0
    %3248 = vmatpush.xpose.msra.mxu0 0.0
    %3249 = vmatpush.xpose.msra.mxu0 0.0
    %3250 = vmatpush.xpose.msra.mxu0 0.0
    %3251 = vmatpush.xpose.msra.mxu0 0.0
    %3252 = vmatpush.xpose.msra.mxu0 0.0
    %3253 = vmatpush.xpose.msra.mxu0 0.0
    %3254 = vmatpush.xpose.msra.mxu0 0.0
    %3255 = vmatpush.xpose.msra.mxu0 0.0
    %3256 = vmatpush.xpose.msra.mxu0 0.0
    %3257 = vmatpush.xpose.msra.mxu0 0.0
    %3258 = vmatpush.xpose.msra.mxu0 %v356
    %3259 = vmatmul.f32.gmra.mxu0 %v3241
    %v3260 = vpop.f32.mrf.mxu0
    %v3261 = vadd.f32 0.0, %v3260
    %3262 = vdwg.mxu0
    %v3263 = vsel %vm222, %v3150, 0
    %3265 = vmatpush.xpose.msra.mxu0 0.0
    %3266 = vmatpush.xpose.msra.mxu0 0.0
    %3267 = vmatpush.xpose.msra.mxu0 0.0
    %3268 = vmatpush.xpose.msra.mxu0 0.0
    %3269 = vmatpush.xpose.msra.mxu0 0.0
    %3270 = vmatpush.xpose.msra.mxu0 0.0
    %3271 = vmatpush.xpose.msra.mxu0 0.0
    %3272 = vmatpush.xpose.msra.mxu0 0.0
    %3273 = vmatpush.xpose.msra.mxu0 0.0
    %3274 = vmatpush.xpose.msra.mxu0 0.0
    %3275 = vmatpush.xpose.msra.mxu0 0.0
    %3276 = vmatpush.xpose.msra.mxu0 0.0
    %3277 = vmatpush.xpose.msra.mxu0 0.0
    %3278 = vmatpush.xpose.msra.mxu0 0.0
    %3279 = vmatpush.xpose.msra.mxu0 0.0
    %3280 = vmatpush.xpose.msra.mxu0 %v381
    %3281 = vmatmul.f32.gmra.mxu0 %v3263
    %v3282 = vpop.f32.mrf.mxu0
    %v3283 = vadd.f32 0.0, %v3282
    %3284 = vdwg.mxu0
    %v3285 = vsel %vm222, %v3151, 0
    %3287 = vmatpush.xpose.msra.mxu0 0.0
    %3288 = vmatpush.xpose.msra.mxu0 0.0
    %3289 = vmatpush.xpose.msra.mxu0 0.0
    %3290 = vmatpush.xpose.msra.mxu0 0.0
    %3291 = vmatpush.xpose.msra.mxu0 0.0
    %3292 = vmatpush.xpose.msra.mxu0 0.0
    %3293 = vmatpush.xpose.msra.mxu0 0.0
    %3294 = vmatpush.xpose.msra.mxu0 0.0
    %3295 = vmatpush.xpose.msra.mxu0 0.0
    %3296 = vmatpush.xpose.msra.mxu0 0.0
    %3297 = vmatpush.xpose.msra.mxu0 0.0
    %3298 = vmatpush.xpose.msra.mxu0 0.0
    %3299 = vmatpush.xpose.msra.mxu0 0.0
    %3300 = vmatpush.xpose.msra.mxu0 0.0
    %3301 = vmatpush.xpose.msra.mxu0 0.0
    %3302 = vmatpush.xpose.msra.mxu0 %v406
    %3303 = vmatmul.f32.gmra.mxu0 %v3285
    %v3304 = vpop.f32.mrf.mxu0
    %v3305 = vadd.f32 0.0, %v3304
    %3306 = vdwg.mxu0
    %v3307 = vsel %vm222, %v3152, 0
    %3309 = vmatpush.xpose.msra.mxu0 0.0
    %3310 = vmatpush.xpose.msra.mxu0 0.0
    %3311 = vmatpush.xpose.msra.mxu0 0.0
    %3312 = vmatpush.xpose.msra.mxu0 0.0
    %3313 = vmatpush.xpose.msra.mxu0 0.0
    %3314 = vmatpush.xpose.msra.mxu0 0.0
    %3315 = vmatpush.xpose.msra.mxu0 0.0
    %3316 = vmatpush.xpose.msra.mxu0 0.0
    %3317 = vmatpush.xpose.msra.mxu0 0.0
    %3318 = vmatpush.xpose.msra.mxu0 0.0
    %3319 = vmatpush.xpose.msra.mxu0 0.0
    %3320 = vmatpush.xpose.msra.mxu0 0.0
    %3321 = vmatpush.xpose.msra.mxu0 0.0
    %3322 = vmatpush.xpose.msra.mxu0 0.0
    %3323 = vmatpush.xpose.msra.mxu0 0.0
    %3324 = vmatpush.xpose.msra.mxu0 %v431
    %3325 = vmatmul.f32.gmra.mxu0 %v3307
    %v3326 = vpop.f32.mrf.mxu0
    %v3327 = vadd.f32 0.0, %v3326
    %3328 = vdwg.mxu0
    %v3329 = vadd.f32 %v3173, %v198
    %v3330 = vadd.f32 %v3195, %v454
    %v3331 = vadd.f32 %v3217, %v455
    %v3332 = vadd.f32 %v3239, %v456
    %v3333 = vadd.f32 %v3261, %v457
    %v3334 = vadd.f32 %v3283, %v458
    %v3335 = vadd.f32 %v3305, %v459
    %v3336 = vadd.f32 %v3327, %v460
    %v3345 = vrot.slane %v3330, 7
    %v3346 = vsel %vm486, %v3345, %v3329
    %v3347 = vrot.slane %v3331, 6
    %v3348 = vsel %vm489, %v3347, %v3346
    %v3349 = vrot.slane %v3332, 5
    %v3350 = vsel %vm492, %v3349, %v3348
    %v3351 = vrot.slane %v3333, 4
    %v3352 = vsel %vm495, %v3351, %v3350
    %v3353 = vrot.slane %v3334, 3
    %v3354 = vsel %vm498, %v3353, %v3352
    %v3355 = vrot.slane %v3335, 2
    %v3356 = vsel %vm501, %v3355, %v3354
    %v3357 = vrot.slane %v3336, 1
    %v3358 = vsel %vm504, %v3357, %v3356
    %v3360 = vsel %vm507, %v3358, -inf
    %3361 = vmax.xlane.f32.xlu0 %v3360
    %v3362 = vpop.xlane.xlu0 %3361
    %v3364 = vrot.slane %v3362, 1
    %v3365 = vrot.slane %v3362, 2
    %v3366 = vrot.slane %v3362, 3
    %v3367 = vrot.slane %v3362, 4
    %v3368 = vrot.slane %v3362, 5
    %v3369 = vrot.slane %v3362, 6
    %v3370 = vrot.slane %v3362, 7
    %v3379 = vsub.f32 %v3329, %v3362
    %v3380 = vsub.f32 %v3330, %v3364
    %v3381 = vsub.f32 %v3331, %v3365
    %v3382 = vsub.f32 %v3332, %v3366
    %v3383 = vsub.f32 %v3333, %v3367
    %v3384 = vsub.f32 %v3334, %v3368
    %v3385 = vsub.f32 %v3335, %v3369
    %v3386 = vsub.f32 %v3336, %v3370
    %v3387 = vmul.f32 %v3379, 1.442695
    %v3388 = vpow.pop %v3387
    %v3389 = vmul.f32 %v3380, 1.442695
    %v3390 = vpow.pop %v3389
    %v3391 = vmul.f32 %v3381, 1.442695
    %v3392 = vpow.pop %v3391
    %v3393 = vmul.f32 %v3382, 1.442695
    %v3394 = vpow.pop %v3393
    %v3395 = vmul.f32 %v3383, 1.442695
    %v3396 = vpow.pop %v3395
    %v3397 = vmul.f32 %v3384, 1.442695
    %v3398 = vpow.pop %v3397
    %v3399 = vmul.f32 %v3385, 1.442695
    %v3400 = vpow.pop %v3399
    %v3401 = vmul.f32 %v3386, 1.442695
    %v3402 = vpow.pop %v3401
    %v3411 = vrot.slane %v3390, 7
    %v3412 = vsel %vm486, %v3411, %v3388
    %v3413 = vrot.slane %v3392, 6
    %v3414 = vsel %vm489, %v3413, %v3412
    %v3415 = vrot.slane %v3394, 5
    %v3416 = vsel %vm492, %v3415, %v3414
    %v3417 = vrot.slane %v3396, 4
    %v3418 = vsel %vm495, %v3417, %v3416
    %v3419 = vrot.slane %v3398, 3
    %v3420 = vsel %vm498, %v3419, %v3418
    %v3421 = vrot.slane %v3400, 2
    %v3422 = vsel %vm501, %v3421, %v3420
    %v3423 = vrot.slane %v3402, 1
    %v3424 = vsel %vm504, %v3423, %v3422
    %v3426 = vsel %vm507, %v3424, 0.0
    %3427 = vadd.xlane.f32.xlu0 %v3426
    %v3428 = vpop.xlane.xlu0 %3427
    %v3429 = vrcp.pop %v3428
    %v3431 = vrot.slane %v3429, 1
    %v3432 = vrot.slane %v3429, 2
    %v3433 = vrot.slane %v3429, 3
    %v3434 = vrot.slane %v3429, 4
    %v3435 = vrot.slane %v3429, 5
    %v3436 = vrot.slane %v3429, 6
    %v3437 = vrot.slane %v3429, 7
    %v3446 = vmul.f32 %v3388, %v3429
    %v3447 = vmul.f32 %v3390, %v3431
    %v3448 = vmul.f32 %v3392, %v3432
    %v3449 = vmul.f32 %v3394, %v3433
    %v3450 = vmul.f32 %v3396, %v3434
    %v3451 = vmul.f32 %v3398, %v3435
    %v3452 = vmul.f32 %v3400, %v3436
    %v3453 = vmul.f32 %v3402, %v3437
    %v3455 = vsel %vm507, %v3446, 0
    %3457 = vmatpush.msra.mxu0 0.0
    %3458 = vmatpush.msra.mxu0 0.0
    %3459 = vmatpush.msra.mxu0 0.0
    %3460 = vmatpush.msra.mxu0 0.0
    %3461 = vmatpush.msra.mxu0 0.0
    %3462 = vmatpush.msra.mxu0 0.0
    %3463 = vmatpush.msra.mxu0 0.0
    %3464 = vmatpush.msra.mxu0 0.0
    %3465 = vmatpush.msra.mxu0 0.0
    %3466 = vmatpush.msra.mxu0 0.0
    %3467 = vmatpush.msra.mxu0 0.0
    %3468 = vmatpush.msra.mxu0 0.0
    %3469 = vmatpush.msra.mxu0 0.0
    %3470 = vmatpush.msra.mxu0 0.0
    %3471 = vmatpush.msra.mxu0 0.0
    %3472 = vmatpush.msra.mxu0 %v190
    %3473 = vmatmul.f32.gmra.mxu0 %v3455
    %v3474 = vpop.f32.mrf.mxu0
    %v3475 = vadd.f32 0.0, %v3474
    %3476 = vdwg.mxu0
    %v3478 = vsel %vm507, %v3447, 0
    %3480 = vmatpush.msra.mxu0 0.0
    %3481 = vmatpush.msra.mxu0 0.0
    %3482 = vmatpush.msra.mxu0 0.0
    %3483 = vmatpush.msra.mxu0 0.0
    %3484 = vmatpush.msra.mxu0 0.0
    %3485 = vmatpush.msra.mxu0 0.0
    %3486 = vmatpush.msra.mxu0 0.0
    %3487 = vmatpush.msra.mxu0 0.0
    %3488 = vmatpush.msra.mxu0 0.0
    %3489 = vmatpush.msra.mxu0 0.0
    %3490 = vmatpush.msra.mxu0 0.0
    %3491 = vmatpush.msra.mxu0 0.0
    %3492 = vmatpush.msra.mxu0 0.0
    %3493 = vmatpush.msra.mxu0 0.0
    %3494 = vmatpush.msra.mxu0 0.0
    %3495 = vmatpush.msra.mxu0 %v191
    %3496 = vmatmul.f32.gmra.mxu0 %v3478
    %v3497 = vpop.f32.mrf.mxu0
    %v3498 = vadd.f32 0.0, %v3497
    %3499 = vdwg.mxu0
    %v3501 = vsel %vm507, %v3448, 0
    %3503 = vmatpush.msra.mxu0 0.0
    %3504 = vmatpush.msra.mxu0 0.0
    %3505 = vmatpush.msra.mxu0 0.0
    %3506 = vmatpush.msra.mxu0 0.0
    %3507 = vmatpush.msra.mxu0 0.0
    %3508 = vmatpush.msra.mxu0 0.0
    %3509 = vmatpush.msra.mxu0 0.0
    %3510 = vmatpush.msra.mxu0 0.0
    %3511 = vmatpush.msra.mxu0 0.0
    %3512 = vmatpush.msra.mxu0 0.0
    %3513 = vmatpush.msra.mxu0 0.0
    %3514 = vmatpush.msra.mxu0 0.0
    %3515 = vmatpush.msra.mxu0 0.0
    %3516 = vmatpush.msra.mxu0 0.0
    %3517 = vmatpush.msra.mxu0 0.0
    %3518 = vmatpush.msra.mxu0 %v192
    %3519 = vmatmul.f32.gmra.mxu0 %v3501
    %v3520 = vpop.f32.mrf.mxu0
    %v3521 = vadd.f32 0.0, %v3520
    %3522 = vdwg.mxu0
    %v3524 = vsel %vm507, %v3449, 0
    %3526 = vmatpush.msra.mxu0 0.0
    %3527 = vmatpush.msra.mxu0 0.0
    %3528 = vmatpush.msra.mxu0 0.0
    %3529 = vmatpush.msra.mxu0 0.0
    %3530 = vmatpush.msra.mxu0 0.0
    %3531 = vmatpush.msra.mxu0 0.0
    %3532 = vmatpush.msra.mxu0 0.0
    %3533 = vmatpush.msra.mxu0 0.0
    %3534 = vmatpush.msra.mxu0 0.0
    %3535 = vmatpush.msra.mxu0 0.0
    %3536 = vmatpush.msra.mxu0 0.0
    %3537 = vmatpush.msra.mxu0 0.0
    %3538 = vmatpush.msra.mxu0 0.0
    %3539 = vmatpush.msra.mxu0 0.0
    %3540 = vmatpush.msra.mxu0 0.0
    %3541 = vmatpush.msra.mxu0 %v193
    %3542 = vmatmul.f32.gmra.mxu0 %v3524
    %v3543 = vpop.f32.mrf.mxu0
    %v3544 = vadd.f32 0.0, %v3543
    %3545 = vdwg.mxu0
    %v3547 = vsel %vm507, %v3450, 0
    %3549 = vmatpush.msra.mxu0 0.0
    %3550 = vmatpush.msra.mxu0 0.0
    %3551 = vmatpush.msra.mxu0 0.0
    %3552 = vmatpush.msra.mxu0 0.0
    %3553 = vmatpush.msra.mxu0 0.0
    %3554 = vmatpush.msra.mxu0 0.0
    %3555 = vmatpush.msra.mxu0 0.0
    %3556 = vmatpush.msra.mxu0 0.0
    %3557 = vmatpush.msra.mxu0 0.0
    %3558 = vmatpush.msra.mxu0 0.0
    %3559 = vmatpush.msra.mxu0 0.0
    %3560 = vmatpush.msra.mxu0 0.0
    %3561 = vmatpush.msra.mxu0 0.0
    %3562 = vmatpush.msra.mxu0 0.0
    %3563 = vmatpush.msra.mxu0 0.0
    %3564 = vmatpush.msra.mxu0 %v194
    %3565 = vmatmul.f32.gmra.mxu0 %v3547
    %v3566 = vpop.f32.mrf.mxu0
    %v3567 = vadd.f32 0.0, %v3566
    %3568 = vdwg.mxu0
    %v3570 = vsel %vm507, %v3451, 0
    %3572 = vmatpush.msra.mxu0 0.0
    %3573 = vmatpush.msra.mxu0 0.0
    %3574 = vmatpush.msra.mxu0 0.0
    %3575 = vmatpush.msra.mxu0 0.0
    %3576 = vmatpush.msra.mxu0 0.0
    %3577 = vmatpush.msra.mxu0 0.0
    %3578 = vmatpush.msra.mxu0 0.0
    %3579 = vmatpush.msra.mxu0 0.0
    %3580 = vmatpush.msra.mxu0 0.0
    %3581 = vmatpush.msra.mxu0 0.0
    %3582 = vmatpush.msra.mxu0 0.0
    %3583 = vmatpush.msra.mxu0 0.0
    %3584 = vmatpush.msra.mxu0 0.0
    %3585 = vmatpush.msra.mxu0 0.0
    %3586 = vmatpush.msra.mxu0 0.0
    %3587 = vmatpush.msra.mxu0 %v195
    %3588 = vmatmul.f32.gmra.mxu0 %v3570
    %v3589 = vpop.f32.mrf.mxu0
    %v3590 = vadd.f32 0.0, %v3589
    %3591 = vdwg.mxu0
    %v3593 = vsel %vm507, %v3452, 0
    %3595 = vmatpush.msra.mxu0 0.0
    %3596 = vmatpush.msra.mxu0 0.0
    %3597 = vmatpush.msra.mxu0 0.0
    %3598 = vmatpush.msra.mxu0 0.0
    %3599 = vmatpush.msra.mxu0 0.0
    %3600 = vmatpush.msra.mxu0 0.0
    %3601 = vmatpush.msra.mxu0 0.0
    %3602 = vmatpush.msra.mxu0 0.0
    %3603 = vmatpush.msra.mxu0 0.0
    %3604 = vmatpush.msra.mxu0 0.0
    %3605 = vmatpush.msra.mxu0 0.0
    %3606 = vmatpush.msra.mxu0 0.0
    %3607 = vmatpush.msra.mxu0 0.0
    %3608 = vmatpush.msra.mxu0 0.0
    %3609 = vmatpush.msra.mxu0 0.0
    %3610 = vmatpush.msra.mxu0 %v196
    %3611 = vmatmul.f32.gmra.mxu0 %v3593
    %v3612 = vpop.f32.mrf.mxu0
    %v3613 = vadd.f32 0.0, %v3612
    %3614 = vdwg.mxu0
    %v3616 = vsel %vm507, %v3453, 0
    %3618 = vmatpush.msra.mxu0 0.0
    %3619 = vmatpush.msra.mxu0 0.0
    %3620 = vmatpush.msra.mxu0 0.0
    %3621 = vmatpush.msra.mxu0 0.0
    %3622 = vmatpush.msra.mxu0 0.0
    %3623 = vmatpush.msra.mxu0 0.0
    %3624 = vmatpush.msra.mxu0 0.0
    %3625 = vmatpush.msra.mxu0 0.0
    %3626 = vmatpush.msra.mxu0 0.0
    %3627 = vmatpush.msra.mxu0 0.0
    %3628 = vmatpush.msra.mxu0 0.0
    %3629 = vmatpush.msra.mxu0 0.0
    %3630 = vmatpush.msra.mxu0 0.0
    %3631 = vmatpush.msra.mxu0 0.0
    %3632 = vmatpush.msra.mxu0 0.0
    %3633 = vmatpush.msra.mxu0 %v197
    %3634 = vmatmul.f32.gmra.mxu0 %v3616
    %v3635 = vpop.f32.mrf.mxu0
    %v3636 = vadd.f32 0.0, %v3635
    %3637 = vdwg.mxu0
    %s3638 = scalar_lea.vmem [#allocation3], 32
    %v3639 = vld [vmem:[%s3638] sm:$0xff]
    %v3648 = vrot.slane %v3498, 7
    %v3649 = vsel %vm486, %v3648, %v3475
    %v3650 = vrot.slane %v3521, 6
    %v3651 = vsel %vm489, %v3650, %v3649
    %v3652 = vrot.slane %v3544, 5
    %v3653 = vsel %vm492, %v3652, %v3651
    %v3654 = vrot.slane %v3567, 4
    %v3655 = vsel %vm495, %v3654, %v3653
    %v3656 = vrot.slane %v3590, 3
    %v3657 = vsel %vm498, %v3656, %v3655
    %v3658 = vrot.slane %v3613, 2
    %v3659 = vsel %vm501, %v3658, %v3657
    %v3660 = vrot.slane %v3636, 1
    %v3661 = vsel %vm504, %v3660, %v3659
    %v3662 = vsel %vm809, %v3661, 0
    %3664 = vmatpush.msra.mxu0 0.0
    %3665 = vmatpush.msra.mxu0 0.0
    %3666 = vmatpush.msra.mxu0 0.0
    %3667 = vmatpush.msra.mxu0 0.0
    %3668 = vmatpush.msra.mxu0 0.0
    %3669 = vmatpush.msra.mxu0 0.0
    %3670 = vmatpush.msra.mxu0 0.0
    %3671 = vmatpush.msra.mxu0 0.0
    %3672 = vmatpush.msra.mxu0 0.0
    %3673 = vmatpush.msra.mxu0 0.0
    %3674 = vmatpush.msra.mxu0 0.0
    %3675 = vmatpush.msra.mxu0 0.0
    %3676 = vmatpush.msra.mxu0 0.0
    %3677 = vmatpush.msra.mxu0 0.0
    %3678 = vmatpush.msra.mxu0 %v204
    %3679 = vmatpush.msra.mxu0 %v203
    %3680 = vmatmul.f32.gmra.mxu0 %v3662
    %v3681 = vpop.f32.mrf.mxu0
    %v3682 = vadd.f32 0.0, %v3681
    %3683 = vdwg.mxu0
    %v3684 = vadd.f32 %v3639, %v3682
    %3685 = vmatpush.msra.mxu0 0.0
    %3686 = vmatpush.msra.mxu0 0.0
    %3687 = vmatpush.msra.mxu0 0.0
    %3688 = vmatpush.msra.mxu0 0.0
    %3689 = vmatpush.msra.mxu0 0.0
    %3690 = vmatpush.msra.mxu0 0.0
    %3691 = vmatpush.msra.mxu0 0.0
    %3692 = vmatpush.msra.mxu0 0.0
    %3693 = vmatpush.msra.mxu0 0.0
    %3694 = vmatpush.msra.mxu0 0.0
    %3695 = vmatpush.msra.mxu0 0.0
    %3696 = vmatpush.msra.mxu0 0.0
    %3697 = vmatpush.msra.mxu0 %v208
    %3698 = vmatpush.msra.mxu0 %v207
    %3699 = vmatpush.msra.mxu0 %v206
    %3700 = vmatpush.msra.mxu0 %v205
    %3701 = vmatmul.f32.gmra.mxu0 %v3054
    %v3702 = vpop.f32.mrf.mxu0
    %v3703 = vadd.f32 0.0, %v3702
    %3704 = vdwg.mxu0
    %v3705 = vadd.f32 %v3684, %v3703
    %v3706 = vxor.u32 %v3705, 2147483648
    %v3707 = vmul.f32 %v3706, 1.442695
    %v3708 = vpow.pop %v3707
    %v3709 = vadd.f32 %v3708, 1.0
    %v3710 = vrcp.pop %v3709
    %v3711 = vmul.f32 %v3709, %v3710
    %v3712 = vsub.f32 1.0, %v3711
    %v3713 = vmul.f32 %v3710, %v3712
    %v3714 = vadd.f32 %v3710, %v3713
    %vm3715 = vweird.f32 %v3709
    %vm3716 = vweird.f32 %v3710
    %vm3717 = vmor %vm3715, %vm3716
    %v3718 = vsel %vm3717, %v3710, %v3714
    %v3719 = vand.u32 2147483647, %v3709
    %vm3720 = vcmp.eq.f32.partialorder %v3719, 8.507059e+37
    %v3721 = vand.u32 %v3709, 2147483648
    %v3722 = vor.u32 1.1754944e-38, %v3721
    %v3723 = vsel %vm3720, %v3722, %v3718
    %v3724 = vmul.f32 1.0, %v3723
    %v3725 = vtanh.pop %v3705
    %v3726 = vmul.f32 %v3724, %v3024
    %3728 = vrot.lane.b32.xlu0 %v3725, 64
    %v3729 = vpop.permute.xlu0 %3728
    %v3731 = vmul.f32 %v3724, %v3729
    %3733 = vrot.lane.b32.xlu0 %v3731, 32
    %v3734 = vpop.permute.xlu0 %3733
    %v3736 = vadd.f32 %v3726, %v3734
    %v3737 = vtanh.pop %v3736
    %3739 = vrot.lane.b32.xlu0 %v3737, 64
    %v3740 = vpop.permute.xlu0 %3739
    %v3742 = vmul.f32 %v3724, %v3740
    %3743 = vmatpush.msra.mxu0 0.0
    %3744 = vmatpush.msra.mxu0 0.0
    %3745 = vmatpush.msra.mxu0 0.0
    %3746 = vmatpush.msra.mxu0 0.0
    %3747 = vmatpush.msra.mxu0 0.0
    %3748 = vmatpush.msra.mxu0 0.0
    %3749 = vmatpush.msra.mxu0 0.0
    %3750 = vmatpush.msra.mxu0 0.0
    %3751 = vmatpush.msra.mxu0 0.0
    %3752 = vmatpush.msra.mxu0 0.0
    %3753 = vmatpush.msra.mxu0 0.0
    %3754 = vmatpush.msra.mxu0 0.0
    %3755 = vmatpush.msra.mxu0 %v216
    %3756 = vmatpush.msra.mxu0 %v215
    %3757 = vmatpush.msra.mxu0 %v214
    %3758 = vmatpush.msra.mxu0 %v213
    %3759 = vmatmul.f32.gmra.mxu0 %v3123
    %v3760 = vpop.f32.mrf.mxu0
    %v3761 = vadd.f32 0.0, %v3760
    %3762 = vdwg.mxu0
    %3764 = vrot.lane.b32.xlu0 %v3742, 32
    %v3765 = vpop.permute.xlu0 %3764
    %v3766 = vsel %vm222, %v3765, 0
    %3768 = vmatpush.msra.mxu0 0.0
    %3769 = vmatpush.msra.mxu0 0.0
    %3770 = vmatpush.msra.mxu0 0.0
    %3771 = vmatpush.msra.mxu0 0.0
    %3772 = vmatpush.msra.mxu0 0.0
    %3773 = vmatpush.msra.mxu0 0.0
    %3774 = vmatpush.msra.mxu0 0.0
    %3775 = vmatpush.msra.mxu0 0.0
    %3776 = vmatpush.msra.mxu0 0.0
    %3777 = vmatpush.msra.mxu0 0.0
    %3778 = vmatpush.msra.mxu0 0.0
    %3779 = vmatpush.msra.mxu0 0.0
    %3780 = vmatpush.msra.mxu0 %v212
    %3781 = vmatpush.msra.mxu0 %v211
    %3782 = vmatpush.msra.mxu0 %v210
    %3783 = vmatpush.msra.mxu0 %v209
    %3784 = vmatmul.f32.gmra.mxu0 %v3766
    %v3785 = vpop.f32.mrf.mxu0
    %v3786 = vadd.f32 %v3761, %v3785
    %3787 = vdwg.mxu0
    %v3788 = vadd.f32 %v3786, %v939
    %v3789 = vxor.u32 %v3788, 2147483648
    %v3790 = vmul.f32 %v3789, 1.442695
    %v3791 = vpow.pop %v3790
    %v3792 = vadd.f32 %v3791, 1.0
    %v3793 = vrcp.pop %v3792
    %v3794 = vmul.f32 %v3792, %v3793
    %v3795 = vsub.f32 1.0, %v3794
    %v3796 = vmul.f32 %v3793, %v3795
    %v3797 = vadd.f32 %v3793, %v3796
    %vm3798 = vweird.f32 %v3792
    %vm3799 = vweird.f32 %v3793
    %vm3800 = vmor %vm3798, %vm3799
    %v3801 = vsel %vm3800, %v3793, %v3797
    %v3802 = vand.u32 2147483647, %v3792
    %vm3803 = vcmp.eq.f32.partialorder %v3802, 8.507059e+37
    %v3804 = vand.u32 %v3792, 2147483648
    %v3805 = vor.u32 1.1754944e-38, %v3804
    %v3806 = vsel %vm3803, %v3805, %v3801
    %v3807 = vmul.f32 1.0, %v3806
    %v3808 = vtanh.pop %v3788
    %v3809 = vmul.f32 %v3807, %v3107
    %3811 = vrot.lane.b32.xlu0 %v3808, 64
    %v3812 = vpop.permute.xlu0 %3811
    %v3814 = vmul.f32 %v3807, %v3812
    %3816 = vrot.lane.b32.xlu0 %v3814, 32
    %v3817 = vpop.permute.xlu0 %3816
    %v3819 = vadd.f32 %v3809, %v3817
    %v3820 = vtanh.pop %v3819
    %3822 = vrot.lane.b32.xlu0 %v3820, 64
    %v3823 = vpop.permute.xlu0 %3822
    %v3825 = vmul.f32 %v3807, %v3823
    %3827 = vrot.lane.b32.xlu0 %v3825, 32
    %v3828 = vpop.permute.xlu0 %3827
    %s3830 = scalar_lea.vmem [#allocation18], 32
    %3831 = vst.msk [vmem:[%s3830] sm:$0xff] %vm222, %v3828
    %s3833 = scalar_lea.vmem [#allocation19], 32
    %3834 = vst.msk [vmem:[%s3833] sm:$0xff] %vm809, %v3661
    %v3835 = vsel %vm222, %v3828, 0
    %3837 = vmatpush.msra.mxu0 0.0
    %3838 = vmatpush.msra.mxu0 0.0
    %3839 = vmatpush.msra.mxu0 0.0
    %3840 = vmatpush.msra.mxu0 0.0
    %3841 = vmatpush.msra.mxu0 0.0
    %3842 = vmatpush.msra.mxu0 0.0
    %3843 = vmatpush.msra.mxu0 0.0
    %3844 = vmatpush.msra.mxu0 0.0
    %3845 = vmatpush.msra.mxu0 0.0
    %3846 = vmatpush.msra.mxu0 0.0
    %3847 = vmatpush.msra.mxu0 0.0
    %3848 = vmatpush.msra.mxu0 0.0
    %3849 = vmatpush.msra.mxu0 %v202
    %3850 = vmatpush.msra.mxu0 %v201
    %3851 = vmatpush.msra.mxu0 %v200
    %3852 = vmatpush.msra.mxu0 %v199
    %3853 = vmatmul.f32.gmra.mxu0 %v3835
    %v3854 = vpop.f32.mrf.mxu0
    %v3855 = vadd.f32 0.0, %v3854
    %3856 = vdwg.mxu0
    %v3858 = vrot.slane %v3855, 1
    %v3859 = vrot.slane %v3855, 2
    %v3860 = vrot.slane %v3855, 3
    %v3861 = vrot.slane %v3855, 4
    %v3862 = vrot.slane %v3855, 5
    %v3863 = vrot.slane %v3855, 6
    %v3864 = vrot.slane %v3855, 7
    %v3865 = vsel %vm222, %v3855, 0
    %3867 = vmatpush.xpose.msra.mxu0 0.0
    %3868 = vmatpush.xpose.msra.mxu0 0.0
    %3869 = vmatpush.xpose.msra.mxu0 0.0
    %3870 = vmatpush.xpose.msra.mxu0 0.0
    %3871 = vmatpush.xpose.msra.mxu0 0.0
    %3872 = vmatpush.xpose.msra.mxu0 0.0
    %3873 = vmatpush.xpose.msra.mxu0 0.0
    %3874 = vmatpush.xpose.msra.mxu0 0.0
    %3875 = vmatpush.xpose.msra.mxu0 0.0
    %3876 = vmatpush.xpose.msra.mxu0 0.0
    %3877 = vmatpush.xpose.msra.mxu0 0.0
    %3878 = vmatpush.xpose.msra.mxu0 0.0
    %3879 = vmatpush.xpose.msra.mxu0 0.0
    %3880 = vmatpush.xpose.msra.mxu0 0.0
    %3881 = vmatpush.xpose.msra.mxu0 0.0
    %3882 = vmatpush.xpose.msra.mxu0 %v256
    %3883 = vmatmul.f32.gmra.mxu0 %v3865
    %v3884 = vpop.f32.mrf.mxu0
    %v3885 = vadd.f32 0.0, %v3884
    %3886 = vdwg.mxu0
    %v3887 = vsel %vm222, %v3858, 0
    %3889 = vmatpush.xpose.msra.mxu0 0.0
    %3890 = vmatpush.xpose.msra.mxu0 0.0
    %3891 = vmatpush.xpose.msra.mxu0 0.0
    %3892 = vmatpush.xpose.msra.mxu0 0.0
    %3893 = vmatpush.xpose.msra.mxu0 0.0
    %3894 = vmatpush.xpose.msra.mxu0 0.0
    %3895 = vmatpush.xpose.msra.mxu0 0.0
    %3896 = vmatpush.xpose.msra.mxu0 0.0
    %3897 = vmatpush.xpose.msra.mxu0 0.0
    %3898 = vmatpush.xpose.msra.mxu0 0.0
    %3899 = vmatpush.xpose.msra.mxu0 0.0
    %3900 = vmatpush.xpose.msra.mxu0 0.0
    %3901 = vmatpush.xpose.msra.mxu0 0.0
    %3902 = vmatpush.xpose.msra.mxu0 0.0
    %3903 = vmatpush.xpose.msra.mxu0 0.0
    %3904 = vmatpush.xpose.msra.mxu0 %v281
    %3905 = vmatmul.f32.gmra.mxu0 %v3887
    %v3906 = vpop.f32.mrf.mxu0
    %v3907 = vadd.f32 0.0, %v3906
    %3908 = vdwg.mxu0
    %v3909 = vsel %vm222, %v3859, 0
    %3911 = vmatpush.xpose.msra.mxu0 0.0
    %3912 = vmatpush.xpose.msra.mxu0 0.0
    %3913 = vmatpush.xpose.msra.mxu0 0.0
    %3914 = vmatpush.xpose.msra.mxu0 0.0
    %3915 = vmatpush.xpose.msra.mxu0 0.0
    %3916 = vmatpush.xpose.msra.mxu0 0.0
    %3917 = vmatpush.xpose.msra.mxu0 0.0
    %3918 = vmatpush.xpose.msra.mxu0 0.0
    %3919 = vmatpush.xpose.msra.mxu0 0.0
    %3920 = vmatpush.xpose.msra.mxu0 0.0
    %3921 = vmatpush.xpose.msra.mxu0 0.0
    %3922 = vmatpush.xpose.msra.mxu0 0.0
    %3923 = vmatpush.xpose.msra.mxu0 0.0
    %3924 = vmatpush.xpose.msra.mxu0 0.0
    %3925 = vmatpush.xpose.msra.mxu0 0.0
    %3926 = vmatpush.xpose.msra.mxu0 %v306
    %3927 = vmatmul.f32.gmra.mxu0 %v3909
    %v3928 = vpop.f32.mrf.mxu0
    %v3929 = vadd.f32 0.0, %v3928
    %3930 = vdwg.mxu0
    %v3931 = vsel %vm222, %v3860, 0
    %3933 = vmatpush.xpose.msra.mxu0 0.0
    %3934 = vmatpush.xpose.msra.mxu0 0.0
    %3935 = vmatpush.xpose.msra.mxu0 0.0
    %3936 = vmatpush.xpose.msra.mxu0 0.0
    %3937 = vmatpush.xpose.msra.mxu0 0.0
    %3938 = vmatpush.xpose.msra.mxu0 0.0
    %3939 = vmatpush.xpose.msra.mxu0 0.0
    %3940 = vmatpush.xpose.msra.mxu0 0.0
    %3941 = vmatpush.xpose.msra.mxu0 0.0
    %3942 = vmatpush.xpose.msra.mxu0 0.0
    %3943 = vmatpush.xpose.msra.mxu0 0.0
    %3944 = vmatpush.xpose.msra.mxu0 0.0
    %3945 = vmatpush.xpose.msra.mxu0 0.0
    %3946 = vmatpush.xpose.msra.mxu0 0.0
    %3947 = vmatpush.xpose.msra.mxu0 0.0
    %3948 = vmatpush.xpose.msra.mxu0 %v331
    %3949 = vmatmul.f32.gmra.mxu0 %v3931
    %v3950 = vpop.f32.mrf.mxu0
    %v3951 = vadd.f32 0.0, %v3950
    %3952 = vdwg.mxu0
    %v3953 = vsel %vm222, %v3861, 0
    %3955 = vmatpush.xpose.msra.mxu0 0.0
    %3956 = vmatpush.xpose.msra.mxu0 0.0
    %3957 = vmatpush.xpose.msra.mxu0 0.0
    %3958 = vmatpush.xpose.msra.mxu0 0.0
    %3959 = vmatpush.xpose.msra.mxu0 0.0
    %3960 = vmatpush.xpose.msra.mxu0 0.0
    %3961 = vmatpush.xpose.msra.mxu0 0.0
    %3962 = vmatpush.xpose.msra.mxu0 0.0
    %3963 = vmatpush.xpose.msra.mxu0 0.0
    %3964 = vmatpush.xpose.msra.mxu0 0.0
    %3965 = vmatpush.xpose.msra.mxu0 0.0
    %3966 = vmatpush.xpose.msra.mxu0 0.0
    %3967 = vmatpush.xpose.msra.mxu0 0.0
    %3968 = vmatpush.xpose.msra.mxu0 0.0
    %3969 = vmatpush.xpose.msra.mxu0 0.0
    %3970 = vmatpush.xpose.msra.mxu0 %v356
    %3971 = vmatmul.f32.gmra.mxu0 %v3953
    %v3972 = vpop.f32.mrf.mxu0
    %v3973 = vadd.f32 0.0, %v3972
    %3974 = vdwg.mxu0
    %v3975 = vsel %vm222, %v3862, 0
    %3977 = vmatpush.xpose.msra.mxu0 0.0
    %3978 = vmatpush.xpose.msra.mxu0 0.0
    %3979 = vmatpush.xpose.msra.mxu0 0.0
    %3980 = vmatpush.xpose.msra.mxu0 0.0
    %3981 = vmatpush.xpose.msra.mxu0 0.0
    %3982 = vmatpush.xpose.msra.mxu0 0.0
    %3983 = vmatpush.xpose.msra.mxu0 0.0
    %3984 = vmatpush.xpose.msra.mxu0 0.0
    %3985 = vmatpush.xpose.msra.mxu0 0.0
    %3986 = vmatpush.xpose.msra.mxu0 0.0
    %3987 = vmatpush.xpose.msra.mxu0 0.0
    %3988 = vmatpush.xpose.msra.mxu0 0.0
    %3989 = vmatpush.xpose.msra.mxu0 0.0
    %3990 = vmatpush.xpose.msra.mxu0 0.0
    %3991 = vmatpush.xpose.msra.mxu0 0.0
    %3992 = vmatpush.xpose.msra.mxu0 %v381
    %3993 = vmatmul.f32.gmra.mxu0 %v3975
    %v3994 = vpop.f32.mrf.mxu0
    %v3995 = vadd.f32 0.0, %v3994
    %3996 = vdwg.mxu0
    %v3997 = vsel %vm222, %v3863, 0
    %3999 = vmatpush.xpose.msra.mxu0 0.0
    %4000 = vmatpush.xpose.msra.mxu0 0.0
    %4001 = vmatpush.xpose.msra.mxu0 0.0
    %4002 = vmatpush.xpose.msra.mxu0 0.0
    %4003 = vmatpush.xpose.msra.mxu0 0.0
    %4004 = vmatpush.xpose.msra.mxu0 0.0
    %4005 = vmatpush.xpose.msra.mxu0 0.0
    %4006 = vmatpush.xpose.msra.mxu0 0.0
    %4007 = vmatpush.xpose.msra.mxu0 0.0
    %4008 = vmatpush.xpose.msra.mxu0 0.0
    %4009 = vmatpush.xpose.msra.mxu0 0.0
    %4010 = vmatpush.xpose.msra.mxu0 0.0
    %4011 = vmatpush.xpose.msra.mxu0 0.0
    %4012 = vmatpush.xpose.msra.mxu0 0.0
    %4013 = vmatpush.xpose.msra.mxu0 0.0
    %4014 = vmatpush.xpose.msra.mxu0 %v406
    %4015 = vmatmul.f32.gmra.mxu0 %v3997
    %v4016 = vpop.f32.mrf.mxu0
    %v4017 = vadd.f32 0.0, %v4016
    %4018 = vdwg.mxu0
    %v4019 = vsel %vm222, %v3864, 0
    %4021 = vmatpush.xpose.msra.mxu0 0.0
    %4022 = vmatpush.xpose.msra.mxu0 0.0
    %4023 = vmatpush.xpose.msra.mxu0 0.0
    %4024 = vmatpush.xpose.msra.mxu0 0.0
    %4025 = vmatpush.xpose.msra.mxu0 0.0
    %4026 = vmatpush.xpose.msra.mxu0 0.0
    %4027 = vmatpush.xpose.msra.mxu0 0.0
    %4028 = vmatpush.xpose.msra.mxu0 0.0
    %4029 = vmatpush.xpose.msra.mxu0 0.0
    %4030 = vmatpush.xpose.msra.mxu0 0.0
    %4031 = vmatpush.xpose.msra.mxu0 0.0
    %4032 = vmatpush.xpose.msra.mxu0 0.0
    %4033 = vmatpush.xpose.msra.mxu0 0.0
    %4034 = vmatpush.xpose.msra.mxu0 0.0
    %4035 = vmatpush.xpose.msra.mxu0 0.0
    %4036 = vmatpush.xpose.msra.mxu0 %v431
    %4037 = vmatmul.f32.gmra.mxu0 %v4019
    %v4038 = vpop.f32.mrf.mxu0
    %v4039 = vadd.f32 0.0, %v4038
    %4040 = vdwg.mxu0
    %v4041 = vadd.f32 %v3885, %v198
    %v4042 = vadd.f32 %v3907, %v454
    %v4043 = vadd.f32 %v3929, %v455
    %v4044 = vadd.f32 %v3951, %v456
    %v4045 = vadd.f32 %v3973, %v457
    %v4046 = vadd.f32 %v3995, %v458
    %v4047 = vadd.f32 %v4017, %v459
    %v4048 = vadd.f32 %v4039, %v460
    %v4057 = vrot.slane %v4042, 7
    %v4058 = vsel %vm486, %v4057, %v4041
    %v4059 = vrot.slane %v4043, 6
    %v4060 = vsel %vm489, %v4059, %v4058
    %v4061 = vrot.slane %v4044, 5
    %v4062 = vsel %vm492, %v4061, %v4060
    %v4063 = vrot.slane %v4045, 4
    %v4064 = vsel %vm495, %v4063, %v4062
    %v4065 = vrot.slane %v4046, 3
    %v4066 = vsel %vm498, %v4065, %v4064
    %v4067 = vrot.slane %v4047, 2
    %v4068 = vsel %vm501, %v4067, %v4066
    %v4069 = vrot.slane %v4048, 1
    %v4070 = vsel %vm504, %v4069, %v4068
    %v4072 = vsel %vm507, %v4070, -inf
    %4073 = vmax.xlane.f32.xlu0 %v4072
    %v4074 = vpop.xlane.xlu0 %4073
    %v4076 = vrot.slane %v4074, 1
    %v4077 = vrot.slane %v4074, 2
    %v4078 = vrot.slane %v4074, 3
    %v4079 = vrot.slane %v4074, 4
    %v4080 = vrot.slane %v4074, 5
    %v4081 = vrot.slane %v4074, 6
    %v4082 = vrot.slane %v4074, 7
    %v4091 = vsub.f32 %v4041, %v4074
    %v4092 = vsub.f32 %v4042, %v4076
    %v4093 = vsub.f32 %v4043, %v4077
    %v4094 = vsub.f32 %v4044, %v4078
    %v4095 = vsub.f32 %v4045, %v4079
    %v4096 = vsub.f32 %v4046, %v4080
    %v4097 = vsub.f32 %v4047, %v4081
    %v4098 = vsub.f32 %v4048, %v4082
    %v4099 = vmul.f32 %v4091, 1.442695
    %v4100 = vpow.pop %v4099
    %v4101 = vmul.f32 %v4092, 1.442695
    %v4102 = vpow.pop %v4101
    %v4103 = vmul.f32 %v4093, 1.442695
    %v4104 = vpow.pop %v4103
    %v4105 = vmul.f32 %v4094, 1.442695
    %v4106 = vpow.pop %v4105
    %v4107 = vmul.f32 %v4095, 1.442695
    %v4108 = vpow.pop %v4107
    %v4109 = vmul.f32 %v4096, 1.442695
    %v4110 = vpow.pop %v4109
    %v4111 = vmul.f32 %v4097, 1.442695
    %v4112 = vpow.pop %v4111
    %v4113 = vmul.f32 %v4098, 1.442695
    %v4114 = vpow.pop %v4113
    %v4123 = vrot.slane %v4102, 7
    %v4124 = vsel %vm486, %v4123, %v4100
    %v4125 = vrot.slane %v4104, 6
    %v4126 = vsel %vm489, %v4125, %v4124
    %v4127 = vrot.slane %v4106, 5
    %v4128 = vsel %vm492, %v4127, %v4126
    %v4129 = vrot.slane %v4108, 4
    %v4130 = vsel %vm495, %v4129, %v4128
    %v4131 = vrot.slane %v4110, 3
    %v4132 = vsel %vm498, %v4131, %v4130
    %v4133 = vrot.slane %v4112, 2
    %v4134 = vsel %vm501, %v4133, %v4132
    %v4135 = vrot.slane %v4114, 1
    %v4136 = vsel %vm504, %v4135, %v4134
    %v4138 = vsel %vm507, %v4136, 0.0
    %4139 = vadd.xlane.f32.xlu0 %v4138
    %v4140 = vpop.xlane.xlu0 %4139
    %v4141 = vrcp.pop %v4140
    %v4143 = vrot.slane %v4141, 1
    %v4144 = vrot.slane %v4141, 2
    %v4145 = vrot.slane %v4141, 3
    %v4146 = vrot.slane %v4141, 4
    %v4147 = vrot.slane %v4141, 5
    %v4148 = vrot.slane %v4141, 6
    %v4149 = vrot.slane %v4141, 7
    %v4158 = vmul.f32 %v4100, %v4141
    %v4159 = vmul.f32 %v4102, %v4143
    %v4160 = vmul.f32 %v4104, %v4144
    %v4161 = vmul.f32 %v4106, %v4145
    %v4162 = vmul.f32 %v4108, %v4146
    %v4163 = vmul.f32 %v4110, %v4147
    %v4164 = vmul.f32 %v4112, %v4148
    %v4165 = vmul.f32 %v4114, %v4149
    %v4167 = vsel %vm507, %v4158, 0
    %4169 = vmatpush.msra.mxu0 0.0
    %4170 = vmatpush.msra.mxu0 0.0
    %4171 = vmatpush.msra.mxu0 0.0
    %4172 = vmatpush.msra.mxu0 0.0
    %4173 = vmatpush.msra.mxu0 0.0
    %4174 = vmatpush.msra.mxu0 0.0
    %4175 = vmatpush.msra.mxu0 0.0
    %4176 = vmatpush.msra.mxu0 0.0
    %4177 = vmatpush.msra.mxu0 0.0
    %4178 = vmatpush.msra.mxu0 0.0
    %4179 = vmatpush.msra.mxu0 0.0
    %4180 = vmatpush.msra.mxu0 0.0
    %4181 = vmatpush.msra.mxu0 0.0
    %4182 = vmatpush.msra.mxu0 0.0
    %4183 = vmatpush.msra.mxu0 0.0
    %4184 = vmatpush.msra.mxu0 %v190
    %4185 = vmatmul.f32.gmra.mxu0 %v4167
    %v4186 = vpop.f32.mrf.mxu0
    %v4187 = vadd.f32 0.0, %v4186
    %4188 = vdwg.mxu0
    %v4190 = vsel %vm507, %v4159, 0
    %4192 = vmatpush.msra.mxu0 0.0
    %4193 = vmatpush.msra.mxu0 0.0
    %4194 = vmatpush.msra.mxu0 0.0
    %4195 = vmatpush.msra.mxu0 0.0
    %4196 = vmatpush.msra.mxu0 0.0
    %4197 = vmatpush.msra.mxu0 0.0
    %4198 = vmatpush.msra.mxu0 0.0
    %4199 = vmatpush.msra.mxu0 0.0
    %4200 = vmatpush.msra.mxu0 0.0
    %4201 = vmatpush.msra.mxu0 0.0
    %4202 = vmatpush.msra.mxu0 0.0
    %4203 = vmatpush.msra.mxu0 0.0
    %4204 = vmatpush.msra.mxu0 0.0
    %4205 = vmatpush.msra.mxu0 0.0
    %4206 = vmatpush.msra.mxu0 0.0
    %4207 = vmatpush.msra.mxu0 %v191
    %4208 = vmatmul.f32.gmra.mxu0 %v4190
    %v4209 = vpop.f32.mrf.mxu0
    %v4210 = vadd.f32 0.0, %v4209
    %4211 = vdwg.mxu0
    %v4213 = vsel %vm507, %v4160, 0
    %4215 = vmatpush.msra.mxu0 0.0
    %4216 = vmatpush.msra.mxu0 0.0
    %4217 = vmatpush.msra.mxu0 0.0
    %4218 = vmatpush.msra.mxu0 0.0
    %4219 = vmatpush.msra.mxu0 0.0
    %4220 = vmatpush.msra.mxu0 0.0
    %4221 = vmatpush.msra.mxu0 0.0
    %4222 = vmatpush.msra.mxu0 0.0
    %4223 = vmatpush.msra.mxu0 0.0
    %4224 = vmatpush.msra.mxu0 0.0
    %4225 = vmatpush.msra.mxu0 0.0
    %4226 = vmatpush.msra.mxu0 0.0
    %4227 = vmatpush.msra.mxu0 0.0
    %4228 = vmatpush.msra.mxu0 0.0
    %4229 = vmatpush.msra.mxu0 0.0
    %4230 = vmatpush.msra.mxu0 %v192
    %4231 = vmatmul.f32.gmra.mxu0 %v4213
    %v4232 = vpop.f32.mrf.mxu0
    %v4233 = vadd.f32 0.0, %v4232
    %4234 = vdwg.mxu0
    %v4236 = vsel %vm507, %v4161, 0
    %4238 = vmatpush.msra.mxu0 0.0
    %4239 = vmatpush.msra.mxu0 0.0
    %4240 = vmatpush.msra.mxu0 0.0
    %4241 = vmatpush.msra.mxu0 0.0
    %4242 = vmatpush.msra.mxu0 0.0
    %4243 = vmatpush.msra.mxu0 0.0
    %4244 = vmatpush.msra.mxu0 0.0
    %4245 = vmatpush.msra.mxu0 0.0
    %4246 = vmatpush.msra.mxu0 0.0
    %4247 = vmatpush.msra.mxu0 0.0
    %4248 = vmatpush.msra.mxu0 0.0
    %4249 = vmatpush.msra.mxu0 0.0
    %4250 = vmatpush.msra.mxu0 0.0
    %4251 = vmatpush.msra.mxu0 0.0
    %4252 = vmatpush.msra.mxu0 0.0
    %4253 = vmatpush.msra.mxu0 %v193
    %4254 = vmatmul.f32.gmra.mxu0 %v4236
    %v4255 = vpop.f32.mrf.mxu0
    %v4256 = vadd.f32 0.0, %v4255
    %4257 = vdwg.mxu0
    %v4259 = vsel %vm507, %v4162, 0
    %4261 = vmatpush.msra.mxu0 0.0
    %4262 = vmatpush.msra.mxu0 0.0
    %4263 = vmatpush.msra.mxu0 0.0
    %4264 = vmatpush.msra.mxu0 0.0
    %4265 = vmatpush.msra.mxu0 0.0
    %4266 = vmatpush.msra.mxu0 0.0
    %4267 = vmatpush.msra.mxu0 0.0
    %4268 = vmatpush.msra.mxu0 0.0
    %4269 = vmatpush.msra.mxu0 0.0
    %4270 = vmatpush.msra.mxu0 0.0
    %4271 = vmatpush.msra.mxu0 0.0
    %4272 = vmatpush.msra.mxu0 0.0
    %4273 = vmatpush.msra.mxu0 0.0
    %4274 = vmatpush.msra.mxu0 0.0
    %4275 = vmatpush.msra.mxu0 0.0
    %4276 = vmatpush.msra.mxu0 %v194
    %4277 = vmatmul.f32.gmra.mxu0 %v4259
    %v4278 = vpop.f32.mrf.mxu0
    %v4279 = vadd.f32 0.0, %v4278
    %4280 = vdwg.mxu0
    %v4282 = vsel %vm507, %v4163, 0
    %4284 = vmatpush.msra.mxu0 0.0
    %4285 = vmatpush.msra.mxu0 0.0
    %4286 = vmatpush.msra.mxu0 0.0
    %4287 = vmatpush.msra.mxu0 0.0
    %4288 = vmatpush.msra.mxu0 0.0
    %4289 = vmatpush.msra.mxu0 0.0
    %4290 = vmatpush.msra.mxu0 0.0
    %4291 = vmatpush.msra.mxu0 0.0
    %4292 = vmatpush.msra.mxu0 0.0
    %4293 = vmatpush.msra.mxu0 0.0
    %4294 = vmatpush.msra.mxu0 0.0
    %4295 = vmatpush.msra.mxu0 0.0
    %4296 = vmatpush.msra.mxu0 0.0
    %4297 = vmatpush.msra.mxu0 0.0
    %4298 = vmatpush.msra.mxu0 0.0
    %4299 = vmatpush.msra.mxu0 %v195
    %4300 = vmatmul.f32.gmra.mxu0 %v4282
    %v4301 = vpop.f32.mrf.mxu0
    %v4302 = vadd.f32 0.0, %v4301
    %4303 = vdwg.mxu0
    %v4305 = vsel %vm507, %v4164, 0
    %4307 = vmatpush.msra.mxu0 0.0
    %4308 = vmatpush.msra.mxu0 0.0
    %4309 = vmatpush.msra.mxu0 0.0
    %4310 = vmatpush.msra.mxu0 0.0
    %4311 = vmatpush.msra.mxu0 0.0
    %4312 = vmatpush.msra.mxu0 0.0
    %4313 = vmatpush.msra.mxu0 0.0
    %4314 = vmatpush.msra.mxu0 0.0
    %4315 = vmatpush.msra.mxu0 0.0
    %4316 = vmatpush.msra.mxu0 0.0
    %4317 = vmatpush.msra.mxu0 0.0
    %4318 = vmatpush.msra.mxu0 0.0
    %4319 = vmatpush.msra.mxu0 0.0
    %4320 = vmatpush.msra.mxu0 0.0
    %4321 = vmatpush.msra.mxu0 0.0
    %4322 = vmatpush.msra.mxu0 %v196
    %4323 = vmatmul.f32.gmra.mxu0 %v4305
    %v4324 = vpop.f32.mrf.mxu0
    %v4325 = vadd.f32 0.0, %v4324
    %4326 = vdwg.mxu0
    %v4328 = vsel %vm507, %v4165, 0
    %4330 = vmatpush.msra.mxu0 0.0
    %4331 = vmatpush.msra.mxu0 0.0
    %4332 = vmatpush.msra.mxu0 0.0
    %4333 = vmatpush.msra.mxu0 0.0
    %4334 = vmatpush.msra.mxu0 0.0
    %4335 = vmatpush.msra.mxu0 0.0
    %4336 = vmatpush.msra.mxu0 0.0
    %4337 = vmatpush.msra.mxu0 0.0
    %4338 = vmatpush.msra.mxu0 0.0
    %4339 = vmatpush.msra.mxu0 0.0
    %4340 = vmatpush.msra.mxu0 0.0
    %4341 = vmatpush.msra.mxu0 0.0
    %4342 = vmatpush.msra.mxu0 0.0
    %4343 = vmatpush.msra.mxu0 0.0
    %4344 = vmatpush.msra.mxu0 0.0
    %4345 = vmatpush.msra.mxu0 %v197
    %4346 = vmatmul.f32.gmra.mxu0 %v4328
    %v4347 = vpop.f32.mrf.mxu0
    %v4348 = vadd.f32 0.0, %v4347
    %4349 = vdwg.mxu0
    %s4350 = scalar_lea.vmem [#allocation3], 40
    %v4351 = vld [vmem:[%s4350] sm:$0xff]
    %v4360 = vrot.slane %v4210, 7
    %v4361 = vsel %vm486, %v4360, %v4187
    %v4362 = vrot.slane %v4233, 6
    %v4363 = vsel %vm489, %v4362, %v4361
    %v4364 = vrot.slane %v4256, 5
    %v4365 = vsel %vm492, %v4364, %v4363
    %v4366 = vrot.slane %v4279, 4
    %v4367 = vsel %vm495, %v4366, %v4365
    %v4368 = vrot.slane %v4302, 3
    %v4369 = vsel %vm498, %v4368, %v4367
    %v4370 = vrot.slane %v4325, 2
    %v4371 = vsel %vm501, %v4370, %v4369
    %v4372 = vrot.slane %v4348, 1
    %v4373 = vsel %vm504, %v4372, %v4371
    %v4374 = vsel %vm809, %v4373, 0
    %4376 = vmatpush.msra.mxu0 0.0
    %4377 = vmatpush.msra.mxu0 0.0
    %4378 = vmatpush.msra.mxu0 0.0
    %4379 = vmatpush.msra.mxu0 0.0
    %4380 = vmatpush.msra.mxu0 0.0
    %4381 = vmatpush.msra.mxu0 0.0
    %4382 = vmatpush.msra.mxu0 0.0
    %4383 = vmatpush.msra.mxu0 0.0
    %4384 = vmatpush.msra.mxu0 0.0
    %4385 = vmatpush.msra.mxu0 0.0
    %4386 = vmatpush.msra.mxu0 0.0
    %4387 = vmatpush.msra.mxu0 0.0
    %4388 = vmatpush.msra.mxu0 0.0
    %4389 = vmatpush.msra.mxu0 0.0
    %4390 = vmatpush.msra.mxu0 %v204
    %4391 = vmatpush.msra.mxu0 %v203
    %4392 = vmatmul.f32.gmra.mxu0 %v4374
    %v4393 = vpop.f32.mrf.mxu0
    %v4394 = vadd.f32 0.0, %v4393
    %4395 = vdwg.mxu0
    %v4396 = vadd.f32 %v4351, %v4394
    %4397 = vmatpush.msra.mxu0 0.0
    %4398 = vmatpush.msra.mxu0 0.0
    %4399 = vmatpush.msra.mxu0 0.0
    %4400 = vmatpush.msra.mxu0 0.0
    %4401 = vmatpush.msra.mxu0 0.0
    %4402 = vmatpush.msra.mxu0 0.0
    %4403 = vmatpush.msra.mxu0 0.0
    %4404 = vmatpush.msra.mxu0 0.0
    %4405 = vmatpush.msra.mxu0 0.0
    %4406 = vmatpush.msra.mxu0 0.0
    %4407 = vmatpush.msra.mxu0 0.0
    %4408 = vmatpush.msra.mxu0 0.0
    %4409 = vmatpush.msra.mxu0 %v208
    %4410 = vmatpush.msra.mxu0 %v207
    %4411 = vmatpush.msra.mxu0 %v206
    %4412 = vmatpush.msra.mxu0 %v205
    %4413 = vmatmul.f32.gmra.mxu0 %v3766
    %v4414 = vpop.f32.mrf.mxu0
    %v4415 = vadd.f32 0.0, %v4414
    %4416 = vdwg.mxu0
    %v4417 = vadd.f32 %v4396, %v4415
    %v4418 = vxor.u32 %v4417, 2147483648
    %v4419 = vmul.f32 %v4418, 1.442695
    %v4420 = vpow.pop %v4419
    %v4421 = vadd.f32 %v4420, 1.0
    %v4422 = vrcp.pop %v4421
    %v4423 = vmul.f32 %v4421, %v4422
    %v4424 = vsub.f32 1.0, %v4423
    %v4425 = vmul.f32 %v4422, %v4424
    %v4426 = vadd.f32 %v4422, %v4425
    %vm4427 = vweird.f32 %v4421
    %vm4428 = vweird.f32 %v4422
    %vm4429 = vmor %vm4427, %vm4428
    %v4430 = vsel %vm4429, %v4422, %v4426
    %v4431 = vand.u32 2147483647, %v4421
    %vm4432 = vcmp.eq.f32.partialorder %v4431, 8.507059e+37
    %v4433 = vand.u32 %v4421, 2147483648
    %v4434 = vor.u32 1.1754944e-38, %v4433
    %v4435 = vsel %vm4432, %v4434, %v4430
    %v4436 = vmul.f32 1.0, %v4435
    %v4437 = vtanh.pop %v4417
    %v4438 = vmul.f32 %v4436, %v3736
    %4440 = vrot.lane.b32.xlu0 %v4437, 64
    %v4441 = vpop.permute.xlu0 %4440
    %v4443 = vmul.f32 %v4436, %v4441
    %4445 = vrot.lane.b32.xlu0 %v4443, 32
    %v4446 = vpop.permute.xlu0 %4445
    %v4448 = vadd.f32 %v4438, %v4446
    %v4449 = vtanh.pop %v4448
    %4451 = vrot.lane.b32.xlu0 %v4449, 64
    %v4452 = vpop.permute.xlu0 %4451
    %v4454 = vmul.f32 %v4436, %v4452
    %4455 = vmatpush.msra.mxu0 0.0
    %4456 = vmatpush.msra.mxu0 0.0
    %4457 = vmatpush.msra.mxu0 0.0
    %4458 = vmatpush.msra.mxu0 0.0
    %4459 = vmatpush.msra.mxu0 0.0
    %4460 = vmatpush.msra.mxu0 0.0
    %4461 = vmatpush.msra.mxu0 0.0
    %4462 = vmatpush.msra.mxu0 0.0
    %4463 = vmatpush.msra.mxu0 0.0
    %4464 = vmatpush.msra.mxu0 0.0
    %4465 = vmatpush.msra.mxu0 0.0
    %4466 = vmatpush.msra.mxu0 0.0
    %4467 = vmatpush.msra.mxu0 %v216
    %4468 = vmatpush.msra.mxu0 %v215
    %4469 = vmatpush.msra.mxu0 %v214
    %4470 = vmatpush.msra.mxu0 %v213
    %4471 = vmatmul.f32.gmra.mxu0 %v3835
    %v4472 = vpop.f32.mrf.mxu0
    %v4473 = vadd.f32 0.0, %v4472
    %4474 = vdwg.mxu0
    %4476 = vrot.lane.b32.xlu0 %v4454, 32
    %v4477 = vpop.permute.xlu0 %4476
    %v4478 = vsel %vm222, %v4477, 0
    %4480 = vmatpush.msra.mxu0 0.0
    %4481 = vmatpush.msra.mxu0 0.0
    %4482 = vmatpush.msra.mxu0 0.0
    %4483 = vmatpush.msra.mxu0 0.0
    %4484 = vmatpush.msra.mxu0 0.0
    %4485 = vmatpush.msra.mxu0 0.0
    %4486 = vmatpush.msra.mxu0 0.0
    %4487 = vmatpush.msra.mxu0 0.0
    %4488 = vmatpush.msra.mxu0 0.0
    %4489 = vmatpush.msra.mxu0 0.0
    %4490 = vmatpush.msra.mxu0 0.0
    %4491 = vmatpush.msra.mxu0 0.0
    %4492 = vmatpush.msra.mxu0 %v212
    %4493 = vmatpush.msra.mxu0 %v211
    %4494 = vmatpush.msra.mxu0 %v210
    %4495 = vmatpush.msra.mxu0 %v209
    %4496 = vmatmul.f32.gmra.mxu0 %v4478
    %v4497 = vpop.f32.mrf.mxu0
    %v4498 = vadd.f32 %v4473, %v4497
    %4499 = vdwg.mxu0
    %v4500 = vadd.f32 %v4498, %v939
    %v4501 = vxor.u32 %v4500, 2147483648
    %v4502 = vmul.f32 %v4501, 1.442695
    %v4503 = vpow.pop %v4502
    %v4504 = vadd.f32 %v4503, 1.0
    %v4505 = vrcp.pop %v4504
    %v4506 = vmul.f32 %v4504, %v4505
    %v4507 = vsub.f32 1.0, %v4506
    %v4508 = vmul.f32 %v4505, %v4507
    %v4509 = vadd.f32 %v4505, %v4508
    %vm4510 = vweird.f32 %v4504
    %vm4511 = vweird.f32 %v4505
    %vm4512 = vmor %vm4510, %vm4511
    %v4513 = vsel %vm4512, %v4505, %v4509
    %v4514 = vand.u32 2147483647, %v4504
    %vm4515 = vcmp.eq.f32.partialorder %v4514, 8.507059e+37
    %v4516 = vand.u32 %v4504, 2147483648
    %v4517 = vor.u32 1.1754944e-38, %v4516
    %v4518 = vsel %vm4515, %v4517, %v4513
    %v4519 = vmul.f32 1.0, %v4518
    %v4520 = vtanh.pop %v4500
    %v4521 = vmul.f32 %v4519, %v3819
    %4523 = vrot.lane.b32.xlu0 %v4520, 64
    %v4524 = vpop.permute.xlu0 %4523
    %v4526 = vmul.f32 %v4519, %v4524
    %4528 = vrot.lane.b32.xlu0 %v4526, 32
    %v4529 = vpop.permute.xlu0 %4528
    %v4531 = vadd.f32 %v4521, %v4529
    %v4532 = vtanh.pop %v4531
    %4534 = vrot.lane.b32.xlu0 %v4532, 64
    %v4535 = vpop.permute.xlu0 %4534
    %v4537 = vmul.f32 %v4519, %v4535
    %4539 = vrot.lane.b32.xlu0 %v4537, 32
    %v4540 = vpop.permute.xlu0 %4539
    %s4542 = scalar_lea.vmem [#allocation18], 40
    %4543 = vst.msk [vmem:[%s4542] sm:$0xff] %vm222, %v4540
    %s4545 = scalar_lea.vmem [#allocation19], 40
    %4546 = vst.msk [vmem:[%s4545] sm:$0xff] %vm809, %v4373
    %v4547 = vsel %vm222, %v4540, 0
    %4549 = vmatpush.msra.mxu0 0.0
    %4550 = vmatpush.msra.mxu0 0.0
    %4551 = vmatpush.msra.mxu0 0.0
    %4552 = vmatpush.msra.mxu0 0.0
    %4553 = vmatpush.msra.mxu0 0.0
    %4554 = vmatpush.msra.mxu0 0.0
    %4555 = vmatpush.msra.mxu0 0.0
    %4556 = vmatpush.msra.mxu0 0.0
    %4557 = vmatpush.msra.mxu0 0.0
    %4558 = vmatpush.msra.mxu0 0.0
    %4559 = vmatpush.msra.mxu0 0.0
    %4560 = vmatpush.msra.mxu0 0.0
    %4561 = vmatpush.msra.mxu0 %v202
    %4562 = vmatpush.msra.mxu0 %v201
    %4563 = vmatpush.msra.mxu0 %v200
    %4564 = vmatpush.msra.mxu0 %v199
    %4565 = vmatmul.f32.gmra.mxu0 %v4547
    %v4566 = vpop.f32.mrf.mxu0
    %v4567 = vadd.f32 0.0, %v4566
    %4568 = vdwg.mxu0
    %v4570 = vrot.slane %v4567, 1
    %v4571 = vrot.slane %v4567, 2
    %v4572 = vrot.slane %v4567, 3
    %v4573 = vrot.slane %v4567, 4
    %v4574 = vrot.slane %v4567, 5
    %v4575 = vrot.slane %v4567, 6
    %v4576 = vrot.slane %v4567, 7
    %v4577 = vsel %vm222, %v4567, 0
    %4579 = vmatpush.xpose.msra.mxu0 0.0
    %4580 = vmatpush.xpose.msra.mxu0 0.0
    %4581 = vmatpush.xpose.msra.mxu0 0.0
    %4582 = vmatpush.xpose.msra.mxu0 0.0
    %4583 = vmatpush.xpose.msra.mxu0 0.0
    %4584 = vmatpush.xpose.msra.mxu0 0.0
    %4585 = vmatpush.xpose.msra.mxu0 0.0
    %4586 = vmatpush.xpose.msra.mxu0 0.0
    %4587 = vmatpush.xpose.msra.mxu0 0.0
    %4588 = vmatpush.xpose.msra.mxu0 0.0
    %4589 = vmatpush.xpose.msra.mxu0 0.0
    %4590 = vmatpush.xpose.msra.mxu0 0.0
    %4591 = vmatpush.xpose.msra.mxu0 0.0
    %4592 = vmatpush.xpose.msra.mxu0 0.0
    %4593 = vmatpush.xpose.msra.mxu0 0.0
    %4594 = vmatpush.xpose.msra.mxu0 %v256
    %4595 = vmatmul.f32.gmra.mxu0 %v4577
    %v4596 = vpop.f32.mrf.mxu0
    %v4597 = vadd.f32 0.0, %v4596
    %4598 = vdwg.mxu0
    %v4599 = vsel %vm222, %v4570, 0
    %4601 = vmatpush.xpose.msra.mxu0 0.0
    %4602 = vmatpush.xpose.msra.mxu0 0.0
    %4603 = vmatpush.xpose.msra.mxu0 0.0
    %4604 = vmatpush.xpose.msra.mxu0 0.0
    %4605 = vmatpush.xpose.msra.mxu0 0.0
    %4606 = vmatpush.xpose.msra.mxu0 0.0
    %4607 = vmatpush.xpose.msra.mxu0 0.0
    %4608 = vmatpush.xpose.msra.mxu0 0.0
    %4609 = vmatpush.xpose.msra.mxu0 0.0
    %4610 = vmatpush.xpose.msra.mxu0 0.0
    %4611 = vmatpush.xpose.msra.mxu0 0.0
    %4612 = vmatpush.xpose.msra.mxu0 0.0
    %4613 = vmatpush.xpose.msra.mxu0 0.0
    %4614 = vmatpush.xpose.msra.mxu0 0.0
    %4615 = vmatpush.xpose.msra.mxu0 0.0
    %4616 = vmatpush.xpose.msra.mxu0 %v281
    %4617 = vmatmul.f32.gmra.mxu0 %v4599
    %v4618 = vpop.f32.mrf.mxu0
    %v4619 = vadd.f32 0.0, %v4618
    %4620 = vdwg.mxu0
    %v4621 = vsel %vm222, %v4571, 0
    %4623 = vmatpush.xpose.msra.mxu0 0.0
    %4624 = vmatpush.xpose.msra.mxu0 0.0
    %4625 = vmatpush.xpose.msra.mxu0 0.0
    %4626 = vmatpush.xpose.msra.mxu0 0.0
    %4627 = vmatpush.xpose.msra.mxu0 0.0
    %4628 = vmatpush.xpose.msra.mxu0 0.0
    %4629 = vmatpush.xpose.msra.mxu0 0.0
    %4630 = vmatpush.xpose.msra.mxu0 0.0
    %4631 = vmatpush.xpose.msra.mxu0 0.0
    %4632 = vmatpush.xpose.msra.mxu0 0.0
    %4633 = vmatpush.xpose.msra.mxu0 0.0
    %4634 = vmatpush.xpose.msra.mxu0 0.0
    %4635 = vmatpush.xpose.msra.mxu0 0.0
    %4636 = vmatpush.xpose.msra.mxu0 0.0
    %4637 = vmatpush.xpose.msra.mxu0 0.0
    %4638 = vmatpush.xpose.msra.mxu0 %v306
    %4639 = vmatmul.f32.gmra.mxu0 %v4621
    %v4640 = vpop.f32.mrf.mxu0
    %v4641 = vadd.f32 0.0, %v4640
    %4642 = vdwg.mxu0
    %v4643 = vsel %vm222, %v4572, 0
    %4645 = vmatpush.xpose.msra.mxu0 0.0
    %4646 = vmatpush.xpose.msra.mxu0 0.0
    %4647 = vmatpush.xpose.msra.mxu0 0.0
    %4648 = vmatpush.xpose.msra.mxu0 0.0
    %4649 = vmatpush.xpose.msra.mxu0 0.0
    %4650 = vmatpush.xpose.msra.mxu0 0.0
    %4651 = vmatpush.xpose.msra.mxu0 0.0
    %4652 = vmatpush.xpose.msra.mxu0 0.0
    %4653 = vmatpush.xpose.msra.mxu0 0.0
    %4654 = vmatpush.xpose.msra.mxu0 0.0
    %4655 = vmatpush.xpose.msra.mxu0 0.0
    %4656 = vmatpush.xpose.msra.mxu0 0.0
    %4657 = vmatpush.xpose.msra.mxu0 0.0
    %4658 = vmatpush.xpose.msra.mxu0 0.0
    %4659 = vmatpush.xpose.msra.mxu0 0.0
    %4660 = vmatpush.xpose.msra.mxu0 %v331
    %4661 = vmatmul.f32.gmra.mxu0 %v4643
    %v4662 = vpop.f32.mrf.mxu0
    %v4663 = vadd.f32 0.0, %v4662
    %4664 = vdwg.mxu0
    %v4665 = vsel %vm222, %v4573, 0
    %4667 = vmatpush.xpose.msra.mxu0 0.0
    %4668 = vmatpush.xpose.msra.mxu0 0.0
    %4669 = vmatpush.xpose.msra.mxu0 0.0
    %4670 = vmatpush.xpose.msra.mxu0 0.0
    %4671 = vmatpush.xpose.msra.mxu0 0.0
    %4672 = vmatpush.xpose.msra.mxu0 0.0
    %4673 = vmatpush.xpose.msra.mxu0 0.0
    %4674 = vmatpush.xpose.msra.mxu0 0.0
    %4675 = vmatpush.xpose.msra.mxu0 0.0
    %4676 = vmatpush.xpose.msra.mxu0 0.0
    %4677 = vmatpush.xpose.msra.mxu0 0.0
    %4678 = vmatpush.xpose.msra.mxu0 0.0
    %4679 = vmatpush.xpose.msra.mxu0 0.0
    %4680 = vmatpush.xpose.msra.mxu0 0.0
    %4681 = vmatpush.xpose.msra.mxu0 0.0
    %4682 = vmatpush.xpose.msra.mxu0 %v356
    %4683 = vmatmul.f32.gmra.mxu0 %v4665
    %v4684 = vpop.f32.mrf.mxu0
    %v4685 = vadd.f32 0.0, %v4684
    %4686 = vdwg.mxu0
    %v4687 = vsel %vm222, %v4574, 0
    %4689 = vmatpush.xpose.msra.mxu0 0.0
    %4690 = vmatpush.xpose.msra.mxu0 0.0
    %4691 = vmatpush.xpose.msra.mxu0 0.0
    %4692 = vmatpush.xpose.msra.mxu0 0.0
    %4693 = vmatpush.xpose.msra.mxu0 0.0
    %4694 = vmatpush.xpose.msra.mxu0 0.0
    %4695 = vmatpush.xpose.msra.mxu0 0.0
    %4696 = vmatpush.xpose.msra.mxu0 0.0
    %4697 = vmatpush.xpose.msra.mxu0 0.0
    %4698 = vmatpush.xpose.msra.mxu0 0.0
    %4699 = vmatpush.xpose.msra.mxu0 0.0
    %4700 = vmatpush.xpose.msra.mxu0 0.0
    %4701 = vmatpush.xpose.msra.mxu0 0.0
    %4702 = vmatpush.xpose.msra.mxu0 0.0
    %4703 = vmatpush.xpose.msra.mxu0 0.0
    %4704 = vmatpush.xpose.msra.mxu0 %v381
    %4705 = vmatmul.f32.gmra.mxu0 %v4687
    %v4706 = vpop.f32.mrf.mxu0
    %v4707 = vadd.f32 0.0, %v4706
    %4708 = vdwg.mxu0
    %v4709 = vsel %vm222, %v4575, 0
    %4711 = vmatpush.xpose.msra.mxu0 0.0
    %4712 = vmatpush.xpose.msra.mxu0 0.0
    %4713 = vmatpush.xpose.msra.mxu0 0.0
    %4714 = vmatpush.xpose.msra.mxu0 0.0
    %4715 = vmatpush.xpose.msra.mxu0 0.0
    %4716 = vmatpush.xpose.msra.mxu0 0.0
    %4717 = vmatpush.xpose.msra.mxu0 0.0
    %4718 = vmatpush.xpose.msra.mxu0 0.0
    %4719 = vmatpush.xpose.msra.mxu0 0.0
    %4720 = vmatpush.xpose.msra.mxu0 0.0
    %4721 = vmatpush.xpose.msra.mxu0 0.0
    %4722 = vmatpush.xpose.msra.mxu0 0.0
    %4723 = vmatpush.xpose.msra.mxu0 0.0
    %4724 = vmatpush.xpose.msra.mxu0 0.0
    %4725 = vmatpush.xpose.msra.mxu0 0.0
    %4726 = vmatpush.xpose.msra.mxu0 %v406
    %4727 = vmatmul.f32.gmra.mxu0 %v4709
    %v4728 = vpop.f32.mrf.mxu0
    %v4729 = vadd.f32 0.0, %v4728
    %4730 = vdwg.mxu0
    %v4731 = vsel %vm222, %v4576, 0
    %4733 = vmatpush.xpose.msra.mxu0 0.0
    %4734 = vmatpush.xpose.msra.mxu0 0.0
    %4735 = vmatpush.xpose.msra.mxu0 0.0
    %4736 = vmatpush.xpose.msra.mxu0 0.0
    %4737 = vmatpush.xpose.msra.mxu0 0.0
    %4738 = vmatpush.xpose.msra.mxu0 0.0
    %4739 = vmatpush.xpose.msra.mxu0 0.0
    %4740 = vmatpush.xpose.msra.mxu0 0.0
    %4741 = vmatpush.xpose.msra.mxu0 0.0
    %4742 = vmatpush.xpose.msra.mxu0 0.0
    %4743 = vmatpush.xpose.msra.mxu0 0.0
    %4744 = vmatpush.xpose.msra.mxu0 0.0
    %4745 = vmatpush.xpose.msra.mxu0 0.0
    %4746 = vmatpush.xpose.msra.mxu0 0.0
    %4747 = vmatpush.xpose.msra.mxu0 0.0
    %4748 = vmatpush.xpose.msra.mxu0 %v431
    %4749 = vmatmul.f32.gmra.mxu0 %v4731
    %v4750 = vpop.f32.mrf.mxu0
    %v4751 = vadd.f32 0.0, %v4750
    %4752 = vdwg.mxu0
    %v4753 = vadd.f32 %v4597, %v198
    %v4754 = vadd.f32 %v4619, %v454
    %v4755 = vadd.f32 %v4641, %v455
    %v4756 = vadd.f32 %v4663, %v456
    %v4757 = vadd.f32 %v4685, %v457
    %v4758 = vadd.f32 %v4707, %v458
    %v4759 = vadd.f32 %v4729, %v459
    %v4760 = vadd.f32 %v4751, %v460
    %v4769 = vrot.slane %v4754, 7
    %v4770 = vsel %vm486, %v4769, %v4753
    %v4771 = vrot.slane %v4755, 6
    %v4772 = vsel %vm489, %v4771, %v4770
    %v4773 = vrot.slane %v4756, 5
    %v4774 = vsel %vm492, %v4773, %v4772
    %v4775 = vrot.slane %v4757, 4
    %v4776 = vsel %vm495, %v4775, %v4774
    %v4777 = vrot.slane %v4758, 3
    %v4778 = vsel %vm498, %v4777, %v4776
    %v4779 = vrot.slane %v4759, 2
    %v4780 = vsel %vm501, %v4779, %v4778
    %v4781 = vrot.slane %v4760, 1
    %v4782 = vsel %vm504, %v4781, %v4780
    %v4784 = vsel %vm507, %v4782, -inf
    %4785 = vmax.xlane.f32.xlu0 %v4784
    %v4786 = vpop.xlane.xlu0 %4785
    %v4788 = vrot.slane %v4786, 1
    %v4789 = vrot.slane %v4786, 2
    %v4790 = vrot.slane %v4786, 3
    %v4791 = vrot.slane %v4786, 4
    %v4792 = vrot.slane %v4786, 5
    %v4793 = vrot.slane %v4786, 6
    %v4794 = vrot.slane %v4786, 7
    %v4803 = vsub.f32 %v4753, %v4786
    %v4804 = vsub.f32 %v4754, %v4788
    %v4805 = vsub.f32 %v4755, %v4789
    %v4806 = vsub.f32 %v4756, %v4790
    %v4807 = vsub.f32 %v4757, %v4791
    %v4808 = vsub.f32 %v4758, %v4792
    %v4809 = vsub.f32 %v4759, %v4793
    %v4810 = vsub.f32 %v4760, %v4794
    %v4811 = vmul.f32 %v4803, 1.442695
    %v4812 = vpow.pop %v4811
    %v4813 = vmul.f32 %v4804, 1.442695
    %v4814 = vpow.pop %v4813
    %v4815 = vmul.f32 %v4805, 1.442695
    %v4816 = vpow.pop %v4815
    %v4817 = vmul.f32 %v4806, 1.442695
    %v4818 = vpow.pop %v4817
    %v4819 = vmul.f32 %v4807, 1.442695
    %v4820 = vpow.pop %v4819
    %v4821 = vmul.f32 %v4808, 1.442695
    %v4822 = vpow.pop %v4821
    %v4823 = vmul.f32 %v4809, 1.442695
    %v4824 = vpow.pop %v4823
    %v4825 = vmul.f32 %v4810, 1.442695
    %v4826 = vpow.pop %v4825
    %v4835 = vrot.slane %v4814, 7
    %v4836 = vsel %vm486, %v4835, %v4812
    %v4837 = vrot.slane %v4816, 6
    %v4838 = vsel %vm489, %v4837, %v4836
    %v4839 = vrot.slane %v4818, 5
    %v4840 = vsel %vm492, %v4839, %v4838
    %v4841 = vrot.slane %v4820, 4
    %v4842 = vsel %vm495, %v4841, %v4840
    %v4843 = vrot.slane %v4822, 3
    %v4844 = vsel %vm498, %v4843, %v4842
    %v4845 = vrot.slane %v4824, 2
    %v4846 = vsel %vm501, %v4845, %v4844
    %v4847 = vrot.slane %v4826, 1
    %v4848 = vsel %vm504, %v4847, %v4846
    %v4850 = vsel %vm507, %v4848, 0.0
    %4851 = vadd.xlane.f32.xlu0 %v4850
    %v4852 = vpop.xlane.xlu0 %4851
    %v4853 = vrcp.pop %v4852
    %v4855 = vrot.slane %v4853, 1
    %v4856 = vrot.slane %v4853, 2
    %v4857 = vrot.slane %v4853, 3
    %v4858 = vrot.slane %v4853, 4
    %v4859 = vrot.slane %v4853, 5
    %v4860 = vrot.slane %v4853, 6
    %v4861 = vrot.slane %v4853, 7
    %v4870 = vmul.f32 %v4812, %v4853
    %v4871 = vmul.f32 %v4814, %v4855
    %v4872 = vmul.f32 %v4816, %v4856
    %v4873 = vmul.f32 %v4818, %v4857
    %v4874 = vmul.f32 %v4820, %v4858
    %v4875 = vmul.f32 %v4822, %v4859
    %v4876 = vmul.f32 %v4824, %v4860
    %v4877 = vmul.f32 %v4826, %v4861
    %v4879 = vsel %vm507, %v4870, 0
    %4881 = vmatpush.msra.mxu0 0.0
    %4882 = vmatpush.msra.mxu0 0.0
    %4883 = vmatpush.msra.mxu0 0.0
    %4884 = vmatpush.msra.mxu0 0.0
    %4885 = vmatpush.msra.mxu0 0.0
    %4886 = vmatpush.msra.mxu0 0.0
    %4887 = vmatpush.msra.mxu0 0.0
    %4888 = vmatpush.msra.mxu0 0.0
    %4889 = vmatpush.msra.mxu0 0.0
    %4890 = vmatpush.msra.mxu0 0.0
    %4891 = vmatpush.msra.mxu0 0.0
    %4892 = vmatpush.msra.mxu0 0.0
    %4893 = vmatpush.msra.mxu0 0.0
    %4894 = vmatpush.msra.mxu0 0.0
    %4895 = vmatpush.msra.mxu0 0.0
    %4896 = vmatpush.msra.mxu0 %v190
    %4897 = vmatmul.f32.gmra.mxu0 %v4879
    %v4898 = vpop.f32.mrf.mxu0
    %v4899 = vadd.f32 0.0, %v4898
    %4900 = vdwg.mxu0
    %v4902 = vsel %vm507, %v4871, 0
    %4904 = vmatpush.msra.mxu0 0.0
    %4905 = vmatpush.msra.mxu0 0.0
    %4906 = vmatpush.msra.mxu0 0.0
    %4907 = vmatpush.msra.mxu0 0.0
    %4908 = vmatpush.msra.mxu0 0.0
    %4909 = vmatpush.msra.mxu0 0.0
    %4910 = vmatpush.msra.mxu0 0.0
    %4911 = vmatpush.msra.mxu0 0.0
    %4912 = vmatpush.msra.mxu0 0.0
    %4913 = vmatpush.msra.mxu0 0.0
    %4914 = vmatpush.msra.mxu0 0.0
    %4915 = vmatpush.msra.mxu0 0.0
    %4916 = vmatpush.msra.mxu0 0.0
    %4917 = vmatpush.msra.mxu0 0.0
    %4918 = vmatpush.msra.mxu0 0.0
    %4919 = vmatpush.msra.mxu0 %v191
    %4920 = vmatmul.f32.gmra.mxu0 %v4902
    %v4921 = vpop.f32.mrf.mxu0
    %v4922 = vadd.f32 0.0, %v4921
    %4923 = vdwg.mxu0
    %v4925 = vsel %vm507, %v4872, 0
    %4927 = vmatpush.msra.mxu0 0.0
    %4928 = vmatpush.msra.mxu0 0.0
    %4929 = vmatpush.msra.mxu0 0.0
    %4930 = vmatpush.msra.mxu0 0.0
    %4931 = vmatpush.msra.mxu0 0.0
    %4932 = vmatpush.msra.mxu0 0.0
    %4933 = vmatpush.msra.mxu0 0.0
    %4934 = vmatpush.msra.mxu0 0.0
    %4935 = vmatpush.msra.mxu0 0.0
    %4936 = vmatpush.msra.mxu0 0.0
    %4937 = vmatpush.msra.mxu0 0.0
    %4938 = vmatpush.msra.mxu0 0.0
    %4939 = vmatpush.msra.mxu0 0.0
    %4940 = vmatpush.msra.mxu0 0.0
    %4941 = vmatpush.msra.mxu0 0.0
    %4942 = vmatpush.msra.mxu0 %v192
    %4943 = vmatmul.f32.gmra.mxu0 %v4925
    %v4944 = vpop.f32.mrf.mxu0
    %v4945 = vadd.f32 0.0, %v4944
    %4946 = vdwg.mxu0
    %v4948 = vsel %vm507, %v4873, 0
    %4950 = vmatpush.msra.mxu0 0.0
    %4951 = vmatpush.msra.mxu0 0.0
    %4952 = vmatpush.msra.mxu0 0.0
    %4953 = vmatpush.msra.mxu0 0.0
    %4954 = vmatpush.msra.mxu0 0.0
    %4955 = vmatpush.msra.mxu0 0.0
    %4956 = vmatpush.msra.mxu0 0.0
    %4957 = vmatpush.msra.mxu0 0.0
    %4958 = vmatpush.msra.mxu0 0.0
    %4959 = vmatpush.msra.mxu0 0.0
    %4960 = vmatpush.msra.mxu0 0.0
    %4961 = vmatpush.msra.mxu0 0.0
    %4962 = vmatpush.msra.mxu0 0.0
    %4963 = vmatpush.msra.mxu0 0.0
    %4964 = vmatpush.msra.mxu0 0.0
    %4965 = vmatpush.msra.mxu0 %v193
    %4966 = vmatmul.f32.gmra.mxu0 %v4948
    %v4967 = vpop.f32.mrf.mxu0
    %v4968 = vadd.f32 0.0, %v4967
    %4969 = vdwg.mxu0
    %v4971 = vsel %vm507, %v4874, 0
    %4973 = vmatpush.msra.mxu0 0.0
    %4974 = vmatpush.msra.mxu0 0.0
    %4975 = vmatpush.msra.mxu0 0.0
    %4976 = vmatpush.msra.mxu0 0.0
    %4977 = vmatpush.msra.mxu0 0.0
    %4978 = vmatpush.msra.mxu0 0.0
    %4979 = vmatpush.msra.mxu0 0.0
    %4980 = vmatpush.msra.mxu0 0.0
    %4981 = vmatpush.msra.mxu0 0.0
    %4982 = vmatpush.msra.mxu0 0.0
    %4983 = vmatpush.msra.mxu0 0.0
    %4984 = vmatpush.msra.mxu0 0.0
    %4985 = vmatpush.msra.mxu0 0.0
    %4986 = vmatpush.msra.mxu0 0.0
    %4987 = vmatpush.msra.mxu0 0.0
    %4988 = vmatpush.msra.mxu0 %v194
    %4989 = vmatmul.f32.gmra.mxu0 %v4971
    %v4990 = vpop.f32.mrf.mxu0
    %v4991 = vadd.f32 0.0, %v4990
    %4992 = vdwg.mxu0
    %v4994 = vsel %vm507, %v4875, 0
    %4996 = vmatpush.msra.mxu0 0.0
    %4997 = vmatpush.msra.mxu0 0.0
    %4998 = vmatpush.msra.mxu0 0.0
    %4999 = vmatpush.msra.mxu0 0.0
    %5000 = vmatpush.msra.mxu0 0.0
    %5001 = vmatpush.msra.mxu0 0.0
    %5002 = vmatpush.msra.mxu0 0.0
    %5003 = vmatpush.msra.mxu0 0.0
    %5004 = vmatpush.msra.mxu0 0.0
    %5005 = vmatpush.msra.mxu0 0.0
    %5006 = vmatpush.msra.mxu0 0.0
    %5007 = vmatpush.msra.mxu0 0.0
    %5008 = vmatpush.msra.mxu0 0.0
    %5009 = vmatpush.msra.mxu0 0.0
    %5010 = vmatpush.msra.mxu0 0.0
    %5011 = vmatpush.msra.mxu0 %v195
    %5012 = vmatmul.f32.gmra.mxu0 %v4994
    %v5013 = vpop.f32.mrf.mxu0
    %v5014 = vadd.f32 0.0, %v5013
    %5015 = vdwg.mxu0
    %v5017 = vsel %vm507, %v4876, 0
    %5019 = vmatpush.msra.mxu0 0.0
    %5020 = vmatpush.msra.mxu0 0.0
    %5021 = vmatpush.msra.mxu0 0.0
    %5022 = vmatpush.msra.mxu0 0.0
    %5023 = vmatpush.msra.mxu0 0.0
    %5024 = vmatpush.msra.mxu0 0.0
    %5025 = vmatpush.msra.mxu0 0.0
    %5026 = vmatpush.msra.mxu0 0.0
    %5027 = vmatpush.msra.mxu0 0.0
    %5028 = vmatpush.msra.mxu0 0.0
    %5029 = vmatpush.msra.mxu0 0.0
    %5030 = vmatpush.msra.mxu0 0.0
    %5031 = vmatpush.msra.mxu0 0.0
    %5032 = vmatpush.msra.mxu0 0.0
    %5033 = vmatpush.msra.mxu0 0.0
    %5034 = vmatpush.msra.mxu0 %v196
    %5035 = vmatmul.f32.gmra.mxu0 %v5017
    %v5036 = vpop.f32.mrf.mxu0
    %v5037 = vadd.f32 0.0, %v5036
    %5038 = vdwg.mxu0
    %v5040 = vsel %vm507, %v4877, 0
    %5042 = vmatpush.msra.mxu0 0.0
    %5043 = vmatpush.msra.mxu0 0.0
    %5044 = vmatpush.msra.mxu0 0.0
    %5045 = vmatpush.msra.mxu0 0.0
    %5046 = vmatpush.msra.mxu0 0.0
    %5047 = vmatpush.msra.mxu0 0.0
    %5048 = vmatpush.msra.mxu0 0.0
    %5049 = vmatpush.msra.mxu0 0.0
    %5050 = vmatpush.msra.mxu0 0.0
    %5051 = vmatpush.msra.mxu0 0.0
    %5052 = vmatpush.msra.mxu0 0.0
    %5053 = vmatpush.msra.mxu0 0.0
    %5054 = vmatpush.msra.mxu0 0.0
    %5055 = vmatpush.msra.mxu0 0.0
    %5056 = vmatpush.msra.mxu0 0.0
    %5057 = vmatpush.msra.mxu0 %v197
    %5058 = vmatmul.f32.gmra.mxu0 %v5040
    %v5059 = vpop.f32.mrf.mxu0
    %v5060 = vadd.f32 0.0, %v5059
    %5061 = vdwg.mxu0
    %s5062 = scalar_lea.vmem [#allocation3], 48
    %v5063 = vld [vmem:[%s5062] sm:$0xff]
    %v5072 = vrot.slane %v4922, 7
    %v5073 = vsel %vm486, %v5072, %v4899
    %v5074 = vrot.slane %v4945, 6
    %v5075 = vsel %vm489, %v5074, %v5073
    %v5076 = vrot.slane %v4968, 5
    %v5077 = vsel %vm492, %v5076, %v5075
    %v5078 = vrot.slane %v4991, 4
    %v5079 = vsel %vm495, %v5078, %v5077
    %v5080 = vrot.slane %v5014, 3
    %v5081 = vsel %vm498, %v5080, %v5079
    %v5082 = vrot.slane %v5037, 2
    %v5083 = vsel %vm501, %v5082, %v5081
    %v5084 = vrot.slane %v5060, 1
    %v5085 = vsel %vm504, %v5084, %v5083
    %v5086 = vsel %vm809, %v5085, 0
    %5088 = vmatpush.msra.mxu0 0.0
    %5089 = vmatpush.msra.mxu0 0.0
    %5090 = vmatpush.msra.mxu0 0.0
    %5091 = vmatpush.msra.mxu0 0.0
    %5092 = vmatpush.msra.mxu0 0.0
    %5093 = vmatpush.msra.mxu0 0.0
    %5094 = vmatpush.msra.mxu0 0.0
    %5095 = vmatpush.msra.mxu0 0.0
    %5096 = vmatpush.msra.mxu0 0.0
    %5097 = vmatpush.msra.mxu0 0.0
    %5098 = vmatpush.msra.mxu0 0.0
    %5099 = vmatpush.msra.mxu0 0.0
    %5100 = vmatpush.msra.mxu0 0.0
    %5101 = vmatpush.msra.mxu0 0.0
    %5102 = vmatpush.msra.mxu0 %v204
    %5103 = vmatpush.msra.mxu0 %v203
    %5104 = vmatmul.f32.gmra.mxu0 %v5086
    %v5105 = vpop.f32.mrf.mxu0
    %v5106 = vadd.f32 0.0, %v5105
    %5107 = vdwg.mxu0
    %v5108 = vadd.f32 %v5063, %v5106
    %5109 = vmatpush.msra.mxu0 0.0
    %5110 = vmatpush.msra.mxu0 0.0
    %5111 = vmatpush.msra.mxu0 0.0
    %5112 = vmatpush.msra.mxu0 0.0
    %5113 = vmatpush.msra.mxu0 0.0
    %5114 = vmatpush.msra.mxu0 0.0
    %5115 = vmatpush.msra.mxu0 0.0
    %5116 = vmatpush.msra.mxu0 0.0
    %5117 = vmatpush.msra.mxu0 0.0
    %5118 = vmatpush.msra.mxu0 0.0
    %5119 = vmatpush.msra.mxu0 0.0
    %5120 = vmatpush.msra.mxu0 0.0
    %5121 = vmatpush.msra.mxu0 %v208
    %5122 = vmatpush.msra.mxu0 %v207
    %5123 = vmatpush.msra.mxu0 %v206
    %5124 = vmatpush.msra.mxu0 %v205
    %5125 = vmatmul.f32.gmra.mxu0 %v4478
    %v5126 = vpop.f32.mrf.mxu0
    %v5127 = vadd.f32 0.0, %v5126
    %5128 = vdwg.mxu0
    %v5129 = vadd.f32 %v5108, %v5127
    %v5130 = vxor.u32 %v5129, 2147483648
    %v5131 = vmul.f32 %v5130, 1.442695
    %v5132 = vpow.pop %v5131
    %v5133 = vadd.f32 %v5132, 1.0
    %v5134 = vrcp.pop %v5133
    %v5135 = vmul.f32 %v5133, %v5134
    %v5136 = vsub.f32 1.0, %v5135
    %v5137 = vmul.f32 %v5134, %v5136
    %v5138 = vadd.f32 %v5134, %v5137
    %vm5139 = vweird.f32 %v5133
    %vm5140 = vweird.f32 %v5134
    %vm5141 = vmor %vm5139, %vm5140
    %v5142 = vsel %vm5141, %v5134, %v5138
    %v5143 = vand.u32 2147483647, %v5133
    %vm5144 = vcmp.eq.f32.partialorder %v5143, 8.507059e+37
    %v5145 = vand.u32 %v5133, 2147483648
    %v5146 = vor.u32 1.1754944e-38, %v5145
    %v5147 = vsel %vm5144, %v5146, %v5142
    %v5148 = vmul.f32 1.0, %v5147
    %v5149 = vtanh.pop %v5129
    %v5150 = vmul.f32 %v5148, %v4448
    %5152 = vrot.lane.b32.xlu0 %v5149, 64
    %v5153 = vpop.permute.xlu0 %5152
    %v5155 = vmul.f32 %v5148, %v5153
    %5157 = vrot.lane.b32.xlu0 %v5155, 32
    %v5158 = vpop.permute.xlu0 %5157
    %v5160 = vadd.f32 %v5150, %v5158
    %v5161 = vtanh.pop %v5160
    %5163 = vrot.lane.b32.xlu0 %v5161, 64
    %v5164 = vpop.permute.xlu0 %5163
    %v5166 = vmul.f32 %v5148, %v5164
    %5167 = vmatpush.msra.mxu0 0.0
    %5168 = vmatpush.msra.mxu0 0.0
    %5169 = vmatpush.msra.mxu0 0.0
    %5170 = vmatpush.msra.mxu0 0.0
    %5171 = vmatpush.msra.mxu0 0.0
    %5172 = vmatpush.msra.mxu0 0.0
    %5173 = vmatpush.msra.mxu0 0.0
    %5174 = vmatpush.msra.mxu0 0.0
    %5175 = vmatpush.msra.mxu0 0.0
    %5176 = vmatpush.msra.mxu0 0.0
    %5177 = vmatpush.msra.mxu0 0.0
    %5178 = vmatpush.msra.mxu0 0.0
    %5179 = vmatpush.msra.mxu0 %v216
    %5180 = vmatpush.msra.mxu0 %v215
    %5181 = vmatpush.msra.mxu0 %v214
    %5182 = vmatpush.msra.mxu0 %v213
    %5183 = vmatmul.f32.gmra.mxu0 %v4547
    %v5184 = vpop.f32.mrf.mxu0
    %v5185 = vadd.f32 0.0, %v5184
    %5186 = vdwg.mxu0
    %5188 = vrot.lane.b32.xlu0 %v5166, 32
    %v5189 = vpop.permute.xlu0 %5188
    %v5190 = vsel %vm222, %v5189, 0
    %5192 = vmatpush.msra.mxu0 0.0
    %5193 = vmatpush.msra.mxu0 0.0
    %5194 = vmatpush.msra.mxu0 0.0
    %5195 = vmatpush.msra.mxu0 0.0
    %5196 = vmatpush.msra.mxu0 0.0
    %5197 = vmatpush.msra.mxu0 0.0
    %5198 = vmatpush.msra.mxu0 0.0
    %5199 = vmatpush.msra.mxu0 0.0
    %5200 = vmatpush.msra.mxu0 0.0
    %5201 = vmatpush.msra.mxu0 0.0
    %5202 = vmatpush.msra.mxu0 0.0
    %5203 = vmatpush.msra.mxu0 0.0
    %5204 = vmatpush.msra.mxu0 %v212
    %5205 = vmatpush.msra.mxu0 %v211
    %5206 = vmatpush.msra.mxu0 %v210
    %5207 = vmatpush.msra.mxu0 %v209
    %5208 = vmatmul.f32.gmra.mxu0 %v5190
    %v5209 = vpop.f32.mrf.mxu0
    %v5210 = vadd.f32 %v5185, %v5209
    %5211 = vdwg.mxu0
    %v5212 = vadd.f32 %v5210, %v939
    %v5213 = vxor.u32 %v5212, 2147483648
    %v5214 = vmul.f32 %v5213, 1.442695
    %v5215 = vpow.pop %v5214
    %v5216 = vadd.f32 %v5215, 1.0
    %v5217 = vrcp.pop %v5216
    %v5218 = vmul.f32 %v5216, %v5217
    %v5219 = vsub.f32 1.0, %v5218
    %v5220 = vmul.f32 %v5217, %v5219
    %v5221 = vadd.f32 %v5217, %v5220
    %vm5222 = vweird.f32 %v5216
    %vm5223 = vweird.f32 %v5217
    %vm5224 = vmor %vm5222, %vm5223
    %v5225 = vsel %vm5224, %v5217, %v5221
    %v5226 = vand.u32 2147483647, %v5216
    %vm5227 = vcmp.eq.f32.partialorder %v5226, 8.507059e+37
    %v5228 = vand.u32 %v5216, 2147483648
    %v5229 = vor.u32 1.1754944e-38, %v5228
    %v5230 = vsel %vm5227, %v5229, %v5225
    %v5231 = vmul.f32 1.0, %v5230
    %v5232 = vtanh.pop %v5212
    %v5233 = vmul.f32 %v5231, %v4531
    %5235 = vrot.lane.b32.xlu0 %v5232, 64
    %v5236 = vpop.permute.xlu0 %5235
    %v5238 = vmul.f32 %v5231, %v5236
    %5240 = vrot.lane.b32.xlu0 %v5238, 32
    %v5241 = vpop.permute.xlu0 %5240
    %v5243 = vadd.f32 %v5233, %v5241
    %v5244 = vtanh.pop %v5243
    %5246 = vrot.lane.b32.xlu0 %v5244, 64
    %v5247 = vpop.permute.xlu0 %5246
    %v5249 = vmul.f32 %v5231, %v5247
    %5251 = vrot.lane.b32.xlu0 %v5249, 32
    %v5252 = vpop.permute.xlu0 %5251
    %s5254 = scalar_lea.vmem [#allocation18], 48
    %5255 = vst.msk [vmem:[%s5254] sm:$0xff] %vm222, %v5252
    %s5257 = scalar_lea.vmem [#allocation19], 48
    %5258 = vst.msk [vmem:[%s5257] sm:$0xff] %vm809, %v5085
    %v5259 = vsel %vm222, %v5252, 0
    %5261 = vmatpush.msra.mxu0 0.0
    %5262 = vmatpush.msra.mxu0 0.0
    %5263 = vmatpush.msra.mxu0 0.0
    %5264 = vmatpush.msra.mxu0 0.0
    %5265 = vmatpush.msra.mxu0 0.0
    %5266 = vmatpush.msra.mxu0 0.0
    %5267 = vmatpush.msra.mxu0 0.0
    %5268 = vmatpush.msra.mxu0 0.0
    %5269 = vmatpush.msra.mxu0 0.0
    %5270 = vmatpush.msra.mxu0 0.0
    %5271 = vmatpush.msra.mxu0 0.0
    %5272 = vmatpush.msra.mxu0 0.0
    %5273 = vmatpush.msra.mxu0 %v202
    %5274 = vmatpush.msra.mxu0 %v201
    %5275 = vmatpush.msra.mxu0 %v200
    %5276 = vmatpush.msra.mxu0 %v199
    %5277 = vmatmul.f32.gmra.mxu0 %v5259
    %v5278 = vpop.f32.mrf.mxu0
    %v5279 = vadd.f32 0.0, %v5278
    %5280 = vdwg.mxu0
    %v5282 = vrot.slane %v5279, 1
    %v5283 = vrot.slane %v5279, 2
    %v5284 = vrot.slane %v5279, 3
    %v5285 = vrot.slane %v5279, 4
    %v5286 = vrot.slane %v5279, 5
    %v5287 = vrot.slane %v5279, 6
    %v5288 = vrot.slane %v5279, 7
    %v5289 = vsel %vm222, %v5279, 0
    %5291 = vmatpush.xpose.msra.mxu0 0.0
    %5292 = vmatpush.xpose.msra.mxu0 0.0
    %5293 = vmatpush.xpose.msra.mxu0 0.0
    %5294 = vmatpush.xpose.msra.mxu0 0.0
    %5295 = vmatpush.xpose.msra.mxu0 0.0
    %5296 = vmatpush.xpose.msra.mxu0 0.0
    %5297 = vmatpush.xpose.msra.mxu0 0.0
    %5298 = vmatpush.xpose.msra.mxu0 0.0
    %5299 = vmatpush.xpose.msra.mxu0 0.0
    %5300 = vmatpush.xpose.msra.mxu0 0.0
    %5301 = vmatpush.xpose.msra.mxu0 0.0
    %5302 = vmatpush.xpose.msra.mxu0 0.0
    %5303 = vmatpush.xpose.msra.mxu0 0.0
    %5304 = vmatpush.xpose.msra.mxu0 0.0
    %5305 = vmatpush.xpose.msra.mxu0 0.0
    %5306 = vmatpush.xpose.msra.mxu0 %v256
    %5307 = vmatmul.f32.gmra.mxu0 %v5289
    %v5308 = vpop.f32.mrf.mxu0
    %v5309 = vadd.f32 0.0, %v5308
    %5310 = vdwg.mxu0
    %v5311 = vsel %vm222, %v5282, 0
    %5313 = vmatpush.xpose.msra.mxu0 0.0
    %5314 = vmatpush.xpose.msra.mxu0 0.0
    %5315 = vmatpush.xpose.msra.mxu0 0.0
    %5316 = vmatpush.xpose.msra.mxu0 0.0
    %5317 = vmatpush.xpose.msra.mxu0 0.0
    %5318 = vmatpush.xpose.msra.mxu0 0.0
    %5319 = vmatpush.xpose.msra.mxu0 0.0
    %5320 = vmatpush.xpose.msra.mxu0 0.0
    %5321 = vmatpush.xpose.msra.mxu0 0.0
    %5322 = vmatpush.xpose.msra.mxu0 0.0
    %5323 = vmatpush.xpose.msra.mxu0 0.0
    %5324 = vmatpush.xpose.msra.mxu0 0.0
    %5325 = vmatpush.xpose.msra.mxu0 0.0
    %5326 = vmatpush.xpose.msra.mxu0 0.0
    %5327 = vmatpush.xpose.msra.mxu0 0.0
    %5328 = vmatpush.xpose.msra.mxu0 %v281
    %5329 = vmatmul.f32.gmra.mxu0 %v5311
    %v5330 = vpop.f32.mrf.mxu0
    %v5331 = vadd.f32 0.0, %v5330
    %5332 = vdwg.mxu0
    %v5333 = vsel %vm222, %v5283, 0
    %5335 = vmatpush.xpose.msra.mxu0 0.0
    %5336 = vmatpush.xpose.msra.mxu0 0.0
    %5337 = vmatpush.xpose.msra.mxu0 0.0
    %5338 = vmatpush.xpose.msra.mxu0 0.0
    %5339 = vmatpush.xpose.msra.mxu0 0.0
    %5340 = vmatpush.xpose.msra.mxu0 0.0
    %5341 = vmatpush.xpose.msra.mxu0 0.0
    %5342 = vmatpush.xpose.msra.mxu0 0.0
    %5343 = vmatpush.xpose.msra.mxu0 0.0
    %5344 = vmatpush.xpose.msra.mxu0 0.0
    %5345 = vmatpush.xpose.msra.mxu0 0.0
    %5346 = vmatpush.xpose.msra.mxu0 0.0
    %5347 = vmatpush.xpose.msra.mxu0 0.0
    %5348 = vmatpush.xpose.msra.mxu0 0.0
    %5349 = vmatpush.xpose.msra.mxu0 0.0
    %5350 = vmatpush.xpose.msra.mxu0 %v306
    %5351 = vmatmul.f32.gmra.mxu0 %v5333
    %v5352 = vpop.f32.mrf.mxu0
    %v5353 = vadd.f32 0.0, %v5352
    %5354 = vdwg.mxu0
    %v5355 = vsel %vm222, %v5284, 0
    %5357 = vmatpush.xpose.msra.mxu0 0.0
    %5358 = vmatpush.xpose.msra.mxu0 0.0
    %5359 = vmatpush.xpose.msra.mxu0 0.0
    %5360 = vmatpush.xpose.msra.mxu0 0.0
    %5361 = vmatpush.xpose.msra.mxu0 0.0
    %5362 = vmatpush.xpose.msra.mxu0 0.0
    %5363 = vmatpush.xpose.msra.mxu0 0.0
    %5364 = vmatpush.xpose.msra.mxu0 0.0
    %5365 = vmatpush.xpose.msra.mxu0 0.0
    %5366 = vmatpush.xpose.msra.mxu0 0.0
    %5367 = vmatpush.xpose.msra.mxu0 0.0
    %5368 = vmatpush.xpose.msra.mxu0 0.0
    %5369 = vmatpush.xpose.msra.mxu0 0.0
    %5370 = vmatpush.xpose.msra.mxu0 0.0
    %5371 = vmatpush.xpose.msra.mxu0 0.0
    %5372 = vmatpush.xpose.msra.mxu0 %v331
    %5373 = vmatmul.f32.gmra.mxu0 %v5355
    %v5374 = vpop.f32.mrf.mxu0
    %v5375 = vadd.f32 0.0, %v5374
    %5376 = vdwg.mxu0
    %v5377 = vsel %vm222, %v5285, 0
    %5379 = vmatpush.xpose.msra.mxu0 0.0
    %5380 = vmatpush.xpose.msra.mxu0 0.0
    %5381 = vmatpush.xpose.msra.mxu0 0.0
    %5382 = vmatpush.xpose.msra.mxu0 0.0
    %5383 = vmatpush.xpose.msra.mxu0 0.0
    %5384 = vmatpush.xpose.msra.mxu0 0.0
    %5385 = vmatpush.xpose.msra.mxu0 0.0
    %5386 = vmatpush.xpose.msra.mxu0 0.0
    %5387 = vmatpush.xpose.msra.mxu0 0.0
    %5388 = vmatpush.xpose.msra.mxu0 0.0
    %5389 = vmatpush.xpose.msra.mxu0 0.0
    %5390 = vmatpush.xpose.msra.mxu0 0.0
    %5391 = vmatpush.xpose.msra.mxu0 0.0
    %5392 = vmatpush.xpose.msra.mxu0 0.0
    %5393 = vmatpush.xpose.msra.mxu0 0.0
    %5394 = vmatpush.xpose.msra.mxu0 %v356
    %5395 = vmatmul.f32.gmra.mxu0 %v5377
    %v5396 = vpop.f32.mrf.mxu0
    %v5397 = vadd.f32 0.0, %v5396
    %5398 = vdwg.mxu0
    %v5399 = vsel %vm222, %v5286, 0
    %5401 = vmatpush.xpose.msra.mxu0 0.0
    %5402 = vmatpush.xpose.msra.mxu0 0.0
    %5403 = vmatpush.xpose.msra.mxu0 0.0
    %5404 = vmatpush.xpose.msra.mxu0 0.0
    %5405 = vmatpush.xpose.msra.mxu0 0.0
    %5406 = vmatpush.xpose.msra.mxu0 0.0
    %5407 = vmatpush.xpose.msra.mxu0 0.0
    %5408 = vmatpush.xpose.msra.mxu0 0.0
    %5409 = vmatpush.xpose.msra.mxu0 0.0
    %5410 = vmatpush.xpose.msra.mxu0 0.0
    %5411 = vmatpush.xpose.msra.mxu0 0.0
    %5412 = vmatpush.xpose.msra.mxu0 0.0
    %5413 = vmatpush.xpose.msra.mxu0 0.0
    %5414 = vmatpush.xpose.msra.mxu0 0.0
    %5415 = vmatpush.xpose.msra.mxu0 0.0
    %5416 = vmatpush.xpose.msra.mxu0 %v381
    %5417 = vmatmul.f32.gmra.mxu0 %v5399
    %v5418 = vpop.f32.mrf.mxu0
    %v5419 = vadd.f32 0.0, %v5418
    %5420 = vdwg.mxu0
    %v5421 = vsel %vm222, %v5287, 0
    %5423 = vmatpush.xpose.msra.mxu0 0.0
    %5424 = vmatpush.xpose.msra.mxu0 0.0
    %5425 = vmatpush.xpose.msra.mxu0 0.0
    %5426 = vmatpush.xpose.msra.mxu0 0.0
    %5427 = vmatpush.xpose.msra.mxu0 0.0
    %5428 = vmatpush.xpose.msra.mxu0 0.0
    %5429 = vmatpush.xpose.msra.mxu0 0.0
    %5430 = vmatpush.xpose.msra.mxu0 0.0
    %5431 = vmatpush.xpose.msra.mxu0 0.0
    %5432 = vmatpush.xpose.msra.mxu0 0.0
    %5433 = vmatpush.xpose.msra.mxu0 0.0
    %5434 = vmatpush.xpose.msra.mxu0 0.0
    %5435 = vmatpush.xpose.msra.mxu0 0.0
    %5436 = vmatpush.xpose.msra.mxu0 0.0
    %5437 = vmatpush.xpose.msra.mxu0 0.0
    %5438 = vmatpush.xpose.msra.mxu0 %v406
    %5439 = vmatmul.f32.gmra.mxu0 %v5421
    %v5440 = vpop.f32.mrf.mxu0
    %v5441 = vadd.f32 0.0, %v5440
    %5442 = vdwg.mxu0
    %v5443 = vsel %vm222, %v5288, 0
    %5445 = vmatpush.xpose.msra.mxu0 0.0
    %5446 = vmatpush.xpose.msra.mxu0 0.0
    %5447 = vmatpush.xpose.msra.mxu0 0.0
    %5448 = vmatpush.xpose.msra.mxu0 0.0
    %5449 = vmatpush.xpose.msra.mxu0 0.0
    %5450 = vmatpush.xpose.msra.mxu0 0.0
    %5451 = vmatpush.xpose.msra.mxu0 0.0
    %5452 = vmatpush.xpose.msra.mxu0 0.0
    %5453 = vmatpush.xpose.msra.mxu0 0.0
    %5454 = vmatpush.xpose.msra.mxu0 0.0
    %5455 = vmatpush.xpose.msra.mxu0 0.0
    %5456 = vmatpush.xpose.msra.mxu0 0.0
    %5457 = vmatpush.xpose.msra.mxu0 0.0
    %5458 = vmatpush.xpose.msra.mxu0 0.0
    %5459 = vmatpush.xpose.msra.mxu0 0.0
    %5460 = vmatpush.xpose.msra.mxu0 %v431
    %5461 = vmatmul.f32.gmra.mxu0 %v5443
    %v5462 = vpop.f32.mrf.mxu0
    %v5463 = vadd.f32 0.0, %v5462
    %5464 = vdwg.mxu0
    %v5465 = vadd.f32 %v5309, %v198
    %v5466 = vadd.f32 %v5331, %v454
    %v5467 = vadd.f32 %v5353, %v455
    %v5468 = vadd.f32 %v5375, %v456
    %v5469 = vadd.f32 %v5397, %v457
    %v5470 = vadd.f32 %v5419, %v458
    %v5471 = vadd.f32 %v5441, %v459
    %v5472 = vadd.f32 %v5463, %v460
    %v5481 = vrot.slane %v5466, 7
    %v5482 = vsel %vm486, %v5481, %v5465
    %v5483 = vrot.slane %v5467, 6
    %v5484 = vsel %vm489, %v5483, %v5482
    %v5485 = vrot.slane %v5468, 5
    %v5486 = vsel %vm492, %v5485, %v5484
    %v5487 = vrot.slane %v5469, 4
    %v5488 = vsel %vm495, %v5487, %v5486
    %v5489 = vrot.slane %v5470, 3
    %v5490 = vsel %vm498, %v5489, %v5488
    %v5491 = vrot.slane %v5471, 2
    %v5492 = vsel %vm501, %v5491, %v5490
    %v5493 = vrot.slane %v5472, 1
    %v5494 = vsel %vm504, %v5493, %v5492
    %v5496 = vsel %vm507, %v5494, -inf
    %5497 = vmax.xlane.f32.xlu0 %v5496
    %v5498 = vpop.xlane.xlu0 %5497
    %v5500 = vrot.slane %v5498, 1
    %v5501 = vrot.slane %v5498, 2
    %v5502 = vrot.slane %v5498, 3
    %v5503 = vrot.slane %v5498, 4
    %v5504 = vrot.slane %v5498, 5
    %v5505 = vrot.slane %v5498, 6
    %v5506 = vrot.slane %v5498, 7
    %v5515 = vsub.f32 %v5465, %v5498
    %v5516 = vsub.f32 %v5466, %v5500
    %v5517 = vsub.f32 %v5467, %v5501
    %v5518 = vsub.f32 %v5468, %v5502
    %v5519 = vsub.f32 %v5469, %v5503
    %v5520 = vsub.f32 %v5470, %v5504
    %v5521 = vsub.f32 %v5471, %v5505
    %v5522 = vsub.f32 %v5472, %v5506
    %v5523 = vmul.f32 %v5515, 1.442695
    %v5524 = vpow.pop %v5523
    %v5525 = vmul.f32 %v5516, 1.442695
    %v5526 = vpow.pop %v5525
    %v5527 = vmul.f32 %v5517, 1.442695
    %v5528 = vpow.pop %v5527
    %v5529 = vmul.f32 %v5518, 1.442695
    %v5530 = vpow.pop %v5529
    %v5531 = vmul.f32 %v5519, 1.442695
    %v5532 = vpow.pop %v5531
    %v5533 = vmul.f32 %v5520, 1.442695
    %v5534 = vpow.pop %v5533
    %v5535 = vmul.f32 %v5521, 1.442695
    %v5536 = vpow.pop %v5535
    %v5537 = vmul.f32 %v5522, 1.442695
    %v5538 = vpow.pop %v5537
    %v5547 = vrot.slane %v5526, 7
    %v5548 = vsel %vm486, %v5547, %v5524
    %v5549 = vrot.slane %v5528, 6
    %v5550 = vsel %vm489, %v5549, %v5548
    %v5551 = vrot.slane %v5530, 5
    %v5552 = vsel %vm492, %v5551, %v5550
    %v5553 = vrot.slane %v5532, 4
    %v5554 = vsel %vm495, %v5553, %v5552
    %v5555 = vrot.slane %v5534, 3
    %v5556 = vsel %vm498, %v5555, %v5554
    %v5557 = vrot.slane %v5536, 2
    %v5558 = vsel %vm501, %v5557, %v5556
    %v5559 = vrot.slane %v5538, 1
    %v5560 = vsel %vm504, %v5559, %v5558
    %v5562 = vsel %vm507, %v5560, 0.0
    %5563 = vadd.xlane.f32.xlu0 %v5562
    %v5564 = vpop.xlane.xlu0 %5563
    %v5565 = vrcp.pop %v5564
    %v5567 = vrot.slane %v5565, 1
    %v5568 = vrot.slane %v5565, 2
    %v5569 = vrot.slane %v5565, 3
    %v5570 = vrot.slane %v5565, 4
    %v5571 = vrot.slane %v5565, 5
    %v5572 = vrot.slane %v5565, 6
    %v5573 = vrot.slane %v5565, 7
    %v5582 = vmul.f32 %v5524, %v5565
    %v5583 = vmul.f32 %v5526, %v5567
    %v5584 = vmul.f32 %v5528, %v5568
    %v5585 = vmul.f32 %v5530, %v5569
    %v5586 = vmul.f32 %v5532, %v5570
    %v5587 = vmul.f32 %v5534, %v5571
    %v5588 = vmul.f32 %v5536, %v5572
    %v5589 = vmul.f32 %v5538, %v5573
    %v5591 = vsel %vm507, %v5582, 0
    %5593 = vmatpush.msra.mxu0 0.0
    %5594 = vmatpush.msra.mxu0 0.0
    %5595 = vmatpush.msra.mxu0 0.0
    %5596 = vmatpush.msra.mxu0 0.0
    %5597 = vmatpush.msra.mxu0 0.0
    %5598 = vmatpush.msra.mxu0 0.0
    %5599 = vmatpush.msra.mxu0 0.0
    %5600 = vmatpush.msra.mxu0 0.0
    %5601 = vmatpush.msra.mxu0 0.0
    %5602 = vmatpush.msra.mxu0 0.0
    %5603 = vmatpush.msra.mxu0 0.0
    %5604 = vmatpush.msra.mxu0 0.0
    %5605 = vmatpush.msra.mxu0 0.0
    %5606 = vmatpush.msra.mxu0 0.0
    %5607 = vmatpush.msra.mxu0 0.0
    %5608 = vmatpush.msra.mxu0 %v190
    %5609 = vmatmul.f32.gmra.mxu0 %v5591
    %v5610 = vpop.f32.mrf.mxu0
    %v5611 = vadd.f32 0.0, %v5610
    %5612 = vdwg.mxu0
    %v5614 = vsel %vm507, %v5583, 0
    %5616 = vmatpush.msra.mxu0 0.0
    %5617 = vmatpush.msra.mxu0 0.0
    %5618 = vmatpush.msra.mxu0 0.0
    %5619 = vmatpush.msra.mxu0 0.0
    %5620 = vmatpush.msra.mxu0 0.0
    %5621 = vmatpush.msra.mxu0 0.0
    %5622 = vmatpush.msra.mxu0 0.0
    %5623 = vmatpush.msra.mxu0 0.0
    %5624 = vmatpush.msra.mxu0 0.0
    %5625 = vmatpush.msra.mxu0 0.0
    %5626 = vmatpush.msra.mxu0 0.0
    %5627 = vmatpush.msra.mxu0 0.0
    %5628 = vmatpush.msra.mxu0 0.0
    %5629 = vmatpush.msra.mxu0 0.0
    %5630 = vmatpush.msra.mxu0 0.0
    %5631 = vmatpush.msra.mxu0 %v191
    %5632 = vmatmul.f32.gmra.mxu0 %v5614
    %v5633 = vpop.f32.mrf.mxu0
    %v5634 = vadd.f32 0.0, %v5633
    %5635 = vdwg.mxu0
    %v5637 = vsel %vm507, %v5584, 0
    %5639 = vmatpush.msra.mxu0 0.0
    %5640 = vmatpush.msra.mxu0 0.0
    %5641 = vmatpush.msra.mxu0 0.0
    %5642 = vmatpush.msra.mxu0 0.0
    %5643 = vmatpush.msra.mxu0 0.0
    %5644 = vmatpush.msra.mxu0 0.0
    %5645 = vmatpush.msra.mxu0 0.0
    %5646 = vmatpush.msra.mxu0 0.0
    %5647 = vmatpush.msra.mxu0 0.0
    %5648 = vmatpush.msra.mxu0 0.0
    %5649 = vmatpush.msra.mxu0 0.0
    %5650 = vmatpush.msra.mxu0 0.0
    %5651 = vmatpush.msra.mxu0 0.0
    %5652 = vmatpush.msra.mxu0 0.0
    %5653 = vmatpush.msra.mxu0 0.0
    %5654 = vmatpush.msra.mxu0 %v192
    %5655 = vmatmul.f32.gmra.mxu0 %v5637
    %v5656 = vpop.f32.mrf.mxu0
    %v5657 = vadd.f32 0.0, %v5656
    %5658 = vdwg.mxu0
    %v5660 = vsel %vm507, %v5585, 0
    %5662 = vmatpush.msra.mxu0 0.0
    %5663 = vmatpush.msra.mxu0 0.0
    %5664 = vmatpush.msra.mxu0 0.0
    %5665 = vmatpush.msra.mxu0 0.0
    %5666 = vmatpush.msra.mxu0 0.0
    %5667 = vmatpush.msra.mxu0 0.0
    %5668 = vmatpush.msra.mxu0 0.0
    %5669 = vmatpush.msra.mxu0 0.0
    %5670 = vmatpush.msra.mxu0 0.0
    %5671 = vmatpush.msra.mxu0 0.0
    %5672 = vmatpush.msra.mxu0 0.0
    %5673 = vmatpush.msra.mxu0 0.0
    %5674 = vmatpush.msra.mxu0 0.0
    %5675 = vmatpush.msra.mxu0 0.0
    %5676 = vmatpush.msra.mxu0 0.0
    %5677 = vmatpush.msra.mxu0 %v193
    %5678 = vmatmul.f32.gmra.mxu0 %v5660
    %v5679 = vpop.f32.mrf.mxu0
    %v5680 = vadd.f32 0.0, %v5679
    %5681 = vdwg.mxu0
    %v5683 = vsel %vm507, %v5586, 0
    %5685 = vmatpush.msra.mxu0 0.0
    %5686 = vmatpush.msra.mxu0 0.0
    %5687 = vmatpush.msra.mxu0 0.0
    %5688 = vmatpush.msra.mxu0 0.0
    %5689 = vmatpush.msra.mxu0 0.0
    %5690 = vmatpush.msra.mxu0 0.0
    %5691 = vmatpush.msra.mxu0 0.0
    %5692 = vmatpush.msra.mxu0 0.0
    %5693 = vmatpush.msra.mxu0 0.0
    %5694 = vmatpush.msra.mxu0 0.0
    %5695 = vmatpush.msra.mxu0 0.0
    %5696 = vmatpush.msra.mxu0 0.0
    %5697 = vmatpush.msra.mxu0 0.0
    %5698 = vmatpush.msra.mxu0 0.0
    %5699 = vmatpush.msra.mxu0 0.0
    %5700 = vmatpush.msra.mxu0 %v194
    %5701 = vmatmul.f32.gmra.mxu0 %v5683
    %v5702 = vpop.f32.mrf.mxu0
    %v5703 = vadd.f32 0.0, %v5702
    %5704 = vdwg.mxu0
    %v5706 = vsel %vm507, %v5587, 0
    %5708 = vmatpush.msra.mxu0 0.0
    %5709 = vmatpush.msra.mxu0 0.0
    %5710 = vmatpush.msra.mxu0 0.0
    %5711 = vmatpush.msra.mxu0 0.0
    %5712 = vmatpush.msra.mxu0 0.0
    %5713 = vmatpush.msra.mxu0 0.0
    %5714 = vmatpush.msra.mxu0 0.0
    %5715 = vmatpush.msra.mxu0 0.0
    %5716 = vmatpush.msra.mxu0 0.0
    %5717 = vmatpush.msra.mxu0 0.0
    %5718 = vmatpush.msra.mxu0 0.0
    %5719 = vmatpush.msra.mxu0 0.0
    %5720 = vmatpush.msra.mxu0 0.0
    %5721 = vmatpush.msra.mxu0 0.0
    %5722 = vmatpush.msra.mxu0 0.0
    %5723 = vmatpush.msra.mxu0 %v195
    %5724 = vmatmul.f32.gmra.mxu0 %v5706
    %v5725 = vpop.f32.mrf.mxu0
    %v5726 = vadd.f32 0.0, %v5725
    %5727 = vdwg.mxu0
    %v5729 = vsel %vm507, %v5588, 0
    %5731 = vmatpush.msra.mxu0 0.0
    %5732 = vmatpush.msra.mxu0 0.0
    %5733 = vmatpush.msra.mxu0 0.0
    %5734 = vmatpush.msra.mxu0 0.0
    %5735 = vmatpush.msra.mxu0 0.0
    %5736 = vmatpush.msra.mxu0 0.0
    %5737 = vmatpush.msra.mxu0 0.0
    %5738 = vmatpush.msra.mxu0 0.0
    %5739 = vmatpush.msra.mxu0 0.0
    %5740 = vmatpush.msra.mxu0 0.0
    %5741 = vmatpush.msra.mxu0 0.0
    %5742 = vmatpush.msra.mxu0 0.0
    %5743 = vmatpush.msra.mxu0 0.0
    %5744 = vmatpush.msra.mxu0 0.0
    %5745 = vmatpush.msra.mxu0 0.0
    %5746 = vmatpush.msra.mxu0 %v196
    %5747 = vmatmul.f32.gmra.mxu0 %v5729
    %v5748 = vpop.f32.mrf.mxu0
    %v5749 = vadd.f32 0.0, %v5748
    %5750 = vdwg.mxu0
    %v5752 = vsel %vm507, %v5589, 0
    %5754 = vmatpush.msra.mxu0 0.0
    %5755 = vmatpush.msra.mxu0 0.0
    %5756 = vmatpush.msra.mxu0 0.0
    %5757 = vmatpush.msra.mxu0 0.0
    %5758 = vmatpush.msra.mxu0 0.0
    %5759 = vmatpush.msra.mxu0 0.0
    %5760 = vmatpush.msra.mxu0 0.0
    %5761 = vmatpush.msra.mxu0 0.0
    %5762 = vmatpush.msra.mxu0 0.0
    %5763 = vmatpush.msra.mxu0 0.0
    %5764 = vmatpush.msra.mxu0 0.0
    %5765 = vmatpush.msra.mxu0 0.0
    %5766 = vmatpush.msra.mxu0 0.0
    %5767 = vmatpush.msra.mxu0 0.0
    %5768 = vmatpush.msra.mxu0 0.0
    %5769 = vmatpush.msra.mxu0 %v197
    %5770 = vmatmul.f32.gmra.mxu0 %v5752
    %v5771 = vpop.f32.mrf.mxu0
    %v5772 = vadd.f32 0.0, %v5771
    %5773 = vdwg.mxu0
    %s5774 = scalar_lea.vmem [#allocation3], 56
    %v5775 = vld [vmem:[%s5774] sm:$0xff]
    %v5784 = vrot.slane %v5634, 7
    %v5785 = vsel %vm486, %v5784, %v5611
    %v5786 = vrot.slane %v5657, 6
    %v5787 = vsel %vm489, %v5786, %v5785
    %v5788 = vrot.slane %v5680, 5
    %v5789 = vsel %vm492, %v5788, %v5787
    %v5790 = vrot.slane %v5703, 4
    %v5791 = vsel %vm495, %v5790, %v5789
    %v5792 = vrot.slane %v5726, 3
    %v5793 = vsel %vm498, %v5792, %v5791
    %v5794 = vrot.slane %v5749, 2
    %v5795 = vsel %vm501, %v5794, %v5793
    %v5796 = vrot.slane %v5772, 1
    %v5797 = vsel %vm504, %v5796, %v5795
    %v5798 = vsel %vm809, %v5797, 0
    %5800 = vmatpush.msra.mxu0 0.0
    %5801 = vmatpush.msra.mxu0 0.0
    %5802 = vmatpush.msra.mxu0 0.0
    %5803 = vmatpush.msra.mxu0 0.0
    %5804 = vmatpush.msra.mxu0 0.0
    %5805 = vmatpush.msra.mxu0 0.0
    %5806 = vmatpush.msra.mxu0 0.0
    %5807 = vmatpush.msra.mxu0 0.0
    %5808 = vmatpush.msra.mxu0 0.0
    %5809 = vmatpush.msra.mxu0 0.0
    %5810 = vmatpush.msra.mxu0 0.0
    %5811 = vmatpush.msra.mxu0 0.0
    %5812 = vmatpush.msra.mxu0 0.0
    %5813 = vmatpush.msra.mxu0 0.0
    %5814 = vmatpush.msra.mxu0 %v204
    %5815 = vmatpush.msra.mxu0 %v203
    %5816 = vmatmul.f32.gmra.mxu0 %v5798
    %v5817 = vpop.f32.mrf.mxu0
    %v5818 = vadd.f32 0.0, %v5817
    %5819 = vdwg.mxu0
    %v5820 = vadd.f32 %v5775, %v5818
    %5821 = vmatpush.msra.mxu0 0.0
    %5822 = vmatpush.msra.mxu0 0.0
    %5823 = vmatpush.msra.mxu0 0.0
    %5824 = vmatpush.msra.mxu0 0.0
    %5825 = vmatpush.msra.mxu0 0.0
    %5826 = vmatpush.msra.mxu0 0.0
    %5827 = vmatpush.msra.mxu0 0.0
    %5828 = vmatpush.msra.mxu0 0.0
    %5829 = vmatpush.msra.mxu0 0.0
    %5830 = vmatpush.msra.mxu0 0.0
    %5831 = vmatpush.msra.mxu0 0.0
    %5832 = vmatpush.msra.mxu0 0.0
    %5833 = vmatpush.msra.mxu0 %v208
    %5834 = vmatpush.msra.mxu0 %v207
    %5835 = vmatpush.msra.mxu0 %v206
    %5836 = vmatpush.msra.mxu0 %v205
    %5837 = vmatmul.f32.gmra.mxu0 %v5190
    %v5838 = vpop.f32.mrf.mxu0
    %v5839 = vadd.f32 0.0, %v5838
    %5840 = vdwg.mxu0
    %v5841 = vadd.f32 %v5820, %v5839
    %v5842 = vxor.u32 %v5841, 2147483648
    %v5843 = vmul.f32 %v5842, 1.442695
    %v5844 = vpow.pop %v5843
    %v5845 = vadd.f32 %v5844, 1.0
    %v5846 = vrcp.pop %v5845
    %v5847 = vmul.f32 %v5845, %v5846
    %v5848 = vsub.f32 1.0, %v5847
    %v5849 = vmul.f32 %v5846, %v5848
    %v5850 = vadd.f32 %v5846, %v5849
    %vm5851 = vweird.f32 %v5845
    %vm5852 = vweird.f32 %v5846
    %vm5853 = vmor %vm5851, %vm5852
    %v5854 = vsel %vm5853, %v5846, %v5850
    %v5855 = vand.u32 2147483647, %v5845
    %vm5856 = vcmp.eq.f32.partialorder %v5855, 8.507059e+37
    %v5857 = vand.u32 %v5845, 2147483648
    %v5858 = vor.u32 1.1754944e-38, %v5857
    %v5859 = vsel %vm5856, %v5858, %v5854
    %v5860 = vmul.f32 1.0, %v5859
    %v5861 = vtanh.pop %v5841
    %v5862 = vmul.f32 %v5860, %v5160
    %5864 = vrot.lane.b32.xlu0 %v5861, 64
    %v5865 = vpop.permute.xlu0 %5864
    %v5867 = vmul.f32 %v5860, %v5865
    %5869 = vrot.lane.b32.xlu0 %v5867, 32
    %v5870 = vpop.permute.xlu0 %5869
    %v5872 = vadd.f32 %v5862, %v5870
    %v5873 = vtanh.pop %v5872
    %5875 = vrot.lane.b32.xlu0 %v5873, 64
    %v5876 = vpop.permute.xlu0 %5875
    %v5878 = vmul.f32 %v5860, %v5876
    %5879 = vmatpush.msra.mxu0 0.0
    %5880 = vmatpush.msra.mxu0 0.0
    %5881 = vmatpush.msra.mxu0 0.0
    %5882 = vmatpush.msra.mxu0 0.0
    %5883 = vmatpush.msra.mxu0 0.0
    %5884 = vmatpush.msra.mxu0 0.0
    %5885 = vmatpush.msra.mxu0 0.0
    %5886 = vmatpush.msra.mxu0 0.0
    %5887 = vmatpush.msra.mxu0 0.0
    %5888 = vmatpush.msra.mxu0 0.0
    %5889 = vmatpush.msra.mxu0 0.0
    %5890 = vmatpush.msra.mxu0 0.0
    %5891 = vmatpush.msra.mxu0 %v216
    %5892 = vmatpush.msra.mxu0 %v215
    %5893 = vmatpush.msra.mxu0 %v214
    %5894 = vmatpush.msra.mxu0 %v213
    %5895 = vmatmul.f32.gmra.mxu0 %v5259
    %v5896 = vpop.f32.mrf.mxu0
    %v5897 = vadd.f32 0.0, %v5896
    %5898 = vdwg.mxu0
    %5900 = vrot.lane.b32.xlu0 %v5878, 32
    %v5901 = vpop.permute.xlu0 %5900
    %v5902 = vsel %vm222, %v5901, 0
    %5904 = vmatpush.msra.mxu0 0.0
    %5905 = vmatpush.msra.mxu0 0.0
    %5906 = vmatpush.msra.mxu0 0.0
    %5907 = vmatpush.msra.mxu0 0.0
    %5908 = vmatpush.msra.mxu0 0.0
    %5909 = vmatpush.msra.mxu0 0.0
    %5910 = vmatpush.msra.mxu0 0.0
    %5911 = vmatpush.msra.mxu0 0.0
    %5912 = vmatpush.msra.mxu0 0.0
    %5913 = vmatpush.msra.mxu0 0.0
    %5914 = vmatpush.msra.mxu0 0.0
    %5915 = vmatpush.msra.mxu0 0.0
    %5916 = vmatpush.msra.mxu0 %v212
    %5917 = vmatpush.msra.mxu0 %v211
    %5918 = vmatpush.msra.mxu0 %v210
    %5919 = vmatpush.msra.mxu0 %v209
    %5920 = vmatmul.f32.gmra.mxu0 %v5902
    %v5921 = vpop.f32.mrf.mxu0
    %v5922 = vadd.f32 %v5897, %v5921
    %5923 = vdwg.mxu0
    %v5924 = vadd.f32 %v5922, %v939
    %v5925 = vxor.u32 %v5924, 2147483648
    %v5926 = vmul.f32 %v5925, 1.442695
    %v5927 = vpow.pop %v5926
    %v5928 = vadd.f32 %v5927, 1.0
    %v5929 = vrcp.pop %v5928
    %v5930 = vmul.f32 %v5928, %v5929
    %v5931 = vsub.f32 1.0, %v5930
    %v5932 = vmul.f32 %v5929, %v5931
    %v5933 = vadd.f32 %v5929, %v5932
    %vm5934 = vweird.f32 %v5928
    %vm5935 = vweird.f32 %v5929
    %vm5936 = vmor %vm5934, %vm5935
    %v5937 = vsel %vm5936, %v5929, %v5933
    %v5938 = vand.u32 2147483647, %v5928
    %vm5939 = vcmp.eq.f32.partialorder %v5938, 8.507059e+37
    %v5940 = vand.u32 %v5928, 2147483648
    %v5941 = vor.u32 1.1754944e-38, %v5940
    %v5942 = vsel %vm5939, %v5941, %v5937
    %v5943 = vmul.f32 1.0, %v5942
    %v5944 = vtanh.pop %v5924
    %v5945 = vmul.f32 %v5943, %v5243
    %5947 = vrot.lane.b32.xlu0 %v5944, 64
    %v5948 = vpop.permute.xlu0 %5947
    %v5950 = vmul.f32 %v5943, %v5948
    %5952 = vrot.lane.b32.xlu0 %v5950, 32
    %v5953 = vpop.permute.xlu0 %5952
    %v5955 = vadd.f32 %v5945, %v5953
    %v5956 = vtanh.pop %v5955
    %5958 = vrot.lane.b32.xlu0 %v5956, 64
    %v5959 = vpop.permute.xlu0 %5958
    %v5961 = vmul.f32 %v5943, %v5959
    %5963 = vrot.lane.b32.xlu0 %v5961, 32
    %v5964 = vpop.permute.xlu0 %5963
    %s5966 = scalar_lea.vmem [#allocation18], 56
    %5967 = vst.msk [vmem:[%s5966] sm:$0xff] %vm222, %v5964
    %s5969 = scalar_lea.vmem [#allocation19], 56
    %5970 = vst.msk [vmem:[%s5969] sm:$0xff] %vm809, %v5797
    %5972 = vst.msk [vmem:[#allocation2] sm:$0xff] %vm222, %v5901
    %vm5973 = vcmask 523520
    %5974 = vst.msk [vmem:[#allocation2] sm:$0xff] %vm5973, %v5872
    %5975 = vrot.lane.b32.xlu0 %v5961, 96
    %v5976 = vpop.permute.xlu0 %5975
    %vm5978 = vcmask 785920
    %5979 = vst.msk [vmem:[#allocation2] sm:$0xff] %vm5978, %v5976
    %5981 = vrot.lane.b32.xlu0 %v5955, 64
    %v5982 = vpop.permute.xlu0 %5981
    %vm5984 = vcmask 1048320
    %5985 = vst.msk [vmem:[#allocation2] sm:$0xff] %vm5984, %v5982
    // Predicated region
    $region82: #{tpu_custom_call.1} parent=1 // pred_check
      _
    $region83: #{tpu_custom_call.1} parent=1 // pred_check_branch
      %5987 = sbr.rel (0) target = $region85
    $region84: #{tpu_custom_call.1} parent=1 // pred_region
      %5989 = vsyncadd [#allocation5], 0
      %s5990 = sshll.u32 [#allocation18], 4
      %s5991 = int_to_ptr.vmem [resolvable:$true] %s5990
      %s5992 = sshll.u32 %s10, 4
      %s5993 = int_to_ptr.hbm [resolvable:$true] %s5992
      %5998 = dma.vmem_to_hbm [thread:$0]  %s5991, 1024, %s5993, [#allocation5], 128, 128, 8
    $region85: #{tpu_custom_call.1} parent=1 // pred_fallthru
      _
    // Predicated region
    $region86: #{tpu_custom_call.1} parent=1 // pred_check
      _
    $region87: #{tpu_custom_call.1} parent=1 // pred_check_branch
      %6000 = sbr.rel (0) target = $region89
    $region88: #{tpu_custom_call.1} parent=1 // pred_region
      %6002 = vsyncadd [#allocation20], 0
      %s6003 = sshll.u32 [#allocation19], 4
      %s6004 = int_to_ptr.vmem [resolvable:$true] %s6003
      %s6005 = sshll.u32 %s11, 4
      %s6006 = int_to_ptr.hbm [resolvable:$true] %s6005
      %6011 = dma.vmem_to_hbm [thread:$0]  %s6004, 1024, %s6006, [#allocation20], 128, 128, 8
    $region89: #{tpu_custom_call.1} parent=1 // pred_fallthru
      _
    // Predicated region
    $region90: #{tpu_custom_call.1} parent=1 // pred_check
      _
    $region91: #{tpu_custom_call.1} parent=1 // pred_check_branch
      %6013 = sbr.rel (0) target = $region93
    $region92: #{tpu_custom_call.1} parent=1 // pred_region
      %6015 = dma.done [#allocation5], 1024
    $region93: #{tpu_custom_call.1} parent=1 // pred_fallthru
      _
    // Predicated region
    $region94: #{tpu_custom_call.1} parent=1 // pred_check
      _
    $region95: #{tpu_custom_call.1} parent=1 // pred_check_branch
      %6017 = sbr.rel (0) target = $region97
    $region96: #{tpu_custom_call.1} parent=1 // pred_region
      %6019 = dma.done [#allocation20], 1024
    $region97: #{tpu_custom_call.1} parent=1 // pred_fallthru
      _
    %6020 = vsyncpa [#allocation4], 1
    %6021 = vsyncpa [#allocation7], 1
    %6022 = vsyncpa [#allocation10], 1
    %6023 = vsyncpa [#allocation13], 1
    %6024 = vsyncpa [#allocation16], 1
    %6025 = vsyncpa [#allocation5], 1
    %6026 = vsyncpa [#allocation20], 1

</llo_original>
